<compile_context>
chip_gen: v5e
topology: v5e:2x2
jax: 0.10.0
libtpu: 0.0.40
codegen_flags: <defaults>
</compile_context>

<pallas_src>
import jax
import jax.numpy as jnp
import numpy as np
from jax.experimental import pallas as pl
from jax.experimental.pallas import tpu as pltpu

CPAD = 128          # padded channel / lane width
KSIZE = 4           # conv kernel size
NTAPS = KSIZE * KSIZE


# ------------------------------ Pallas kernel -------------------------------

def _encoder_kernel(p1_ref, w1_ref, b1_ref,
                    s2c_ref, w2c_ref, b2_ref,
                    s3c_ref, w3c_ref, b3_ref,
                    wfc_ref, bfc_ref,
                    out_ref,
                    y1_scr, g_scr, pat_scr, fcin_scr):
    f32, bf16 = jnp.float32, jnp.bfloat16
    B = fcin_scr.shape[0]

    # ---- conv1, batched over the whole block: (B*256, 128) @ (128, 128) ----
    y1 = jnp.dot(p1_ref[...], w1_ref[...], preferred_element_type=f32)
    y1_scr[...] = jnp.maximum(y1 + b1_ref[...], 0.0).astype(bf16)

    # ---- loop-invariant operand / bias loads (hoisted out of the sample loop) ----
    s2c = s2c_ref[...]          # (1024, 256)  stacked conv2 tap selectors
    w2c = w2c_ref[...]          # (2048, 128)  conv2 weights stacked along K
    s3c = s3c_ref[...]          # (256, 128)   stacked conv3 tap selectors (K padded)
    w3c = w3c_ref[...]          # (2048, 128)
    b2 = b2_ref[...]
    b3 = b3_ref[...]
    zeros64 = jnp.zeros((64, CPAD), bf16)

    for s in range(B):          # static, unrolled per-sample loop
        # ---- conv2: 16x16x12 -> 8x8x24 (1 gather matmul + slab rearrange + fat-K matmul)
        y1_s = y1_scr[s * 256:(s + 1) * 256, :]                               # (256,128)
        g_scr[...] = jnp.dot(s2c, y1_s, preferred_element_type=f32).astype(bf16)  # (1024,128)
        for t in range(NTAPS):
            pat_scr[0:64, t * CPAD:(t + 1) * CPAD] = g_scr[t * 64:(t + 1) * 64, :]
        y2 = jnp.dot(pat_scr[0:64, :], w2c, preferred_element_type=f32)       # (64,128)
        y2 = jnp.maximum(y2 + b2, 0.0).astype(bf16)

        # ---- conv3: 8x8x24 -> 4x4x48 ----
        y2p = jnp.concatenate([y2, zeros64], axis=0)                          # (128,128), lane-dense K
        g_scr[0:256, :] = jnp.dot(s3c, y2p, preferred_element_type=f32).astype(bf16)
        for t in range(NTAPS):
            pat_scr[0:16, t * CPAD:(t + 1) * CPAD] = g_scr[t * 16:(t + 1) * 16, :]
        y3 = jnp.dot(pat_scr[0:16, :], w3c, preferred_element_type=f32)       # (16,128)
        y3 = jnp.maximum(y3 + b3, 0.0).astype(bf16)

        # ---- NCHW flatten baked into wfc layout: fc lane index = t*128 + c ----
        for t in range(NTAPS):
            fcin_scr[s:s + 1, t * CPAD:(t + 1) * CPAD] = y3[t:t + 1, :]

    # ---- fc: one (B, 2048) @ (2048, 128) matmul; logits live in lanes 0..9 ----
    logits = jnp.dot(fcin_scr[...], wfc_ref[...], preferred_element_type=f32)
    out_ref[...] = (logits + bfc_ref[...]).astype(out_ref.dtype)


# ------------------------- host-side operand building ------------------------

def _make_tap_select(hi, wi, ho, wo, ksize=KSIZE, stride=2, pad=1):
    """0/1 selection matrices S[t, out_pos, in_pos] per conv tap (exact gather)."""
    s = np.zeros((ksize * ksize, ho * wo, hi * wi), np.float32)
    for oy in range(ho):
        for ox in range(wo):
            for ky in range(ksize):
                for kx in range(ksize):
                    iy = stride * oy + ky - pad
                    ix = stride * ox + kx - pad
                    if 0 <= iy < hi and 0 <= ix < wi:
                        s[ky * ksize + kx, oy * wo + ox, iy * wi + ix] = 1.0
    return s


def init_params(key):
    ks = jax.random.split(key, 8)

    def conv_w(k, cin, cout):
        return jax.random.normal(k, (KSIZE, KSIZE, cin, cout), jnp.float32) / np.sqrt(KSIZE * KSIZE * cin)

    return dict(
        w1=conv_w(ks[0], 3, 12),  b1=0.01 * jax.random.normal(ks[1], (12,), jnp.float32),
        w2=conv_w(ks[2], 12, 24), b2=0.01 * jax.random.normal(ks[3], (24,), jnp.float32),
        w3=conv_w(ks[4], 24, 48), b3=0.01 * jax.random.normal(ks[5], (48,), jnp.float32),
        # fc weight stored in PyTorch NCHW-flatten row order: row = c*16 + h*4 + w
        wfc=jax.random.normal(ks[6], (48 * 4 * 4, 10), jnp.float32) / np.sqrt(768.0),
        bfc=0.01 * jax.random.normal(ks[7], (10,), jnp.float32),
    )


def prepare_operands(params):
    bf16 = jnp.bfloat16

    def pad_bias(b):
        return jnp.pad(b, (0, CPAD - b.shape[0])).reshape(1, CPAD).astype(jnp.float32)

    def cat_taps(w_hwio):
        # weights stacked along K: row index = t*128 + cin  ->  (16*128, 128)
        kh, kw, ci, co = w_hwio.shape
        w = w_hwio.reshape(kh * kw, ci, co)
        w = jnp.pad(w, ((0, 0), (0, CPAD - ci), (0, CPAD - co)))
        return w.reshape(kh * kw * CPAD, CPAD).astype(bf16)

    # conv1 im2col weight: (kh*kw*cin, cout) -> (128, 128)
    w1 = params['w1'].reshape(KSIZE * KSIZE * 3, 12)
    w1 = jnp.pad(w1, ((0, CPAD - w1.shape[0]), (0, CPAD - w1.shape[1]))).astype(bf16)

    # stacked tap selectors: row = t*out_positions + out_pos
    s2c = jnp.asarray(_make_tap_select(16, 16, 8, 8).reshape(NTAPS * 64, 256), bf16)
    s3c_np = _make_tap_select(8, 8, 4, 4).reshape(NTAPS * 16, 64)
    s3c = jnp.asarray(np.pad(s3c_np, ((0, 0), (0, CPAD - 64))), bf16)        # K padded to 128

    # fc weight: original row = c*16 + t (NCHW flatten); stacked so row = t*128 + c
    wfc_t = params['wfc'].reshape(48, 16, 10).transpose(1, 0, 2)             # (t, c, n)
    wfc = jnp.pad(wfc_t, ((0, 0), (0, CPAD - 48), (0, CPAD - 10)))
    wfc = wfc.reshape(NTAPS * CPAD, CPAD).astype(bf16)

    return dict(
        w1=w1, b1=pad_bias(params['b1']),
        s2c=s2c, w2c=cat_taps(params['w2']), b2=pad_bias(params['b2']),
        s3c=s3c, w3c=cat_taps(params['w3']), b3=pad_bias(params['b3']),
        wfc=wfc, bfc=pad_bias(params['bfc']),
    )


# --------------------------------- forward ----------------------------------

def encoder_forward(ops, x_nchw, block_b=32):
    n = x_nchw.shape[0]
    B = int(min(block_b, n))                 # samples per grid step (tunable per chip gen)
    nb = -(-n // B)
    n_pad = nb * B
    if n_pad != n:
        x_nchw = jnp.pad(x_nchw, ((0, n_pad - n), (0, 0), (0, 0), (0, 0)))

    # conv1 im2col patches (kept host-side: tiny input, XLA fuses the slicing)
    x = jnp.transpose(x_nchw.astype(jnp.float32), (0, 2, 3, 1))              # NHWC
    xp = jnp.pad(x, ((0, 0), (1, 1), (1, 1), (0, 0)))                        # (n,34,34,3)
    taps = [xp[:, i:i + 32:2, j:j + 32:2, :] for i in range(KSIZE) for j in range(KSIZE)]
    p1 = jnp.stack(taps, axis=3).reshape(n_pad * 16 * 16, KSIZE * KSIZE * 3)
    p1 = jnp.pad(p1, ((0, 0), (0, CPAD - p1.shape[1]))).astype(jnp.bfloat16)

    def full_spec(a):
        nd = a.ndim
        return pl.BlockSpec(a.shape, lambda b, _nd=nd: (0,) * _nd)

    operands = (p1, ops['w1'], ops['b1'],
                ops['s2c'], ops['w2c'], ops['b2'],
                ops['s3c'], ops['w3c'], ops['b3'],
                ops['wfc'], ops['bfc'])
    in_specs = [pl.BlockSpec((B * 256, CPAD), lambda b: (b, 0))] + \
               [full_spec(a) for a in operands[1:]]

    out = pl.pallas_call(
        _encoder_kernel,
        out_shape=jax.ShapeDtypeStruct((nb, B, CPAD), jnp.float32),
        grid=(nb,),
        in_specs=in_specs,
        out_specs=pl.BlockSpec((None, B, CPAD), lambda b: (b, 0, 0)),
        scratch_shapes=[
            pltpu.VMEM((B * 256, CPAD), jnp.bfloat16),       # y1 activations for the block
            pltpu.VMEM((NTAPS * 64, CPAD), jnp.bfloat16),    # stacked gather result G
            pltpu.VMEM((64, NTAPS * CPAD), jnp.bfloat16),    # rearranged patches (out, 2048)
            pltpu.VMEM((B, NTAPS * CPAD), jnp.bfloat16),     # flattened fc input rows
        ],
        compiler_params=pltpu.CompilerParams(
            dimension_semantics=("parallel",),
            vmem_limit_bytes=32 * 1024 * 1024),
    )(*operands)
    return out.reshape(n_pad, CPAD)[:n, :10]


# ------------------------------ pure-JAX reference ---------------------------

def reference_forward(params, x_nchw):
    x = jnp.transpose(x_nchw.astype(jnp.float32), (0, 2, 3, 1))

    def cbr(x, w, b):
        y = jax.lax.conv_general_dilated(x, w, (2, 2), ((1, 1), (1, 1)),
                                         dimension_numbers=('NHWC', 'HWIO', 'NHWC'))
        return jnp.maximum(y + b, 0.0)

    y = cbr(x, params['w1'], params['b1'])
    y = cbr(y, params['w2'], params['b2'])
    y = cbr(y, params['w3'], params['b3'])                                   # (n,4,4,48)
    yf = jnp.transpose(y, (0, 3, 1, 2)).reshape(x.shape[0], -1)              # NCHW flatten
    return yf @ params['wfc'] + params['bfc']


if __name__ == "__main__":
    key = jax.random.PRNGKey(0)
    kx, kp = jax.random.split(key)
    params = init_params(kp)
    ops = prepare_operands(params)

    fwd = jax.jit(encoder_forward, static_argnames=("block_b",))

    # small CIFAR10-like batch, single grid step
    x = jax.random.normal(kx, (2, 3, 32, 32), jnp.float32)
    logits = fwd(ops, x, block_b=32)
    jax.block_until_ready(logits)
    assert logits.shape == (2, 10) and logits.dtype == jnp.float32
    assert bool(jnp.all(jnp.isfinite(logits)))
    ref = reference_forward(params, x)
    err = float(jnp.max(jnp.abs(logits - ref)))
    assert err < 2e-1, f"mismatch vs f32 reference: max abs err {err}"

    # multi-block grid + batch-padding path: n=6, B=4 -> grid=(2,), pad to 8
    x2 = jax.random.normal(jax.random.PRNGKey(1), (6, 3, 32, 32), jnp.float32)
    logits2 = fwd(ops, x2, block_b=4)
    jax.block_until_ready(logits2)
    ref2 = reference_forward(params, x2)
    err2 = float(jnp.max(jnp.abs(logits2 - ref2)))
    assert logits2.shape == (6, 10) and err2 < 2e-1, f"multi-block mismatch: {err2}"

    print("KERNEL_OK")
</pallas_src>

<mosaic_0001>
module attributes {stable_mosaic.version = 11 : i64} {
  func.func @_encoder_kernel(%arg0: i32, %arg1: memref<512x128xbf16, #tpu.memory_space<vmem>>, %arg2: memref<128x128xbf16, #tpu.memory_space<vmem>>, %arg3: memref<1x128xf32, #tpu.memory_space<vmem>>, %arg4: memref<1024x256xbf16, #tpu.memory_space<vmem>>, %arg5: memref<2048x128xbf16, #tpu.memory_space<vmem>>, %arg6: memref<1x128xf32, #tpu.memory_space<vmem>>, %arg7: memref<256x128xbf16, #tpu.memory_space<vmem>>, %arg8: memref<2048x128xbf16, #tpu.memory_space<vmem>>, %arg9: memref<1x128xf32, #tpu.memory_space<vmem>>, %arg10: memref<2048x128xbf16, #tpu.memory_space<vmem>>, %arg11: memref<1x128xf32, #tpu.memory_space<vmem>>, %arg12: memref<1x2x128xf32, #tpu.memory_space<vmem>>, %arg13: memref<512x128xbf16, #tpu.memory_space<vmem>>, %arg14: memref<1024x128xbf16, #tpu.memory_space<vmem>>, %arg15: memref<64x2048xbf16, #tpu.memory_space<vmem>>, %arg16: memref<2x2048xbf16, #tpu.memory_space<vmem>>) attributes {dimension_semantics = [#tpu.dimension_semantics<parallel>], iteration_bounds = array<i64: 1>, scalar_prefetch = 0 : i64, scratch_operands = 4 : i64, tpu.core_type = #tpu.core_type<tc>, window_params = [{transform_indices = @transform_0, window_bounds = array<i64: 512, 128>}, {pipeline_mode = #tpu.pipeline_mode<synchronous>, transform_indices = @transform_1, window_bounds = array<i64: 128, 128>}, {pipeline_mode = #tpu.pipeline_mode<synchronous>, transform_indices = @transform_2, window_bounds = array<i64: 1, 128>}, {pipeline_mode = #tpu.pipeline_mode<synchronous>, transform_indices = @transform_3, window_bounds = array<i64: 1024, 256>}, {pipeline_mode = #tpu.pipeline_mode<synchronous>, transform_indices = @transform_4, window_bounds = array<i64: 2048, 128>}, {pipeline_mode = #tpu.pipeline_mode<synchronous>, transform_indices = @transform_5, window_bounds = array<i64: 1, 128>}, {pipeline_mode = #tpu.pipeline_mode<synchronous>, transform_indices = @transform_6, window_bounds = array<i64: 256, 128>}, {pipeline_mode = #tpu.pipeline_mode<synchronous>, transform_indices = @transform_7, window_bounds = array<i64: 2048, 128>}, {pipeline_mode = #tpu.pipeline_mode<synchronous>, transform_indices = @transform_8, window_bounds = array<i64: 1, 128>}, {pipeline_mode = #tpu.pipeline_mode<synchronous>, transform_indices = @transform_9, window_bounds = array<i64: 2048, 128>}, {pipeline_mode = #tpu.pipeline_mode<synchronous>, transform_indices = @transform_10, window_bounds = array<i64: 1, 128>}, {transform_indices = @transform_11, window_bounds = array<i64: 1, 2, 128>}]} {
    %c0 = arith.constant 0 : index
    %c0_0 = arith.constant 0 : index
    %0 = vector.load %arg1[%c0, %c0_0] : memref<512x128xbf16, #tpu.memory_space<vmem>>, vector<512x128xbf16>
    %c0_1 = arith.constant 0 : index
    %c0_2 = arith.constant 0 : index
    %1 = vector.load %arg2[%c0_1, %c0_2] : memref<128x128xbf16, #tpu.memory_space<vmem>>, vector<128x128xbf16>
    %cst = arith.constant dense<0.000000e+00> : vector<512x128xf32>
    %2 = tpu.matmul %0, %1, %cst {dimension_numbers = #tpu.dot_dimension_numbers<[1], [0], [0], [1], [0, 0, 1, 1], [], []>} : vector<512x128xbf16>, vector<128x128xbf16>, vector<512x128xf32> -> vector<512x128xf32>
    %c0_3 = arith.constant 0 : index
    %c0_4 = arith.constant 0 : index
    %3 = vector.load %arg3[%c0_3, %c0_4] : memref<1x128xf32, #tpu.memory_space<vmem>>, vector<1x128xf32>
    %4 = vector.broadcast %3 : vector<1x128xf32> to vector<512x128xf32>
    %5 = arith.addf %2, %4 : vector<512x128xf32>
    %cst_5 = arith.constant 0.000000e+00 : f32
    %6 = vector.broadcast %cst_5 : f32 to vector<512x128xf32>
    %7 = arith.maximumf %5, %6 : vector<512x128xf32>
    %8 = arith.truncf %7 : vector<512x128xf32> to vector<512x128xbf16>
    %c0_6 = arith.constant 0 : index
    %c0_7 = arith.constant 0 : index
    %9 = vector.load %arg13[%c0_6, %c0_7] : memref<512x128xbf16, #tpu.memory_space<vmem>>, vector<512x128xbf16>
    tpu.vector_store %arg13[%c0_6, %c0_7], %8 {strides = array<i32>} : memref<512x128xbf16, #tpu.memory_space<vmem>>, vector<512x128xbf16>,
    %c0_8 = arith.constant 0 : index
    %c0_9 = arith.constant 0 : index
    %10 = vector.load %arg4[%c0_8, %c0_9] : memref<1024x256xbf16, #tpu.memory_space<vmem>>, vector<1024x256xbf16>
    %c0_10 = arith.constant 0 : index
    %c0_11 = arith.constant 0 : index
    %11 = vector.load %arg5[%c0_10, %c0_11] : memref<2048x128xbf16, #tpu.memory_space<vmem>>, vector<2048x128xbf16>
    %c0_12 = arith.constant 0 : index
    %c0_13 = arith.constant 0 : index
    %12 = vector.load %arg7[%c0_12, %c0_13] : memref<256x128xbf16, #tpu.memory_space<vmem>>, vector<256x128xbf16>
    %c0_14 = arith.constant 0 : index
    %c0_15 = arith.constant 0 : index
    %13 = vector.load %arg8[%c0_14, %c0_15] : memref<2048x128xbf16, #tpu.memory_space<vmem>>, vector<2048x128xbf16>
    %c0_16 = arith.constant 0 : index
    %c0_17 = arith.constant 0 : index
    %14 = vector.load %arg6[%c0_16, %c0_17] : memref<1x128xf32, #tpu.memory_space<vmem>>, vector<1x128xf32>
    %c0_18 = arith.constant 0 : index
    %c0_19 = arith.constant 0 : index
    %15 = vector.load %arg9[%c0_18, %c0_19] : memref<1x128xf32, #tpu.memory_space<vmem>>, vector<1x128xf32>
    %cst_20 = arith.constant 0.000000e+00 : bf16
    %16 = vector.broadcast %cst_20 : bf16 to vector<64x128xbf16>
    %c0_21 = arith.constant 0 : index
    %c0_22 = arith.constant 0 : index
    %17 = vector.load %arg13[%c0_21, %c0_22] : memref<512x128xbf16, #tpu.memory_space<vmem>>, vector<256x128xbf16>
    %cst_23 = arith.constant dense<0.000000e+00> : vector<1024x128xf32>
    %18 = tpu.matmul %10, %17, %cst_23 {dimension_numbers = #tpu.dot_dimension_numbers<[1], [0], [0], [1], [0, 0, 1, 1], [], []>} : vector<1024x256xbf16>, vector<256x128xbf16>, vector<1024x128xf32> -> vector<1024x128xf32>
    %19 = arith.truncf %18 : vector<1024x128xf32> to vector<1024x128xbf16>
    %c0_24 = arith.constant 0 : index
    %c0_25 = arith.constant 0 : index
    %20 = vector.load %arg14[%c0_24, %c0_25] : memref<1024x128xbf16, #tpu.memory_space<vmem>>, vector<1024x128xbf16>
    tpu.vector_store %arg14[%c0_24, %c0_25], %19 {strides = array<i32>} : memref<1024x128xbf16, #tpu.memory_space<vmem>>, vector<1024x128xbf16>,
    %c0_26 = arith.constant 0 : index
    %c0_27 = arith.constant 0 : index
    %21 = vector.load %arg14[%c0_26, %c0_27] : memref<1024x128xbf16, #tpu.memory_space<vmem>>, vector<64x128xbf16>
    %c0_28 = arith.constant 0 : index
    %c0_29 = arith.constant 0 : index
    %22 = vector.load %arg15[%c0_28, %c0_29] : memref<64x2048xbf16, #tpu.memory_space<vmem>>, vector<64x128xbf16>
    tpu.vector_store %arg15[%c0_28, %c0_29], %21 {strides = array<i32>} : memref<64x2048xbf16, #tpu.memory_space<vmem>>, vector<64x128xbf16>,
    %c64 = arith.constant 64 : index
    %c0_30 = arith.constant 0 : index
    %23 = vector.load %arg14[%c64, %c0_30] : memref<1024x128xbf16, #tpu.memory_space<vmem>>, vector<64x128xbf16>
    %c0_31 = arith.constant 0 : index
    %c128 = arith.constant 128 : index
    %24 = vector.load %arg15[%c0_31, %c128] : memref<64x2048xbf16, #tpu.memory_space<vmem>>, vector<64x128xbf16>
    tpu.vector_store %arg15[%c0_31, %c128], %23 {strides = array<i32>} : memref<64x2048xbf16, #tpu.memory_space<vmem>>, vector<64x128xbf16>,
    %c128_32 = arith.constant 128 : index
    %c0_33 = arith.constant 0 : index
    %25 = vector.load %arg14[%c128_32, %c0_33] : memref<1024x128xbf16, #tpu.memory_space<vmem>>, vector<64x128xbf16>
    %c0_34 = arith.constant 0 : index
    %c256 = arith.constant 256 : index
    %26 = vector.load %arg15[%c0_34, %c256] : memref<64x2048xbf16, #tpu.memory_space<vmem>>, vector<64x128xbf16>
    tpu.vector_store %arg15[%c0_34, %c256], %25 {strides = array<i32>} : memref<64x2048xbf16, #tpu.memory_space<vmem>>, vector<64x128xbf16>,
    %c192 = arith.constant 192 : index
    %c0_35 = arith.constant 0 : index
    %27 = vector.load %arg14[%c192, %c0_35] : memref<1024x128xbf16, #tpu.memory_space<vmem>>, vector<64x128xbf16>
    %c0_36 = arith.constant 0 : index
    %c384 = arith.constant 384 : index
    %28 = vector.load %arg15[%c0_36, %c384] : memref<64x2048xbf16, #tpu.memory_space<vmem>>, vector<64x128xbf16>
    tpu.vector_store %arg15[%c0_36, %c384], %27 {strides = array<i32>} : memref<64x2048xbf16, #tpu.memory_space<vmem>>, vector<64x128xbf16>,
    %c256_37 = arith.constant 256 : index
    %c0_38 = arith.constant 0 : index
    %29 = vector.load %arg14[%c256_37, %c0_38] : memref<1024x128xbf16, #tpu.memory_space<vmem>>, vector<64x128xbf16>
    %c0_39 = arith.constant 0 : index
    %c512 = arith.constant 512 : index
    %30 = vector.load %arg15[%c0_39, %c512] : memref<64x2048xbf16, #tpu.memory_space<vmem>>, vector<64x128xbf16>
    tpu.vector_store %arg15[%c0_39, %c512], %29 {strides = array<i32>} : memref<64x2048xbf16, #tpu.memory_space<vmem>>, vector<64x128xbf16>,
    %c320 = arith.constant 320 : index
    %c0_40 = arith.constant 0 : index
    %31 = vector.load %arg14[%c320, %c0_40] : memref<1024x128xbf16, #tpu.memory_space<vmem>>, vector<64x128xbf16>
    %c0_41 = arith.constant 0 : index
    %c640 = arith.constant 640 : index
    %32 = vector.load %arg15[%c0_41, %c640] : memref<64x2048xbf16, #tpu.memory_space<vmem>>, vector<64x128xbf16>
    tpu.vector_store %arg15[%c0_41, %c640], %31 {strides = array<i32>} : memref<64x2048xbf16, #tpu.memory_space<vmem>>, vector<64x128xbf16>,
    %c384_42 = arith.constant 384 : index
    %c0_43 = arith.constant 0 : index
    %33 = vector.load %arg14[%c384_42, %c0_43] : memref<1024x128xbf16, #tpu.memory_space<vmem>>, vector<64x128xbf16>
    %c0_44 = arith.constant 0 : index
    %c768 = arith.constant 768 : index
    %34 = vector.load %arg15[%c0_44, %c768] : memref<64x2048xbf16, #tpu.memory_space<vmem>>, vector<64x128xbf16>
    tpu.vector_store %arg15[%c0_44, %c768], %33 {strides = array<i32>} : memref<64x2048xbf16, #tpu.memory_space<vmem>>, vector<64x128xbf16>,
    %c448 = arith.constant 448 : index
    %c0_45 = arith.constant 0 : index
    %35 = vector.load %arg14[%c448, %c0_45] : memref<1024x128xbf16, #tpu.memory_space<vmem>>, vector<64x128xbf16>
    %c0_46 = arith.constant 0 : index
    %c896 = arith.constant 896 : index
    %36 = vector.load %arg15[%c0_46, %c896] : memref<64x2048xbf16, #tpu.memory_space<vmem>>, vector<64x128xbf16>
    tpu.vector_store %arg15[%c0_46, %c896], %35 {strides = array<i32>} : memref<64x2048xbf16, #tpu.memory_space<vmem>>, vector<64x128xbf16>,
    %c512_47 = arith.constant 512 : index
    %c0_48 = arith.constant 0 : index
    %37 = vector.load %arg14[%c512_47, %c0_48] : memref<1024x128xbf16, #tpu.memory_space<vmem>>, vector<64x128xbf16>
    %c0_49 = arith.constant 0 : index
    %c1024 = arith.constant 1024 : index
    %38 = vector.load %arg15[%c0_49, %c1024] : memref<64x2048xbf16, #tpu.memory_space<vmem>>, vector<64x128xbf16>
    tpu.vector_store %arg15[%c0_49, %c1024], %37 {strides = array<i32>} : memref<64x2048xbf16, #tpu.memory_space<vmem>>, vector<64x128xbf16>,
    %c576 = arith.constant 576 : index
    %c0_50 = arith.constant 0 : index
    %39 = vector.load %arg14[%c576, %c0_50] : memref<1024x128xbf16, #tpu.memory_space<vmem>>, vector<64x128xbf16>
    %c0_51 = arith.constant 0 : index
    %c1152 = arith.constant 1152 : index
    %40 = vector.load %arg15[%c0_51, %c1152] : memref<64x2048xbf16, #tpu.memory_space<vmem>>, vector<64x128xbf16>
    tpu.vector_store %arg15[%c0_51, %c1152], %39 {strides = array<i32>} : memref<64x2048xbf16, #tpu.memory_space<vmem>>, vector<64x128xbf16>,
    %c640_52 = arith.constant 640 : index
    %c0_53 = arith.constant 0 : index
    %41 = vector.load %arg14[%c640_52, %c0_53] : memref<1024x128xbf16, #tpu.memory_space<vmem>>, vector<64x128xbf16>
    %c0_54 = arith.constant 0 : index
    %c1280 = arith.constant 1280 : index
    %42 = vector.load %arg15[%c0_54, %c1280] : memref<64x2048xbf16, #tpu.memory_space<vmem>>, vector<64x128xbf16>
    tpu.vector_store %arg15[%c0_54, %c1280], %41 {strides = array<i32>} : memref<64x2048xbf16, #tpu.memory_space<vmem>>, vector<64x128xbf16>,
    %c704 = arith.constant 704 : index
    %c0_55 = arith.constant 0 : index
    %43 = vector.load %arg14[%c704, %c0_55] : memref<1024x128xbf16, #tpu.memory_space<vmem>>, vector<64x128xbf16>
    %c0_56 = arith.constant 0 : index
    %c1408 = arith.constant 1408 : index
    %44 = vector.load %arg15[%c0_56, %c1408] : memref<64x2048xbf16, #tpu.memory_space<vmem>>, vector<64x128xbf16>
    tpu.vector_store %arg15[%c0_56, %c1408], %43 {strides = array<i32>} : memref<64x2048xbf16, #tpu.memory_space<vmem>>, vector<64x128xbf16>,
    %c768_57 = arith.constant 768 : index
    %c0_58 = arith.constant 0 : index
    %45 = vector.load %arg14[%c768_57, %c0_58] : memref<1024x128xbf16, #tpu.memory_space<vmem>>, vector<64x128xbf16>
    %c0_59 = arith.constant 0 : index
    %c1536 = arith.constant 1536 : index
    %46 = vector.load %arg15[%c0_59, %c1536] : memref<64x2048xbf16, #tpu.memory_space<vmem>>, vector<64x128xbf16>
    tpu.vector_store %arg15[%c0_59, %c1536], %45 {strides = array<i32>} : memref<64x2048xbf16, #tpu.memory_space<vmem>>, vector<64x128xbf16>,
    %c832 = arith.constant 832 : index
    %c0_60 = arith.constant 0 : index
    %47 = vector.load %arg14[%c832, %c0_60] : memref<1024x128xbf16, #tpu.memory_space<vmem>>, vector<64x128xbf16>
    %c0_61 = arith.constant 0 : index
    %c1664 = arith.constant 1664 : index
    %48 = vector.load %arg15[%c0_61, %c1664] : memref<64x2048xbf16, #tpu.memory_space<vmem>>, vector<64x128xbf16>
    tpu.vector_store %arg15[%c0_61, %c1664], %47 {strides = array<i32>} : memref<64x2048xbf16, #tpu.memory_space<vmem>>, vector<64x128xbf16>,
    %c896_62 = arith.constant 896 : index
    %c0_63 = arith.constant 0 : index
    %49 = vector.load %arg14[%c896_62, %c0_63] : memref<1024x128xbf16, #tpu.memory_space<vmem>>, vector<64x128xbf16>
    %c0_64 = arith.constant 0 : index
    %c1792 = arith.constant 1792 : index
    %50 = vector.load %arg15[%c0_64, %c1792] : memref<64x2048xbf16, #tpu.memory_space<vmem>>, vector<64x128xbf16>
    tpu.vector_store %arg15[%c0_64, %c1792], %49 {strides = array<i32>} : memref<64x2048xbf16, #tpu.memory_space<vmem>>, vector<64x128xbf16>,
    %c960 = arith.constant 960 : index
    %c0_65 = arith.constant 0 : index
    %51 = vector.load %arg14[%c960, %c0_65] : memref<1024x128xbf16, #tpu.memory_space<vmem>>, vector<64x128xbf16>
    %c0_66 = arith.constant 0 : index
    %c1920 = arith.constant 1920 : index
    %52 = vector.load %arg15[%c0_66, %c1920] : memref<64x2048xbf16, #tpu.memory_space<vmem>>, vector<64x128xbf16>
    tpu.vector_store %arg15[%c0_66, %c1920], %51 {strides = array<i32>} : memref<64x2048xbf16, #tpu.memory_space<vmem>>, vector<64x128xbf16>,
    %c0_67 = arith.constant 0 : index
    %c0_68 = arith.constant 0 : index
    %53 = vector.load %arg15[%c0_67, %c0_68] : memref<64x2048xbf16, #tpu.memory_space<vmem>>, vector<64x2048xbf16>
    %cst_69 = arith.constant dense<0.000000e+00> : vector<64x128xf32>
    %54 = tpu.matmul %53, %11, %cst_69 {dimension_numbers = #tpu.dot_dimension_numbers<[1], [0], [0], [1], [0, 0, 1, 1], [], []>} : vector<64x2048xbf16>, vector<2048x128xbf16>, vector<64x128xf32> -> vector<64x128xf32>
    %55 = vector.broadcast %14 : vector<1x128xf32> to vector<64x128xf32>
    %56 = arith.addf %54, %55 : vector<64x128xf32>
    %cst_70 = arith.constant 0.000000e+00 : f32
    %57 = vector.broadcast %cst_70 : f32 to vector<64x128xf32>
    %58 = arith.maximumf %56, %57 : vector<64x128xf32>
    %59 = arith.truncf %58 : vector<64x128xf32> to vector<64x128xbf16>
    %60 = tpu.concatenate %59, %16 in 0 : vector<64x128xbf16>, vector<64x128xbf16> -> vector<128x128xbf16>
    %cst_71 = arith.constant dense<0.000000e+00> : vector<256x128xf32>
    %61 = tpu.matmul %12, %60, %cst_71 {dimension_numbers = #tpu.dot_dimension_numbers<[1], [0], [0], [1], [0, 0, 1, 1], [], []>} : vector<256x128xbf16>, vector<128x128xbf16>, vector<256x128xf32> -> vector<256x128xf32>
    %62 = arith.truncf %61 : vector<256x128xf32> to vector<256x128xbf16>
    %c0_72 = arith.constant 0 : index
    %c0_73 = arith.constant 0 : index
    %63 = vector.load %arg14[%c0_72, %c0_73] : memref<1024x128xbf16, #tpu.memory_space<vmem>>, vector<256x128xbf16>
    tpu.vector_store %arg14[%c0_72, %c0_73], %62 {strides = array<i32>} : memref<1024x128xbf16, #tpu.memory_space<vmem>>, vector<256x128xbf16>,
    %c0_74 = arith.constant 0 : index
    %c0_75 = arith.constant 0 : index
    %64 = vector.load %arg14[%c0_74, %c0_75] : memref<1024x128xbf16, #tpu.memory_space<vmem>>, vector<16x128xbf16>
    %c0_76 = arith.constant 0 : index
    %c0_77 = arith.constant 0 : index
    %65 = vector.load %arg15[%c0_76, %c0_77] : memref<64x2048xbf16, #tpu.memory_space<vmem>>, vector<16x128xbf16>
    tpu.vector_store %arg15[%c0_76, %c0_77], %64 {strides = array<i32>} : memref<64x2048xbf16, #tpu.memory_space<vmem>>, vector<16x128xbf16>,
    %c16 = arith.constant 16 : index
    %c0_78 = arith.constant 0 : index
    %66 = vector.load %arg14[%c16, %c0_78] : memref<1024x128xbf16, #tpu.memory_space<vmem>>, vector<16x128xbf16>
    %c0_79 = arith.constant 0 : index
    %c128_80 = arith.constant 128 : index
    %67 = vector.load %arg15[%c0_79, %c128_80] : memref<64x2048xbf16, #tpu.memory_space<vmem>>, vector<16x128xbf16>
    tpu.vector_store %arg15[%c0_79, %c128_80], %66 {strides = array<i32>} : memref<64x2048xbf16, #tpu.memory_space<vmem>>, vector<16x128xbf16>,
    %c32 = arith.constant 32 : index
    %c0_81 = arith.constant 0 : index
    %68 = vector.load %arg14[%c32, %c0_81] : memref<1024x128xbf16, #tpu.memory_space<vmem>>, vector<16x128xbf16>
    %c0_82 = arith.constant 0 : index
    %c256_83 = arith.constant 256 : index
    %69 = vector.load %arg15[%c0_82, %c256_83] : memref<64x2048xbf16, #tpu.memory_space<vmem>>, vector<16x128xbf16>
    tpu.vector_store %arg15[%c0_82, %c256_83], %68 {strides = array<i32>} : memref<64x2048xbf16, #tpu.memory_space<vmem>>, vector<16x128xbf16>,
    %c48 = arith.constant 48 : index
    %c0_84 = arith.constant 0 : index
    %70 = vector.load %arg14[%c48, %c0_84] : memref<1024x128xbf16, #tpu.memory_space<vmem>>, vector<16x128xbf16>
    %c0_85 = arith.constant 0 : index
    %c384_86 = arith.constant 384 : index
    %71 = vector.load %arg15[%c0_85, %c384_86] : memref<64x2048xbf16, #tpu.memory_space<vmem>>, vector<16x128xbf16>
    tpu.vector_store %arg15[%c0_85, %c384_86], %70 {strides = array<i32>} : memref<64x2048xbf16, #tpu.memory_space<vmem>>, vector<16x128xbf16>,
    %c64_87 = arith.constant 64 : index
    %c0_88 = arith.constant 0 : index
    %72 = vector.load %arg14[%c64_87, %c0_88] : memref<1024x128xbf16, #tpu.memory_space<vmem>>, vector<16x128xbf16>
    %c0_89 = arith.constant 0 : index
    %c512_90 = arith.constant 512 : index
    %73 = vector.load %arg15[%c0_89, %c512_90] : memref<64x2048xbf16, #tpu.memory_space<vmem>>, vector<16x128xbf16>
    tpu.vector_store %arg15[%c0_89, %c512_90], %72 {strides = array<i32>} : memref<64x2048xbf16, #tpu.memory_space<vmem>>, vector<16x128xbf16>,
    %c80 = arith.constant 80 : index
    %c0_91 = arith.constant 0 : index
    %74 = vector.load %arg14[%c80, %c0_91] : memref<1024x128xbf16, #tpu.memory_space<vmem>>, vector<16x128xbf16>
    %c0_92 = arith.constant 0 : index
    %c640_93 = arith.constant 640 : index
    %75 = vector.load %arg15[%c0_92, %c640_93] : memref<64x2048xbf16, #tpu.memory_space<vmem>>, vector<16x128xbf16>
    tpu.vector_store %arg15[%c0_92, %c640_93], %74 {strides = array<i32>} : memref<64x2048xbf16, #tpu.memory_space<vmem>>, vector<16x128xbf16>,
    %c96 = arith.constant 96 : index
    %c0_94 = arith.constant 0 : index
    %76 = vector.load %arg14[%c96, %c0_94] : memref<1024x128xbf16, #tpu.memory_space<vmem>>, vector<16x128xbf16>
    %c0_95 = arith.constant 0 : index
    %c768_96 = arith.constant 768 : index
    %77 = vector.load %arg15[%c0_95, %c768_96] : memref<64x2048xbf16, #tpu.memory_space<vmem>>, vector<16x128xbf16>
    tpu.vector_store %arg15[%c0_95, %c768_96], %76 {strides = array<i32>} : memref<64x2048xbf16, #tpu.memory_space<vmem>>, vector<16x128xbf16>,
    %c112 = arith.constant 112 : index
    %c0_97 = arith.constant 0 : index
    %78 = vector.load %arg14[%c112, %c0_97] : memref<1024x128xbf16, #tpu.memory_space<vmem>>, vector<16x128xbf16>
    %c0_98 = arith.constant 0 : index
    %c896_99 = arith.constant 896 : index
    %79 = vector.load %arg15[%c0_98, %c896_99] : memref<64x2048xbf16, #tpu.memory_space<vmem>>, vector<16x128xbf16>
    tpu.vector_store %arg15[%c0_98, %c896_99], %78 {strides = array<i32>} : memref<64x2048xbf16, #tpu.memory_space<vmem>>, vector<16x128xbf16>,
    %c128_100 = arith.constant 128 : index
    %c0_101 = arith.constant 0 : index
    %80 = vector.load %arg14[%c128_100, %c0_101] : memref<1024x128xbf16, #tpu.memory_space<vmem>>, vector<16x128xbf16>
    %c0_102 = arith.constant 0 : index
    %c1024_103 = arith.constant 1024 : index
    %81 = vector.load %arg15[%c0_102, %c1024_103] : memref<64x2048xbf16, #tpu.memory_space<vmem>>, vector<16x128xbf16>
    tpu.vector_store %arg15[%c0_102, %c1024_103], %80 {strides = array<i32>} : memref<64x2048xbf16, #tpu.memory_space<vmem>>, vector<16x128xbf16>,
    %c144 = arith.constant 144 : index
    %c0_104 = arith.constant 0 : index
    %82 = vector.load %arg14[%c144, %c0_104] : memref<1024x128xbf16, #tpu.memory_space<vmem>>, vector<16x128xbf16>
    %c0_105 = arith.constant 0 : index
    %c1152_106 = arith.constant 1152 : index
    %83 = vector.load %arg15[%c0_105, %c1152_106] : memref<64x2048xbf16, #tpu.memory_space<vmem>>, vector<16x128xbf16>
    tpu.vector_store %arg15[%c0_105, %c1152_106], %82 {strides = array<i32>} : memref<64x2048xbf16, #tpu.memory_space<vmem>>, vector<16x128xbf16>,
    %c160 = arith.constant 160 : index
    %c0_107 = arith.constant 0 : index
    %84 = vector.load %arg14[%c160, %c0_107] : memref<1024x128xbf16, #tpu.memory_space<vmem>>, vector<16x128xbf16>
    %c0_108 = arith.constant 0 : index
    %c1280_109 = arith.constant 1280 : index
    %85 = vector.load %arg15[%c0_108, %c1280_109] : memref<64x2048xbf16, #tpu.memory_space<vmem>>, vector<16x128xbf16>
    tpu.vector_store %arg15[%c0_108, %c1280_109], %84 {strides = array<i32>} : memref<64x2048xbf16, #tpu.memory_space<vmem>>, vector<16x128xbf16>,
    %c176 = arith.constant 176 : index
    %c0_110 = arith.constant 0 : index
    %86 = vector.load %arg14[%c176, %c0_110] : memref<1024x128xbf16, #tpu.memory_space<vmem>>, vector<16x128xbf16>
    %c0_111 = arith.constant 0 : index
    %c1408_112 = arith.constant 1408 : index
    %87 = vector.load %arg15[%c0_111, %c1408_112] : memref<64x2048xbf16, #tpu.memory_space<vmem>>, vector<16x128xbf16>
    tpu.vector_store %arg15[%c0_111, %c1408_112], %86 {strides = array<i32>} : memref<64x2048xbf16, #tpu.memory_space<vmem>>, vector<16x128xbf16>,
    %c192_113 = arith.constant 192 : index
    %c0_114 = arith.constant 0 : index
    %88 = vector.load %arg14[%c192_113, %c0_114] : memref<1024x128xbf16, #tpu.memory_space<vmem>>, vector<16x128xbf16>
    %c0_115 = arith.constant 0 : index
    %c1536_116 = arith.constant 1536 : index
    %89 = vector.load %arg15[%c0_115, %c1536_116] : memref<64x2048xbf16, #tpu.memory_space<vmem>>, vector<16x128xbf16>
    tpu.vector_store %arg15[%c0_115, %c1536_116], %88 {strides = array<i32>} : memref<64x2048xbf16, #tpu.memory_space<vmem>>, vector<16x128xbf16>,
    %c208 = arith.constant 208 : index
    %c0_117 = arith.constant 0 : index
    %90 = vector.load %arg14[%c208, %c0_117] : memref<1024x128xbf16, #tpu.memory_space<vmem>>, vector<16x128xbf16>
    %c0_118 = arith.constant 0 : index
    %c1664_119 = arith.constant 1664 : index
    %91 = vector.load %arg15[%c0_118, %c1664_119] : memref<64x2048xbf16, #tpu.memory_space<vmem>>, vector<16x128xbf16>
    tpu.vector_store %arg15[%c0_118, %c1664_119], %90 {strides = array<i32>} : memref<64x2048xbf16, #tpu.memory_space<vmem>>, vector<16x128xbf16>,
    %c224 = arith.constant 224 : index
    %c0_120 = arith.constant 0 : index
    %92 = vector.load %arg14[%c224, %c0_120] : memref<1024x128xbf16, #tpu.memory_space<vmem>>, vector<16x128xbf16>
    %c0_121 = arith.constant 0 : index
    %c1792_122 = arith.constant 1792 : index
    %93 = vector.load %arg15[%c0_121, %c1792_122] : memref<64x2048xbf16, #tpu.memory_space<vmem>>, vector<16x128xbf16>
    tpu.vector_store %arg15[%c0_121, %c1792_122], %92 {strides = array<i32>} : memref<64x2048xbf16, #tpu.memory_space<vmem>>, vector<16x128xbf16>,
    %c240 = arith.constant 240 : index
    %c0_123 = arith.constant 0 : index
    %94 = vector.load %arg14[%c240, %c0_123] : memref<1024x128xbf16, #tpu.memory_space<vmem>>, vector<16x128xbf16>
    %c0_124 = arith.constant 0 : index
    %c1920_125 = arith.constant 1920 : index
    %95 = vector.load %arg15[%c0_124, %c1920_125] : memref<64x2048xbf16, #tpu.memory_space<vmem>>, vector<16x128xbf16>
    tpu.vector_store %arg15[%c0_124, %c1920_125], %94 {strides = array<i32>} : memref<64x2048xbf16, #tpu.memory_space<vmem>>, vector<16x128xbf16>,
    %c0_126 = arith.constant 0 : index
    %c0_127 = arith.constant 0 : index
    %96 = vector.load %arg15[%c0_126, %c0_127] : memref<64x2048xbf16, #tpu.memory_space<vmem>>, vector<16x2048xbf16>
    %cst_128 = arith.constant dense<0.000000e+00> : vector<16x128xf32>
    %97 = tpu.matmul %96, %13, %cst_128 {dimension_numbers = #tpu.dot_dimension_numbers<[1], [0], [0], [1], [0, 0, 1, 1], [], []>} : vector<16x2048xbf16>, vector<2048x128xbf16>, vector<16x128xf32> -> vector<16x128xf32>
    %98 = vector.broadcast %15 : vector<1x128xf32> to vector<16x128xf32>
    %99 = arith.addf %97, %98 : vector<16x128xf32>
    %cst_129 = arith.constant 0.000000e+00 : f32
    %100 = vector.broadcast %cst_129 : f32 to vector<16x128xf32>
    %101 = arith.maximumf %99, %100 : vector<16x128xf32>
    %102 = arith.truncf %101 : vector<16x128xf32> to vector<16x128xbf16>
    %103 = vector.extract_strided_slice %102 {offsets = [0, 0], sizes = [1, 128], strides = [1, 1]} : vector<16x128xbf16> to vector<1x128xbf16>
    %c0_130 = arith.constant 0 : index
    %c0_131 = arith.constant 0 : index
    %104 = vector.load %arg16[%c0_130, %c0_131] : memref<2x2048xbf16, #tpu.memory_space<vmem>>, vector<1x128xbf16>
    tpu.vector_store %arg16[%c0_130, %c0_131], %103 {strides = array<i32>} : memref<2x2048xbf16, #tpu.memory_space<vmem>>, vector<1x128xbf16>,
    %105 = vector.extract_strided_slice %102 {offsets = [1, 0], sizes = [1, 128], strides = [1, 1]} : vector<16x128xbf16> to vector<1x128xbf16>
    %c0_132 = arith.constant 0 : index
    %c128_133 = arith.constant 128 : index
    %106 = vector.load %arg16[%c0_132, %c128_133] : memref<2x2048xbf16, #tpu.memory_space<vmem>>, vector<1x128xbf16>
    tpu.vector_store %arg16[%c0_132, %c128_133], %105 {strides = array<i32>} : memref<2x2048xbf16, #tpu.memory_space<vmem>>, vector<1x128xbf16>,
    %107 = vector.extract_strided_slice %102 {offsets = [2, 0], sizes = [1, 128], strides = [1, 1]} : vector<16x128xbf16> to vector<1x128xbf16>
    %c0_134 = arith.constant 0 : index
    %c256_135 = arith.constant 256 : index
    %108 = vector.load %arg16[%c0_134, %c256_135] : memref<2x2048xbf16, #tpu.memory_space<vmem>>, vector<1x128xbf16>
    tpu.vector_store %arg16[%c0_134, %c256_135], %107 {strides = array<i32>} : memref<2x2048xbf16, #tpu.memory_space<vmem>>, vector<1x128xbf16>,
    %109 = vector.extract_strided_slice %102 {offsets = [3, 0], sizes = [1, 128], strides = [1, 1]} : vector<16x128xbf16> to vector<1x128xbf16>
    %c0_136 = arith.constant 0 : index
    %c384_137 = arith.constant 384 : index
    %110 = vector.load %arg16[%c0_136, %c384_137] : memref<2x2048xbf16, #tpu.memory_space<vmem>>, vector<1x128xbf16>
    tpu.vector_store %arg16[%c0_136, %c384_137], %109 {strides = array<i32>} : memref<2x2048xbf16, #tpu.memory_space<vmem>>, vector<1x128xbf16>,
    %111 = vector.extract_strided_slice %102 {offsets = [4, 0], sizes = [1, 128], strides = [1, 1]} : vector<16x128xbf16> to vector<1x128xbf16>
    %c0_138 = arith.constant 0 : index
    %c512_139 = arith.constant 512 : index
    %112 = vector.load %arg16[%c0_138, %c512_139] : memref<2x2048xbf16, #tpu.memory_space<vmem>>, vector<1x128xbf16>
    tpu.vector_store %arg16[%c0_138, %c512_139], %111 {strides = array<i32>} : memref<2x2048xbf16, #tpu.memory_space<vmem>>, vector<1x128xbf16>,
    %113 = vector.extract_strided_slice %102 {offsets = [5, 0], sizes = [1, 128], strides = [1, 1]} : vector<16x128xbf16> to vector<1x128xbf16>
    %c0_140 = arith.constant 0 : index
    %c640_141 = arith.constant 640 : index
    %114 = vector.load %arg16[%c0_140, %c640_141] : memref<2x2048xbf16, #tpu.memory_space<vmem>>, vector<1x128xbf16>
    tpu.vector_store %arg16[%c0_140, %c640_141], %113 {strides = array<i32>} : memref<2x2048xbf16, #tpu.memory_space<vmem>>, vector<1x128xbf16>,
    %115 = vector.extract_strided_slice %102 {offsets = [6, 0], sizes = [1, 128], strides = [1, 1]} : vector<16x128xbf16> to vector<1x128xbf16>
    %c0_142 = arith.constant 0 : index
    %c768_143 = arith.constant 768 : index
    %116 = vector.load %arg16[%c0_142, %c768_143] : memref<2x2048xbf16, #tpu.memory_space<vmem>>, vector<1x128xbf16>
    tpu.vector_store %arg16[%c0_142, %c768_143], %115 {strides = array<i32>} : memref<2x2048xbf16, #tpu.memory_space<vmem>>, vector<1x128xbf16>,
    %117 = vector.extract_strided_slice %102 {offsets = [7, 0], sizes = [1, 128], strides = [1, 1]} : vector<16x128xbf16> to vector<1x128xbf16>
    %c0_144 = arith.constant 0 : index
    %c896_145 = arith.constant 896 : index
    %118 = vector.load %arg16[%c0_144, %c896_145] : memref<2x2048xbf16, #tpu.memory_space<vmem>>, vector<1x128xbf16>
    tpu.vector_store %arg16[%c0_144, %c896_145], %117 {strides = array<i32>} : memref<2x2048xbf16, #tpu.memory_space<vmem>>, vector<1x128xbf16>,
    %119 = vector.extract_strided_slice %102 {offsets = [8, 0], sizes = [1, 128], strides = [1, 1]} : vector<16x128xbf16> to vector<1x128xbf16>
    %c0_146 = arith.constant 0 : index
    %c1024_147 = arith.constant 1024 : index
    %120 = vector.load %arg16[%c0_146, %c1024_147] : memref<2x2048xbf16, #tpu.memory_space<vmem>>, vector<1x128xbf16>
    tpu.vector_store %arg16[%c0_146, %c1024_147], %119 {strides = array<i32>} : memref<2x2048xbf16, #tpu.memory_space<vmem>>, vector<1x128xbf16>,
    %121 = vector.extract_strided_slice %102 {offsets = [9, 0], sizes = [1, 128], strides = [1, 1]} : vector<16x128xbf16> to vector<1x128xbf16>
    %c0_148 = arith.constant 0 : index
    %c1152_149 = arith.constant 1152 : index
    %122 = vector.load %arg16[%c0_148, %c1152_149] : memref<2x2048xbf16, #tpu.memory_space<vmem>>, vector<1x128xbf16>
    tpu.vector_store %arg16[%c0_148, %c1152_149], %121 {strides = array<i32>} : memref<2x2048xbf16, #tpu.memory_space<vmem>>, vector<1x128xbf16>,
    %123 = vector.extract_strided_slice %102 {offsets = [10, 0], sizes = [1, 128], strides = [1, 1]} : vector<16x128xbf16> to vector<1x128xbf16>
    %c0_150 = arith.constant 0 : index
    %c1280_151 = arith.constant 1280 : index
    %124 = vector.load %arg16[%c0_150, %c1280_151] : memref<2x2048xbf16, #tpu.memory_space<vmem>>, vector<1x128xbf16>
    tpu.vector_store %arg16[%c0_150, %c1280_151], %123 {strides = array<i32>} : memref<2x2048xbf16, #tpu.memory_space<vmem>>, vector<1x128xbf16>,
    %125 = vector.extract_strided_slice %102 {offsets = [11, 0], sizes = [1, 128], strides = [1, 1]} : vector<16x128xbf16> to vector<1x128xbf16>
    %c0_152 = arith.constant 0 : index
    %c1408_153 = arith.constant 1408 : index
    %126 = vector.load %arg16[%c0_152, %c1408_153] : memref<2x2048xbf16, #tpu.memory_space<vmem>>, vector<1x128xbf16>
    tpu.vector_store %arg16[%c0_152, %c1408_153], %125 {strides = array<i32>} : memref<2x2048xbf16, #tpu.memory_space<vmem>>, vector<1x128xbf16>,
    %127 = vector.extract_strided_slice %102 {offsets = [12, 0], sizes = [1, 128], strides = [1, 1]} : vector<16x128xbf16> to vector<1x128xbf16>
    %c0_154 = arith.constant 0 : index
    %c1536_155 = arith.constant 1536 : index
    %128 = vector.load %arg16[%c0_154, %c1536_155] : memref<2x2048xbf16, #tpu.memory_space<vmem>>, vector<1x128xbf16>
    tpu.vector_store %arg16[%c0_154, %c1536_155], %127 {strides = array<i32>} : memref<2x2048xbf16, #tpu.memory_space<vmem>>, vector<1x128xbf16>,
    %129 = vector.extract_strided_slice %102 {offsets = [13, 0], sizes = [1, 128], strides = [1, 1]} : vector<16x128xbf16> to vector<1x128xbf16>
    %c0_156 = arith.constant 0 : index
    %c1664_157 = arith.constant 1664 : index
    %130 = vector.load %arg16[%c0_156, %c1664_157] : memref<2x2048xbf16, #tpu.memory_space<vmem>>, vector<1x128xbf16>
    tpu.vector_store %arg16[%c0_156, %c1664_157], %129 {strides = array<i32>} : memref<2x2048xbf16, #tpu.memory_space<vmem>>, vector<1x128xbf16>,
    %131 = vector.extract_strided_slice %102 {offsets = [14, 0], sizes = [1, 128], strides = [1, 1]} : vector<16x128xbf16> to vector<1x128xbf16>
    %c0_158 = arith.constant 0 : index
    %c1792_159 = arith.constant 1792 : index
    %132 = vector.load %arg16[%c0_158, %c1792_159] : memref<2x2048xbf16, #tpu.memory_space<vmem>>, vector<1x128xbf16>
    tpu.vector_store %arg16[%c0_158, %c1792_159], %131 {strides = array<i32>} : memref<2x2048xbf16, #tpu.memory_space<vmem>>, vector<1x128xbf16>,
    %133 = vector.extract_strided_slice %102 {offsets = [15, 0], sizes = [1, 128], strides = [1, 1]} : vector<16x128xbf16> to vector<1x128xbf16>
    %c0_160 = arith.constant 0 : index
    %c1920_161 = arith.constant 1920 : index
    %134 = vector.load %arg16[%c0_160, %c1920_161] : memref<2x2048xbf16, #tpu.memory_space<vmem>>, vector<1x128xbf16>
    tpu.vector_store %arg16[%c0_160, %c1920_161], %133 {strides = array<i32>} : memref<2x2048xbf16, #tpu.memory_space<vmem>>, vector<1x128xbf16>,
    %c256_162 = arith.constant 256 : index
    %c0_163 = arith.constant 0 : index
    %135 = vector.load %arg13[%c256_162, %c0_163] : memref<512x128xbf16, #tpu.memory_space<vmem>>, vector<256x128xbf16>
    %cst_164 = arith.constant dense<0.000000e+00> : vector<1024x128xf32>
    %136 = tpu.matmul %10, %135, %cst_164 {dimension_numbers = #tpu.dot_dimension_numbers<[1], [0], [0], [1], [0, 0, 1, 1], [], []>} : vector<1024x256xbf16>, vector<256x128xbf16>, vector<1024x128xf32> -> vector<1024x128xf32>
    %137 = arith.truncf %136 : vector<1024x128xf32> to vector<1024x128xbf16>
    %c0_165 = arith.constant 0 : index
    %c0_166 = arith.constant 0 : index
    %138 = vector.load %arg14[%c0_165, %c0_166] : memref<1024x128xbf16, #tpu.memory_space<vmem>>, vector<1024x128xbf16>
    tpu.vector_store %arg14[%c0_165, %c0_166], %137 {strides = array<i32>} : memref<1024x128xbf16, #tpu.memory_space<vmem>>, vector<1024x128xbf16>,
    %c0_167 = arith.constant 0 : index
    %c0_168 = arith.constant 0 : index
    %139 = vector.load %arg14[%c0_167, %c0_168] : memref<1024x128xbf16, #tpu.memory_space<vmem>>, vector<64x128xbf16>
    %c0_169 = arith.constant 0 : index
    %c0_170 = arith.constant 0 : index
    %140 = vector.load %arg15[%c0_169, %c0_170] : memref<64x2048xbf16, #tpu.memory_space<vmem>>, vector<64x128xbf16>
    tpu.vector_store %arg15[%c0_169, %c0_170], %139 {strides = array<i32>} : memref<64x2048xbf16, #tpu.memory_space<vmem>>, vector<64x128xbf16>,
    %c64_171 = arith.constant 64 : index
    %c0_172 = arith.constant 0 : index
    %141 = vector.load %arg14[%c64_171, %c0_172] : memref<1024x128xbf16, #tpu.memory_space<vmem>>, vector<64x128xbf16>
    %c0_173 = arith.constant 0 : index
    %c128_174 = arith.constant 128 : index
    %142 = vector.load %arg15[%c0_173, %c128_174] : memref<64x2048xbf16, #tpu.memory_space<vmem>>, vector<64x128xbf16>
    tpu.vector_store %arg15[%c0_173, %c128_174], %141 {strides = array<i32>} : memref<64x2048xbf16, #tpu.memory_space<vmem>>, vector<64x128xbf16>,
    %c128_175 = arith.constant 128 : index
    %c0_176 = arith.constant 0 : index
    %143 = vector.load %arg14[%c128_175, %c0_176] : memref<1024x128xbf16, #tpu.memory_space<vmem>>, vector<64x128xbf16>
    %c0_177 = arith.constant 0 : index
    %c256_178 = arith.constant 256 : index
    %144 = vector.load %arg15[%c0_177, %c256_178] : memref<64x2048xbf16, #tpu.memory_space<vmem>>, vector<64x128xbf16>
    tpu.vector_store %arg15[%c0_177, %c256_178], %143 {strides = array<i32>} : memref<64x2048xbf16, #tpu.memory_space<vmem>>, vector<64x128xbf16>,
    %c192_179 = arith.constant 192 : index
    %c0_180 = arith.constant 0 : index
    %145 = vector.load %arg14[%c192_179, %c0_180] : memref<1024x128xbf16, #tpu.memory_space<vmem>>, vector<64x128xbf16>
    %c0_181 = arith.constant 0 : index
    %c384_182 = arith.constant 384 : index
    %146 = vector.load %arg15[%c0_181, %c384_182] : memref<64x2048xbf16, #tpu.memory_space<vmem>>, vector<64x128xbf16>
    tpu.vector_store %arg15[%c0_181, %c384_182], %145 {strides = array<i32>} : memref<64x2048xbf16, #tpu.memory_space<vmem>>, vector<64x128xbf16>,
    %c256_183 = arith.constant 256 : index
    %c0_184 = arith.constant 0 : index
    %147 = vector.load %arg14[%c256_183, %c0_184] : memref<1024x128xbf16, #tpu.memory_space<vmem>>, vector<64x128xbf16>
    %c0_185 = arith.constant 0 : index
    %c512_186 = arith.constant 512 : index
    %148 = vector.load %arg15[%c0_185, %c512_186] : memref<64x2048xbf16, #tpu.memory_space<vmem>>, vector<64x128xbf16>
    tpu.vector_store %arg15[%c0_185, %c512_186], %147 {strides = array<i32>} : memref<64x2048xbf16, #tpu.memory_space<vmem>>, vector<64x128xbf16>,
    %c320_187 = arith.constant 320 : index
    %c0_188 = arith.constant 0 : index
    %149 = vector.load %arg14[%c320_187, %c0_188] : memref<1024x128xbf16, #tpu.memory_space<vmem>>, vector<64x128xbf16>
    %c0_189 = arith.constant 0 : index
    %c640_190 = arith.constant 640 : index
    %150 = vector.load %arg15[%c0_189, %c640_190] : memref<64x2048xbf16, #tpu.memory_space<vmem>>, vector<64x128xbf16>
    tpu.vector_store %arg15[%c0_189, %c640_190], %149 {strides = array<i32>} : memref<64x2048xbf16, #tpu.memory_space<vmem>>, vector<64x128xbf16>,
    %c384_191 = arith.constant 384 : index
    %c0_192 = arith.constant 0 : index
    %151 = vector.load %arg14[%c384_191, %c0_192] : memref<1024x128xbf16, #tpu.memory_space<vmem>>, vector<64x128xbf16>
    %c0_193 = arith.constant 0 : index
    %c768_194 = arith.constant 768 : index
    %152 = vector.load %arg15[%c0_193, %c768_194] : memref<64x2048xbf16, #tpu.memory_space<vmem>>, vector<64x128xbf16>
    tpu.vector_store %arg15[%c0_193, %c768_194], %151 {strides = array<i32>} : memref<64x2048xbf16, #tpu.memory_space<vmem>>, vector<64x128xbf16>,
    %c448_195 = arith.constant 448 : index
    %c0_196 = arith.constant 0 : index
    %153 = vector.load %arg14[%c448_195, %c0_196] : memref<1024x128xbf16, #tpu.memory_space<vmem>>, vector<64x128xbf16>
    %c0_197 = arith.constant 0 : index
    %c896_198 = arith.constant 896 : index
    %154 = vector.load %arg15[%c0_197, %c896_198] : memref<64x2048xbf16, #tpu.memory_space<vmem>>, vector<64x128xbf16>
    tpu.vector_store %arg15[%c0_197, %c896_198], %153 {strides = array<i32>} : memref<64x2048xbf16, #tpu.memory_space<vmem>>, vector<64x128xbf16>,
    %c512_199 = arith.constant 512 : index
    %c0_200 = arith.constant 0 : index
    %155 = vector.load %arg14[%c512_199, %c0_200] : memref<1024x128xbf16, #tpu.memory_space<vmem>>, vector<64x128xbf16>
    %c0_201 = arith.constant 0 : index
    %c1024_202 = arith.constant 1024 : index
    %156 = vector.load %arg15[%c0_201, %c1024_202] : memref<64x2048xbf16, #tpu.memory_space<vmem>>, vector<64x128xbf16>
    tpu.vector_store %arg15[%c0_201, %c1024_202], %155 {strides = array<i32>} : memref<64x2048xbf16, #tpu.memory_space<vmem>>, vector<64x128xbf16>,
    %c576_203 = arith.constant 576 : index
    %c0_204 = arith.constant 0 : index
    %157 = vector.load %arg14[%c576_203, %c0_204] : memref<1024x128xbf16, #tpu.memory_space<vmem>>, vector<64x128xbf16>
    %c0_205 = arith.constant 0 : index
    %c1152_206 = arith.constant 1152 : index
    %158 = vector.load %arg15[%c0_205, %c1152_206] : memref<64x2048xbf16, #tpu.memory_space<vmem>>, vector<64x128xbf16>
    tpu.vector_store %arg15[%c0_205, %c1152_206], %157 {strides = array<i32>} : memref<64x2048xbf16, #tpu.memory_space<vmem>>, vector<64x128xbf16>,
    %c640_207 = arith.constant 640 : index
    %c0_208 = arith.constant 0 : index
    %159 = vector.load %arg14[%c640_207, %c0_208] : memref<1024x128xbf16, #tpu.memory_space<vmem>>, vector<64x128xbf16>
    %c0_209 = arith.constant 0 : index
    %c1280_210 = arith.constant 1280 : index
    %160 = vector.load %arg15[%c0_209, %c1280_210] : memref<64x2048xbf16, #tpu.memory_space<vmem>>, vector<64x128xbf16>
    tpu.vector_store %arg15[%c0_209, %c1280_210], %159 {strides = array<i32>} : memref<64x2048xbf16, #tpu.memory_space<vmem>>, vector<64x128xbf16>,
    %c704_211 = arith.constant 704 : index
    %c0_212 = arith.constant 0 : index
    %161 = vector.load %arg14[%c704_211, %c0_212] : memref<1024x128xbf16, #tpu.memory_space<vmem>>, vector<64x128xbf16>
    %c0_213 = arith.constant 0 : index
    %c1408_214 = arith.constant 1408 : index
    %162 = vector.load %arg15[%c0_213, %c1408_214] : memref<64x2048xbf16, #tpu.memory_space<vmem>>, vector<64x128xbf16>
    tpu.vector_store %arg15[%c0_213, %c1408_214], %161 {strides = array<i32>} : memref<64x2048xbf16, #tpu.memory_space<vmem>>, vector<64x128xbf16>,
    %c768_215 = arith.constant 768 : index
    %c0_216 = arith.constant 0 : index
    %163 = vector.load %arg14[%c768_215, %c0_216] : memref<1024x128xbf16, #tpu.memory_space<vmem>>, vector<64x128xbf16>
    %c0_217 = arith.constant 0 : index
    %c1536_218 = arith.constant 1536 : index
    %164 = vector.load %arg15[%c0_217, %c1536_218] : memref<64x2048xbf16, #tpu.memory_space<vmem>>, vector<64x128xbf16>
    tpu.vector_store %arg15[%c0_217, %c1536_218], %163 {strides = array<i32>} : memref<64x2048xbf16, #tpu.memory_space<vmem>>, vector<64x128xbf16>,
    %c832_219 = arith.constant 832 : index
    %c0_220 = arith.constant 0 : index
    %165 = vector.load %arg14[%c832_219, %c0_220] : memref<1024x128xbf16, #tpu.memory_space<vmem>>, vector<64x128xbf16>
    %c0_221 = arith.constant 0 : index
    %c1664_222 = arith.constant 1664 : index
    %166 = vector.load %arg15[%c0_221, %c1664_222] : memref<64x2048xbf16, #tpu.memory_space<vmem>>, vector<64x128xbf16>
    tpu.vector_store %arg15[%c0_221, %c1664_222], %165 {strides = array<i32>} : memref<64x2048xbf16, #tpu.memory_space<vmem>>, vector<64x128xbf16>,
    %c896_223 = arith.constant 896 : index
    %c0_224 = arith.constant 0 : index
    %167 = vector.load %arg14[%c896_223, %c0_224] : memref<1024x128xbf16, #tpu.memory_space<vmem>>, vector<64x128xbf16>
    %c0_225 = arith.constant 0 : index
    %c1792_226 = arith.constant 1792 : index
    %168 = vector.load %arg15[%c0_225, %c1792_226] : memref<64x2048xbf16, #tpu.memory_space<vmem>>, vector<64x128xbf16>
    tpu.vector_store %arg15[%c0_225, %c1792_226], %167 {strides = array<i32>} : memref<64x2048xbf16, #tpu.memory_space<vmem>>, vector<64x128xbf16>,
    %c960_227 = arith.constant 960 : index
    %c0_228 = arith.constant 0 : index
    %169 = vector.load %arg14[%c960_227, %c0_228] : memref<1024x128xbf16, #tpu.memory_space<vmem>>, vector<64x128xbf16>
    %c0_229 = arith.constant 0 : index
    %c1920_230 = arith.constant 1920 : index
    %170 = vector.load %arg15[%c0_229, %c1920_230] : memref<64x2048xbf16, #tpu.memory_space<vmem>>, vector<64x128xbf16>
    tpu.vector_store %arg15[%c0_229, %c1920_230], %169 {strides = array<i32>} : memref<64x2048xbf16, #tpu.memory_space<vmem>>, vector<64x128xbf16>,
    %c0_231 = arith.constant 0 : index
    %c0_232 = arith.constant 0 : index
    %171 = vector.load %arg15[%c0_231, %c0_232] : memref<64x2048xbf16, #tpu.memory_space<vmem>>, vector<64x2048xbf16>
    %cst_233 = arith.constant dense<0.000000e+00> : vector<64x128xf32>
    %172 = tpu.matmul %171, %11, %cst_233 {dimension_numbers = #tpu.dot_dimension_numbers<[1], [0], [0], [1], [0, 0, 1, 1], [], []>} : vector<64x2048xbf16>, vector<2048x128xbf16>, vector<64x128xf32> -> vector<64x128xf32>
    %173 = vector.broadcast %14 : vector<1x128xf32> to vector<64x128xf32>
    %174 = arith.addf %172, %173 : vector<64x128xf32>
    %cst_234 = arith.constant 0.000000e+00 : f32
    %175 = vector.broadcast %cst_234 : f32 to vector<64x128xf32>
    %176 = arith.maximumf %174, %175 : vector<64x128xf32>
    %177 = arith.truncf %176 : vector<64x128xf32> to vector<64x128xbf16>
    %178 = tpu.concatenate %177, %16 in 0 : vector<64x128xbf16>, vector<64x128xbf16> -> vector<128x128xbf16>
    %cst_235 = arith.constant dense<0.000000e+00> : vector<256x128xf32>
    %179 = tpu.matmul %12, %178, %cst_235 {dimension_numbers = #tpu.dot_dimension_numbers<[1], [0], [0], [1], [0, 0, 1, 1], [], []>} : vector<256x128xbf16>, vector<128x128xbf16>, vector<256x128xf32> -> vector<256x128xf32>
    %180 = arith.truncf %179 : vector<256x128xf32> to vector<256x128xbf16>
    %c0_236 = arith.constant 0 : index
    %c0_237 = arith.constant 0 : index
    %181 = vector.load %arg14[%c0_236, %c0_237] : memref<1024x128xbf16, #tpu.memory_space<vmem>>, vector<256x128xbf16>
    tpu.vector_store %arg14[%c0_236, %c0_237], %180 {strides = array<i32>} : memref<1024x128xbf16, #tpu.memory_space<vmem>>, vector<256x128xbf16>,
    %c0_238 = arith.constant 0 : index
    %c0_239 = arith.constant 0 : index
    %182 = vector.load %arg14[%c0_238, %c0_239] : memref<1024x128xbf16, #tpu.memory_space<vmem>>, vector<16x128xbf16>
    %c0_240 = arith.constant 0 : index
    %c0_241 = arith.constant 0 : index
    %183 = vector.load %arg15[%c0_240, %c0_241] : memref<64x2048xbf16, #tpu.memory_space<vmem>>, vector<16x128xbf16>
    tpu.vector_store %arg15[%c0_240, %c0_241], %182 {strides = array<i32>} : memref<64x2048xbf16, #tpu.memory_space<vmem>>, vector<16x128xbf16>,
    %c16_242 = arith.constant 16 : index
    %c0_243 = arith.constant 0 : index
    %184 = vector.load %arg14[%c16_242, %c0_243] : memref<1024x128xbf16, #tpu.memory_space<vmem>>, vector<16x128xbf16>
    %c0_244 = arith.constant 0 : index
    %c128_245 = arith.constant 128 : index
    %185 = vector.load %arg15[%c0_244, %c128_245] : memref<64x2048xbf16, #tpu.memory_space<vmem>>, vector<16x128xbf16>
    tpu.vector_store %arg15[%c0_244, %c128_245], %184 {strides = array<i32>} : memref<64x2048xbf16, #tpu.memory_space<vmem>>, vector<16x128xbf16>,
    %c32_246 = arith.constant 32 : index
    %c0_247 = arith.constant 0 : index
    %186 = vector.load %arg14[%c32_246, %c0_247] : memref<1024x128xbf16, #tpu.memory_space<vmem>>, vector<16x128xbf16>
    %c0_248 = arith.constant 0 : index
    %c256_249 = arith.constant 256 : index
    %187 = vector.load %arg15[%c0_248, %c256_249] : memref<64x2048xbf16, #tpu.memory_space<vmem>>, vector<16x128xbf16>
    tpu.vector_store %arg15[%c0_248, %c256_249], %186 {strides = array<i32>} : memref<64x2048xbf16, #tpu.memory_space<vmem>>, vector<16x128xbf16>,
    %c48_250 = arith.constant 48 : index
    %c0_251 = arith.constant 0 : index
    %188 = vector.load %arg14[%c48_250, %c0_251] : memref<1024x128xbf16, #tpu.memory_space<vmem>>, vector<16x128xbf16>
    %c0_252 = arith.constant 0 : index
    %c384_253 = arith.constant 384 : index
    %189 = vector.load %arg15[%c0_252, %c384_253] : memref<64x2048xbf16, #tpu.memory_space<vmem>>, vector<16x128xbf16>
    tpu.vector_store %arg15[%c0_252, %c384_253], %188 {strides = array<i32>} : memref<64x2048xbf16, #tpu.memory_space<vmem>>, vector<16x128xbf16>,
    %c64_254 = arith.constant 64 : index
    %c0_255 = arith.constant 0 : index
    %190 = vector.load %arg14[%c64_254, %c0_255] : memref<1024x128xbf16, #tpu.memory_space<vmem>>, vector<16x128xbf16>
    %c0_256 = arith.constant 0 : index
    %c512_257 = arith.constant 512 : index
    %191 = vector.load %arg15[%c0_256, %c512_257] : memref<64x2048xbf16, #tpu.memory_space<vmem>>, vector<16x128xbf16>
    tpu.vector_store %arg15[%c0_256, %c512_257], %190 {strides = array<i32>} : memref<64x2048xbf16, #tpu.memory_space<vmem>>, vector<16x128xbf16>,
    %c80_258 = arith.constant 80 : index
    %c0_259 = arith.constant 0 : index
    %192 = vector.load %arg14[%c80_258, %c0_259] : memref<1024x128xbf16, #tpu.memory_space<vmem>>, vector<16x128xbf16>
    %c0_260 = arith.constant 0 : index
    %c640_261 = arith.constant 640 : index
    %193 = vector.load %arg15[%c0_260, %c640_261] : memref<64x2048xbf16, #tpu.memory_space<vmem>>, vector<16x128xbf16>
    tpu.vector_store %arg15[%c0_260, %c640_261], %192 {strides = array<i32>} : memref<64x2048xbf16, #tpu.memory_space<vmem>>, vector<16x128xbf16>,
    %c96_262 = arith.constant 96 : index
    %c0_263 = arith.constant 0 : index
    %194 = vector.load %arg14[%c96_262, %c0_263] : memref<1024x128xbf16, #tpu.memory_space<vmem>>, vector<16x128xbf16>
    %c0_264 = arith.constant 0 : index
    %c768_265 = arith.constant 768 : index
    %195 = vector.load %arg15[%c0_264, %c768_265] : memref<64x2048xbf16, #tpu.memory_space<vmem>>, vector<16x128xbf16>
    tpu.vector_store %arg15[%c0_264, %c768_265], %194 {strides = array<i32>} : memref<64x2048xbf16, #tpu.memory_space<vmem>>, vector<16x128xbf16>,
    %c112_266 = arith.constant 112 : index
    %c0_267 = arith.constant 0 : index
    %196 = vector.load %arg14[%c112_266, %c0_267] : memref<1024x128xbf16, #tpu.memory_space<vmem>>, vector<16x128xbf16>
    %c0_268 = arith.constant 0 : index
    %c896_269 = arith.constant 896 : index
    %197 = vector.load %arg15[%c0_268, %c896_269] : memref<64x2048xbf16, #tpu.memory_space<vmem>>, vector<16x128xbf16>
    tpu.vector_store %arg15[%c0_268, %c896_269], %196 {strides = array<i32>} : memref<64x2048xbf16, #tpu.memory_space<vmem>>, vector<16x128xbf16>,
    %c128_270 = arith.constant 128 : index
    %c0_271 = arith.constant 0 : index
    %198 = vector.load %arg14[%c128_270, %c0_271] : memref<1024x128xbf16, #tpu.memory_space<vmem>>, vector<16x128xbf16>
    %c0_272 = arith.constant 0 : index
    %c1024_273 = arith.constant 1024 : index
    %199 = vector.load %arg15[%c0_272, %c1024_273] : memref<64x2048xbf16, #tpu.memory_space<vmem>>, vector<16x128xbf16>
    tpu.vector_store %arg15[%c0_272, %c1024_273], %198 {strides = array<i32>} : memref<64x2048xbf16, #tpu.memory_space<vmem>>, vector<16x128xbf16>,
    %c144_274 = arith.constant 144 : index
    %c0_275 = arith.constant 0 : index
    %200 = vector.load %arg14[%c144_274, %c0_275] : memref<1024x128xbf16, #tpu.memory_space<vmem>>, vector<16x128xbf16>
    %c0_276 = arith.constant 0 : index
    %c1152_277 = arith.constant 1152 : index
    %201 = vector.load %arg15[%c0_276, %c1152_277] : memref<64x2048xbf16, #tpu.memory_space<vmem>>, vector<16x128xbf16>
    tpu.vector_store %arg15[%c0_276, %c1152_277], %200 {strides = array<i32>} : memref<64x2048xbf16, #tpu.memory_space<vmem>>, vector<16x128xbf16>,
    %c160_278 = arith.constant 160 : index
    %c0_279 = arith.constant 0 : index
    %202 = vector.load %arg14[%c160_278, %c0_279] : memref<1024x128xbf16, #tpu.memory_space<vmem>>, vector<16x128xbf16>
    %c0_280 = arith.constant 0 : index
    %c1280_281 = arith.constant 1280 : index
    %203 = vector.load %arg15[%c0_280, %c1280_281] : memref<64x2048xbf16, #tpu.memory_space<vmem>>, vector<16x128xbf16>
    tpu.vector_store %arg15[%c0_280, %c1280_281], %202 {strides = array<i32>} : memref<64x2048xbf16, #tpu.memory_space<vmem>>, vector<16x128xbf16>,
    %c176_282 = arith.constant 176 : index
    %c0_283 = arith.constant 0 : index
    %204 = vector.load %arg14[%c176_282, %c0_283] : memref<1024x128xbf16, #tpu.memory_space<vmem>>, vector<16x128xbf16>
    %c0_284 = arith.constant 0 : index
    %c1408_285 = arith.constant 1408 : index
    %205 = vector.load %arg15[%c0_284, %c1408_285] : memref<64x2048xbf16, #tpu.memory_space<vmem>>, vector<16x128xbf16>
    tpu.vector_store %arg15[%c0_284, %c1408_285], %204 {strides = array<i32>} : memref<64x2048xbf16, #tpu.memory_space<vmem>>, vector<16x128xbf16>,
    %c192_286 = arith.constant 192 : index
    %c0_287 = arith.constant 0 : index
    %206 = vector.load %arg14[%c192_286, %c0_287] : memref<1024x128xbf16, #tpu.memory_space<vmem>>, vector<16x128xbf16>
    %c0_288 = arith.constant 0 : index
    %c1536_289 = arith.constant 1536 : index
    %207 = vector.load %arg15[%c0_288, %c1536_289] : memref<64x2048xbf16, #tpu.memory_space<vmem>>, vector<16x128xbf16>
    tpu.vector_store %arg15[%c0_288, %c1536_289], %206 {strides = array<i32>} : memref<64x2048xbf16, #tpu.memory_space<vmem>>, vector<16x128xbf16>,
    %c208_290 = arith.constant 208 : index
    %c0_291 = arith.constant 0 : index
    %208 = vector.load %arg14[%c208_290, %c0_291] : memref<1024x128xbf16, #tpu.memory_space<vmem>>, vector<16x128xbf16>
    %c0_292 = arith.constant 0 : index
    %c1664_293 = arith.constant 1664 : index
    %209 = vector.load %arg15[%c0_292, %c1664_293] : memref<64x2048xbf16, #tpu.memory_space<vmem>>, vector<16x128xbf16>
    tpu.vector_store %arg15[%c0_292, %c1664_293], %208 {strides = array<i32>} : memref<64x2048xbf16, #tpu.memory_space<vmem>>, vector<16x128xbf16>,
    %c224_294 = arith.constant 224 : index
    %c0_295 = arith.constant 0 : index
    %210 = vector.load %arg14[%c224_294, %c0_295] : memref<1024x128xbf16, #tpu.memory_space<vmem>>, vector<16x128xbf16>
    %c0_296 = arith.constant 0 : index
    %c1792_297 = arith.constant 1792 : index
    %211 = vector.load %arg15[%c0_296, %c1792_297] : memref<64x2048xbf16, #tpu.memory_space<vmem>>, vector<16x128xbf16>
    tpu.vector_store %arg15[%c0_296, %c1792_297], %210 {strides = array<i32>} : memref<64x2048xbf16, #tpu.memory_space<vmem>>, vector<16x128xbf16>,
    %c240_298 = arith.constant 240 : index
    %c0_299 = arith.constant 0 : index
    %212 = vector.load %arg14[%c240_298, %c0_299] : memref<1024x128xbf16, #tpu.memory_space<vmem>>, vector<16x128xbf16>
    %c0_300 = arith.constant 0 : index
    %c1920_301 = arith.constant 1920 : index
    %213 = vector.load %arg15[%c0_300, %c1920_301] : memref<64x2048xbf16, #tpu.memory_space<vmem>>, vector<16x128xbf16>
    tpu.vector_store %arg15[%c0_300, %c1920_301], %212 {strides = array<i32>} : memref<64x2048xbf16, #tpu.memory_space<vmem>>, vector<16x128xbf16>,
    %c0_302 = arith.constant 0 : index
    %c0_303 = arith.constant 0 : index
    %214 = vector.load %arg15[%c0_302, %c0_303] : memref<64x2048xbf16, #tpu.memory_space<vmem>>, vector<16x2048xbf16>
    %cst_304 = arith.constant dense<0.000000e+00> : vector<16x128xf32>
    %215 = tpu.matmul %214, %13, %cst_304 {dimension_numbers = #tpu.dot_dimension_numbers<[1], [0], [0], [1], [0, 0, 1, 1], [], []>} : vector<16x2048xbf16>, vector<2048x128xbf16>, vector<16x128xf32> -> vector<16x128xf32>
    %216 = vector.broadcast %15 : vector<1x128xf32> to vector<16x128xf32>
    %217 = arith.addf %215, %216 : vector<16x128xf32>
    %cst_305 = arith.constant 0.000000e+00 : f32
    %218 = vector.broadcast %cst_305 : f32 to vector<16x128xf32>
    %219 = arith.maximumf %217, %218 : vector<16x128xf32>
    %220 = arith.truncf %219 : vector<16x128xf32> to vector<16x128xbf16>
    %221 = vector.extract_strided_slice %220 {offsets = [0, 0], sizes = [1, 128], strides = [1, 1]} : vector<16x128xbf16> to vector<1x128xbf16>
    %c1 = arith.constant 1 : index
    %c0_306 = arith.constant 0 : index
    %222 = vector.load %arg16[%c1, %c0_306] : memref<2x2048xbf16, #tpu.memory_space<vmem>>, vector<1x128xbf16>
    tpu.vector_store %arg16[%c1, %c0_306], %221 {strides = array<i32>} : memref<2x2048xbf16, #tpu.memory_space<vmem>>, vector<1x128xbf16>,
    %223 = vector.extract_strided_slice %220 {offsets = [1, 0], sizes = [1, 128], strides = [1, 1]} : vector<16x128xbf16> to vector<1x128xbf16>
    %c1_307 = arith.constant 1 : index
    %c128_308 = arith.constant 128 : index
    %224 = vector.load %arg16[%c1_307, %c128_308] : memref<2x2048xbf16, #tpu.memory_space<vmem>>, vector<1x128xbf16>
    tpu.vector_store %arg16[%c1_307, %c128_308], %223 {strides = array<i32>} : memref<2x2048xbf16, #tpu.memory_space<vmem>>, vector<1x128xbf16>,
    %225 = vector.extract_strided_slice %220 {offsets = [2, 0], sizes = [1, 128], strides = [1, 1]} : vector<16x128xbf16> to vector<1x128xbf16>
    %c1_309 = arith.constant 1 : index
    %c256_310 = arith.constant 256 : index
    %226 = vector.load %arg16[%c1_309, %c256_310] : memref<2x2048xbf16, #tpu.memory_space<vmem>>, vector<1x128xbf16>
    tpu.vector_store %arg16[%c1_309, %c256_310], %225 {strides = array<i32>} : memref<2x2048xbf16, #tpu.memory_space<vmem>>, vector<1x128xbf16>,
    %227 = vector.extract_strided_slice %220 {offsets = [3, 0], sizes = [1, 128], strides = [1, 1]} : vector<16x128xbf16> to vector<1x128xbf16>
    %c1_311 = arith.constant 1 : index
    %c384_312 = arith.constant 384 : index
    %228 = vector.load %arg16[%c1_311, %c384_312] : memref<2x2048xbf16, #tpu.memory_space<vmem>>, vector<1x128xbf16>
    tpu.vector_store %arg16[%c1_311, %c384_312], %227 {strides = array<i32>} : memref<2x2048xbf16, #tpu.memory_space<vmem>>, vector<1x128xbf16>,
    %229 = vector.extract_strided_slice %220 {offsets = [4, 0], sizes = [1, 128], strides = [1, 1]} : vector<16x128xbf16> to vector<1x128xbf16>
    %c1_313 = arith.constant 1 : index
    %c512_314 = arith.constant 512 : index
    %230 = vector.load %arg16[%c1_313, %c512_314] : memref<2x2048xbf16, #tpu.memory_space<vmem>>, vector<1x128xbf16>
    tpu.vector_store %arg16[%c1_313, %c512_314], %229 {strides = array<i32>} : memref<2x2048xbf16, #tpu.memory_space<vmem>>, vector<1x128xbf16>,
    %231 = vector.extract_strided_slice %220 {offsets = [5, 0], sizes = [1, 128], strides = [1, 1]} : vector<16x128xbf16> to vector<1x128xbf16>
    %c1_315 = arith.constant 1 : index
    %c640_316 = arith.constant 640 : index
    %232 = vector.load %arg16[%c1_315, %c640_316] : memref<2x2048xbf16, #tpu.memory_space<vmem>>, vector<1x128xbf16>
    tpu.vector_store %arg16[%c1_315, %c640_316], %231 {strides = array<i32>} : memref<2x2048xbf16, #tpu.memory_space<vmem>>, vector<1x128xbf16>,
    %233 = vector.extract_strided_slice %220 {offsets = [6, 0], sizes = [1, 128], strides = [1, 1]} : vector<16x128xbf16> to vector<1x128xbf16>
    %c1_317 = arith.constant 1 : index
    %c768_318 = arith.constant 768 : index
    %234 = vector.load %arg16[%c1_317, %c768_318] : memref<2x2048xbf16, #tpu.memory_space<vmem>>, vector<1x128xbf16>
    tpu.vector_store %arg16[%c1_317, %c768_318], %233 {strides = array<i32>} : memref<2x2048xbf16, #tpu.memory_space<vmem>>, vector<1x128xbf16>,
    %235 = vector.extract_strided_slice %220 {offsets = [7, 0], sizes = [1, 128], strides = [1, 1]} : vector<16x128xbf16> to vector<1x128xbf16>
    %c1_319 = arith.constant 1 : index
    %c896_320 = arith.constant 896 : index
    %236 = vector.load %arg16[%c1_319, %c896_320] : memref<2x2048xbf16, #tpu.memory_space<vmem>>, vector<1x128xbf16>
    tpu.vector_store %arg16[%c1_319, %c896_320], %235 {strides = array<i32>} : memref<2x2048xbf16, #tpu.memory_space<vmem>>, vector<1x128xbf16>,
    %237 = vector.extract_strided_slice %220 {offsets = [8, 0], sizes = [1, 128], strides = [1, 1]} : vector<16x128xbf16> to vector<1x128xbf16>
    %c1_321 = arith.constant 1 : index
    %c1024_322 = arith.constant 1024 : index
    %238 = vector.load %arg16[%c1_321, %c1024_322] : memref<2x2048xbf16, #tpu.memory_space<vmem>>, vector<1x128xbf16>
    tpu.vector_store %arg16[%c1_321, %c1024_322], %237 {strides = array<i32>} : memref<2x2048xbf16, #tpu.memory_space<vmem>>, vector<1x128xbf16>,
    %239 = vector.extract_strided_slice %220 {offsets = [9, 0], sizes = [1, 128], strides = [1, 1]} : vector<16x128xbf16> to vector<1x128xbf16>
    %c1_323 = arith.constant 1 : index
    %c1152_324 = arith.constant 1152 : index
    %240 = vector.load %arg16[%c1_323, %c1152_324] : memref<2x2048xbf16, #tpu.memory_space<vmem>>, vector<1x128xbf16>
    tpu.vector_store %arg16[%c1_323, %c1152_324], %239 {strides = array<i32>} : memref<2x2048xbf16, #tpu.memory_space<vmem>>, vector<1x128xbf16>,
    %241 = vector.extract_strided_slice %220 {offsets = [10, 0], sizes = [1, 128], strides = [1, 1]} : vector<16x128xbf16> to vector<1x128xbf16>
    %c1_325 = arith.constant 1 : index
    %c1280_326 = arith.constant 1280 : index
    %242 = vector.load %arg16[%c1_325, %c1280_326] : memref<2x2048xbf16, #tpu.memory_space<vmem>>, vector<1x128xbf16>
    tpu.vector_store %arg16[%c1_325, %c1280_326], %241 {strides = array<i32>} : memref<2x2048xbf16, #tpu.memory_space<vmem>>, vector<1x128xbf16>,
    %243 = vector.extract_strided_slice %220 {offsets = [11, 0], sizes = [1, 128], strides = [1, 1]} : vector<16x128xbf16> to vector<1x128xbf16>
    %c1_327 = arith.constant 1 : index
    %c1408_328 = arith.constant 1408 : index
    %244 = vector.load %arg16[%c1_327, %c1408_328] : memref<2x2048xbf16, #tpu.memory_space<vmem>>, vector<1x128xbf16>
    tpu.vector_store %arg16[%c1_327, %c1408_328], %243 {strides = array<i32>} : memref<2x2048xbf16, #tpu.memory_space<vmem>>, vector<1x128xbf16>,
    %245 = vector.extract_strided_slice %220 {offsets = [12, 0], sizes = [1, 128], strides = [1, 1]} : vector<16x128xbf16> to vector<1x128xbf16>
    %c1_329 = arith.constant 1 : index
    %c1536_330 = arith.constant 1536 : index
    %246 = vector.load %arg16[%c1_329, %c1536_330] : memref<2x2048xbf16, #tpu.memory_space<vmem>>, vector<1x128xbf16>
    tpu.vector_store %arg16[%c1_329, %c1536_330], %245 {strides = array<i32>} : memref<2x2048xbf16, #tpu.memory_space<vmem>>, vector<1x128xbf16>,
    %247 = vector.extract_strided_slice %220 {offsets = [13, 0], sizes = [1, 128], strides = [1, 1]} : vector<16x128xbf16> to vector<1x128xbf16>
    %c1_331 = arith.constant 1 : index
    %c1664_332 = arith.constant 1664 : index
    %248 = vector.load %arg16[%c1_331, %c1664_332] : memref<2x2048xbf16, #tpu.memory_space<vmem>>, vector<1x128xbf16>
    tpu.vector_store %arg16[%c1_331, %c1664_332], %247 {strides = array<i32>} : memref<2x2048xbf16, #tpu.memory_space<vmem>>, vector<1x128xbf16>,
    %249 = vector.extract_strided_slice %220 {offsets = [14, 0], sizes = [1, 128], strides = [1, 1]} : vector<16x128xbf16> to vector<1x128xbf16>
    %c1_333 = arith.constant 1 : index
    %c1792_334 = arith.constant 1792 : index
    %250 = vector.load %arg16[%c1_333, %c1792_334] : memref<2x2048xbf16, #tpu.memory_space<vmem>>, vector<1x128xbf16>
    tpu.vector_store %arg16[%c1_333, %c1792_334], %249 {strides = array<i32>} : memref<2x2048xbf16, #tpu.memory_space<vmem>>, vector<1x128xbf16>,
    %251 = vector.extract_strided_slice %220 {offsets = [15, 0], sizes = [1, 128], strides = [1, 1]} : vector<16x128xbf16> to vector<1x128xbf16>
    %c1_335 = arith.constant 1 : index
    %c1920_336 = arith.constant 1920 : index
    %252 = vector.load %arg16[%c1_335, %c1920_336] : memref<2x2048xbf16, #tpu.memory_space<vmem>>, vector<1x128xbf16>
    tpu.vector_store %arg16[%c1_335, %c1920_336], %251 {strides = array<i32>} : memref<2x2048xbf16, #tpu.memory_space<vmem>>, vector<1x128xbf16>,
    %c0_337 = arith.constant 0 : index
    %c0_338 = arith.constant 0 : index
    %253 = vector.load %arg16[%c0_337, %c0_338] : memref<2x2048xbf16, #tpu.memory_space<vmem>>, vector<2x2048xbf16>
    %c0_339 = arith.constant 0 : index
    %c0_340 = arith.constant 0 : index
    %254 = vector.load %arg10[%c0_339, %c0_340] : memref<2048x128xbf16, #tpu.memory_space<vmem>>, vector<2048x128xbf16>
    %cst_341 = arith.constant dense<0.000000e+00> : vector<2x128xf32>
    %255 = tpu.matmul %253, %254, %cst_341 {dimension_numbers = #tpu.dot_dimension_numbers<[1], [0], [0], [1], [0, 0, 1, 1], [], []>} : vector<2x2048xbf16>, vector<2048x128xbf16>, vector<2x128xf32> -> vector<2x128xf32>
    %c0_342 = arith.constant 0 : index
    %c0_343 = arith.constant 0 : index
    %256 = vector.load %arg11[%c0_342, %c0_343] : memref<1x128xf32, #tpu.memory_space<vmem>>, vector<1x128xf32>
    %257 = vector.broadcast %256 : vector<1x128xf32> to vector<2x128xf32>
    %258 = arith.addf %255, %257 : vector<2x128xf32>
    %c0_344 = arith.constant 0 : index
    %c0_345 = arith.constant 0 : index
    %c0_346 = arith.constant 0 : index
    %259 = vector.load %arg12[%c0_344, %c0_345, %c0_346] : memref<1x2x128xf32, #tpu.memory_space<vmem>>, vector<1x2x128xf32>
    %260 = vector.shape_cast %259 : vector<1x2x128xf32> to vector<2x128xf32>
    %261 = vector.shape_cast %258 : vector<2x128xf32> to vector<1x2x128xf32>
    tpu.vector_store %arg12[%c0_344, %c0_345, %c0_346], %261 {strides = array<i32>} : memref<1x2x128xf32, #tpu.memory_space<vmem>>, vector<1x2x128xf32>,
    return
  }
  func.func @transform_0(%arg0: i32) -> (i32, i32) {
    %c0_i32 = arith.constant 0 : i32
    %c0_i32_0 = arith.constant 0 : i32
    return %arg0, %c0_i32 : i32, i32
  }
  func.func @transform_1(%arg0: i32) -> (i32, i32) {
    %c0_i32 = arith.constant 0 : i32
    %c0_i32_0 = arith.constant 0 : i32
    %c0_i32_1 = arith.constant 0 : i32
    return %c0_i32, %c0_i32_0 : i32, i32
  }
  func.func @transform_2(%arg0: i32) -> (i32, i32) {
    %c0_i32 = arith.constant 0 : i32
    %c0_i32_0 = arith.constant 0 : i32
    %c0_i32_1 = arith.constant 0 : i32
    return %c0_i32, %c0_i32_0 : i32, i32
  }
  func.func @transform_3(%arg0: i32) -> (i32, i32) {
    %c0_i32 = arith.constant 0 : i32
    %c0_i32_0 = arith.constant 0 : i32
    %c0_i32_1 = arith.constant 0 : i32
    return %c0_i32, %c0_i32_0 : i32, i32
  }
  func.func @transform_4(%arg0: i32) -> (i32, i32) {
    %c0_i32 = arith.constant 0 : i32
    %c0_i32_0 = arith.constant 0 : i32
    %c0_i32_1 = arith.constant 0 : i32
    return %c0_i32, %c0_i32_0 : i32, i32
  }
  func.func @transform_5(%arg0: i32) -> (i32, i32) {
    %c0_i32 = arith.constant 0 : i32
    %c0_i32_0 = arith.constant 0 : i32
    %c0_i32_1 = arith.constant 0 : i32
    return %c0_i32, %c0_i32_0 : i32, i32
  }
  func.func @transform_6(%arg0: i32) -> (i32, i32) {
    %c0_i32 = arith.constant 0 : i32
    %c0_i32_0 = arith.constant 0 : i32
    %c0_i32_1 = arith.constant 0 : i32
    return %c0_i32, %c0_i32_0 : i32, i32
  }
  func.func @transform_7(%arg0: i32) -> (i32, i32) {
    %c0_i32 = arith.constant 0 : i32
    %c0_i32_0 = arith.constant 0 : i32
    %c0_i32_1 = arith.constant 0 : i32
    return %c0_i32, %c0_i32_0 : i32, i32
  }
  func.func @transform_8(%arg0: i32) -> (i32, i32) {
    %c0_i32 = arith.constant 0 : i32
    %c0_i32_0 = arith.constant 0 : i32
    %c0_i32_1 = arith.constant 0 : i32
    return %c0_i32, %c0_i32_0 : i32, i32
  }
  func.func @transform_9(%arg0: i32) -> (i32, i32) {
    %c0_i32 = arith.constant 0 : i32
    %c0_i32_0 = arith.constant 0 : i32
    %c0_i32_1 = arith.constant 0 : i32
    return %c0_i32, %c0_i32_0 : i32, i32
  }
  func.func @transform_10(%arg0: i32) -> (i32, i32) {
    %c0_i32 = arith.constant 0 : i32
    %c0_i32_0 = arith.constant 0 : i32
    %c0_i32_1 = arith.constant 0 : i32
    return %c0_i32, %c0_i32_0 : i32, i32
  }
  func.func @transform_11(%arg0: i32) -> (i32, i32, i32) {
    %c0_i32 = arith.constant 0 : i32
    %c0_i32_0 = arith.constant 0 : i32
    %c0_i32_1 = arith.constant 0 : i32
    return %arg0, %c0_i32, %c0_i32_0 : i32, i32, i32
  }
}

</mosaic_0001>

<llo_original>
// kernel: encoder_forward.1
$region0: #{encoder_forward.1}
  #allocation0 [shape = 'u32[]', space=smem, size = 0x4, offset = 0x4, fixed_abs, tag = 'smem constant byte address 0x4 - core index']
  #allocation1 [shape = 'u32[72,128]{1,0:T(1,128)}', space=vmem, size = 0x9000, scoped, tag = 'internal scratch']
  #allocation2 [shape = 'bf16[512,128]{1,0:T(8,128)(2,1)}', space=vmem, size = 0x20000, scoped, tag = 'scratch operand']
  #allocation3 [shape = 'bf16[1024,128]{1,0:T(8,128)(2,1)}', space=vmem, size = 0x40000, scoped, tag = 'scratch operand']
  #allocation4 [shape = 'bf16[64,2048]{1,0:T(8,128)(2,1)}', space=vmem, size = 0x40000, scoped, tag = 'scratch operand']
  #allocation5 [shape = 'bf16[2,2048]{1,0:T(2,128)(2,1)}', space=vmem, size = 0x2000, scoped, tag = 'scratch operand']
  %s0 = inlined_call_operand.vmem [shape: bf16[512,128], index: 0, kind: input, shape index: {}]
  %s1 = inlined_call_operand.vmem [shape: bf16[128,128], index: 1, kind: input, shape index: {}]
  %s2 = inlined_call_operand.vmem [shape: f32[1,128], index: 2, kind: input, shape index: {}]
  %s3 = inlined_call_operand.vmem [shape: bf16[1024,256], index: 3, kind: input, shape index: {}]
  %s4 = inlined_call_operand.vmem [shape: bf16[2048,128], index: 4, kind: input, shape index: {}]
  %s5 = inlined_call_operand.vmem [shape: f32[1,128], index: 5, kind: input, shape index: {}]
  %s6 = inlined_call_operand.vmem [shape: bf16[256,128], index: 6, kind: input, shape index: {}]
  %s7 = inlined_call_operand.vmem [shape: bf16[2048,128], index: 7, kind: input, shape index: {}]
  %s8 = inlined_call_operand.vmem [shape: f32[1,128], index: 8, kind: input, shape index: {}]
  %s9 = inlined_call_operand.vmem [shape: bf16[2048,128], index: 9, kind: input, shape index: {}]
  %s10 = inlined_call_operand.vmem [shape: f32[1,128], index: 10, kind: input, shape index: {}]
  %s11 = inlined_call_operand.hbm [shape: f32[1,2,128], index: 11, kind: output, shape index: {}]
  %s12 = sld [smem:[#allocation0]]
  $region54: #{encoder_forward.1} parent=0
    _
  %s14 = ssub.s32 1, %s12
  %s15 = scalar_select 0, %s14, %s12
  $region1: #{encoder_forward.1} parent=0
    #allocation6 [shape = 'u8[1024]{0}', space=vmem, size = 0x400, scoped, tag = 'output window, operand 0, single buffered']
    #allocation7 [shape = 's32[1]{0}', space=sflag, size = 0x4, scoped, tag = 'scoped memory for encoder_forward.1']
    %16 = vsyncpa [#allocation7], 0
    // Predicated region
    $region2: #{encoder_forward.1} parent=1 // pred_check
      _
    $region3: #{encoder_forward.1} parent=1 // pred_check_branch
      %18 = sbr.rel (0) target = $region5
    $region4: #{encoder_forward.1} parent=1 // pred_region
      _
    $region5: #{encoder_forward.1} parent=1 // pred_fallthru
      _
    // Predicated region
    $region6: #{encoder_forward.1} parent=1 // pred_check
      _
    $region7: #{encoder_forward.1} parent=1 // pred_check_branch
      %20 = sbr.rel (0) target = $region9
    $region8: #{encoder_forward.1} parent=1 // pred_region
      _
    $region9: #{encoder_forward.1} parent=1 // pred_fallthru
      _
    // Predicated region
    $region10: #{encoder_forward.1} parent=1 // pred_check
      _
    $region11: #{encoder_forward.1} parent=1 // pred_check_branch
      %22 = sbr.rel (0) target = $region13
    $region12: #{encoder_forward.1} parent=1 // pred_region
      _
    $region13: #{encoder_forward.1} parent=1 // pred_fallthru
      _
    // Predicated region
    $region14: #{encoder_forward.1} parent=1 // pred_check
      _
    $region15: #{encoder_forward.1} parent=1 // pred_check_branch
      %24 = sbr.rel (0) target = $region17
    $region16: #{encoder_forward.1} parent=1 // pred_region
      _
    $region17: #{encoder_forward.1} parent=1 // pred_fallthru
      _
    // Predicated region
    $region18: #{encoder_forward.1} parent=1 // pred_check
      _
    $region19: #{encoder_forward.1} parent=1 // pred_check_branch
      %26 = sbr.rel (0) target = $region21
    $region20: #{encoder_forward.1} parent=1 // pred_region
      _
    $region21: #{encoder_forward.1} parent=1 // pred_fallthru
      _
    // Predicated region
    $region22: #{encoder_forward.1} parent=1 // pred_check
      _
    $region23: #{encoder_forward.1} parent=1 // pred_check_branch
      %28 = sbr.rel (0) target = $region25
    $region24: #{encoder_forward.1} parent=1 // pred_region
      _
    $region25: #{encoder_forward.1} parent=1 // pred_fallthru
      _
    // Predicated region
    $region26: #{encoder_forward.1} parent=1 // pred_check
      _
    $region27: #{encoder_forward.1} parent=1 // pred_check_branch
      %30 = sbr.rel (0) target = $region29
    $region28: #{encoder_forward.1} parent=1 // pred_region
      _
    $region29: #{encoder_forward.1} parent=1 // pred_fallthru
      _
    // Predicated region
    $region30: #{encoder_forward.1} parent=1 // pred_check
      _
    $region31: #{encoder_forward.1} parent=1 // pred_check_branch
      %32 = sbr.rel (0) target = $region33
    $region32: #{encoder_forward.1} parent=1 // pred_region
      _
    $region33: #{encoder_forward.1} parent=1 // pred_fallthru
      _
    // Predicated region
    $region34: #{encoder_forward.1} parent=1 // pred_check
      _
    $region35: #{encoder_forward.1} parent=1 // pred_check_branch
      %34 = sbr.rel (0) target = $region37
    $region36: #{encoder_forward.1} parent=1 // pred_region
      _
    $region37: #{encoder_forward.1} parent=1 // pred_fallthru
      _
    // Predicated region
    $region38: #{encoder_forward.1} parent=1 // pred_check
      _
    $region39: #{encoder_forward.1} parent=1 // pred_check_branch
      %36 = sbr.rel (0) target = $region41
    $region40: #{encoder_forward.1} parent=1 // pred_region
      _
    $region41: #{encoder_forward.1} parent=1 // pred_fallthru
      _
    // Predicated region
    $region42: #{encoder_forward.1} parent=1 // pred_check
      _
    $region43: #{encoder_forward.1} parent=1 // pred_check_branch
      %38 = sbr.rel (0) target = $region45
    $region44: #{encoder_forward.1} parent=1 // pred_region
      _
    $region45: #{encoder_forward.1} parent=1 // pred_fallthru
      _
    %v40 = vld [vmem:[%s0] sm:$0xf]
    %v41 = vld [vmem:[%s0 + $0x4] sm:$0xf]
    %v42 = vld [vmem:[%s0 + $0x8] sm:$0xf]
    %v43 = vld [vmem:[%s0 + $0xc] sm:$0xf]
    %v44 = vld [vmem:[%s0 + $0x10] sm:$0xf]
    %v45 = vld [vmem:[%s0 + $0x14] sm:$0xf]
    %v46 = vld [vmem:[%s0 + $0x18] sm:$0xf]
    %v47 = vld [vmem:[%s0 + $0x1c] sm:$0xf]
    %v48 = vld [vmem:[%s0 + $0x20] sm:$0xf]
    %v49 = vld [vmem:[%s0 + $0x24] sm:$0xf]
    %v50 = vld [vmem:[%s0 + $0x28] sm:$0xf]
    %v51 = vld [vmem:[%s0 + $0x2c] sm:$0xf]
    %v52 = vld [vmem:[%s0 + $0x30] sm:$0xf]
    %v53 = vld [vmem:[%s0 + $0x34] sm:$0xf]
    %v54 = vld [vmem:[%s0 + $0x38] sm:$0xf]
    %v55 = vld [vmem:[%s0 + $0x3c] sm:$0xf]
    %v56 = vld [vmem:[%s0 + $0x40] sm:$0xf]
    %v57 = vld [vmem:[%s0 + $0x44] sm:$0xf]
    %v58 = vld [vmem:[%s0 + $0x48] sm:$0xf]
    %v59 = vld [vmem:[%s0 + $0x4c] sm:$0xf]
    %v60 = vld [vmem:[%s0 + $0x50] sm:$0xf]
    %v61 = vld [vmem:[%s0 + $0x54] sm:$0xf]
    %v62 = vld [vmem:[%s0 + $0x58] sm:$0xf]
    %v63 = vld [vmem:[%s0 + $0x5c] sm:$0xf]
    %v64 = vld [vmem:[%s0 + $0x60] sm:$0xf]
    %v65 = vld [vmem:[%s0 + $0x64] sm:$0xf]
    %v66 = vld [vmem:[%s0 + $0x68] sm:$0xf]
    %v67 = vld [vmem:[%s0 + $0x6c] sm:$0xf]
    %v68 = vld [vmem:[%s0 + $0x70] sm:$0xf]
    %v69 = vld [vmem:[%s0 + $0x74] sm:$0xf]
    %v70 = vld [vmem:[%s0 + $0x78] sm:$0xf]
    %v71 = vld [vmem:[%s0 + $0x7c] sm:$0xf]
    %v72 = vld [vmem:[%s0 + $0x80] sm:$0xf]
    %v73 = vld [vmem:[%s0 + $0x84] sm:$0xf]
    %v74 = vld [vmem:[%s0 + $0x88] sm:$0xf]
    %v75 = vld [vmem:[%s0 + $0x8c] sm:$0xf]
    %v76 = vld [vmem:[%s0 + $0x90] sm:$0xf]
    %v77 = vld [vmem:[%s0 + $0x94] sm:$0xf]
    %v78 = vld [vmem:[%s0 + $0x98] sm:$0xf]
    %v79 = vld [vmem:[%s0 + $0x9c] sm:$0xf]
    %v80 = vld [vmem:[%s0 + $0xa0] sm:$0xf]
    %v81 = vld [vmem:[%s0 + $0xa4] sm:$0xf]
    %v82 = vld [vmem:[%s0 + $0xa8] sm:$0xf]
    %v83 = vld [vmem:[%s0 + $0xac] sm:$0xf]
    %v84 = vld [vmem:[%s0 + $0xb0] sm:$0xf]
    %v85 = vld [vmem:[%s0 + $0xb4] sm:$0xf]
    %v86 = vld [vmem:[%s0 + $0xb8] sm:$0xf]
    %v87 = vld [vmem:[%s0 + $0xbc] sm:$0xf]
    %v88 = vld [vmem:[%s0 + $0xc0] sm:$0xf]
    %v89 = vld [vmem:[%s0 + $0xc4] sm:$0xf]
    %v90 = vld [vmem:[%s0 + $0xc8] sm:$0xf]
    %v91 = vld [vmem:[%s0 + $0xcc] sm:$0xf]
    %v92 = vld [vmem:[%s0 + $0xd0] sm:$0xf]
    %v93 = vld [vmem:[%s0 + $0xd4] sm:$0xf]
    %v94 = vld [vmem:[%s0 + $0xd8] sm:$0xf]
    %v95 = vld [vmem:[%s0 + $0xdc] sm:$0xf]
    %v96 = vld [vmem:[%s0 + $0xe0] sm:$0xf]
    %v97 = vld [vmem:[%s0 + $0xe4] sm:$0xf]
    %v98 = vld [vmem:[%s0 + $0xe8] sm:$0xf]
    %v99 = vld [vmem:[%s0 + $0xec] sm:$0xf]
    %v100 = vld [vmem:[%s0 + $0xf0] sm:$0xf]
    %v101 = vld [vmem:[%s0 + $0xf4] sm:$0xf]
    %v102 = vld [vmem:[%s0 + $0xf8] sm:$0xf]
    %v103 = vld [vmem:[%s0 + $0xfc] sm:$0xf]
    %v104 = vld [vmem:[%s1] sm:$0xf]
    %v105 = vld [vmem:[%s1 + $0x4] sm:$0xf]
    %v106 = vld [vmem:[%s1 + $0x8] sm:$0xf]
    %v107 = vld [vmem:[%s1 + $0xc] sm:$0xf]
    %v108 = vld [vmem:[%s1 + $0x10] sm:$0xf]
    %v109 = vld [vmem:[%s1 + $0x14] sm:$0xf]
    %v110 = vld [vmem:[%s1 + $0x18] sm:$0xf]
    %v111 = vld [vmem:[%s1 + $0x1c] sm:$0xf]
    %v112 = vld [vmem:[%s1 + $0x20] sm:$0xf]
    %v113 = vld [vmem:[%s1 + $0x24] sm:$0xf]
    %v114 = vld [vmem:[%s1 + $0x28] sm:$0xf]
    %v115 = vld [vmem:[%s1 + $0x2c] sm:$0xf]
    %v116 = vld [vmem:[%s1 + $0x30] sm:$0xf]
    %v117 = vld [vmem:[%s1 + $0x34] sm:$0xf]
    %v118 = vld [vmem:[%s1 + $0x38] sm:$0xf]
    %v119 = vld [vmem:[%s1 + $0x3c] sm:$0xf]
    %v120 = vld [vmem:[%s2] sm:$0x1]
    %v122 = vperm.slane %v120, 0
    %v188 = vunpack.c.l.b16 %v40
    %v189 = vunpack.c.l.b16 %v41
    %v190 = vunpack.c.l.b16 %v42
    %v191 = vunpack.c.l.b16 %v43
    %v192 = vunpack.c.l.b16 %v44
    %v193 = vunpack.c.l.b16 %v45
    %v194 = vunpack.c.l.b16 %v46
    %v195 = vunpack.c.l.b16 %v47
    %v196 = vunpack.c.l.b16 %v48
    %v197 = vunpack.c.l.b16 %v49
    %v198 = vunpack.c.l.b16 %v50
    %v199 = vunpack.c.l.b16 %v51
    %v200 = vunpack.c.l.b16 %v52
    %v201 = vunpack.c.l.b16 %v53
    %v202 = vunpack.c.l.b16 %v54
    %v203 = vunpack.c.l.b16 %v55
    %v204 = vunpack.c.l.b16 %v56
    %v205 = vunpack.c.l.b16 %v57
    %v206 = vunpack.c.l.b16 %v58
    %v207 = vunpack.c.l.b16 %v59
    %v208 = vunpack.c.l.b16 %v60
    %v209 = vunpack.c.l.b16 %v61
    %v210 = vunpack.c.l.b16 %v62
    %v211 = vunpack.c.l.b16 %v63
    %v212 = vunpack.c.l.b16 %v64
    %v213 = vunpack.c.l.b16 %v65
    %v214 = vunpack.c.l.b16 %v66
    %v215 = vunpack.c.l.b16 %v67
    %v216 = vunpack.c.l.b16 %v68
    %v217 = vunpack.c.l.b16 %v69
    %v218 = vunpack.c.l.b16 %v70
    %v219 = vunpack.c.l.b16 %v71
    %v220 = vunpack.c.l.b16 %v72
    %v221 = vunpack.c.l.b16 %v73
    %v222 = vunpack.c.l.b16 %v74
    %v223 = vunpack.c.l.b16 %v75
    %v224 = vunpack.c.l.b16 %v76
    %v225 = vunpack.c.l.b16 %v77
    %v226 = vunpack.c.l.b16 %v78
    %v227 = vunpack.c.l.b16 %v79
    %v228 = vunpack.c.l.b16 %v80
    %v229 = vunpack.c.l.b16 %v81
    %v230 = vunpack.c.l.b16 %v82
    %v231 = vunpack.c.l.b16 %v83
    %v232 = vunpack.c.l.b16 %v84
    %v233 = vunpack.c.l.b16 %v85
    %v234 = vunpack.c.l.b16 %v86
    %v235 = vunpack.c.l.b16 %v87
    %v236 = vunpack.c.l.b16 %v88
    %v237 = vunpack.c.l.b16 %v89
    %v238 = vunpack.c.l.b16 %v90
    %v239 = vunpack.c.l.b16 %v91
    %v240 = vunpack.c.l.b16 %v92
    %v241 = vunpack.c.l.b16 %v93
    %v242 = vunpack.c.l.b16 %v94
    %v243 = vunpack.c.l.b16 %v95
    %v244 = vunpack.c.l.b16 %v96
    %v245 = vunpack.c.l.b16 %v97
    %v246 = vunpack.c.l.b16 %v98
    %v247 = vunpack.c.l.b16 %v99
    %v248 = vunpack.c.l.b16 %v100
    %v249 = vunpack.c.l.b16 %v101
    %v250 = vunpack.c.l.b16 %v102
    %v251 = vunpack.c.l.b16 %v103
    %v252 = vpack.c.b16 %v189, %v188
    %v253 = vpack.c.b16 %v191, %v190
    %v254 = vpack.c.b16 %v193, %v192
    %v255 = vpack.c.b16 %v195, %v194
    %v256 = vpack.c.b16 %v197, %v196
    %v257 = vpack.c.b16 %v199, %v198
    %v258 = vpack.c.b16 %v201, %v200
    %v259 = vpack.c.b16 %v203, %v202
    %v260 = vpack.c.b16 %v205, %v204
    %v261 = vpack.c.b16 %v207, %v206
    %v262 = vpack.c.b16 %v209, %v208
    %v263 = vpack.c.b16 %v211, %v210
    %v264 = vpack.c.b16 %v213, %v212
    %v265 = vpack.c.b16 %v215, %v214
    %v266 = vpack.c.b16 %v217, %v216
    %v267 = vpack.c.b16 %v219, %v218
    %v268 = vpack.c.b16 %v221, %v220
    %v269 = vpack.c.b16 %v223, %v222
    %v270 = vpack.c.b16 %v225, %v224
    %v271 = vpack.c.b16 %v227, %v226
    %v272 = vpack.c.b16 %v229, %v228
    %v273 = vpack.c.b16 %v231, %v230
    %v274 = vpack.c.b16 %v233, %v232
    %v275 = vpack.c.b16 %v235, %v234
    %v276 = vpack.c.b16 %v237, %v236
    %v277 = vpack.c.b16 %v239, %v238
    %v278 = vpack.c.b16 %v241, %v240
    %v279 = vpack.c.b16 %v243, %v242
    %v280 = vpack.c.b16 %v245, %v244
    %v281 = vpack.c.b16 %v247, %v246
    %v282 = vpack.c.b16 %v249, %v248
    %v283 = vpack.c.b16 %v251, %v250
    %v332 = vunpack.c.l.b16 %v104
    %v333 = vunpack.c.l.b16 %v105
    %v334 = vunpack.c.l.b16 %v106
    %v335 = vunpack.c.l.b16 %v107
    %v336 = vunpack.c.l.b16 %v108
    %v337 = vunpack.c.l.b16 %v109
    %v338 = vunpack.c.l.b16 %v110
    %v339 = vunpack.c.l.b16 %v111
    %v340 = vunpack.c.l.b16 %v112
    %v341 = vunpack.c.l.b16 %v113
    %v342 = vunpack.c.l.b16 %v114
    %v343 = vunpack.c.l.b16 %v115
    %v344 = vunpack.c.l.b16 %v116
    %v345 = vunpack.c.l.b16 %v117
    %v346 = vunpack.c.l.b16 %v118
    %v347 = vunpack.c.l.b16 %v119
    %v348 = vpack.c.b16 %v333, %v332
    %v349 = vpack.c.b16 %v335, %v334
    %v350 = vpack.c.b16 %v337, %v336
    %v351 = vpack.c.b16 %v339, %v338
    %v352 = vpack.c.b16 %v341, %v340
    %v353 = vpack.c.b16 %v343, %v342
    %v354 = vpack.c.b16 %v345, %v344
    %v355 = vpack.c.b16 %v347, %v346
    %364 = vmatpush.bf16.msra.mxu0 %v355
    %365 = vmatpush.bf16.msra.mxu0 %v354
    %366 = vmatpush.bf16.msra.mxu0 %v353
    %367 = vmatpush.bf16.msra.mxu0 %v352
    %368 = vmatpush.bf16.msra.mxu0 %v351
    %369 = vmatpush.bf16.msra.mxu0 %v350
    %370 = vmatpush.bf16.msra.mxu0 %v349
    %371 = vmatpush.bf16.msra.mxu0 %v348
    %372 = vmatmul.bf16.gmra.mxu0 %v252
    %v373 = vpop.f32.mrf.mxu0
    %v374 = vadd.f32 %v122, %v373
    %v375 = vpop.f32.mrf.mxu0
    %v376 = vadd.f32 %v122, %v375
    %377 = vmatmul.bf16.gmra.mxu0 %v253
    %v378 = vpop.f32.mrf.mxu0
    %v379 = vadd.f32 %v122, %v378
    %v380 = vpop.f32.mrf.mxu0
    %v381 = vadd.f32 %v122, %v380
    %382 = vmatmul.bf16.gmra.mxu0 %v254
    %v383 = vpop.f32.mrf.mxu0
    %v384 = vadd.f32 %v122, %v383
    %v385 = vpop.f32.mrf.mxu0
    %v386 = vadd.f32 %v122, %v385
    %387 = vmatmul.bf16.gmra.mxu0 %v255
    %v388 = vpop.f32.mrf.mxu0
    %v389 = vadd.f32 %v122, %v388
    %v390 = vpop.f32.mrf.mxu0
    %v391 = vadd.f32 %v122, %v390
    %392 = vmatmul.bf16.gmra.mxu0 %v256
    %v393 = vpop.f32.mrf.mxu0
    %v394 = vadd.f32 %v122, %v393
    %v395 = vpop.f32.mrf.mxu0
    %v396 = vadd.f32 %v122, %v395
    %397 = vmatmul.bf16.gmra.mxu0 %v257
    %v398 = vpop.f32.mrf.mxu0
    %v399 = vadd.f32 %v122, %v398
    %v400 = vpop.f32.mrf.mxu0
    %v401 = vadd.f32 %v122, %v400
    %402 = vmatmul.bf16.gmra.mxu0 %v258
    %v403 = vpop.f32.mrf.mxu0
    %v404 = vadd.f32 %v122, %v403
    %v405 = vpop.f32.mrf.mxu0
    %v406 = vadd.f32 %v122, %v405
    %407 = vmatmul.bf16.gmra.mxu0 %v259
    %v408 = vpop.f32.mrf.mxu0
    %v409 = vadd.f32 %v122, %v408
    %v410 = vpop.f32.mrf.mxu0
    %v411 = vadd.f32 %v122, %v410
    %412 = vmatmul.bf16.gmra.mxu0 %v260
    %v413 = vpop.f32.mrf.mxu0
    %v414 = vadd.f32 %v122, %v413
    %v415 = vpop.f32.mrf.mxu0
    %v416 = vadd.f32 %v122, %v415
    %417 = vmatmul.bf16.gmra.mxu0 %v261
    %v418 = vpop.f32.mrf.mxu0
    %v419 = vadd.f32 %v122, %v418
    %v420 = vpop.f32.mrf.mxu0
    %v421 = vadd.f32 %v122, %v420
    %422 = vmatmul.bf16.gmra.mxu0 %v262
    %v423 = vpop.f32.mrf.mxu0
    %v424 = vadd.f32 %v122, %v423
    %v425 = vpop.f32.mrf.mxu0
    %v426 = vadd.f32 %v122, %v425
    %427 = vmatmul.bf16.gmra.mxu0 %v263
    %v428 = vpop.f32.mrf.mxu0
    %v429 = vadd.f32 %v122, %v428
    %v430 = vpop.f32.mrf.mxu0
    %v431 = vadd.f32 %v122, %v430
    %432 = vmatmul.bf16.gmra.mxu0 %v264
    %v433 = vpop.f32.mrf.mxu0
    %v434 = vadd.f32 %v122, %v433
    %v435 = vpop.f32.mrf.mxu0
    %v436 = vadd.f32 %v122, %v435
    %437 = vmatmul.bf16.gmra.mxu0 %v265
    %v438 = vpop.f32.mrf.mxu0
    %v439 = vadd.f32 %v122, %v438
    %v440 = vpop.f32.mrf.mxu0
    %v441 = vadd.f32 %v122, %v440
    %442 = vmatmul.bf16.gmra.mxu0 %v266
    %v443 = vpop.f32.mrf.mxu0
    %v444 = vadd.f32 %v122, %v443
    %v445 = vpop.f32.mrf.mxu0
    %v446 = vadd.f32 %v122, %v445
    %447 = vmatmul.bf16.gmra.mxu0 %v267
    %v448 = vpop.f32.mrf.mxu0
    %v449 = vadd.f32 %v122, %v448
    %v450 = vpop.f32.mrf.mxu0
    %v451 = vadd.f32 %v122, %v450
    %452 = vmatmul.bf16.gmra.mxu0 %v268
    %v453 = vpop.f32.mrf.mxu0
    %v454 = vadd.f32 %v122, %v453
    %v455 = vpop.f32.mrf.mxu0
    %v456 = vadd.f32 %v122, %v455
    %457 = vmatmul.bf16.gmra.mxu0 %v269
    %v458 = vpop.f32.mrf.mxu0
    %v459 = vadd.f32 %v122, %v458
    %v460 = vpop.f32.mrf.mxu0
    %v461 = vadd.f32 %v122, %v460
    %462 = vmatmul.bf16.gmra.mxu0 %v270
    %v463 = vpop.f32.mrf.mxu0
    %v464 = vadd.f32 %v122, %v463
    %v465 = vpop.f32.mrf.mxu0
    %v466 = vadd.f32 %v122, %v465
    %467 = vmatmul.bf16.gmra.mxu0 %v271
    %v468 = vpop.f32.mrf.mxu0
    %v469 = vadd.f32 %v122, %v468
    %v470 = vpop.f32.mrf.mxu0
    %v471 = vadd.f32 %v122, %v470
    %472 = vmatmul.bf16.gmra.mxu0 %v272
    %v473 = vpop.f32.mrf.mxu0
    %v474 = vadd.f32 %v122, %v473
    %v475 = vpop.f32.mrf.mxu0
    %v476 = vadd.f32 %v122, %v475
    %477 = vmatmul.bf16.gmra.mxu0 %v273
    %v478 = vpop.f32.mrf.mxu0
    %v479 = vadd.f32 %v122, %v478
    %v480 = vpop.f32.mrf.mxu0
    %v481 = vadd.f32 %v122, %v480
    %482 = vmatmul.bf16.gmra.mxu0 %v274
    %v483 = vpop.f32.mrf.mxu0
    %v484 = vadd.f32 %v122, %v483
    %v485 = vpop.f32.mrf.mxu0
    %v486 = vadd.f32 %v122, %v485
    %487 = vmatmul.bf16.gmra.mxu0 %v275
    %v488 = vpop.f32.mrf.mxu0
    %v489 = vadd.f32 %v122, %v488
    %v490 = vpop.f32.mrf.mxu0
    %v491 = vadd.f32 %v122, %v490
    %492 = vmatmul.bf16.gmra.mxu0 %v276
    %v493 = vpop.f32.mrf.mxu0
    %v494 = vadd.f32 %v122, %v493
    %v495 = vpop.f32.mrf.mxu0
    %v496 = vadd.f32 %v122, %v495
    %497 = vmatmul.bf16.gmra.mxu0 %v277
    %v498 = vpop.f32.mrf.mxu0
    %v499 = vadd.f32 %v122, %v498
    %v500 = vpop.f32.mrf.mxu0
    %v501 = vadd.f32 %v122, %v500
    %502 = vmatmul.bf16.gmra.mxu0 %v278
    %v503 = vpop.f32.mrf.mxu0
    %v504 = vadd.f32 %v122, %v503
    %v505 = vpop.f32.mrf.mxu0
    %v506 = vadd.f32 %v122, %v505
    %507 = vmatmul.bf16.gmra.mxu0 %v279
    %v508 = vpop.f32.mrf.mxu0
    %v509 = vadd.f32 %v122, %v508
    %v510 = vpop.f32.mrf.mxu0
    %v511 = vadd.f32 %v122, %v510
    %512 = vmatmul.bf16.gmra.mxu0 %v280
    %v513 = vpop.f32.mrf.mxu0
    %v514 = vadd.f32 %v122, %v513
    %v515 = vpop.f32.mrf.mxu0
    %v516 = vadd.f32 %v122, %v515
    %517 = vmatmul.bf16.gmra.mxu0 %v281
    %v518 = vpop.f32.mrf.mxu0
    %v519 = vadd.f32 %v122, %v518
    %v520 = vpop.f32.mrf.mxu0
    %v521 = vadd.f32 %v122, %v520
    %522 = vmatmul.bf16.gmra.mxu0 %v282
    %v523 = vpop.f32.mrf.mxu0
    %v524 = vadd.f32 %v122, %v523
    %v525 = vpop.f32.mrf.mxu0
    %v526 = vadd.f32 %v122, %v525
    %527 = vmatmul.bf16.gmra.mxu0 %v283
    %v528 = vpop.f32.mrf.mxu0
    %v529 = vadd.f32 %v122, %v528
    %v530 = vpop.f32.mrf.mxu0
    %v531 = vadd.f32 %v122, %v530
    %532 = vdwg.mxu0
    %v533 = vmax.f32 %v374, 0.0
    %v534 = vmax.f32 %v376, 0.0
    %v535 = vmax.f32 %v379, 0.0
    %v536 = vmax.f32 %v381, 0.0
    %v537 = vmax.f32 %v384, 0.0
    %v538 = vmax.f32 %v386, 0.0
    %v539 = vmax.f32 %v389, 0.0
    %v540 = vmax.f32 %v391, 0.0
    %v541 = vmax.f32 %v394, 0.0
    %v542 = vmax.f32 %v396, 0.0
    %v543 = vmax.f32 %v399, 0.0
    %v544 = vmax.f32 %v401, 0.0
    %v545 = vmax.f32 %v404, 0.0
    %v546 = vmax.f32 %v406, 0.0
    %v547 = vmax.f32 %v409, 0.0
    %v548 = vmax.f32 %v411, 0.0
    %v549 = vmax.f32 %v414, 0.0
    %v550 = vmax.f32 %v416, 0.0
    %v551 = vmax.f32 %v419, 0.0
    %v552 = vmax.f32 %v421, 0.0
    %v553 = vmax.f32 %v424, 0.0
    %v554 = vmax.f32 %v426, 0.0
    %v555 = vmax.f32 %v429, 0.0
    %v556 = vmax.f32 %v431, 0.0
    %v557 = vmax.f32 %v434, 0.0
    %v558 = vmax.f32 %v436, 0.0
    %v559 = vmax.f32 %v439, 0.0
    %v560 = vmax.f32 %v441, 0.0
    %v561 = vmax.f32 %v444, 0.0
    %v562 = vmax.f32 %v446, 0.0
    %v563 = vmax.f32 %v449, 0.0
    %v564 = vmax.f32 %v451, 0.0
    %v565 = vmax.f32 %v454, 0.0
    %v566 = vmax.f32 %v456, 0.0
    %v567 = vmax.f32 %v459, 0.0
    %v568 = vmax.f32 %v461, 0.0
    %v569 = vmax.f32 %v464, 0.0
    %v570 = vmax.f32 %v466, 0.0
    %v571 = vmax.f32 %v469, 0.0
    %v572 = vmax.f32 %v471, 0.0
    %v573 = vmax.f32 %v474, 0.0
    %v574 = vmax.f32 %v476, 0.0
    %v575 = vmax.f32 %v479, 0.0
    %v576 = vmax.f32 %v481, 0.0
    %v577 = vmax.f32 %v484, 0.0
    %v578 = vmax.f32 %v486, 0.0
    %v579 = vmax.f32 %v489, 0.0
    %v580 = vmax.f32 %v491, 0.0
    %v581 = vmax.f32 %v494, 0.0
    %v582 = vmax.f32 %v496, 0.0
    %v583 = vmax.f32 %v499, 0.0
    %v584 = vmax.f32 %v501, 0.0
    %v585 = vmax.f32 %v504, 0.0
    %v586 = vmax.f32 %v506, 0.0
    %v587 = vmax.f32 %v509, 0.0
    %v588 = vmax.f32 %v511, 0.0
    %v589 = vmax.f32 %v514, 0.0
    %v590 = vmax.f32 %v516, 0.0
    %v591 = vmax.f32 %v519, 0.0
    %v592 = vmax.f32 %v521, 0.0
    %v593 = vmax.f32 %v524, 0.0
    %v594 = vmax.f32 %v526, 0.0
    %v595 = vmax.f32 %v529, 0.0
    %v596 = vmax.f32 %v531, 0.0
    %v597 = vpack.c.bf16 %v533, %v533
    %v598 = vpack.c.bf16 %v534, %v534
    %v599 = vpack.c.bf16 %v535, %v535
    %v600 = vpack.c.bf16 %v536, %v536
    %v601 = vpack.c.bf16 %v537, %v537
    %v602 = vpack.c.bf16 %v538, %v538
    %v603 = vpack.c.bf16 %v539, %v539
    %v604 = vpack.c.bf16 %v540, %v540
    %v605 = vpack.c.bf16 %v541, %v541
    %v606 = vpack.c.bf16 %v542, %v542
    %v607 = vpack.c.bf16 %v543, %v543
    %v608 = vpack.c.bf16 %v544, %v544
    %v609 = vpack.c.bf16 %v545, %v545
    %v610 = vpack.c.bf16 %v546, %v546
    %v611 = vpack.c.bf16 %v547, %v547
    %v612 = vpack.c.bf16 %v548, %v548
    %v613 = vpack.c.bf16 %v549, %v549
    %v614 = vpack.c.bf16 %v550, %v550
    %v615 = vpack.c.bf16 %v551, %v551
    %v616 = vpack.c.bf16 %v552, %v552
    %v617 = vpack.c.bf16 %v553, %v553
    %v618 = vpack.c.bf16 %v554, %v554
    %v619 = vpack.c.bf16 %v555, %v555
    %v620 = vpack.c.bf16 %v556, %v556
    %v621 = vpack.c.bf16 %v557, %v557
    %v622 = vpack.c.bf16 %v558, %v558
    %v623 = vpack.c.bf16 %v559, %v559
    %v624 = vpack.c.bf16 %v560, %v560
    %v625 = vpack.c.bf16 %v561, %v561
    %v626 = vpack.c.bf16 %v562, %v562
    %v627 = vpack.c.bf16 %v563, %v563
    %v628 = vpack.c.bf16 %v564, %v564
    %v629 = vpack.c.bf16 %v565, %v565
    %v630 = vpack.c.bf16 %v566, %v566
    %v631 = vpack.c.bf16 %v567, %v567
    %v632 = vpack.c.bf16 %v568, %v568
    %v633 = vpack.c.bf16 %v569, %v569
    %v634 = vpack.c.bf16 %v570, %v570
    %v635 = vpack.c.bf16 %v571, %v571
    %v636 = vpack.c.bf16 %v572, %v572
    %v637 = vpack.c.bf16 %v573, %v573
    %v638 = vpack.c.bf16 %v574, %v574
    %v639 = vpack.c.bf16 %v575, %v575
    %v640 = vpack.c.bf16 %v576, %v576
    %v641 = vpack.c.bf16 %v577, %v577
    %v642 = vpack.c.bf16 %v578, %v578
    %v643 = vpack.c.bf16 %v579, %v579
    %v644 = vpack.c.bf16 %v580, %v580
    %v645 = vpack.c.bf16 %v581, %v581
    %v646 = vpack.c.bf16 %v582, %v582
    %v647 = vpack.c.bf16 %v583, %v583
    %v648 = vpack.c.bf16 %v584, %v584
    %v649 = vpack.c.bf16 %v585, %v585
    %v650 = vpack.c.bf16 %v586, %v586
    %v651 = vpack.c.bf16 %v587, %v587
    %v652 = vpack.c.bf16 %v588, %v588
    %v653 = vpack.c.bf16 %v589, %v589
    %v654 = vpack.c.bf16 %v590, %v590
    %v655 = vpack.c.bf16 %v591, %v591
    %v656 = vpack.c.bf16 %v592, %v592
    %v657 = vpack.c.bf16 %v593, %v593
    %v658 = vpack.c.bf16 %v594, %v594
    %v659 = vpack.c.bf16 %v595, %v595
    %v660 = vpack.c.bf16 %v596, %v596
    %661 = vst [vmem:[#allocation2] sm:$0xf] %v597
    %662 = vst [vmem:[#allocation2 + $0x4] sm:$0xf] %v598
    %663 = vst [vmem:[#allocation2 + $0x8] sm:$0xf] %v599
    %664 = vst [vmem:[#allocation2 + $0xc] sm:$0xf] %v600
    %665 = vst [vmem:[#allocation2 + $0x10] sm:$0xf] %v601
    %666 = vst [vmem:[#allocation2 + $0x14] sm:$0xf] %v602
    %667 = vst [vmem:[#allocation2 + $0x18] sm:$0xf] %v603
    %668 = vst [vmem:[#allocation2 + $0x1c] sm:$0xf] %v604
    %669 = vst [vmem:[#allocation2 + $0x20] sm:$0xf] %v605
    %670 = vst [vmem:[#allocation2 + $0x24] sm:$0xf] %v606
    %671 = vst [vmem:[#allocation2 + $0x28] sm:$0xf] %v607
    %672 = vst [vmem:[#allocation2 + $0x2c] sm:$0xf] %v608
    %673 = vst [vmem:[#allocation2 + $0x30] sm:$0xf] %v609
    %674 = vst [vmem:[#allocation2 + $0x34] sm:$0xf] %v610
    %675 = vst [vmem:[#allocation2 + $0x38] sm:$0xf] %v611
    %676 = vst [vmem:[#allocation2 + $0x3c] sm:$0xf] %v612
    %677 = vst [vmem:[#allocation2 + $0x40] sm:$0xf] %v613
    %678 = vst [vmem:[#allocation2 + $0x44] sm:$0xf] %v614
    %679 = vst [vmem:[#allocation2 + $0x48] sm:$0xf] %v615
    %680 = vst [vmem:[#allocation2 + $0x4c] sm:$0xf] %v616
    %681 = vst [vmem:[#allocation2 + $0x50] sm:$0xf] %v617
    %682 = vst [vmem:[#allocation2 + $0x54] sm:$0xf] %v618
    %683 = vst [vmem:[#allocation2 + $0x58] sm:$0xf] %v619
    %684 = vst [vmem:[#allocation2 + $0x5c] sm:$0xf] %v620
    %685 = vst [vmem:[#allocation2 + $0x60] sm:$0xf] %v621
    %686 = vst [vmem:[#allocation2 + $0x64] sm:$0xf] %v622
    %687 = vst [vmem:[#allocation2 + $0x68] sm:$0xf] %v623
    %688 = vst [vmem:[#allocation2 + $0x6c] sm:$0xf] %v624
    %689 = vst [vmem:[#allocation2 + $0x70] sm:$0xf] %v625
    %690 = vst [vmem:[#allocation2 + $0x74] sm:$0xf] %v626
    %691 = vst [vmem:[#allocation2 + $0x78] sm:$0xf] %v627
    %692 = vst [vmem:[#allocation2 + $0x7c] sm:$0xf] %v628
    %693 = vst [vmem:[#allocation2 + $0x80] sm:$0xf] %v629
    %694 = vst [vmem:[#allocation2 + $0x84] sm:$0xf] %v630
    %695 = vst [vmem:[#allocation2 + $0x88] sm:$0xf] %v631
    %696 = vst [vmem:[#allocation2 + $0x8c] sm:$0xf] %v632
    %697 = vst [vmem:[#allocation2 + $0x90] sm:$0xf] %v633
    %698 = vst [vmem:[#allocation2 + $0x94] sm:$0xf] %v634
    %699 = vst [vmem:[#allocation2 + $0x98] sm:$0xf] %v635
    %700 = vst [vmem:[#allocation2 + $0x9c] sm:$0xf] %v636
    %701 = vst [vmem:[#allocation2 + $0xa0] sm:$0xf] %v637
    %702 = vst [vmem:[#allocation2 + $0xa4] sm:$0xf] %v638
    %703 = vst [vmem:[#allocation2 + $0xa8] sm:$0xf] %v639
    %704 = vst [vmem:[#allocation2 + $0xac] sm:$0xf] %v640
    %705 = vst [vmem:[#allocation2 + $0xb0] sm:$0xf] %v641
    %706 = vst [vmem:[#allocation2 + $0xb4] sm:$0xf] %v642
    %707 = vst [vmem:[#allocation2 + $0xb8] sm:$0xf] %v643
    %708 = vst [vmem:[#allocation2 + $0xbc] sm:$0xf] %v644
    %709 = vst [vmem:[#allocation2 + $0xc0] sm:$0xf] %v645
    %710 = vst [vmem:[#allocation2 + $0xc4] sm:$0xf] %v646
    %711 = vst [vmem:[#allocation2 + $0xc8] sm:$0xf] %v647
    %712 = vst [vmem:[#allocation2 + $0xcc] sm:$0xf] %v648
    %713 = vst [vmem:[#allocation2 + $0xd0] sm:$0xf] %v649
    %714 = vst [vmem:[#allocation2 + $0xd4] sm:$0xf] %v650
    %715 = vst [vmem:[#allocation2 + $0xd8] sm:$0xf] %v651
    %716 = vst [vmem:[#allocation2 + $0xdc] sm:$0xf] %v652
    %717 = vst [vmem:[#allocation2 + $0xe0] sm:$0xf] %v653
    %718 = vst [vmem:[#allocation2 + $0xe4] sm:$0xf] %v654
    %719 = vst [vmem:[#allocation2 + $0xe8] sm:$0xf] %v655
    %720 = vst [vmem:[#allocation2 + $0xec] sm:$0xf] %v656
    %721 = vst [vmem:[#allocation2 + $0xf0] sm:$0xf] %v657
    %722 = vst [vmem:[#allocation2 + $0xf4] sm:$0xf] %v658
    %723 = vst [vmem:[#allocation2 + $0xf8] sm:$0xf] %v659
    %724 = vst [vmem:[#allocation2 + $0xfc] sm:$0xf] %v660
    %v725 = vld [vmem:[%s3] sm:$0xff]
    %v726 = vld [vmem:[%s3 + $0x8] sm:$0xff]
    %v727 = vld [vmem:[%s3 + $0x10] sm:$0xff]
    %v728 = vld [vmem:[%s3 + $0x18] sm:$0xff]
    %v729 = vld [vmem:[%s3 + $0x20] sm:$0xff]
    %v730 = vld [vmem:[%s3 + $0x28] sm:$0xff]
    %v731 = vld [vmem:[%s3 + $0x30] sm:$0xff]
    %v732 = vld [vmem:[%s3 + $0x38] sm:$0xff]
    %v733 = vld [vmem:[%s3 + $0x40] sm:$0xff]
    %v734 = vld [vmem:[%s3 + $0x48] sm:$0xff]
    %v735 = vld [vmem:[%s3 + $0x50] sm:$0xff]
    %v736 = vld [vmem:[%s3 + $0x58] sm:$0xff]
    %v737 = vld [vmem:[%s3 + $0x60] sm:$0xff]
    %v738 = vld [vmem:[%s3 + $0x68] sm:$0xff]
    %v739 = vld [vmem:[%s3 + $0x70] sm:$0xff]
    %v740 = vld [vmem:[%s3 + $0x78] sm:$0xff]
    %v741 = vld [vmem:[%s3 + $0x80] sm:$0xff]
    %v742 = vld [vmem:[%s3 + $0x88] sm:$0xff]
    %v743 = vld [vmem:[%s3 + $0x90] sm:$0xff]
    %v744 = vld [vmem:[%s3 + $0x98] sm:$0xff]
    %v745 = vld [vmem:[%s3 + $0xa0] sm:$0xff]
    %v746 = vld [vmem:[%s3 + $0xa8] sm:$0xff]
    %v747 = vld [vmem:[%s3 + $0xb0] sm:$0xff]
    %v748 = vld [vmem:[%s3 + $0xb8] sm:$0xff]
    %v749 = vld [vmem:[%s3 + $0xc0] sm:$0xff]
    %v750 = vld [vmem:[%s3 + $0xc8] sm:$0xff]
    %v751 = vld [vmem:[%s3 + $0xd0] sm:$0xff]
    %v752 = vld [vmem:[%s3 + $0xd8] sm:$0xff]
    %v753 = vld [vmem:[%s3 + $0xe0] sm:$0xff]
    %v754 = vld [vmem:[%s3 + $0xe8] sm:$0xff]
    %v755 = vld [vmem:[%s3 + $0xf0] sm:$0xff]
    %v756 = vld [vmem:[%s3 + $0xf8] sm:$0xff]
    %v757 = vld [vmem:[%s3 + $0x100] sm:$0xff]
    %v758 = vld [vmem:[%s3 + $0x108] sm:$0xff]
    %v759 = vld [vmem:[%s3 + $0x110] sm:$0xff]
    %v760 = vld [vmem:[%s3 + $0x118] sm:$0xff]
    %v761 = vld [vmem:[%s3 + $0x120] sm:$0xff]
    %v762 = vld [vmem:[%s3 + $0x128] sm:$0xff]
    %v763 = vld [vmem:[%s3 + $0x130] sm:$0xff]
    %v764 = vld [vmem:[%s3 + $0x138] sm:$0xff]
    %v765 = vld [vmem:[%s3 + $0x140] sm:$0xff]
    %v766 = vld [vmem:[%s3 + $0x148] sm:$0xff]
    %v767 = vld [vmem:[%s3 + $0x150] sm:$0xff]
    %v768 = vld [vmem:[%s3 + $0x158] sm:$0xff]
    %v769 = vld [vmem:[%s3 + $0x160] sm:$0xff]
    %v770 = vld [vmem:[%s3 + $0x168] sm:$0xff]
    %v771 = vld [vmem:[%s3 + $0x170] sm:$0xff]
    %v772 = vld [vmem:[%s3 + $0x178] sm:$0xff]
    %v773 = vld [vmem:[%s3 + $0x180] sm:$0xff]
    %v774 = vld [vmem:[%s3 + $0x188] sm:$0xff]
    %v775 = vld [vmem:[%s3 + $0x190] sm:$0xff]
    %v776 = vld [vmem:[%s3 + $0x198] sm:$0xff]
    %v777 = vld [vmem:[%s3 + $0x1a0] sm:$0xff]
    %v778 = vld [vmem:[%s3 + $0x1a8] sm:$0xff]
    %v779 = vld [vmem:[%s3 + $0x1b0] sm:$0xff]
    %v780 = vld [vmem:[%s3 + $0x1b8] sm:$0xff]
    %v781 = vld [vmem:[%s3 + $0x1c0] sm:$0xff]
    %v782 = vld [vmem:[%s3 + $0x1c8] sm:$0xff]
    %v783 = vld [vmem:[%s3 + $0x1d0] sm:$0xff]
    %v784 = vld [vmem:[%s3 + $0x1d8] sm:$0xff]
    %v785 = vld [vmem:[%s3 + $0x1e0] sm:$0xff]
    %v786 = vld [vmem:[%s3 + $0x1e8] sm:$0xff]
    %v787 = vld [vmem:[%s3 + $0x1f0] sm:$0xff]
    %v788 = vld [vmem:[%s3 + $0x1f8] sm:$0xff]
    %v789 = vld [vmem:[%s3 + $0x200] sm:$0xff]
    %v790 = vld [vmem:[%s3 + $0x208] sm:$0xff]
    %v791 = vld [vmem:[%s3 + $0x210] sm:$0xff]
    %v792 = vld [vmem:[%s3 + $0x218] sm:$0xff]
    %v793 = vld [vmem:[%s3 + $0x220] sm:$0xff]
    %v794 = vld [vmem:[%s3 + $0x228] sm:$0xff]
    %v795 = vld [vmem:[%s3 + $0x230] sm:$0xff]
    %v796 = vld [vmem:[%s3 + $0x238] sm:$0xff]
    %v797 = vld [vmem:[%s3 + $0x240] sm:$0xff]
    %v798 = vld [vmem:[%s3 + $0x248] sm:$0xff]
    %v799 = vld [vmem:[%s3 + $0x250] sm:$0xff]
    %v800 = vld [vmem:[%s3 + $0x258] sm:$0xff]
    %v801 = vld [vmem:[%s3 + $0x260] sm:$0xff]
    %v802 = vld [vmem:[%s3 + $0x268] sm:$0xff]
    %v803 = vld [vmem:[%s3 + $0x270] sm:$0xff]
    %v804 = vld [vmem:[%s3 + $0x278] sm:$0xff]
    %v805 = vld [vmem:[%s3 + $0x280] sm:$0xff]
    %v806 = vld [vmem:[%s3 + $0x288] sm:$0xff]
    %v807 = vld [vmem:[%s3 + $0x290] sm:$0xff]
    %v808 = vld [vmem:[%s3 + $0x298] sm:$0xff]
    %v809 = vld [vmem:[%s3 + $0x2a0] sm:$0xff]
    %v810 = vld [vmem:[%s3 + $0x2a8] sm:$0xff]
    %v811 = vld [vmem:[%s3 + $0x2b0] sm:$0xff]
    %v812 = vld [vmem:[%s3 + $0x2b8] sm:$0xff]
    %v813 = vld [vmem:[%s3 + $0x2c0] sm:$0xff]
    %v814 = vld [vmem:[%s3 + $0x2c8] sm:$0xff]
    %v815 = vld [vmem:[%s3 + $0x2d0] sm:$0xff]
    %v816 = vld [vmem:[%s3 + $0x2d8] sm:$0xff]
    %v817 = vld [vmem:[%s3 + $0x2e0] sm:$0xff]
    %v818 = vld [vmem:[%s3 + $0x2e8] sm:$0xff]
    %v819 = vld [vmem:[%s3 + $0x2f0] sm:$0xff]
    %v820 = vld [vmem:[%s3 + $0x2f8] sm:$0xff]
    %v821 = vld [vmem:[%s3 + $0x300] sm:$0xff]
    %v822 = vld [vmem:[%s3 + $0x308] sm:$0xff]
    %v823 = vld [vmem:[%s3 + $0x310] sm:$0xff]
    %v824 = vld [vmem:[%s3 + $0x318] sm:$0xff]
    %v825 = vld [vmem:[%s3 + $0x320] sm:$0xff]
    %v826 = vld [vmem:[%s3 + $0x328] sm:$0xff]
    %v827 = vld [vmem:[%s3 + $0x330] sm:$0xff]
    %v828 = vld [vmem:[%s3 + $0x338] sm:$0xff]
    %v829 = vld [vmem:[%s3 + $0x340] sm:$0xff]
    %v830 = vld [vmem:[%s3 + $0x348] sm:$0xff]
    %v831 = vld [vmem:[%s3 + $0x350] sm:$0xff]
    %v832 = vld [vmem:[%s3 + $0x358] sm:$0xff]
    %v833 = vld [vmem:[%s3 + $0x360] sm:$0xff]
    %v834 = vld [vmem:[%s3 + $0x368] sm:$0xff]
    %v835 = vld [vmem:[%s3 + $0x370] sm:$0xff]
    %v836 = vld [vmem:[%s3 + $0x378] sm:$0xff]
    %v837 = vld [vmem:[%s3 + $0x380] sm:$0xff]
    %v838 = vld [vmem:[%s3 + $0x388] sm:$0xff]
    %v839 = vld [vmem:[%s3 + $0x390] sm:$0xff]
    %v840 = vld [vmem:[%s3 + $0x398] sm:$0xff]
    %v841 = vld [vmem:[%s3 + $0x3a0] sm:$0xff]
    %v842 = vld [vmem:[%s3 + $0x3a8] sm:$0xff]
    %v843 = vld [vmem:[%s3 + $0x3b0] sm:$0xff]
    %v844 = vld [vmem:[%s3 + $0x3b8] sm:$0xff]
    %v845 = vld [vmem:[%s3 + $0x3c0] sm:$0xff]
    %v846 = vld [vmem:[%s3 + $0x3c8] sm:$0xff]
    %v847 = vld [vmem:[%s3 + $0x3d0] sm:$0xff]
    %v848 = vld [vmem:[%s3 + $0x3d8] sm:$0xff]
    %v849 = vld [vmem:[%s3 + $0x3e0] sm:$0xff]
    %v850 = vld [vmem:[%s3 + $0x3e8] sm:$0xff]
    %v851 = vld [vmem:[%s3 + $0x3f0] sm:$0xff]
    %v852 = vld [vmem:[%s3 + $0x3f8] sm:$0xff]
    %v853 = vld [vmem:[%s4] sm:$0xf]
    %v854 = vld [vmem:[%s4 + $0x4] sm:$0xf]
    %v855 = vld [vmem:[%s4 + $0x8] sm:$0xf]
    %v856 = vld [vmem:[%s4 + $0xc] sm:$0xf]
    %v857 = vld [vmem:[%s4 + $0x10] sm:$0xf]
    %v858 = vld [vmem:[%s4 + $0x14] sm:$0xf]
    %v859 = vld [vmem:[%s4 + $0x18] sm:$0xf]
    %v860 = vld [vmem:[%s4 + $0x1c] sm:$0xf]
    %v861 = vld [vmem:[%s4 + $0x20] sm:$0xf]
    %v862 = vld [vmem:[%s4 + $0x24] sm:$0xf]
    %v863 = vld [vmem:[%s4 + $0x28] sm:$0xf]
    %v864 = vld [vmem:[%s4 + $0x2c] sm:$0xf]
    %v865 = vld [vmem:[%s4 + $0x30] sm:$0xf]
    %v866 = vld [vmem:[%s4 + $0x34] sm:$0xf]
    %v867 = vld [vmem:[%s4 + $0x38] sm:$0xf]
    %v868 = vld [vmem:[%s4 + $0x3c] sm:$0xf]
    %v869 = vld [vmem:[%s4 + $0x40] sm:$0xf]
    %v870 = vld [vmem:[%s4 + $0x44] sm:$0xf]
    %v871 = vld [vmem:[%s4 + $0x48] sm:$0xf]
    %v872 = vld [vmem:[%s4 + $0x4c] sm:$0xf]
    %v873 = vld [vmem:[%s4 + $0x50] sm:$0xf]
    %v874 = vld [vmem:[%s4 + $0x54] sm:$0xf]
    %v875 = vld [vmem:[%s4 + $0x58] sm:$0xf]
    %v876 = vld [vmem:[%s4 + $0x5c] sm:$0xf]
    %v877 = vld [vmem:[%s4 + $0x60] sm:$0xf]
    %v878 = vld [vmem:[%s4 + $0x64] sm:$0xf]
    %v879 = vld [vmem:[%s4 + $0x68] sm:$0xf]
    %v880 = vld [vmem:[%s4 + $0x6c] sm:$0xf]
    %v881 = vld [vmem:[%s4 + $0x70] sm:$0xf]
    %v882 = vld [vmem:[%s4 + $0x74] sm:$0xf]
    %v883 = vld [vmem:[%s4 + $0x78] sm:$0xf]
    %v884 = vld [vmem:[%s4 + $0x7c] sm:$0xf]
    %v885 = vld [vmem:[%s4 + $0x80] sm:$0xf]
    %v886 = vld [vmem:[%s4 + $0x84] sm:$0xf]
    %v887 = vld [vmem:[%s4 + $0x88] sm:$0xf]
    %v888 = vld [vmem:[%s4 + $0x8c] sm:$0xf]
    %v889 = vld [vmem:[%s4 + $0x90] sm:$0xf]
    %v890 = vld [vmem:[%s4 + $0x94] sm:$0xf]
    %v891 = vld [vmem:[%s4 + $0x98] sm:$0xf]
    %v892 = vld [vmem:[%s4 + $0x9c] sm:$0xf]
    %v893 = vld [vmem:[%s4 + $0xa0] sm:$0xf]
    %v894 = vld [vmem:[%s4 + $0xa4] sm:$0xf]
    %v895 = vld [vmem:[%s4 + $0xa8] sm:$0xf]
    %v896 = vld [vmem:[%s4 + $0xac] sm:$0xf]
    %v897 = vld [vmem:[%s4 + $0xb0] sm:$0xf]
    %v898 = vld [vmem:[%s4 + $0xb4] sm:$0xf]
    %v899 = vld [vmem:[%s4 + $0xb8] sm:$0xf]
    %v900 = vld [vmem:[%s4 + $0xbc] sm:$0xf]
    %v901 = vld [vmem:[%s4 + $0xc0] sm:$0xf]
    %v902 = vld [vmem:[%s4 + $0xc4] sm:$0xf]
    %v903 = vld [vmem:[%s4 + $0xc8] sm:$0xf]
    %v904 = vld [vmem:[%s4 + $0xcc] sm:$0xf]
    %v905 = vld [vmem:[%s4 + $0xd0] sm:$0xf]
    %v906 = vld [vmem:[%s4 + $0xd4] sm:$0xf]
    %v907 = vld [vmem:[%s4 + $0xd8] sm:$0xf]
    %v908 = vld [vmem:[%s4 + $0xdc] sm:$0xf]
    %v909 = vld [vmem:[%s4 + $0xe0] sm:$0xf]
    %v910 = vld [vmem:[%s4 + $0xe4] sm:$0xf]
    %v911 = vld [vmem:[%s4 + $0xe8] sm:$0xf]
    %v912 = vld [vmem:[%s4 + $0xec] sm:$0xf]
    %v913 = vld [vmem:[%s4 + $0xf0] sm:$0xf]
    %v914 = vld [vmem:[%s4 + $0xf4] sm:$0xf]
    %v915 = vld [vmem:[%s4 + $0xf8] sm:$0xf]
    %v916 = vld [vmem:[%s4 + $0xfc] sm:$0xf]
    %v917 = vld [vmem:[%s4 + $0x100] sm:$0xf]
    %v918 = vld [vmem:[%s4 + $0x104] sm:$0xf]
    %v919 = vld [vmem:[%s4 + $0x108] sm:$0xf]
    %v920 = vld [vmem:[%s4 + $0x10c] sm:$0xf]
    %v921 = vld [vmem:[%s4 + $0x110] sm:$0xf]
    %v922 = vld [vmem:[%s4 + $0x114] sm:$0xf]
    %v923 = vld [vmem:[%s4 + $0x118] sm:$0xf]
    %v924 = vld [vmem:[%s4 + $0x11c] sm:$0xf]
    %v925 = vld [vmem:[%s4 + $0x120] sm:$0xf]
    %v926 = vld [vmem:[%s4 + $0x124] sm:$0xf]
    %v927 = vld [vmem:[%s4 + $0x128] sm:$0xf]
    %v928 = vld [vmem:[%s4 + $0x12c] sm:$0xf]
    %v929 = vld [vmem:[%s4 + $0x130] sm:$0xf]
    %v930 = vld [vmem:[%s4 + $0x134] sm:$0xf]
    %v931 = vld [vmem:[%s4 + $0x138] sm:$0xf]
    %v932 = vld [vmem:[%s4 + $0x13c] sm:$0xf]
    %v933 = vld [vmem:[%s4 + $0x140] sm:$0xf]
    %v934 = vld [vmem:[%s4 + $0x144] sm:$0xf]
    %v935 = vld [vmem:[%s4 + $0x148] sm:$0xf]
    %v936 = vld [vmem:[%s4 + $0x14c] sm:$0xf]
    %v937 = vld [vmem:[%s4 + $0x150] sm:$0xf]
    %v938 = vld [vmem:[%s4 + $0x154] sm:$0xf]
    %v939 = vld [vmem:[%s4 + $0x158] sm:$0xf]
    %v940 = vld [vmem:[%s4 + $0x15c] sm:$0xf]
    %v941 = vld [vmem:[%s4 + $0x160] sm:$0xf]
    %v942 = vld [vmem:[%s4 + $0x164] sm:$0xf]
    %v943 = vld [vmem:[%s4 + $0x168] sm:$0xf]
    %v944 = vld [vmem:[%s4 + $0x16c] sm:$0xf]
    %v945 = vld [vmem:[%s4 + $0x170] sm:$0xf]
    %v946 = vld [vmem:[%s4 + $0x174] sm:$0xf]
    %v947 = vld [vmem:[%s4 + $0x178] sm:$0xf]
    %v948 = vld [vmem:[%s4 + $0x17c] sm:$0xf]
    %v949 = vld [vmem:[%s4 + $0x180] sm:$0xf]
    %v950 = vld [vmem:[%s4 + $0x184] sm:$0xf]
    %v951 = vld [vmem:[%s4 + $0x188] sm:$0xf]
    %v952 = vld [vmem:[%s4 + $0x18c] sm:$0xf]
    %v953 = vld [vmem:[%s4 + $0x190] sm:$0xf]
    %v954 = vld [vmem:[%s4 + $0x194] sm:$0xf]
    %v955 = vld [vmem:[%s4 + $0x198] sm:$0xf]
    %v956 = vld [vmem:[%s4 + $0x19c] sm:$0xf]
    %v957 = vld [vmem:[%s4 + $0x1a0] sm:$0xf]
    %v958 = vld [vmem:[%s4 + $0x1a4] sm:$0xf]
    %v959 = vld [vmem:[%s4 + $0x1a8] sm:$0xf]
    %v960 = vld [vmem:[%s4 + $0x1ac] sm:$0xf]
    %v961 = vld [vmem:[%s4 + $0x1b0] sm:$0xf]
    %v962 = vld [vmem:[%s4 + $0x1b4] sm:$0xf]
    %v963 = vld [vmem:[%s4 + $0x1b8] sm:$0xf]
    %v964 = vld [vmem:[%s4 + $0x1bc] sm:$0xf]
    %v965 = vld [vmem:[%s4 + $0x1c0] sm:$0xf]
    %v966 = vld [vmem:[%s4 + $0x1c4] sm:$0xf]
    %v967 = vld [vmem:[%s4 + $0x1c8] sm:$0xf]
    %v968 = vld [vmem:[%s4 + $0x1cc] sm:$0xf]
    %v969 = vld [vmem:[%s4 + $0x1d0] sm:$0xf]
    %v970 = vld [vmem:[%s4 + $0x1d4] sm:$0xf]
    %v971 = vld [vmem:[%s4 + $0x1d8] sm:$0xf]
    %v972 = vld [vmem:[%s4 + $0x1dc] sm:$0xf]
    %v973 = vld [vmem:[%s4 + $0x1e0] sm:$0xf]
    %v974 = vld [vmem:[%s4 + $0x1e4] sm:$0xf]
    %v975 = vld [vmem:[%s4 + $0x1e8] sm:$0xf]
    %v976 = vld [vmem:[%s4 + $0x1ec] sm:$0xf]
    %v977 = vld [vmem:[%s4 + $0x1f0] sm:$0xf]
    %v978 = vld [vmem:[%s4 + $0x1f4] sm:$0xf]
    %v979 = vld [vmem:[%s4 + $0x1f8] sm:$0xf]
    %v980 = vld [vmem:[%s4 + $0x1fc] sm:$0xf]
    %v981 = vld [vmem:[%s4 + $0x200] sm:$0xf]
    %v982 = vld [vmem:[%s4 + $0x204] sm:$0xf]
    %v983 = vld [vmem:[%s4 + $0x208] sm:$0xf]
    %v984 = vld [vmem:[%s4 + $0x20c] sm:$0xf]
    %v985 = vld [vmem:[%s4 + $0x210] sm:$0xf]
    %v986 = vld [vmem:[%s4 + $0x214] sm:$0xf]
    %v987 = vld [vmem:[%s4 + $0x218] sm:$0xf]
    %v988 = vld [vmem:[%s4 + $0x21c] sm:$0xf]
    %v989 = vld [vmem:[%s4 + $0x220] sm:$0xf]
    %v990 = vld [vmem:[%s4 + $0x224] sm:$0xf]
    %v991 = vld [vmem:[%s4 + $0x228] sm:$0xf]
    %v992 = vld [vmem:[%s4 + $0x22c] sm:$0xf]
    %v993 = vld [vmem:[%s4 + $0x230] sm:$0xf]
    %v994 = vld [vmem:[%s4 + $0x234] sm:$0xf]
    %v995 = vld [vmem:[%s4 + $0x238] sm:$0xf]
    %v996 = vld [vmem:[%s4 + $0x23c] sm:$0xf]
    %v997 = vld [vmem:[%s4 + $0x240] sm:$0xf]
    %v998 = vld [vmem:[%s4 + $0x244] sm:$0xf]
    %v999 = vld [vmem:[%s4 + $0x248] sm:$0xf]
    %v1000 = vld [vmem:[%s4 + $0x24c] sm:$0xf]
    %v1001 = vld [vmem:[%s4 + $0x250] sm:$0xf]
    %v1002 = vld [vmem:[%s4 + $0x254] sm:$0xf]
    %v1003 = vld [vmem:[%s4 + $0x258] sm:$0xf]
    %v1004 = vld [vmem:[%s4 + $0x25c] sm:$0xf]
    %v1005 = vld [vmem:[%s4 + $0x260] sm:$0xf]
    %v1006 = vld [vmem:[%s4 + $0x264] sm:$0xf]
    %v1007 = vld [vmem:[%s4 + $0x268] sm:$0xf]
    %v1008 = vld [vmem:[%s4 + $0x26c] sm:$0xf]
    %v1009 = vld [vmem:[%s4 + $0x270] sm:$0xf]
    %v1010 = vld [vmem:[%s4 + $0x274] sm:$0xf]
    %v1011 = vld [vmem:[%s4 + $0x278] sm:$0xf]
    %v1012 = vld [vmem:[%s4 + $0x27c] sm:$0xf]
    %v1013 = vld [vmem:[%s4 + $0x280] sm:$0xf]
    %v1014 = vld [vmem:[%s4 + $0x284] sm:$0xf]
    %v1015 = vld [vmem:[%s4 + $0x288] sm:$0xf]
    %v1016 = vld [vmem:[%s4 + $0x28c] sm:$0xf]
    %v1017 = vld [vmem:[%s4 + $0x290] sm:$0xf]
    %v1018 = vld [vmem:[%s4 + $0x294] sm:$0xf]
    %v1019 = vld [vmem:[%s4 + $0x298] sm:$0xf]
    %v1020 = vld [vmem:[%s4 + $0x29c] sm:$0xf]
    %v1021 = vld [vmem:[%s4 + $0x2a0] sm:$0xf]
    %v1022 = vld [vmem:[%s4 + $0x2a4] sm:$0xf]
    %v1023 = vld [vmem:[%s4 + $0x2a8] sm:$0xf]
    %v1024 = vld [vmem:[%s4 + $0x2ac] sm:$0xf]
    %v1025 = vld [vmem:[%s4 + $0x2b0] sm:$0xf]
    %v1026 = vld [vmem:[%s4 + $0x2b4] sm:$0xf]
    %v1027 = vld [vmem:[%s4 + $0x2b8] sm:$0xf]
    %v1028 = vld [vmem:[%s4 + $0x2bc] sm:$0xf]
    %v1029 = vld [vmem:[%s4 + $0x2c0] sm:$0xf]
    %v1030 = vld [vmem:[%s4 + $0x2c4] sm:$0xf]
    %v1031 = vld [vmem:[%s4 + $0x2c8] sm:$0xf]
    %v1032 = vld [vmem:[%s4 + $0x2cc] sm:$0xf]
    %v1033 = vld [vmem:[%s4 + $0x2d0] sm:$0xf]
    %v1034 = vld [vmem:[%s4 + $0x2d4] sm:$0xf]
    %v1035 = vld [vmem:[%s4 + $0x2d8] sm:$0xf]
    %v1036 = vld [vmem:[%s4 + $0x2dc] sm:$0xf]
    %v1037 = vld [vmem:[%s4 + $0x2e0] sm:$0xf]
    %v1038 = vld [vmem:[%s4 + $0x2e4] sm:$0xf]
    %v1039 = vld [vmem:[%s4 + $0x2e8] sm:$0xf]
    %v1040 = vld [vmem:[%s4 + $0x2ec] sm:$0xf]
    %v1041 = vld [vmem:[%s4 + $0x2f0] sm:$0xf]
    %v1042 = vld [vmem:[%s4 + $0x2f4] sm:$0xf]
    %v1043 = vld [vmem:[%s4 + $0x2f8] sm:$0xf]
    %v1044 = vld [vmem:[%s4 + $0x2fc] sm:$0xf]
    %v1045 = vld [vmem:[%s4 + $0x300] sm:$0xf]
    %v1046 = vld [vmem:[%s4 + $0x304] sm:$0xf]
    %v1047 = vld [vmem:[%s4 + $0x308] sm:$0xf]
    %v1048 = vld [vmem:[%s4 + $0x30c] sm:$0xf]
    %v1049 = vld [vmem:[%s4 + $0x310] sm:$0xf]
    %v1050 = vld [vmem:[%s4 + $0x314] sm:$0xf]
    %v1051 = vld [vmem:[%s4 + $0x318] sm:$0xf]
    %v1052 = vld [vmem:[%s4 + $0x31c] sm:$0xf]
    %v1053 = vld [vmem:[%s4 + $0x320] sm:$0xf]
    %v1054 = vld [vmem:[%s4 + $0x324] sm:$0xf]
    %v1055 = vld [vmem:[%s4 + $0x328] sm:$0xf]
    %v1056 = vld [vmem:[%s4 + $0x32c] sm:$0xf]
    %v1057 = vld [vmem:[%s4 + $0x330] sm:$0xf]
    %v1058 = vld [vmem:[%s4 + $0x334] sm:$0xf]
    %v1059 = vld [vmem:[%s4 + $0x338] sm:$0xf]
    %v1060 = vld [vmem:[%s4 + $0x33c] sm:$0xf]
    %v1061 = vld [vmem:[%s4 + $0x340] sm:$0xf]
    %v1062 = vld [vmem:[%s4 + $0x344] sm:$0xf]
    %v1063 = vld [vmem:[%s4 + $0x348] sm:$0xf]
    %v1064 = vld [vmem:[%s4 + $0x34c] sm:$0xf]
    %v1065 = vld [vmem:[%s4 + $0x350] sm:$0xf]
    %v1066 = vld [vmem:[%s4 + $0x354] sm:$0xf]
    %v1067 = vld [vmem:[%s4 + $0x358] sm:$0xf]
    %v1068 = vld [vmem:[%s4 + $0x35c] sm:$0xf]
    %v1069 = vld [vmem:[%s4 + $0x360] sm:$0xf]
    %v1070 = vld [vmem:[%s4 + $0x364] sm:$0xf]
    %v1071 = vld [vmem:[%s4 + $0x368] sm:$0xf]
    %v1072 = vld [vmem:[%s4 + $0x36c] sm:$0xf]
    %v1073 = vld [vmem:[%s4 + $0x370] sm:$0xf]
    %v1074 = vld [vmem:[%s4 + $0x374] sm:$0xf]
    %v1075 = vld [vmem:[%s4 + $0x378] sm:$0xf]
    %v1076 = vld [vmem:[%s4 + $0x37c] sm:$0xf]
    %v1077 = vld [vmem:[%s4 + $0x380] sm:$0xf]
    %v1078 = vld [vmem:[%s4 + $0x384] sm:$0xf]
    %v1079 = vld [vmem:[%s4 + $0x388] sm:$0xf]
    %v1080 = vld [vmem:[%s4 + $0x38c] sm:$0xf]
    %v1081 = vld [vmem:[%s4 + $0x390] sm:$0xf]
    %v1082 = vld [vmem:[%s4 + $0x394] sm:$0xf]
    %v1083 = vld [vmem:[%s4 + $0x398] sm:$0xf]
    %v1084 = vld [vmem:[%s4 + $0x39c] sm:$0xf]
    %v1085 = vld [vmem:[%s4 + $0x3a0] sm:$0xf]
    %v1086 = vld [vmem:[%s4 + $0x3a4] sm:$0xf]
    %v1087 = vld [vmem:[%s4 + $0x3a8] sm:$0xf]
    %v1088 = vld [vmem:[%s4 + $0x3ac] sm:$0xf]
    %v1089 = vld [vmem:[%s4 + $0x3b0] sm:$0xf]
    %v1090 = vld [vmem:[%s4 + $0x3b4] sm:$0xf]
    %v1091 = vld [vmem:[%s4 + $0x3b8] sm:$0xf]
    %v1092 = vld [vmem:[%s4 + $0x3bc] sm:$0xf]
    %v1093 = vld [vmem:[%s4 + $0x3c0] sm:$0xf]
    %v1094 = vld [vmem:[%s4 + $0x3c4] sm:$0xf]
    %v1095 = vld [vmem:[%s4 + $0x3c8] sm:$0xf]
    %v1096 = vld [vmem:[%s4 + $0x3cc] sm:$0xf]
    %v1097 = vld [vmem:[%s4 + $0x3d0] sm:$0xf]
    %v1098 = vld [vmem:[%s4 + $0x3d4] sm:$0xf]
    %v1099 = vld [vmem:[%s4 + $0x3d8] sm:$0xf]
    %v1100 = vld [vmem:[%s4 + $0x3dc] sm:$0xf]
    %v1101 = vld [vmem:[%s4 + $0x3e0] sm:$0xf]
    %v1102 = vld [vmem:[%s4 + $0x3e4] sm:$0xf]
    %v1103 = vld [vmem:[%s4 + $0x3e8] sm:$0xf]
    %v1104 = vld [vmem:[%s4 + $0x3ec] sm:$0xf]
    %v1105 = vld [vmem:[%s4 + $0x3f0] sm:$0xf]
    %v1106 = vld [vmem:[%s4 + $0x3f4] sm:$0xf]
    %v1107 = vld [vmem:[%s4 + $0x3f8] sm:$0xf]
    %v1108 = vld [vmem:[%s4 + $0x3fc] sm:$0xf]
    %v1109 = vld [vmem:[%s6] sm:$0xf]
    %v1110 = vld [vmem:[%s6 + $0x4] sm:$0xf]
    %v1111 = vld [vmem:[%s6 + $0x8] sm:$0xf]
    %v1112 = vld [vmem:[%s6 + $0xc] sm:$0xf]
    %v1113 = vld [vmem:[%s6 + $0x10] sm:$0xf]
    %v1114 = vld [vmem:[%s6 + $0x14] sm:$0xf]
    %v1115 = vld [vmem:[%s6 + $0x18] sm:$0xf]
    %v1116 = vld [vmem:[%s6 + $0x1c] sm:$0xf]
    %v1117 = vld [vmem:[%s6 + $0x20] sm:$0xf]
    %v1118 = vld [vmem:[%s6 + $0x24] sm:$0xf]
    %v1119 = vld [vmem:[%s6 + $0x28] sm:$0xf]
    %v1120 = vld [vmem:[%s6 + $0x2c] sm:$0xf]
    %v1121 = vld [vmem:[%s6 + $0x30] sm:$0xf]
    %v1122 = vld [vmem:[%s6 + $0x34] sm:$0xf]
    %v1123 = vld [vmem:[%s6 + $0x38] sm:$0xf]
    %v1124 = vld [vmem:[%s6 + $0x3c] sm:$0xf]
    %v1125 = vld [vmem:[%s6 + $0x40] sm:$0xf]
    %v1126 = vld [vmem:[%s6 + $0x44] sm:$0xf]
    %v1127 = vld [vmem:[%s6 + $0x48] sm:$0xf]
    %v1128 = vld [vmem:[%s6 + $0x4c] sm:$0xf]
    %v1129 = vld [vmem:[%s6 + $0x50] sm:$0xf]
    %v1130 = vld [vmem:[%s6 + $0x54] sm:$0xf]
    %v1131 = vld [vmem:[%s6 + $0x58] sm:$0xf]
    %v1132 = vld [vmem:[%s6 + $0x5c] sm:$0xf]
    %v1133 = vld [vmem:[%s6 + $0x60] sm:$0xf]
    %v1134 = vld [vmem:[%s6 + $0x64] sm:$0xf]
    %v1135 = vld [vmem:[%s6 + $0x68] sm:$0xf]
    %v1136 = vld [vmem:[%s6 + $0x6c] sm:$0xf]
    %v1137 = vld [vmem:[%s6 + $0x70] sm:$0xf]
    %v1138 = vld [vmem:[%s6 + $0x74] sm:$0xf]
    %v1139 = vld [vmem:[%s6 + $0x78] sm:$0xf]
    %v1140 = vld [vmem:[%s6 + $0x7c] sm:$0xf]
    %v1141 = vld [vmem:[%s7] sm:$0xf]
    %v1142 = vld [vmem:[%s7 + $0x4] sm:$0xf]
    %v1143 = vld [vmem:[%s7 + $0x8] sm:$0xf]
    %v1144 = vld [vmem:[%s7 + $0xc] sm:$0xf]
    %v1145 = vld [vmem:[%s7 + $0x10] sm:$0xf]
    %v1146 = vld [vmem:[%s7 + $0x14] sm:$0xf]
    %v1147 = vld [vmem:[%s7 + $0x18] sm:$0xf]
    %v1148 = vld [vmem:[%s7 + $0x1c] sm:$0xf]
    %v1149 = vld [vmem:[%s7 + $0x20] sm:$0xf]
    %v1150 = vld [vmem:[%s7 + $0x24] sm:$0xf]
    %v1151 = vld [vmem:[%s7 + $0x28] sm:$0xf]
    %v1152 = vld [vmem:[%s7 + $0x2c] sm:$0xf]
    %v1153 = vld [vmem:[%s7 + $0x30] sm:$0xf]
    %v1154 = vld [vmem:[%s7 + $0x34] sm:$0xf]
    %v1155 = vld [vmem:[%s7 + $0x38] sm:$0xf]
    %v1156 = vld [vmem:[%s7 + $0x3c] sm:$0xf]
    %v1157 = vld [vmem:[%s7 + $0x40] sm:$0xf]
    %v1158 = vld [vmem:[%s7 + $0x44] sm:$0xf]
    %v1159 = vld [vmem:[%s7 + $0x48] sm:$0xf]
    %v1160 = vld [vmem:[%s7 + $0x4c] sm:$0xf]
    %v1161 = vld [vmem:[%s7 + $0x50] sm:$0xf]
    %v1162 = vld [vmem:[%s7 + $0x54] sm:$0xf]
    %v1163 = vld [vmem:[%s7 + $0x58] sm:$0xf]
    %v1164 = vld [vmem:[%s7 + $0x5c] sm:$0xf]
    %v1165 = vld [vmem:[%s7 + $0x60] sm:$0xf]
    %v1166 = vld [vmem:[%s7 + $0x64] sm:$0xf]
    %v1167 = vld [vmem:[%s7 + $0x68] sm:$0xf]
    %v1168 = vld [vmem:[%s7 + $0x6c] sm:$0xf]
    %v1169 = vld [vmem:[%s7 + $0x70] sm:$0xf]
    %v1170 = vld [vmem:[%s7 + $0x74] sm:$0xf]
    %v1171 = vld [vmem:[%s7 + $0x78] sm:$0xf]
    %v1172 = vld [vmem:[%s7 + $0x7c] sm:$0xf]
    %v1173 = vld [vmem:[%s7 + $0x80] sm:$0xf]
    %v1174 = vld [vmem:[%s7 + $0x84] sm:$0xf]
    %v1175 = vld [vmem:[%s7 + $0x88] sm:$0xf]
    %v1176 = vld [vmem:[%s7 + $0x8c] sm:$0xf]
    %v1177 = vld [vmem:[%s7 + $0x90] sm:$0xf]
    %v1178 = vld [vmem:[%s7 + $0x94] sm:$0xf]
    %v1179 = vld [vmem:[%s7 + $0x98] sm:$0xf]
    %v1180 = vld [vmem:[%s7 + $0x9c] sm:$0xf]
    %v1181 = vld [vmem:[%s7 + $0xa0] sm:$0xf]
    %v1182 = vld [vmem:[%s7 + $0xa4] sm:$0xf]
    %v1183 = vld [vmem:[%s7 + $0xa8] sm:$0xf]
    %v1184 = vld [vmem:[%s7 + $0xac] sm:$0xf]
    %v1185 = vld [vmem:[%s7 + $0xb0] sm:$0xf]
    %v1186 = vld [vmem:[%s7 + $0xb4] sm:$0xf]
    %v1187 = vld [vmem:[%s7 + $0xb8] sm:$0xf]
    %v1188 = vld [vmem:[%s7 + $0xbc] sm:$0xf]
    %v1189 = vld [vmem:[%s7 + $0xc0] sm:$0xf]
    %v1190 = vld [vmem:[%s7 + $0xc4] sm:$0xf]
    %v1191 = vld [vmem:[%s7 + $0xc8] sm:$0xf]
    %v1192 = vld [vmem:[%s7 + $0xcc] sm:$0xf]
    %v1193 = vld [vmem:[%s7 + $0xd0] sm:$0xf]
    %v1194 = vld [vmem:[%s7 + $0xd4] sm:$0xf]
    %v1195 = vld [vmem:[%s7 + $0xd8] sm:$0xf]
    %v1196 = vld [vmem:[%s7 + $0xdc] sm:$0xf]
    %v1197 = vld [vmem:[%s7 + $0xe0] sm:$0xf]
    %v1198 = vld [vmem:[%s7 + $0xe4] sm:$0xf]
    %v1199 = vld [vmem:[%s7 + $0xe8] sm:$0xf]
    %v1200 = vld [vmem:[%s7 + $0xec] sm:$0xf]
    %v1201 = vld [vmem:[%s7 + $0xf0] sm:$0xf]
    %v1202 = vld [vmem:[%s7 + $0xf4] sm:$0xf]
    %v1203 = vld [vmem:[%s7 + $0xf8] sm:$0xf]
    %v1204 = vld [vmem:[%s7 + $0xfc] sm:$0xf]
    %v1205 = vld [vmem:[%s7 + $0x100] sm:$0xf]
    %v1206 = vld [vmem:[%s7 + $0x104] sm:$0xf]
    %v1207 = vld [vmem:[%s7 + $0x108] sm:$0xf]
    %v1208 = vld [vmem:[%s7 + $0x10c] sm:$0xf]
    %v1209 = vld [vmem:[%s7 + $0x110] sm:$0xf]
    %v1210 = vld [vmem:[%s7 + $0x114] sm:$0xf]
    %v1211 = vld [vmem:[%s7 + $0x118] sm:$0xf]
    %v1212 = vld [vmem:[%s7 + $0x11c] sm:$0xf]
    %v1213 = vld [vmem:[%s7 + $0x120] sm:$0xf]
    %v1214 = vld [vmem:[%s7 + $0x124] sm:$0xf]
    %v1215 = vld [vmem:[%s7 + $0x128] sm:$0xf]
    %v1216 = vld [vmem:[%s7 + $0x12c] sm:$0xf]
    %v1217 = vld [vmem:[%s7 + $0x130] sm:$0xf]
    %v1218 = vld [vmem:[%s7 + $0x134] sm:$0xf]
    %v1219 = vld [vmem:[%s7 + $0x138] sm:$0xf]
    %v1220 = vld [vmem:[%s7 + $0x13c] sm:$0xf]
    %v1221 = vld [vmem:[%s7 + $0x140] sm:$0xf]
    %v1222 = vld [vmem:[%s7 + $0x144] sm:$0xf]
    %v1223 = vld [vmem:[%s7 + $0x148] sm:$0xf]
    %v1224 = vld [vmem:[%s7 + $0x14c] sm:$0xf]
    %v1225 = vld [vmem:[%s7 + $0x150] sm:$0xf]
    %v1226 = vld [vmem:[%s7 + $0x154] sm:$0xf]
    %v1227 = vld [vmem:[%s7 + $0x158] sm:$0xf]
    %v1228 = vld [vmem:[%s7 + $0x15c] sm:$0xf]
    %v1229 = vld [vmem:[%s7 + $0x160] sm:$0xf]
    %v1230 = vld [vmem:[%s7 + $0x164] sm:$0xf]
    %v1231 = vld [vmem:[%s7 + $0x168] sm:$0xf]
    %v1232 = vld [vmem:[%s7 + $0x16c] sm:$0xf]
    %v1233 = vld [vmem:[%s7 + $0x170] sm:$0xf]
    %v1234 = vld [vmem:[%s7 + $0x174] sm:$0xf]
    %v1235 = vld [vmem:[%s7 + $0x178] sm:$0xf]
    %v1236 = vld [vmem:[%s7 + $0x17c] sm:$0xf]
    %v1237 = vld [vmem:[%s7 + $0x180] sm:$0xf]
    %v1238 = vld [vmem:[%s7 + $0x184] sm:$0xf]
    %v1239 = vld [vmem:[%s7 + $0x188] sm:$0xf]
    %v1240 = vld [vmem:[%s7 + $0x18c] sm:$0xf]
    %v1241 = vld [vmem:[%s7 + $0x190] sm:$0xf]
    %v1242 = vld [vmem:[%s7 + $0x194] sm:$0xf]
    %v1243 = vld [vmem:[%s7 + $0x198] sm:$0xf]
    %v1244 = vld [vmem:[%s7 + $0x19c] sm:$0xf]
    %v1245 = vld [vmem:[%s7 + $0x1a0] sm:$0xf]
    %v1246 = vld [vmem:[%s7 + $0x1a4] sm:$0xf]
    %v1247 = vld [vmem:[%s7 + $0x1a8] sm:$0xf]
    %v1248 = vld [vmem:[%s7 + $0x1ac] sm:$0xf]
    %v1249 = vld [vmem:[%s7 + $0x1b0] sm:$0xf]
    %v1250 = vld [vmem:[%s7 + $0x1b4] sm:$0xf]
    %v1251 = vld [vmem:[%s7 + $0x1b8] sm:$0xf]
    %v1252 = vld [vmem:[%s7 + $0x1bc] sm:$0xf]
    %v1253 = vld [vmem:[%s7 + $0x1c0] sm:$0xf]
    %v1254 = vld [vmem:[%s7 + $0x1c4] sm:$0xf]
    %v1255 = vld [vmem:[%s7 + $0x1c8] sm:$0xf]
    %v1256 = vld [vmem:[%s7 + $0x1cc] sm:$0xf]
    %v1257 = vld [vmem:[%s7 + $0x1d0] sm:$0xf]
    %v1258 = vld [vmem:[%s7 + $0x1d4] sm:$0xf]
    %v1259 = vld [vmem:[%s7 + $0x1d8] sm:$0xf]
    %v1260 = vld [vmem:[%s7 + $0x1dc] sm:$0xf]
    %v1261 = vld [vmem:[%s7 + $0x1e0] sm:$0xf]
    %v1262 = vld [vmem:[%s7 + $0x1e4] sm:$0xf]
    %v1263 = vld [vmem:[%s7 + $0x1e8] sm:$0xf]
    %v1264 = vld [vmem:[%s7 + $0x1ec] sm:$0xf]
    %v1265 = vld [vmem:[%s7 + $0x1f0] sm:$0xf]
    %v1266 = vld [vmem:[%s7 + $0x1f4] sm:$0xf]
    %v1267 = vld [vmem:[%s7 + $0x1f8] sm:$0xf]
    %v1268 = vld [vmem:[%s7 + $0x1fc] sm:$0xf]
    %v1269 = vld [vmem:[%s7 + $0x200] sm:$0xf]
    %v1270 = vld [vmem:[%s7 + $0x204] sm:$0xf]
    %v1271 = vld [vmem:[%s7 + $0x208] sm:$0xf]
    %v1272 = vld [vmem:[%s7 + $0x20c] sm:$0xf]
    %v1273 = vld [vmem:[%s7 + $0x210] sm:$0xf]
    %v1274 = vld [vmem:[%s7 + $0x214] sm:$0xf]
    %v1275 = vld [vmem:[%s7 + $0x218] sm:$0xf]
    %v1276 = vld [vmem:[%s7 + $0x21c] sm:$0xf]
    %v1277 = vld [vmem:[%s7 + $0x220] sm:$0xf]
    %v1278 = vld [vmem:[%s7 + $0x224] sm:$0xf]
    %v1279 = vld [vmem:[%s7 + $0x228] sm:$0xf]
    %v1280 = vld [vmem:[%s7 + $0x22c] sm:$0xf]
    %v1281 = vld [vmem:[%s7 + $0x230] sm:$0xf]
    %v1282 = vld [vmem:[%s7 + $0x234] sm:$0xf]
    %v1283 = vld [vmem:[%s7 + $0x238] sm:$0xf]
    %v1284 = vld [vmem:[%s7 + $0x23c] sm:$0xf]
    %v1285 = vld [vmem:[%s7 + $0x240] sm:$0xf]
    %v1286 = vld [vmem:[%s7 + $0x244] sm:$0xf]
    %v1287 = vld [vmem:[%s7 + $0x248] sm:$0xf]
    %v1288 = vld [vmem:[%s7 + $0x24c] sm:$0xf]
    %v1289 = vld [vmem:[%s7 + $0x250] sm:$0xf]
    %v1290 = vld [vmem:[%s7 + $0x254] sm:$0xf]
    %v1291 = vld [vmem:[%s7 + $0x258] sm:$0xf]
    %v1292 = vld [vmem:[%s7 + $0x25c] sm:$0xf]
    %v1293 = vld [vmem:[%s7 + $0x260] sm:$0xf]
    %v1294 = vld [vmem:[%s7 + $0x264] sm:$0xf]
    %v1295 = vld [vmem:[%s7 + $0x268] sm:$0xf]
    %v1296 = vld [vmem:[%s7 + $0x26c] sm:$0xf]
    %v1297 = vld [vmem:[%s7 + $0x270] sm:$0xf]
    %v1298 = vld [vmem:[%s7 + $0x274] sm:$0xf]
    %v1299 = vld [vmem:[%s7 + $0x278] sm:$0xf]
    %v1300 = vld [vmem:[%s7 + $0x27c] sm:$0xf]
    %v1301 = vld [vmem:[%s7 + $0x280] sm:$0xf]
    %v1302 = vld [vmem:[%s7 + $0x284] sm:$0xf]
    %v1303 = vld [vmem:[%s7 + $0x288] sm:$0xf]
    %v1304 = vld [vmem:[%s7 + $0x28c] sm:$0xf]
    %v1305 = vld [vmem:[%s7 + $0x290] sm:$0xf]
    %v1306 = vld [vmem:[%s7 + $0x294] sm:$0xf]
    %v1307 = vld [vmem:[%s7 + $0x298] sm:$0xf]
    %v1308 = vld [vmem:[%s7 + $0x29c] sm:$0xf]
    %v1309 = vld [vmem:[%s7 + $0x2a0] sm:$0xf]
    %v1310 = vld [vmem:[%s7 + $0x2a4] sm:$0xf]
    %v1311 = vld [vmem:[%s7 + $0x2a8] sm:$0xf]
    %v1312 = vld [vmem:[%s7 + $0x2ac] sm:$0xf]
    %v1313 = vld [vmem:[%s7 + $0x2b0] sm:$0xf]
    %v1314 = vld [vmem:[%s7 + $0x2b4] sm:$0xf]
    %v1315 = vld [vmem:[%s7 + $0x2b8] sm:$0xf]
    %v1316 = vld [vmem:[%s7 + $0x2bc] sm:$0xf]
    %v1317 = vld [vmem:[%s7 + $0x2c0] sm:$0xf]
    %v1318 = vld [vmem:[%s7 + $0x2c4] sm:$0xf]
    %v1319 = vld [vmem:[%s7 + $0x2c8] sm:$0xf]
    %v1320 = vld [vmem:[%s7 + $0x2cc] sm:$0xf]
    %v1321 = vld [vmem:[%s7 + $0x2d0] sm:$0xf]
    %v1322 = vld [vmem:[%s7 + $0x2d4] sm:$0xf]
    %v1323 = vld [vmem:[%s7 + $0x2d8] sm:$0xf]
    %v1324 = vld [vmem:[%s7 + $0x2dc] sm:$0xf]
    %v1325 = vld [vmem:[%s7 + $0x2e0] sm:$0xf]
    %v1326 = vld [vmem:[%s7 + $0x2e4] sm:$0xf]
    %v1327 = vld [vmem:[%s7 + $0x2e8] sm:$0xf]
    %v1328 = vld [vmem:[%s7 + $0x2ec] sm:$0xf]
    %v1329 = vld [vmem:[%s7 + $0x2f0] sm:$0xf]
    %v1330 = vld [vmem:[%s7 + $0x2f4] sm:$0xf]
    %v1331 = vld [vmem:[%s7 + $0x2f8] sm:$0xf]
    %v1332 = vld [vmem:[%s7 + $0x2fc] sm:$0xf]
    %v1333 = vld [vmem:[%s7 + $0x300] sm:$0xf]
    %v1334 = vld [vmem:[%s7 + $0x304] sm:$0xf]
    %v1335 = vld [vmem:[%s7 + $0x308] sm:$0xf]
    %v1336 = vld [vmem:[%s7 + $0x30c] sm:$0xf]
    %v1337 = vld [vmem:[%s7 + $0x310] sm:$0xf]
    %v1338 = vld [vmem:[%s7 + $0x314] sm:$0xf]
    %v1339 = vld [vmem:[%s7 + $0x318] sm:$0xf]
    %v1340 = vld [vmem:[%s7 + $0x31c] sm:$0xf]
    %v1341 = vld [vmem:[%s7 + $0x320] sm:$0xf]
    %v1342 = vld [vmem:[%s7 + $0x324] sm:$0xf]
    %v1343 = vld [vmem:[%s7 + $0x328] sm:$0xf]
    %v1344 = vld [vmem:[%s7 + $0x32c] sm:$0xf]
    %v1345 = vld [vmem:[%s7 + $0x330] sm:$0xf]
    %v1346 = vld [vmem:[%s7 + $0x334] sm:$0xf]
    %v1347 = vld [vmem:[%s7 + $0x338] sm:$0xf]
    %v1348 = vld [vmem:[%s7 + $0x33c] sm:$0xf]
    %v1349 = vld [vmem:[%s7 + $0x340] sm:$0xf]
    %v1350 = vld [vmem:[%s7 + $0x344] sm:$0xf]
    %v1351 = vld [vmem:[%s7 + $0x348] sm:$0xf]
    %v1352 = vld [vmem:[%s7 + $0x34c] sm:$0xf]
    %v1353 = vld [vmem:[%s7 + $0x350] sm:$0xf]
    %v1354 = vld [vmem:[%s7 + $0x354] sm:$0xf]
    %v1355 = vld [vmem:[%s7 + $0x358] sm:$0xf]
    %v1356 = vld [vmem:[%s7 + $0x35c] sm:$0xf]
    %v1357 = vld [vmem:[%s7 + $0x360] sm:$0xf]
    %v1358 = vld [vmem:[%s7 + $0x364] sm:$0xf]
    %v1359 = vld [vmem:[%s7 + $0x368] sm:$0xf]
    %v1360 = vld [vmem:[%s7 + $0x36c] sm:$0xf]
    %v1361 = vld [vmem:[%s7 + $0x370] sm:$0xf]
    %v1362 = vld [vmem:[%s7 + $0x374] sm:$0xf]
    %v1363 = vld [vmem:[%s7 + $0x378] sm:$0xf]
    %v1364 = vld [vmem:[%s7 + $0x37c] sm:$0xf]
    %v1365 = vld [vmem:[%s7 + $0x380] sm:$0xf]
    %v1366 = vld [vmem:[%s7 + $0x384] sm:$0xf]
    %v1367 = vld [vmem:[%s7 + $0x388] sm:$0xf]
    %v1368 = vld [vmem:[%s7 + $0x38c] sm:$0xf]
    %v1369 = vld [vmem:[%s7 + $0x390] sm:$0xf]
    %v1370 = vld [vmem:[%s7 + $0x394] sm:$0xf]
    %v1371 = vld [vmem:[%s7 + $0x398] sm:$0xf]
    %v1372 = vld [vmem:[%s7 + $0x39c] sm:$0xf]
    %v1373 = vld [vmem:[%s7 + $0x3a0] sm:$0xf]
    %v1374 = vld [vmem:[%s7 + $0x3a4] sm:$0xf]
    %v1375 = vld [vmem:[%s7 + $0x3a8] sm:$0xf]
    %v1376 = vld [vmem:[%s7 + $0x3ac] sm:$0xf]
    %v1377 = vld [vmem:[%s7 + $0x3b0] sm:$0xf]
    %v1378 = vld [vmem:[%s7 + $0x3b4] sm:$0xf]
    %v1379 = vld [vmem:[%s7 + $0x3b8] sm:$0xf]
    %v1380 = vld [vmem:[%s7 + $0x3bc] sm:$0xf]
    %v1381 = vld [vmem:[%s7 + $0x3c0] sm:$0xf]
    %v1382 = vld [vmem:[%s7 + $0x3c4] sm:$0xf]
    %v1383 = vld [vmem:[%s7 + $0x3c8] sm:$0xf]
    %v1384 = vld [vmem:[%s7 + $0x3cc] sm:$0xf]
    %v1385 = vld [vmem:[%s7 + $0x3d0] sm:$0xf]
    %v1386 = vld [vmem:[%s7 + $0x3d4] sm:$0xf]
    %v1387 = vld [vmem:[%s7 + $0x3d8] sm:$0xf]
    %v1388 = vld [vmem:[%s7 + $0x3dc] sm:$0xf]
    %v1389 = vld [vmem:[%s7 + $0x3e0] sm:$0xf]
    %v1390 = vld [vmem:[%s7 + $0x3e4] sm:$0xf]
    %v1391 = vld [vmem:[%s7 + $0x3e8] sm:$0xf]
    %v1392 = vld [vmem:[%s7 + $0x3ec] sm:$0xf]
    %v1393 = vld [vmem:[%s7 + $0x3f0] sm:$0xf]
    %v1394 = vld [vmem:[%s7 + $0x3f4] sm:$0xf]
    %v1395 = vld [vmem:[%s7 + $0x3f8] sm:$0xf]
    %v1396 = vld [vmem:[%s7 + $0x3fc] sm:$0xf]
    %v1397 = vld [vmem:[%s5] sm:$0x1]
    %v1398 = vld [vmem:[%s8] sm:$0x1]
    %v1399 = vld [vmem:[#allocation2] sm:$0xf]
    %v1400 = vld [vmem:[#allocation2 + $0x4] sm:$0xf]
    %v1401 = vld [vmem:[#allocation2 + $0x8] sm:$0xf]
    %v1402 = vld [vmem:[#allocation2 + $0xc] sm:$0xf]
    %v1403 = vld [vmem:[#allocation2 + $0x10] sm:$0xf]
    %v1404 = vld [vmem:[#allocation2 + $0x14] sm:$0xf]
    %v1405 = vld [vmem:[#allocation2 + $0x18] sm:$0xf]
    %v1406 = vld [vmem:[#allocation2 + $0x1c] sm:$0xf]
    %v1407 = vld [vmem:[#allocation2 + $0x20] sm:$0xf]
    %v1408 = vld [vmem:[#allocation2 + $0x24] sm:$0xf]
    %v1409 = vld [vmem:[#allocation2 + $0x28] sm:$0xf]
    %v1410 = vld [vmem:[#allocation2 + $0x2c] sm:$0xf]
    %v1411 = vld [vmem:[#allocation2 + $0x30] sm:$0xf]
    %v1412 = vld [vmem:[#allocation2 + $0x34] sm:$0xf]
    %v1413 = vld [vmem:[#allocation2 + $0x38] sm:$0xf]
    %v1414 = vld [vmem:[#allocation2 + $0x3c] sm:$0xf]
    %v1415 = vld [vmem:[#allocation2 + $0x40] sm:$0xf]
    %v1416 = vld [vmem:[#allocation2 + $0x44] sm:$0xf]
    %v1417 = vld [vmem:[#allocation2 + $0x48] sm:$0xf]
    %v1418 = vld [vmem:[#allocation2 + $0x4c] sm:$0xf]
    %v1419 = vld [vmem:[#allocation2 + $0x50] sm:$0xf]
    %v1420 = vld [vmem:[#allocation2 + $0x54] sm:$0xf]
    %v1421 = vld [vmem:[#allocation2 + $0x58] sm:$0xf]
    %v1422 = vld [vmem:[#allocation2 + $0x5c] sm:$0xf]
    %v1423 = vld [vmem:[#allocation2 + $0x60] sm:$0xf]
    %v1424 = vld [vmem:[#allocation2 + $0x64] sm:$0xf]
    %v1425 = vld [vmem:[#allocation2 + $0x68] sm:$0xf]
    %v1426 = vld [vmem:[#allocation2 + $0x6c] sm:$0xf]
    %v1427 = vld [vmem:[#allocation2 + $0x70] sm:$0xf]
    %v1428 = vld [vmem:[#allocation2 + $0x74] sm:$0xf]
    %v1429 = vld [vmem:[#allocation2 + $0x78] sm:$0xf]
    %v1430 = vld [vmem:[#allocation2 + $0x7c] sm:$0xf]
    %v1559 = vunpack.c.l.b16 %v725
    %v1560 = vunpack.c.h.b16 %v725
    %v1561 = vunpack.c.l.b16 %v726
    %v1562 = vunpack.c.h.b16 %v726
    %v1563 = vunpack.c.l.b16 %v727
    %v1564 = vunpack.c.h.b16 %v727
    %v1565 = vunpack.c.l.b16 %v728
    %v1566 = vunpack.c.h.b16 %v728
    %v1567 = vunpack.c.l.b16 %v729
    %v1568 = vunpack.c.h.b16 %v729
    %v1569 = vunpack.c.l.b16 %v730
    %v1570 = vunpack.c.h.b16 %v730
    %v1571 = vunpack.c.l.b16 %v731
    %v1572 = vunpack.c.h.b16 %v731
    %v1573 = vunpack.c.l.b16 %v732
    %v1574 = vunpack.c.h.b16 %v732
    %v1575 = vunpack.c.l.b16 %v733
    %v1576 = vunpack.c.h.b16 %v733
    %v1577 = vunpack.c.l.b16 %v734
    %v1578 = vunpack.c.h.b16 %v734
    %v1579 = vunpack.c.l.b16 %v735
    %v1580 = vunpack.c.h.b16 %v735
    %v1581 = vunpack.c.l.b16 %v736
    %v1582 = vunpack.c.h.b16 %v736
    %v1583 = vunpack.c.l.b16 %v737
    %v1584 = vunpack.c.h.b16 %v737
    %v1585 = vunpack.c.l.b16 %v738
    %v1586 = vunpack.c.h.b16 %v738
    %v1587 = vunpack.c.l.b16 %v739
    %v1588 = vunpack.c.h.b16 %v739
    %v1589 = vunpack.c.l.b16 %v740
    %v1590 = vunpack.c.h.b16 %v740
    %v1591 = vunpack.c.l.b16 %v741
    %v1592 = vunpack.c.h.b16 %v741
    %v1593 = vunpack.c.l.b16 %v742
    %v1594 = vunpack.c.h.b16 %v742
    %v1595 = vunpack.c.l.b16 %v743
    %v1596 = vunpack.c.h.b16 %v743
    %v1597 = vunpack.c.l.b16 %v744
    %v1598 = vunpack.c.h.b16 %v744
    %v1599 = vunpack.c.l.b16 %v745
    %v1600 = vunpack.c.h.b16 %v745
    %v1601 = vunpack.c.l.b16 %v746
    %v1602 = vunpack.c.h.b16 %v746
    %v1603 = vunpack.c.l.b16 %v747
    %v1604 = vunpack.c.h.b16 %v747
    %v1605 = vunpack.c.l.b16 %v748
    %v1606 = vunpack.c.h.b16 %v748
    %v1607 = vunpack.c.l.b16 %v749
    %v1608 = vunpack.c.h.b16 %v749
    %v1609 = vunpack.c.l.b16 %v750
    %v1610 = vunpack.c.h.b16 %v750
    %v1611 = vunpack.c.l.b16 %v751
    %v1612 = vunpack.c.h.b16 %v751
    %v1613 = vunpack.c.l.b16 %v752
    %v1614 = vunpack.c.h.b16 %v752
    %v1615 = vunpack.c.l.b16 %v753
    %v1616 = vunpack.c.h.b16 %v753
    %v1617 = vunpack.c.l.b16 %v754
    %v1618 = vunpack.c.h.b16 %v754
    %v1619 = vunpack.c.l.b16 %v755
    %v1620 = vunpack.c.h.b16 %v755
    %v1621 = vunpack.c.l.b16 %v756
    %v1622 = vunpack.c.h.b16 %v756
    %v1623 = vunpack.c.l.b16 %v757
    %v1624 = vunpack.c.h.b16 %v757
    %v1625 = vunpack.c.l.b16 %v758
    %v1626 = vunpack.c.h.b16 %v758
    %v1627 = vunpack.c.l.b16 %v759
    %v1628 = vunpack.c.h.b16 %v759
    %v1629 = vunpack.c.l.b16 %v760
    %v1630 = vunpack.c.h.b16 %v760
    %v1631 = vunpack.c.l.b16 %v761
    %v1632 = vunpack.c.h.b16 %v761
    %v1633 = vunpack.c.l.b16 %v762
    %v1634 = vunpack.c.h.b16 %v762
    %v1635 = vunpack.c.l.b16 %v763
    %v1636 = vunpack.c.h.b16 %v763
    %v1637 = vunpack.c.l.b16 %v764
    %v1638 = vunpack.c.h.b16 %v764
    %v1639 = vunpack.c.l.b16 %v765
    %v1640 = vunpack.c.h.b16 %v765
    %v1641 = vunpack.c.l.b16 %v766
    %v1642 = vunpack.c.h.b16 %v766
    %v1643 = vunpack.c.l.b16 %v767
    %v1644 = vunpack.c.h.b16 %v767
    %v1645 = vunpack.c.l.b16 %v768
    %v1646 = vunpack.c.h.b16 %v768
    %v1647 = vunpack.c.l.b16 %v769
    %v1648 = vunpack.c.h.b16 %v769
    %v1649 = vunpack.c.l.b16 %v770
    %v1650 = vunpack.c.h.b16 %v770
    %v1651 = vunpack.c.l.b16 %v771
    %v1652 = vunpack.c.h.b16 %v771
    %v1653 = vunpack.c.l.b16 %v772
    %v1654 = vunpack.c.h.b16 %v772
    %v1655 = vunpack.c.l.b16 %v773
    %v1656 = vunpack.c.h.b16 %v773
    %v1657 = vunpack.c.l.b16 %v774
    %v1658 = vunpack.c.h.b16 %v774
    %v1659 = vunpack.c.l.b16 %v775
    %v1660 = vunpack.c.h.b16 %v775
    %v1661 = vunpack.c.l.b16 %v776
    %v1662 = vunpack.c.h.b16 %v776
    %v1663 = vunpack.c.l.b16 %v777
    %v1664 = vunpack.c.h.b16 %v777
    %v1665 = vunpack.c.l.b16 %v778
    %v1666 = vunpack.c.h.b16 %v778
    %v1667 = vunpack.c.l.b16 %v779
    %v1668 = vunpack.c.h.b16 %v779
    %v1669 = vunpack.c.l.b16 %v780
    %v1670 = vunpack.c.h.b16 %v780
    %v1671 = vunpack.c.l.b16 %v781
    %v1672 = vunpack.c.h.b16 %v781
    %v1673 = vunpack.c.l.b16 %v782
    %v1674 = vunpack.c.h.b16 %v782
    %v1675 = vunpack.c.l.b16 %v783
    %v1676 = vunpack.c.h.b16 %v783
    %v1677 = vunpack.c.l.b16 %v784
    %v1678 = vunpack.c.h.b16 %v784
    %v1679 = vunpack.c.l.b16 %v785
    %v1680 = vunpack.c.h.b16 %v785
    %v1681 = vunpack.c.l.b16 %v786
    %v1682 = vunpack.c.h.b16 %v786
    %v1683 = vunpack.c.l.b16 %v787
    %v1684 = vunpack.c.h.b16 %v787
    %v1685 = vunpack.c.l.b16 %v788
    %v1686 = vunpack.c.h.b16 %v788
    %v1687 = vunpack.c.l.b16 %v789
    %v1688 = vunpack.c.h.b16 %v789
    %v1689 = vunpack.c.l.b16 %v790
    %v1690 = vunpack.c.h.b16 %v790
    %v1691 = vunpack.c.l.b16 %v791
    %v1692 = vunpack.c.h.b16 %v791
    %v1693 = vunpack.c.l.b16 %v792
    %v1694 = vunpack.c.h.b16 %v792
    %v1695 = vunpack.c.l.b16 %v793
    %v1696 = vunpack.c.h.b16 %v793
    %v1697 = vunpack.c.l.b16 %v794
    %v1698 = vunpack.c.h.b16 %v794
    %v1699 = vunpack.c.l.b16 %v795
    %v1700 = vunpack.c.h.b16 %v795
    %v1701 = vunpack.c.l.b16 %v796
    %v1702 = vunpack.c.h.b16 %v796
    %v1703 = vunpack.c.l.b16 %v797
    %v1704 = vunpack.c.h.b16 %v797
    %v1705 = vunpack.c.l.b16 %v798
    %v1706 = vunpack.c.h.b16 %v798
    %v1707 = vunpack.c.l.b16 %v799
    %v1708 = vunpack.c.h.b16 %v799
    %v1709 = vunpack.c.l.b16 %v800
    %v1710 = vunpack.c.h.b16 %v800
    %v1711 = vunpack.c.l.b16 %v801
    %v1712 = vunpack.c.h.b16 %v801
    %v1713 = vunpack.c.l.b16 %v802
    %v1714 = vunpack.c.h.b16 %v802
    %v1715 = vunpack.c.l.b16 %v803
    %v1716 = vunpack.c.h.b16 %v803
    %v1717 = vunpack.c.l.b16 %v804
    %v1718 = vunpack.c.h.b16 %v804
    %v1719 = vunpack.c.l.b16 %v805
    %v1720 = vunpack.c.h.b16 %v805
    %v1721 = vunpack.c.l.b16 %v806
    %v1722 = vunpack.c.h.b16 %v806
    %v1723 = vunpack.c.l.b16 %v807
    %v1724 = vunpack.c.h.b16 %v807
    %v1725 = vunpack.c.l.b16 %v808
    %v1726 = vunpack.c.h.b16 %v808
    %v1727 = vunpack.c.l.b16 %v809
    %v1728 = vunpack.c.h.b16 %v809
    %v1729 = vunpack.c.l.b16 %v810
    %v1730 = vunpack.c.h.b16 %v810
    %v1731 = vunpack.c.l.b16 %v811
    %v1732 = vunpack.c.h.b16 %v811
    %v1733 = vunpack.c.l.b16 %v812
    %v1734 = vunpack.c.h.b16 %v812
    %v1735 = vunpack.c.l.b16 %v813
    %v1736 = vunpack.c.h.b16 %v813
    %v1737 = vunpack.c.l.b16 %v814
    %v1738 = vunpack.c.h.b16 %v814
    %v1739 = vunpack.c.l.b16 %v815
    %v1740 = vunpack.c.h.b16 %v815
    %v1741 = vunpack.c.l.b16 %v816
    %v1742 = vunpack.c.h.b16 %v816
    %v1743 = vunpack.c.l.b16 %v817
    %v1744 = vunpack.c.h.b16 %v817
    %v1745 = vunpack.c.l.b16 %v818
    %v1746 = vunpack.c.h.b16 %v818
    %v1747 = vunpack.c.l.b16 %v819
    %v1748 = vunpack.c.h.b16 %v819
    %v1749 = vunpack.c.l.b16 %v820
    %v1750 = vunpack.c.h.b16 %v820
    %v1751 = vunpack.c.l.b16 %v821
    %v1752 = vunpack.c.h.b16 %v821
    %v1753 = vunpack.c.l.b16 %v822
    %v1754 = vunpack.c.h.b16 %v822
    %v1755 = vunpack.c.l.b16 %v823
    %v1756 = vunpack.c.h.b16 %v823
    %v1757 = vunpack.c.l.b16 %v824
    %v1758 = vunpack.c.h.b16 %v824
    %v1759 = vunpack.c.l.b16 %v825
    %v1760 = vunpack.c.h.b16 %v825
    %v1761 = vunpack.c.l.b16 %v826
    %v1762 = vunpack.c.h.b16 %v826
    %v1763 = vunpack.c.l.b16 %v827
    %v1764 = vunpack.c.h.b16 %v827
    %v1765 = vunpack.c.l.b16 %v828
    %v1766 = vunpack.c.h.b16 %v828
    %v1767 = vunpack.c.l.b16 %v829
    %v1768 = vunpack.c.h.b16 %v829
    %v1769 = vunpack.c.l.b16 %v830
    %v1770 = vunpack.c.h.b16 %v830
    %v1771 = vunpack.c.l.b16 %v831
    %v1772 = vunpack.c.h.b16 %v831
    %v1773 = vunpack.c.l.b16 %v832
    %v1774 = vunpack.c.h.b16 %v832
    %v1775 = vunpack.c.l.b16 %v833
    %v1776 = vunpack.c.h.b16 %v833
    %v1777 = vunpack.c.l.b16 %v834
    %v1778 = vunpack.c.h.b16 %v834
    %v1779 = vunpack.c.l.b16 %v835
    %v1780 = vunpack.c.h.b16 %v835
    %v1781 = vunpack.c.l.b16 %v836
    %v1782 = vunpack.c.h.b16 %v836
    %v1783 = vunpack.c.l.b16 %v837
    %v1784 = vunpack.c.h.b16 %v837
    %v1785 = vunpack.c.l.b16 %v838
    %v1786 = vunpack.c.h.b16 %v838
    %v1787 = vunpack.c.l.b16 %v839
    %v1788 = vunpack.c.h.b16 %v839
    %v1789 = vunpack.c.l.b16 %v840
    %v1790 = vunpack.c.h.b16 %v840
    %v1791 = vunpack.c.l.b16 %v841
    %v1792 = vunpack.c.h.b16 %v841
    %v1793 = vunpack.c.l.b16 %v842
    %v1794 = vunpack.c.h.b16 %v842
    %v1795 = vunpack.c.l.b16 %v843
    %v1796 = vunpack.c.h.b16 %v843
    %v1797 = vunpack.c.l.b16 %v844
    %v1798 = vunpack.c.h.b16 %v844
    %v1799 = vunpack.c.l.b16 %v845
    %v1800 = vunpack.c.h.b16 %v845
    %v1801 = vunpack.c.l.b16 %v846
    %v1802 = vunpack.c.h.b16 %v846
    %v1803 = vunpack.c.l.b16 %v847
    %v1804 = vunpack.c.h.b16 %v847
    %v1805 = vunpack.c.l.b16 %v848
    %v1806 = vunpack.c.h.b16 %v848
    %v1807 = vunpack.c.l.b16 %v849
    %v1808 = vunpack.c.h.b16 %v849
    %v1809 = vunpack.c.l.b16 %v850
    %v1810 = vunpack.c.h.b16 %v850
    %v1811 = vunpack.c.l.b16 %v851
    %v1812 = vunpack.c.h.b16 %v851
    %v1813 = vunpack.c.l.b16 %v852
    %v1814 = vunpack.c.h.b16 %v852
    %v1815 = vpack.c.b16 %v1561, %v1559
    %v1816 = vpack.c.b16 %v1562, %v1560
    %v1817 = vpack.c.b16 %v1565, %v1563
    %v1818 = vpack.c.b16 %v1566, %v1564
    %v1819 = vpack.c.b16 %v1569, %v1567
    %v1820 = vpack.c.b16 %v1570, %v1568
    %v1821 = vpack.c.b16 %v1573, %v1571
    %v1822 = vpack.c.b16 %v1574, %v1572
    %v1823 = vpack.c.b16 %v1577, %v1575
    %v1824 = vpack.c.b16 %v1578, %v1576
    %v1825 = vpack.c.b16 %v1581, %v1579
    %v1826 = vpack.c.b16 %v1582, %v1580
    %v1827 = vpack.c.b16 %v1585, %v1583
    %v1828 = vpack.c.b16 %v1586, %v1584
    %v1829 = vpack.c.b16 %v1589, %v1587
    %v1830 = vpack.c.b16 %v1590, %v1588
    %v1831 = vpack.c.b16 %v1593, %v1591
    %v1832 = vpack.c.b16 %v1594, %v1592
    %v1833 = vpack.c.b16 %v1597, %v1595
    %v1834 = vpack.c.b16 %v1598, %v1596
    %v1835 = vpack.c.b16 %v1601, %v1599
    %v1836 = vpack.c.b16 %v1602, %v1600
    %v1837 = vpack.c.b16 %v1605, %v1603
    %v1838 = vpack.c.b16 %v1606, %v1604
    %v1839 = vpack.c.b16 %v1609, %v1607
    %v1840 = vpack.c.b16 %v1610, %v1608
    %v1841 = vpack.c.b16 %v1613, %v1611
    %v1842 = vpack.c.b16 %v1614, %v1612
    %v1843 = vpack.c.b16 %v1617, %v1615
    %v1844 = vpack.c.b16 %v1618, %v1616
    %v1845 = vpack.c.b16 %v1621, %v1619
    %v1846 = vpack.c.b16 %v1622, %v1620
    %v1847 = vpack.c.b16 %v1625, %v1623
    %v1848 = vpack.c.b16 %v1626, %v1624
    %v1849 = vpack.c.b16 %v1629, %v1627
    %v1850 = vpack.c.b16 %v1630, %v1628
    %v1851 = vpack.c.b16 %v1633, %v1631
    %v1852 = vpack.c.b16 %v1634, %v1632
    %v1853 = vpack.c.b16 %v1637, %v1635
    %v1854 = vpack.c.b16 %v1638, %v1636
    %v1855 = vpack.c.b16 %v1641, %v1639
    %v1856 = vpack.c.b16 %v1642, %v1640
    %v1857 = vpack.c.b16 %v1645, %v1643
    %v1858 = vpack.c.b16 %v1646, %v1644
    %v1859 = vpack.c.b16 %v1649, %v1647
    %v1860 = vpack.c.b16 %v1650, %v1648
    %v1861 = vpack.c.b16 %v1653, %v1651
    %v1862 = vpack.c.b16 %v1654, %v1652
    %v1863 = vpack.c.b16 %v1657, %v1655
    %v1864 = vpack.c.b16 %v1658, %v1656
    %v1865 = vpack.c.b16 %v1661, %v1659
    %v1866 = vpack.c.b16 %v1662, %v1660
    %v1867 = vpack.c.b16 %v1665, %v1663
    %v1868 = vpack.c.b16 %v1666, %v1664
    %v1869 = vpack.c.b16 %v1669, %v1667
    %v1870 = vpack.c.b16 %v1670, %v1668
    %v1871 = vpack.c.b16 %v1673, %v1671
    %v1872 = vpack.c.b16 %v1674, %v1672
    %v1873 = vpack.c.b16 %v1677, %v1675
    %v1874 = vpack.c.b16 %v1678, %v1676
    %v1875 = vpack.c.b16 %v1681, %v1679
    %v1876 = vpack.c.b16 %v1682, %v1680
    %v1877 = vpack.c.b16 %v1685, %v1683
    %v1878 = vpack.c.b16 %v1686, %v1684
    %v1879 = vpack.c.b16 %v1689, %v1687
    %v1880 = vpack.c.b16 %v1690, %v1688
    %v1881 = vpack.c.b16 %v1693, %v1691
    %v1882 = vpack.c.b16 %v1694, %v1692
    %v1883 = vpack.c.b16 %v1697, %v1695
    %v1884 = vpack.c.b16 %v1698, %v1696
    %v1885 = vpack.c.b16 %v1701, %v1699
    %v1886 = vpack.c.b16 %v1702, %v1700
    %v1887 = vpack.c.b16 %v1705, %v1703
    %v1888 = vpack.c.b16 %v1706, %v1704
    %v1889 = vpack.c.b16 %v1709, %v1707
    %v1890 = vpack.c.b16 %v1710, %v1708
    %v1891 = vpack.c.b16 %v1713, %v1711
    %v1892 = vpack.c.b16 %v1714, %v1712
    %v1893 = vpack.c.b16 %v1717, %v1715
    %v1894 = vpack.c.b16 %v1718, %v1716
    %v1895 = vpack.c.b16 %v1721, %v1719
    %v1896 = vpack.c.b16 %v1722, %v1720
    %v1897 = vpack.c.b16 %v1725, %v1723
    %v1898 = vpack.c.b16 %v1726, %v1724
    %v1899 = vpack.c.b16 %v1729, %v1727
    %v1900 = vpack.c.b16 %v1730, %v1728
    %v1901 = vpack.c.b16 %v1733, %v1731
    %v1902 = vpack.c.b16 %v1734, %v1732
    %v1903 = vpack.c.b16 %v1737, %v1735
    %v1904 = vpack.c.b16 %v1738, %v1736
    %v1905 = vpack.c.b16 %v1741, %v1739
    %v1906 = vpack.c.b16 %v1742, %v1740
    %v1907 = vpack.c.b16 %v1745, %v1743
    %v1908 = vpack.c.b16 %v1746, %v1744
    %v1909 = vpack.c.b16 %v1749, %v1747
    %v1910 = vpack.c.b16 %v1750, %v1748
    %v1911 = vpack.c.b16 %v1753, %v1751
    %v1912 = vpack.c.b16 %v1754, %v1752
    %v1913 = vpack.c.b16 %v1757, %v1755
    %v1914 = vpack.c.b16 %v1758, %v1756
    %v1915 = vpack.c.b16 %v1761, %v1759
    %v1916 = vpack.c.b16 %v1762, %v1760
    %v1917 = vpack.c.b16 %v1765, %v1763
    %v1918 = vpack.c.b16 %v1766, %v1764
    %v1919 = vpack.c.b16 %v1769, %v1767
    %v1920 = vpack.c.b16 %v1770, %v1768
    %v1921 = vpack.c.b16 %v1773, %v1771
    %v1922 = vpack.c.b16 %v1774, %v1772
    %v1923 = vpack.c.b16 %v1777, %v1775
    %v1924 = vpack.c.b16 %v1778, %v1776
    %v1925 = vpack.c.b16 %v1781, %v1779
    %v1926 = vpack.c.b16 %v1782, %v1780
    %v1927 = vpack.c.b16 %v1785, %v1783
    %v1928 = vpack.c.b16 %v1786, %v1784
    %v1929 = vpack.c.b16 %v1789, %v1787
    %v1930 = vpack.c.b16 %v1790, %v1788
    %v1931 = vpack.c.b16 %v1793, %v1791
    %v1932 = vpack.c.b16 %v1794, %v1792
    %v1933 = vpack.c.b16 %v1797, %v1795
    %v1934 = vpack.c.b16 %v1798, %v1796
    %v1935 = vpack.c.b16 %v1801, %v1799
    %v1936 = vpack.c.b16 %v1802, %v1800
    %v1937 = vpack.c.b16 %v1805, %v1803
    %v1938 = vpack.c.b16 %v1806, %v1804
    %v1939 = vpack.c.b16 %v1809, %v1807
    %v1940 = vpack.c.b16 %v1810, %v1808
    %v1941 = vpack.c.b16 %v1813, %v1811
    %v1942 = vpack.c.b16 %v1814, %v1812
    %v2103 = vunpack.c.l.b16 %v1399
    %v2104 = vunpack.c.l.b16 %v1400
    %v2105 = vunpack.c.l.b16 %v1401
    %v2106 = vunpack.c.l.b16 %v1402
    %v2107 = vunpack.c.l.b16 %v1403
    %v2108 = vunpack.c.l.b16 %v1404
    %v2109 = vunpack.c.l.b16 %v1405
    %v2110 = vunpack.c.l.b16 %v1406
    %v2111 = vunpack.c.l.b16 %v1407
    %v2112 = vunpack.c.l.b16 %v1408
    %v2113 = vunpack.c.l.b16 %v1409
    %v2114 = vunpack.c.l.b16 %v1410
    %v2115 = vunpack.c.l.b16 %v1411
    %v2116 = vunpack.c.l.b16 %v1412
    %v2117 = vunpack.c.l.b16 %v1413
    %v2118 = vunpack.c.l.b16 %v1414
    %v2119 = vunpack.c.l.b16 %v1415
    %v2120 = vunpack.c.l.b16 %v1416
    %v2121 = vunpack.c.l.b16 %v1417
    %v2122 = vunpack.c.l.b16 %v1418
    %v2123 = vunpack.c.l.b16 %v1419
    %v2124 = vunpack.c.l.b16 %v1420
    %v2125 = vunpack.c.l.b16 %v1421
    %v2126 = vunpack.c.l.b16 %v1422
    %v2127 = vunpack.c.l.b16 %v1423
    %v2128 = vunpack.c.l.b16 %v1424
    %v2129 = vunpack.c.l.b16 %v1425
    %v2130 = vunpack.c.l.b16 %v1426
    %v2131 = vunpack.c.l.b16 %v1427
    %v2132 = vunpack.c.l.b16 %v1428
    %v2133 = vunpack.c.l.b16 %v1429
    %v2134 = vunpack.c.l.b16 %v1430
    %v2135 = vpack.c.b16 %v2104, %v2103
    %v2136 = vpack.c.b16 %v2106, %v2105
    %v2137 = vpack.c.b16 %v2108, %v2107
    %v2138 = vpack.c.b16 %v2110, %v2109
    %v2139 = vpack.c.b16 %v2112, %v2111
    %v2140 = vpack.c.b16 %v2114, %v2113
    %v2141 = vpack.c.b16 %v2116, %v2115
    %v2142 = vpack.c.b16 %v2118, %v2117
    %v2143 = vpack.c.b16 %v2120, %v2119
    %v2144 = vpack.c.b16 %v2122, %v2121
    %v2145 = vpack.c.b16 %v2124, %v2123
    %v2146 = vpack.c.b16 %v2126, %v2125
    %v2147 = vpack.c.b16 %v2128, %v2127
    %v2148 = vpack.c.b16 %v2130, %v2129
    %v2149 = vpack.c.b16 %v2132, %v2131
    %v2150 = vpack.c.b16 %v2134, %v2133
    %2167 = vmatpush.bf16.msra.mxu0 %v2142
    %2168 = vmatpush.bf16.msra.mxu0 %v2141
    %2169 = vmatpush.bf16.msra.mxu0 %v2140
    %2170 = vmatpush.bf16.msra.mxu0 %v2139
    %2171 = vmatpush.bf16.msra.mxu0 %v2138
    %2172 = vmatpush.bf16.msra.mxu0 %v2137
    %2173 = vmatpush.bf16.msra.mxu0 %v2136
    %2174 = vmatpush.bf16.msra.mxu0 %v2135
    %2175 = vmatmul.bf16.gmra.mxu0 %v1815
    %v2176 = vpop.f32.mrf.mxu0
    %v2177 = vadd.f32 0.0, %v2176
    %v2178 = vpop.f32.mrf.mxu0
    %v2179 = vadd.f32 0.0, %v2178
    %2180 = vmatmul.bf16.gmra.mxu0 %v1817
    %v2181 = vpop.f32.mrf.mxu0
    %v2182 = vadd.f32 0.0, %v2181
    %v2183 = vpop.f32.mrf.mxu0
    %v2184 = vadd.f32 0.0, %v2183
    %2185 = vmatmul.bf16.gmra.mxu0 %v1819
    %v2186 = vpop.f32.mrf.mxu0
    %v2187 = vadd.f32 0.0, %v2186
    %v2188 = vpop.f32.mrf.mxu0
    %v2189 = vadd.f32 0.0, %v2188
    %2190 = vmatmul.bf16.gmra.mxu0 %v1821
    %v2191 = vpop.f32.mrf.mxu0
    %v2192 = vadd.f32 0.0, %v2191
    %v2193 = vpop.f32.mrf.mxu0
    %v2194 = vadd.f32 0.0, %v2193
    %2195 = vmatmul.bf16.gmra.mxu0 %v1823
    %v2196 = vpop.f32.mrf.mxu0
    %v2197 = vadd.f32 0.0, %v2196
    %v2198 = vpop.f32.mrf.mxu0
    %v2199 = vadd.f32 0.0, %v2198
    %2200 = vmatmul.bf16.gmra.mxu0 %v1825
    %v2201 = vpop.f32.mrf.mxu0
    %v2202 = vadd.f32 0.0, %v2201
    %v2203 = vpop.f32.mrf.mxu0
    %v2204 = vadd.f32 0.0, %v2203
    %2205 = vmatmul.bf16.gmra.mxu0 %v1827
    %v2206 = vpop.f32.mrf.mxu0
    %v2207 = vadd.f32 0.0, %v2206
    %v2208 = vpop.f32.mrf.mxu0
    %v2209 = vadd.f32 0.0, %v2208
    %2210 = vmatmul.bf16.gmra.mxu0 %v1829
    %v2211 = vpop.f32.mrf.mxu0
    %v2212 = vadd.f32 0.0, %v2211
    %v2213 = vpop.f32.mrf.mxu0
    %v2214 = vadd.f32 0.0, %v2213
    %2215 = vmatmul.bf16.gmra.mxu0 %v1831
    %v2216 = vpop.f32.mrf.mxu0
    %v2217 = vadd.f32 0.0, %v2216
    %v2218 = vpop.f32.mrf.mxu0
    %v2219 = vadd.f32 0.0, %v2218
    %2220 = vmatmul.bf16.gmra.mxu0 %v1833
    %v2221 = vpop.f32.mrf.mxu0
    %v2222 = vadd.f32 0.0, %v2221
    %v2223 = vpop.f32.mrf.mxu0
    %v2224 = vadd.f32 0.0, %v2223
    %2225 = vmatmul.bf16.gmra.mxu0 %v1835
    %v2226 = vpop.f32.mrf.mxu0
    %v2227 = vadd.f32 0.0, %v2226
    %v2228 = vpop.f32.mrf.mxu0
    %v2229 = vadd.f32 0.0, %v2228
    %2230 = vmatmul.bf16.gmra.mxu0 %v1837
    %v2231 = vpop.f32.mrf.mxu0
    %v2232 = vadd.f32 0.0, %v2231
    %v2233 = vpop.f32.mrf.mxu0
    %v2234 = vadd.f32 0.0, %v2233
    %2235 = vmatmul.bf16.gmra.mxu0 %v1839
    %v2236 = vpop.f32.mrf.mxu0
    %v2237 = vadd.f32 0.0, %v2236
    %v2238 = vpop.f32.mrf.mxu0
    %v2239 = vadd.f32 0.0, %v2238
    %2240 = vmatmul.bf16.gmra.mxu0 %v1841
    %v2241 = vpop.f32.mrf.mxu0
    %v2242 = vadd.f32 0.0, %v2241
    %v2243 = vpop.f32.mrf.mxu0
    %v2244 = vadd.f32 0.0, %v2243
    %2245 = vmatmul.bf16.gmra.mxu0 %v1843
    %v2246 = vpop.f32.mrf.mxu0
    %v2247 = vadd.f32 0.0, %v2246
    %v2248 = vpop.f32.mrf.mxu0
    %v2249 = vadd.f32 0.0, %v2248
    %2250 = vmatmul.bf16.gmra.mxu0 %v1845
    %v2251 = vpop.f32.mrf.mxu0
    %v2252 = vadd.f32 0.0, %v2251
    %v2253 = vpop.f32.mrf.mxu0
    %v2254 = vadd.f32 0.0, %v2253
    %2255 = vmatmul.bf16.gmra.mxu0 %v1847
    %v2256 = vpop.f32.mrf.mxu0
    %v2257 = vadd.f32 0.0, %v2256
    %v2258 = vpop.f32.mrf.mxu0
    %v2259 = vadd.f32 0.0, %v2258
    %2260 = vmatmul.bf16.gmra.mxu0 %v1849
    %v2261 = vpop.f32.mrf.mxu0
    %v2262 = vadd.f32 0.0, %v2261
    %v2263 = vpop.f32.mrf.mxu0
    %v2264 = vadd.f32 0.0, %v2263
    %2265 = vmatmul.bf16.gmra.mxu0 %v1851
    %v2266 = vpop.f32.mrf.mxu0
    %v2267 = vadd.f32 0.0, %v2266
    %v2268 = vpop.f32.mrf.mxu0
    %v2269 = vadd.f32 0.0, %v2268
    %2270 = vmatmul.bf16.gmra.mxu0 %v1853
    %v2271 = vpop.f32.mrf.mxu0
    %v2272 = vadd.f32 0.0, %v2271
    %v2273 = vpop.f32.mrf.mxu0
    %v2274 = vadd.f32 0.0, %v2273
    %2275 = vmatmul.bf16.gmra.mxu0 %v1855
    %v2276 = vpop.f32.mrf.mxu0
    %v2277 = vadd.f32 0.0, %v2276
    %v2278 = vpop.f32.mrf.mxu0
    %v2279 = vadd.f32 0.0, %v2278
    %2280 = vmatmul.bf16.gmra.mxu0 %v1857
    %v2281 = vpop.f32.mrf.mxu0
    %v2282 = vadd.f32 0.0, %v2281
    %v2283 = vpop.f32.mrf.mxu0
    %v2284 = vadd.f32 0.0, %v2283
    %2285 = vmatmul.bf16.gmra.mxu0 %v1859
    %v2286 = vpop.f32.mrf.mxu0
    %v2287 = vadd.f32 0.0, %v2286
    %v2288 = vpop.f32.mrf.mxu0
    %v2289 = vadd.f32 0.0, %v2288
    %2290 = vmatmul.bf16.gmra.mxu0 %v1861
    %v2291 = vpop.f32.mrf.mxu0
    %v2292 = vadd.f32 0.0, %v2291
    %v2293 = vpop.f32.mrf.mxu0
    %v2294 = vadd.f32 0.0, %v2293
    %2295 = vmatmul.bf16.gmra.mxu0 %v1863
    %v2296 = vpop.f32.mrf.mxu0
    %v2297 = vadd.f32 0.0, %v2296
    %v2298 = vpop.f32.mrf.mxu0
    %v2299 = vadd.f32 0.0, %v2298
    %2300 = vmatmul.bf16.gmra.mxu0 %v1865
    %v2301 = vpop.f32.mrf.mxu0
    %v2302 = vadd.f32 0.0, %v2301
    %v2303 = vpop.f32.mrf.mxu0
    %v2304 = vadd.f32 0.0, %v2303
    %2305 = vmatmul.bf16.gmra.mxu0 %v1867
    %v2306 = vpop.f32.mrf.mxu0
    %v2307 = vadd.f32 0.0, %v2306
    %v2308 = vpop.f32.mrf.mxu0
    %v2309 = vadd.f32 0.0, %v2308
    %2310 = vmatmul.bf16.gmra.mxu0 %v1869
    %v2311 = vpop.f32.mrf.mxu0
    %v2312 = vadd.f32 0.0, %v2311
    %v2313 = vpop.f32.mrf.mxu0
    %v2314 = vadd.f32 0.0, %v2313
    %2315 = vmatmul.bf16.gmra.mxu0 %v1871
    %v2316 = vpop.f32.mrf.mxu0
    %v2317 = vadd.f32 0.0, %v2316
    %v2318 = vpop.f32.mrf.mxu0
    %v2319 = vadd.f32 0.0, %v2318
    %2320 = vmatmul.bf16.gmra.mxu0 %v1873
    %v2321 = vpop.f32.mrf.mxu0
    %v2322 = vadd.f32 0.0, %v2321
    %v2323 = vpop.f32.mrf.mxu0
    %v2324 = vadd.f32 0.0, %v2323
    %2325 = vmatmul.bf16.gmra.mxu0 %v1875
    %v2326 = vpop.f32.mrf.mxu0
    %v2327 = vadd.f32 0.0, %v2326
    %v2328 = vpop.f32.mrf.mxu0
    %v2329 = vadd.f32 0.0, %v2328
    %2330 = vmatmul.bf16.gmra.mxu0 %v1877
    %v2331 = vpop.f32.mrf.mxu0
    %v2332 = vadd.f32 0.0, %v2331
    %v2333 = vpop.f32.mrf.mxu0
    %v2334 = vadd.f32 0.0, %v2333
    %2335 = vmatmul.bf16.gmra.mxu0 %v1879
    %v2336 = vpop.f32.mrf.mxu0
    %v2337 = vadd.f32 0.0, %v2336
    %v2338 = vpop.f32.mrf.mxu0
    %v2339 = vadd.f32 0.0, %v2338
    %2340 = vmatmul.bf16.gmra.mxu0 %v1881
    %v2341 = vpop.f32.mrf.mxu0
    %v2342 = vadd.f32 0.0, %v2341
    %v2343 = vpop.f32.mrf.mxu0
    %v2344 = vadd.f32 0.0, %v2343
    %2345 = vmatmul.bf16.gmra.mxu0 %v1883
    %v2346 = vpop.f32.mrf.mxu0
    %v2347 = vadd.f32 0.0, %v2346
    %v2348 = vpop.f32.mrf.mxu0
    %v2349 = vadd.f32 0.0, %v2348
    %2350 = vmatmul.bf16.gmra.mxu0 %v1885
    %v2351 = vpop.f32.mrf.mxu0
    %v2352 = vadd.f32 0.0, %v2351
    %v2353 = vpop.f32.mrf.mxu0
    %v2354 = vadd.f32 0.0, %v2353
    %2355 = vmatmul.bf16.gmra.mxu0 %v1887
    %v2356 = vpop.f32.mrf.mxu0
    %v2357 = vadd.f32 0.0, %v2356
    %v2358 = vpop.f32.mrf.mxu0
    %v2359 = vadd.f32 0.0, %v2358
    %2360 = vmatmul.bf16.gmra.mxu0 %v1889
    %v2361 = vpop.f32.mrf.mxu0
    %v2362 = vadd.f32 0.0, %v2361
    %v2363 = vpop.f32.mrf.mxu0
    %v2364 = vadd.f32 0.0, %v2363
    %2365 = vmatmul.bf16.gmra.mxu0 %v1891
    %v2366 = vpop.f32.mrf.mxu0
    %v2367 = vadd.f32 0.0, %v2366
    %v2368 = vpop.f32.mrf.mxu0
    %v2369 = vadd.f32 0.0, %v2368
    %2370 = vmatmul.bf16.gmra.mxu0 %v1893
    %v2371 = vpop.f32.mrf.mxu0
    %v2372 = vadd.f32 0.0, %v2371
    %v2373 = vpop.f32.mrf.mxu0
    %v2374 = vadd.f32 0.0, %v2373
    %2375 = vmatmul.bf16.gmra.mxu0 %v1895
    %v2376 = vpop.f32.mrf.mxu0
    %v2377 = vadd.f32 0.0, %v2376
    %v2378 = vpop.f32.mrf.mxu0
    %v2379 = vadd.f32 0.0, %v2378
    %2380 = vmatmul.bf16.gmra.mxu0 %v1897
    %v2381 = vpop.f32.mrf.mxu0
    %v2382 = vadd.f32 0.0, %v2381
    %v2383 = vpop.f32.mrf.mxu0
    %v2384 = vadd.f32 0.0, %v2383
    %2385 = vmatmul.bf16.gmra.mxu0 %v1899
    %v2386 = vpop.f32.mrf.mxu0
    %v2387 = vadd.f32 0.0, %v2386
    %v2388 = vpop.f32.mrf.mxu0
    %v2389 = vadd.f32 0.0, %v2388
    %2390 = vmatmul.bf16.gmra.mxu0 %v1901
    %v2391 = vpop.f32.mrf.mxu0
    %v2392 = vadd.f32 0.0, %v2391
    %v2393 = vpop.f32.mrf.mxu0
    %v2394 = vadd.f32 0.0, %v2393
    %2395 = vmatmul.bf16.gmra.mxu0 %v1903
    %v2396 = vpop.f32.mrf.mxu0
    %v2397 = vadd.f32 0.0, %v2396
    %v2398 = vpop.f32.mrf.mxu0
    %v2399 = vadd.f32 0.0, %v2398
    %2400 = vmatmul.bf16.gmra.mxu0 %v1905
    %v2401 = vpop.f32.mrf.mxu0
    %v2402 = vadd.f32 0.0, %v2401
    %v2403 = vpop.f32.mrf.mxu0
    %v2404 = vadd.f32 0.0, %v2403
    %2405 = vmatmul.bf16.gmra.mxu0 %v1907
    %v2406 = vpop.f32.mrf.mxu0
    %v2407 = vadd.f32 0.0, %v2406
    %v2408 = vpop.f32.mrf.mxu0
    %v2409 = vadd.f32 0.0, %v2408
    %2410 = vmatmul.bf16.gmra.mxu0 %v1909
    %v2411 = vpop.f32.mrf.mxu0
    %v2412 = vadd.f32 0.0, %v2411
    %v2413 = vpop.f32.mrf.mxu0
    %v2414 = vadd.f32 0.0, %v2413
    %2415 = vmatmul.bf16.gmra.mxu0 %v1911
    %v2416 = vpop.f32.mrf.mxu0
    %v2417 = vadd.f32 0.0, %v2416
    %v2418 = vpop.f32.mrf.mxu0
    %v2419 = vadd.f32 0.0, %v2418
    %2420 = vmatmul.bf16.gmra.mxu0 %v1913
    %v2421 = vpop.f32.mrf.mxu0
    %v2422 = vadd.f32 0.0, %v2421
    %v2423 = vpop.f32.mrf.mxu0
    %v2424 = vadd.f32 0.0, %v2423
    %2425 = vmatmul.bf16.gmra.mxu0 %v1915
    %v2426 = vpop.f32.mrf.mxu0
    %v2427 = vadd.f32 0.0, %v2426
    %v2428 = vpop.f32.mrf.mxu0
    %v2429 = vadd.f32 0.0, %v2428
    %2430 = vmatmul.bf16.gmra.mxu0 %v1917
    %v2431 = vpop.f32.mrf.mxu0
    %v2432 = vadd.f32 0.0, %v2431
    %v2433 = vpop.f32.mrf.mxu0
    %v2434 = vadd.f32 0.0, %v2433
    %2435 = vmatmul.bf16.gmra.mxu0 %v1919
    %v2436 = vpop.f32.mrf.mxu0
    %v2437 = vadd.f32 0.0, %v2436
    %v2438 = vpop.f32.mrf.mxu0
    %v2439 = vadd.f32 0.0, %v2438
    %2440 = vmatmul.bf16.gmra.mxu0 %v1921
    %v2441 = vpop.f32.mrf.mxu0
    %v2442 = vadd.f32 0.0, %v2441
    %v2443 = vpop.f32.mrf.mxu0
    %v2444 = vadd.f32 0.0, %v2443
    %2445 = vmatmul.bf16.gmra.mxu0 %v1923
    %v2446 = vpop.f32.mrf.mxu0
    %v2447 = vadd.f32 0.0, %v2446
    %v2448 = vpop.f32.mrf.mxu0
    %v2449 = vadd.f32 0.0, %v2448
    %2450 = vmatmul.bf16.gmra.mxu0 %v1925
    %v2451 = vpop.f32.mrf.mxu0
    %v2452 = vadd.f32 0.0, %v2451
    %v2453 = vpop.f32.mrf.mxu0
    %v2454 = vadd.f32 0.0, %v2453
    %2455 = vmatmul.bf16.gmra.mxu0 %v1927
    %v2456 = vpop.f32.mrf.mxu0
    %v2457 = vadd.f32 0.0, %v2456
    %v2458 = vpop.f32.mrf.mxu0
    %v2459 = vadd.f32 0.0, %v2458
    %2460 = vmatmul.bf16.gmra.mxu0 %v1929
    %v2461 = vpop.f32.mrf.mxu0
    %v2462 = vadd.f32 0.0, %v2461
    %v2463 = vpop.f32.mrf.mxu0
    %v2464 = vadd.f32 0.0, %v2463
    %2465 = vmatmul.bf16.gmra.mxu0 %v1931
    %v2466 = vpop.f32.mrf.mxu0
    %v2467 = vadd.f32 0.0, %v2466
    %v2468 = vpop.f32.mrf.mxu0
    %v2469 = vadd.f32 0.0, %v2468
    %2470 = vmatmul.bf16.gmra.mxu0 %v1933
    %v2471 = vpop.f32.mrf.mxu0
    %v2472 = vadd.f32 0.0, %v2471
    %v2473 = vpop.f32.mrf.mxu0
    %v2474 = vadd.f32 0.0, %v2473
    %2475 = vmatmul.bf16.gmra.mxu0 %v1935
    %v2476 = vpop.f32.mrf.mxu0
    %v2477 = vadd.f32 0.0, %v2476
    %v2478 = vpop.f32.mrf.mxu0
    %v2479 = vadd.f32 0.0, %v2478
    %2480 = vmatmul.bf16.gmra.mxu0 %v1937
    %v2481 = vpop.f32.mrf.mxu0
    %v2482 = vadd.f32 0.0, %v2481
    %v2483 = vpop.f32.mrf.mxu0
    %v2484 = vadd.f32 0.0, %v2483
    %2485 = vmatmul.bf16.gmra.mxu0 %v1939
    %v2486 = vpop.f32.mrf.mxu0
    %v2487 = vadd.f32 0.0, %v2486
    %v2488 = vpop.f32.mrf.mxu0
    %v2489 = vadd.f32 0.0, %v2488
    %2490 = vmatmul.bf16.gmra.mxu0 %v1941
    %v2491 = vpop.f32.mrf.mxu0
    %v2492 = vadd.f32 0.0, %v2491
    %v2493 = vpop.f32.mrf.mxu0
    %v2494 = vadd.f32 0.0, %v2493
    %2495 = vdwg.mxu0
    %2496 = vmatpush.bf16.msra.mxu0 %v2150
    %2497 = vmatpush.bf16.msra.mxu0 %v2149
    %2498 = vmatpush.bf16.msra.mxu0 %v2148
    %2499 = vmatpush.bf16.msra.mxu0 %v2147
    %2500 = vmatpush.bf16.msra.mxu0 %v2146
    %2501 = vmatpush.bf16.msra.mxu0 %v2145
    %2502 = vmatpush.bf16.msra.mxu0 %v2144
    %2503 = vmatpush.bf16.msra.mxu0 %v2143
    %2504 = vmatmul.bf16.gmra.mxu0 %v1816
    %v2505 = vpop.f32.mrf.mxu0
    %v2506 = vadd.f32 %v2177, %v2505
    %v2507 = vpop.f32.mrf.mxu0
    %v2508 = vadd.f32 %v2179, %v2507
    %2509 = vmatmul.bf16.gmra.mxu0 %v1818
    %v2510 = vpop.f32.mrf.mxu0
    %v2511 = vadd.f32 %v2182, %v2510
    %v2512 = vpop.f32.mrf.mxu0
    %v2513 = vadd.f32 %v2184, %v2512
    %2514 = vmatmul.bf16.gmra.mxu0 %v1820
    %v2515 = vpop.f32.mrf.mxu0
    %v2516 = vadd.f32 %v2187, %v2515
    %v2517 = vpop.f32.mrf.mxu0
    %v2518 = vadd.f32 %v2189, %v2517
    %2519 = vmatmul.bf16.gmra.mxu0 %v1822
    %v2520 = vpop.f32.mrf.mxu0
    %v2521 = vadd.f32 %v2192, %v2520
    %v2522 = vpop.f32.mrf.mxu0
    %v2523 = vadd.f32 %v2194, %v2522
    %2524 = vmatmul.bf16.gmra.mxu0 %v1824
    %v2525 = vpop.f32.mrf.mxu0
    %v2526 = vadd.f32 %v2197, %v2525
    %v2527 = vpop.f32.mrf.mxu0
    %v2528 = vadd.f32 %v2199, %v2527
    %2529 = vmatmul.bf16.gmra.mxu0 %v1826
    %v2530 = vpop.f32.mrf.mxu0
    %v2531 = vadd.f32 %v2202, %v2530
    %v2532 = vpop.f32.mrf.mxu0
    %v2533 = vadd.f32 %v2204, %v2532
    %2534 = vmatmul.bf16.gmra.mxu0 %v1828
    %v2535 = vpop.f32.mrf.mxu0
    %v2536 = vadd.f32 %v2207, %v2535
    %v2537 = vpop.f32.mrf.mxu0
    %v2538 = vadd.f32 %v2209, %v2537
    %2539 = vmatmul.bf16.gmra.mxu0 %v1830
    %v2540 = vpop.f32.mrf.mxu0
    %v2541 = vadd.f32 %v2212, %v2540
    %v2542 = vpop.f32.mrf.mxu0
    %v2543 = vadd.f32 %v2214, %v2542
    %2544 = vmatmul.bf16.gmra.mxu0 %v1832
    %v2545 = vpop.f32.mrf.mxu0
    %v2546 = vadd.f32 %v2217, %v2545
    %v2547 = vpop.f32.mrf.mxu0
    %v2548 = vadd.f32 %v2219, %v2547
    %2549 = vmatmul.bf16.gmra.mxu0 %v1834
    %v2550 = vpop.f32.mrf.mxu0
    %v2551 = vadd.f32 %v2222, %v2550
    %v2552 = vpop.f32.mrf.mxu0
    %v2553 = vadd.f32 %v2224, %v2552
    %2554 = vmatmul.bf16.gmra.mxu0 %v1836
    %v2555 = vpop.f32.mrf.mxu0
    %v2556 = vadd.f32 %v2227, %v2555
    %v2557 = vpop.f32.mrf.mxu0
    %v2558 = vadd.f32 %v2229, %v2557
    %2559 = vmatmul.bf16.gmra.mxu0 %v1838
    %v2560 = vpop.f32.mrf.mxu0
    %v2561 = vadd.f32 %v2232, %v2560
    %v2562 = vpop.f32.mrf.mxu0
    %v2563 = vadd.f32 %v2234, %v2562
    %2564 = vmatmul.bf16.gmra.mxu0 %v1840
    %v2565 = vpop.f32.mrf.mxu0
    %v2566 = vadd.f32 %v2237, %v2565
    %v2567 = vpop.f32.mrf.mxu0
    %v2568 = vadd.f32 %v2239, %v2567
    %2569 = vmatmul.bf16.gmra.mxu0 %v1842
    %v2570 = vpop.f32.mrf.mxu0
    %v2571 = vadd.f32 %v2242, %v2570
    %v2572 = vpop.f32.mrf.mxu0
    %v2573 = vadd.f32 %v2244, %v2572
    %2574 = vmatmul.bf16.gmra.mxu0 %v1844
    %v2575 = vpop.f32.mrf.mxu0
    %v2576 = vadd.f32 %v2247, %v2575
    %v2577 = vpop.f32.mrf.mxu0
    %v2578 = vadd.f32 %v2249, %v2577
    %2579 = vmatmul.bf16.gmra.mxu0 %v1846
    %v2580 = vpop.f32.mrf.mxu0
    %v2581 = vadd.f32 %v2252, %v2580
    %v2582 = vpop.f32.mrf.mxu0
    %v2583 = vadd.f32 %v2254, %v2582
    %2584 = vmatmul.bf16.gmra.mxu0 %v1848
    %v2585 = vpop.f32.mrf.mxu0
    %v2586 = vadd.f32 %v2257, %v2585
    %v2587 = vpop.f32.mrf.mxu0
    %v2588 = vadd.f32 %v2259, %v2587
    %2589 = vmatmul.bf16.gmra.mxu0 %v1850
    %v2590 = vpop.f32.mrf.mxu0
    %v2591 = vadd.f32 %v2262, %v2590
    %v2592 = vpop.f32.mrf.mxu0
    %v2593 = vadd.f32 %v2264, %v2592
    %2594 = vmatmul.bf16.gmra.mxu0 %v1852
    %v2595 = vpop.f32.mrf.mxu0
    %v2596 = vadd.f32 %v2267, %v2595
    %v2597 = vpop.f32.mrf.mxu0
    %v2598 = vadd.f32 %v2269, %v2597
    %2599 = vmatmul.bf16.gmra.mxu0 %v1854
    %v2600 = vpop.f32.mrf.mxu0
    %v2601 = vadd.f32 %v2272, %v2600
    %v2602 = vpop.f32.mrf.mxu0
    %v2603 = vadd.f32 %v2274, %v2602
    %2604 = vmatmul.bf16.gmra.mxu0 %v1856
    %v2605 = vpop.f32.mrf.mxu0
    %v2606 = vadd.f32 %v2277, %v2605
    %v2607 = vpop.f32.mrf.mxu0
    %v2608 = vadd.f32 %v2279, %v2607
    %2609 = vmatmul.bf16.gmra.mxu0 %v1858
    %v2610 = vpop.f32.mrf.mxu0
    %v2611 = vadd.f32 %v2282, %v2610
    %v2612 = vpop.f32.mrf.mxu0
    %v2613 = vadd.f32 %v2284, %v2612
    %2614 = vmatmul.bf16.gmra.mxu0 %v1860
    %v2615 = vpop.f32.mrf.mxu0
    %v2616 = vadd.f32 %v2287, %v2615
    %v2617 = vpop.f32.mrf.mxu0
    %v2618 = vadd.f32 %v2289, %v2617
    %2619 = vmatmul.bf16.gmra.mxu0 %v1862
    %v2620 = vpop.f32.mrf.mxu0
    %v2621 = vadd.f32 %v2292, %v2620
    %v2622 = vpop.f32.mrf.mxu0
    %v2623 = vadd.f32 %v2294, %v2622
    %2624 = vmatmul.bf16.gmra.mxu0 %v1864
    %v2625 = vpop.f32.mrf.mxu0
    %v2626 = vadd.f32 %v2297, %v2625
    %v2627 = vpop.f32.mrf.mxu0
    %v2628 = vadd.f32 %v2299, %v2627
    %2629 = vmatmul.bf16.gmra.mxu0 %v1866
    %v2630 = vpop.f32.mrf.mxu0
    %v2631 = vadd.f32 %v2302, %v2630
    %v2632 = vpop.f32.mrf.mxu0
    %v2633 = vadd.f32 %v2304, %v2632
    %2634 = vmatmul.bf16.gmra.mxu0 %v1868
    %v2635 = vpop.f32.mrf.mxu0
    %v2636 = vadd.f32 %v2307, %v2635
    %v2637 = vpop.f32.mrf.mxu0
    %v2638 = vadd.f32 %v2309, %v2637
    %2639 = vmatmul.bf16.gmra.mxu0 %v1870
    %v2640 = vpop.f32.mrf.mxu0
    %v2641 = vadd.f32 %v2312, %v2640
    %v2642 = vpop.f32.mrf.mxu0
    %v2643 = vadd.f32 %v2314, %v2642
    %2644 = vmatmul.bf16.gmra.mxu0 %v1872
    %v2645 = vpop.f32.mrf.mxu0
    %v2646 = vadd.f32 %v2317, %v2645
    %v2647 = vpop.f32.mrf.mxu0
    %v2648 = vadd.f32 %v2319, %v2647
    %2649 = vmatmul.bf16.gmra.mxu0 %v1874
    %v2650 = vpop.f32.mrf.mxu0
    %v2651 = vadd.f32 %v2322, %v2650
    %v2652 = vpop.f32.mrf.mxu0
    %v2653 = vadd.f32 %v2324, %v2652
    %2654 = vmatmul.bf16.gmra.mxu0 %v1876
    %v2655 = vpop.f32.mrf.mxu0
    %v2656 = vadd.f32 %v2327, %v2655
    %v2657 = vpop.f32.mrf.mxu0
    %v2658 = vadd.f32 %v2329, %v2657
    %2659 = vmatmul.bf16.gmra.mxu0 %v1878
    %v2660 = vpop.f32.mrf.mxu0
    %v2661 = vadd.f32 %v2332, %v2660
    %v2662 = vpop.f32.mrf.mxu0
    %v2663 = vadd.f32 %v2334, %v2662
    %2664 = vmatmul.bf16.gmra.mxu0 %v1880
    %v2665 = vpop.f32.mrf.mxu0
    %v2666 = vadd.f32 %v2337, %v2665
    %v2667 = vpop.f32.mrf.mxu0
    %v2668 = vadd.f32 %v2339, %v2667
    %2669 = vmatmul.bf16.gmra.mxu0 %v1882
    %v2670 = vpop.f32.mrf.mxu0
    %v2671 = vadd.f32 %v2342, %v2670
    %v2672 = vpop.f32.mrf.mxu0
    %v2673 = vadd.f32 %v2344, %v2672
    %2674 = vmatmul.bf16.gmra.mxu0 %v1884
    %v2675 = vpop.f32.mrf.mxu0
    %v2676 = vadd.f32 %v2347, %v2675
    %v2677 = vpop.f32.mrf.mxu0
    %v2678 = vadd.f32 %v2349, %v2677
    %2679 = vmatmul.bf16.gmra.mxu0 %v1886
    %v2680 = vpop.f32.mrf.mxu0
    %v2681 = vadd.f32 %v2352, %v2680
    %v2682 = vpop.f32.mrf.mxu0
    %v2683 = vadd.f32 %v2354, %v2682
    %2684 = vmatmul.bf16.gmra.mxu0 %v1888
    %v2685 = vpop.f32.mrf.mxu0
    %v2686 = vadd.f32 %v2357, %v2685
    %v2687 = vpop.f32.mrf.mxu0
    %v2688 = vadd.f32 %v2359, %v2687
    %2689 = vmatmul.bf16.gmra.mxu0 %v1890
    %v2690 = vpop.f32.mrf.mxu0
    %v2691 = vadd.f32 %v2362, %v2690
    %v2692 = vpop.f32.mrf.mxu0
    %v2693 = vadd.f32 %v2364, %v2692
    %2694 = vmatmul.bf16.gmra.mxu0 %v1892
    %v2695 = vpop.f32.mrf.mxu0
    %v2696 = vadd.f32 %v2367, %v2695
    %v2697 = vpop.f32.mrf.mxu0
    %v2698 = vadd.f32 %v2369, %v2697
    %2699 = vmatmul.bf16.gmra.mxu0 %v1894
    %v2700 = vpop.f32.mrf.mxu0
    %v2701 = vadd.f32 %v2372, %v2700
    %v2702 = vpop.f32.mrf.mxu0
    %v2703 = vadd.f32 %v2374, %v2702
    %2704 = vmatmul.bf16.gmra.mxu0 %v1896
    %v2705 = vpop.f32.mrf.mxu0
    %v2706 = vadd.f32 %v2377, %v2705
    %v2707 = vpop.f32.mrf.mxu0
    %v2708 = vadd.f32 %v2379, %v2707
    %2709 = vmatmul.bf16.gmra.mxu0 %v1898
    %v2710 = vpop.f32.mrf.mxu0
    %v2711 = vadd.f32 %v2382, %v2710
    %v2712 = vpop.f32.mrf.mxu0
    %v2713 = vadd.f32 %v2384, %v2712
    %2714 = vmatmul.bf16.gmra.mxu0 %v1900
    %v2715 = vpop.f32.mrf.mxu0
    %v2716 = vadd.f32 %v2387, %v2715
    %v2717 = vpop.f32.mrf.mxu0
    %v2718 = vadd.f32 %v2389, %v2717
    %2719 = vmatmul.bf16.gmra.mxu0 %v1902
    %v2720 = vpop.f32.mrf.mxu0
    %v2721 = vadd.f32 %v2392, %v2720
    %v2722 = vpop.f32.mrf.mxu0
    %v2723 = vadd.f32 %v2394, %v2722
    %2724 = vmatmul.bf16.gmra.mxu0 %v1904
    %v2725 = vpop.f32.mrf.mxu0
    %v2726 = vadd.f32 %v2397, %v2725
    %v2727 = vpop.f32.mrf.mxu0
    %v2728 = vadd.f32 %v2399, %v2727
    %2729 = vmatmul.bf16.gmra.mxu0 %v1906
    %v2730 = vpop.f32.mrf.mxu0
    %v2731 = vadd.f32 %v2402, %v2730
    %v2732 = vpop.f32.mrf.mxu0
    %v2733 = vadd.f32 %v2404, %v2732
    %2734 = vmatmul.bf16.gmra.mxu0 %v1908
    %v2735 = vpop.f32.mrf.mxu0
    %v2736 = vadd.f32 %v2407, %v2735
    %v2737 = vpop.f32.mrf.mxu0
    %v2738 = vadd.f32 %v2409, %v2737
    %2739 = vmatmul.bf16.gmra.mxu0 %v1910
    %v2740 = vpop.f32.mrf.mxu0
    %v2741 = vadd.f32 %v2412, %v2740
    %v2742 = vpop.f32.mrf.mxu0
    %v2743 = vadd.f32 %v2414, %v2742
    %2744 = vmatmul.bf16.gmra.mxu0 %v1912
    %v2745 = vpop.f32.mrf.mxu0
    %v2746 = vadd.f32 %v2417, %v2745
    %v2747 = vpop.f32.mrf.mxu0
    %v2748 = vadd.f32 %v2419, %v2747
    %2749 = vmatmul.bf16.gmra.mxu0 %v1914
    %v2750 = vpop.f32.mrf.mxu0
    %v2751 = vadd.f32 %v2422, %v2750
    %v2752 = vpop.f32.mrf.mxu0
    %v2753 = vadd.f32 %v2424, %v2752
    %2754 = vmatmul.bf16.gmra.mxu0 %v1916
    %v2755 = vpop.f32.mrf.mxu0
    %v2756 = vadd.f32 %v2427, %v2755
    %v2757 = vpop.f32.mrf.mxu0
    %v2758 = vadd.f32 %v2429, %v2757
    %2759 = vmatmul.bf16.gmra.mxu0 %v1918
    %v2760 = vpop.f32.mrf.mxu0
    %v2761 = vadd.f32 %v2432, %v2760
    %v2762 = vpop.f32.mrf.mxu0
    %v2763 = vadd.f32 %v2434, %v2762
    %2764 = vmatmul.bf16.gmra.mxu0 %v1920
    %v2765 = vpop.f32.mrf.mxu0
    %v2766 = vadd.f32 %v2437, %v2765
    %v2767 = vpop.f32.mrf.mxu0
    %v2768 = vadd.f32 %v2439, %v2767
    %2769 = vmatmul.bf16.gmra.mxu0 %v1922
    %v2770 = vpop.f32.mrf.mxu0
    %v2771 = vadd.f32 %v2442, %v2770
    %v2772 = vpop.f32.mrf.mxu0
    %v2773 = vadd.f32 %v2444, %v2772
    %2774 = vmatmul.bf16.gmra.mxu0 %v1924
    %v2775 = vpop.f32.mrf.mxu0
    %v2776 = vadd.f32 %v2447, %v2775
    %v2777 = vpop.f32.mrf.mxu0
    %v2778 = vadd.f32 %v2449, %v2777
    %2779 = vmatmul.bf16.gmra.mxu0 %v1926
    %v2780 = vpop.f32.mrf.mxu0
    %v2781 = vadd.f32 %v2452, %v2780
    %v2782 = vpop.f32.mrf.mxu0
    %v2783 = vadd.f32 %v2454, %v2782
    %2784 = vmatmul.bf16.gmra.mxu0 %v1928
    %v2785 = vpop.f32.mrf.mxu0
    %v2786 = vadd.f32 %v2457, %v2785
    %v2787 = vpop.f32.mrf.mxu0
    %v2788 = vadd.f32 %v2459, %v2787
    %2789 = vmatmul.bf16.gmra.mxu0 %v1930
    %v2790 = vpop.f32.mrf.mxu0
    %v2791 = vadd.f32 %v2462, %v2790
    %v2792 = vpop.f32.mrf.mxu0
    %v2793 = vadd.f32 %v2464, %v2792
    %2794 = vmatmul.bf16.gmra.mxu0 %v1932
    %v2795 = vpop.f32.mrf.mxu0
    %v2796 = vadd.f32 %v2467, %v2795
    %v2797 = vpop.f32.mrf.mxu0
    %v2798 = vadd.f32 %v2469, %v2797
    %2799 = vmatmul.bf16.gmra.mxu0 %v1934
    %v2800 = vpop.f32.mrf.mxu0
    %v2801 = vadd.f32 %v2472, %v2800
    %v2802 = vpop.f32.mrf.mxu0
    %v2803 = vadd.f32 %v2474, %v2802
    %2804 = vmatmul.bf16.gmra.mxu0 %v1936
    %v2805 = vpop.f32.mrf.mxu0
    %v2806 = vadd.f32 %v2477, %v2805
    %v2807 = vpop.f32.mrf.mxu0
    %v2808 = vadd.f32 %v2479, %v2807
    %2809 = vmatmul.bf16.gmra.mxu0 %v1938
    %v2810 = vpop.f32.mrf.mxu0
    %v2811 = vadd.f32 %v2482, %v2810
    %v2812 = vpop.f32.mrf.mxu0
    %v2813 = vadd.f32 %v2484, %v2812
    %2814 = vmatmul.bf16.gmra.mxu0 %v1940
    %v2815 = vpop.f32.mrf.mxu0
    %v2816 = vadd.f32 %v2487, %v2815
    %v2817 = vpop.f32.mrf.mxu0
    %v2818 = vadd.f32 %v2489, %v2817
    %2819 = vmatmul.bf16.gmra.mxu0 %v1942
    %v2820 = vpop.f32.mrf.mxu0
    %v2821 = vadd.f32 %v2492, %v2820
    %v2822 = vpop.f32.mrf.mxu0
    %v2823 = vadd.f32 %v2494, %v2822
    %2824 = vdwg.mxu0
    %v2825 = vpack.c.bf16 %v2506, %v2506
    %v2826 = vpack.c.bf16 %v2508, %v2508
    %v2827 = vpack.c.bf16 %v2511, %v2511
    %v2828 = vpack.c.bf16 %v2513, %v2513
    %v2829 = vpack.c.bf16 %v2516, %v2516
    %v2830 = vpack.c.bf16 %v2518, %v2518
    %v2831 = vpack.c.bf16 %v2521, %v2521
    %v2832 = vpack.c.bf16 %v2523, %v2523
    %v2833 = vpack.c.bf16 %v2526, %v2526
    %v2834 = vpack.c.bf16 %v2528, %v2528
    %v2835 = vpack.c.bf16 %v2531, %v2531
    %v2836 = vpack.c.bf16 %v2533, %v2533
    %v2837 = vpack.c.bf16 %v2536, %v2536
    %v2838 = vpack.c.bf16 %v2538, %v2538
    %v2839 = vpack.c.bf16 %v2541, %v2541
    %v2840 = vpack.c.bf16 %v2543, %v2543
    %v2841 = vpack.c.bf16 %v2546, %v2546
    %v2842 = vpack.c.bf16 %v2548, %v2548
    %v2843 = vpack.c.bf16 %v2551, %v2551
    %v2844 = vpack.c.bf16 %v2553, %v2553
    %v2845 = vpack.c.bf16 %v2556, %v2556
    %v2846 = vpack.c.bf16 %v2558, %v2558
    %v2847 = vpack.c.bf16 %v2561, %v2561
    %v2848 = vpack.c.bf16 %v2563, %v2563
    %v2849 = vpack.c.bf16 %v2566, %v2566
    %v2850 = vpack.c.bf16 %v2568, %v2568
    %v2851 = vpack.c.bf16 %v2571, %v2571
    %v2852 = vpack.c.bf16 %v2573, %v2573
    %v2853 = vpack.c.bf16 %v2576, %v2576
    %v2854 = vpack.c.bf16 %v2578, %v2578
    %v2855 = vpack.c.bf16 %v2581, %v2581
    %v2856 = vpack.c.bf16 %v2583, %v2583
    %v2857 = vpack.c.bf16 %v2586, %v2586
    %v2858 = vpack.c.bf16 %v2588, %v2588
    %v2859 = vpack.c.bf16 %v2591, %v2591
    %v2860 = vpack.c.bf16 %v2593, %v2593
    %v2861 = vpack.c.bf16 %v2596, %v2596
    %v2862 = vpack.c.bf16 %v2598, %v2598
    %v2863 = vpack.c.bf16 %v2601, %v2601
    %v2864 = vpack.c.bf16 %v2603, %v2603
    %v2865 = vpack.c.bf16 %v2606, %v2606
    %v2866 = vpack.c.bf16 %v2608, %v2608
    %v2867 = vpack.c.bf16 %v2611, %v2611
    %v2868 = vpack.c.bf16 %v2613, %v2613
    %v2869 = vpack.c.bf16 %v2616, %v2616
    %v2870 = vpack.c.bf16 %v2618, %v2618
    %v2871 = vpack.c.bf16 %v2621, %v2621
    %v2872 = vpack.c.bf16 %v2623, %v2623
    %v2873 = vpack.c.bf16 %v2626, %v2626
    %v2874 = vpack.c.bf16 %v2628, %v2628
    %v2875 = vpack.c.bf16 %v2631, %v2631
    %v2876 = vpack.c.bf16 %v2633, %v2633
    %v2877 = vpack.c.bf16 %v2636, %v2636
    %v2878 = vpack.c.bf16 %v2638, %v2638
    %v2879 = vpack.c.bf16 %v2641, %v2641
    %v2880 = vpack.c.bf16 %v2643, %v2643
    %v2881 = vpack.c.bf16 %v2646, %v2646
    %v2882 = vpack.c.bf16 %v2648, %v2648
    %v2883 = vpack.c.bf16 %v2651, %v2651
    %v2884 = vpack.c.bf16 %v2653, %v2653
    %v2885 = vpack.c.bf16 %v2656, %v2656
    %v2886 = vpack.c.bf16 %v2658, %v2658
    %v2887 = vpack.c.bf16 %v2661, %v2661
    %v2888 = vpack.c.bf16 %v2663, %v2663
    %v2889 = vpack.c.bf16 %v2666, %v2666
    %v2890 = vpack.c.bf16 %v2668, %v2668
    %v2891 = vpack.c.bf16 %v2671, %v2671
    %v2892 = vpack.c.bf16 %v2673, %v2673
    %v2893 = vpack.c.bf16 %v2676, %v2676
    %v2894 = vpack.c.bf16 %v2678, %v2678
    %v2895 = vpack.c.bf16 %v2681, %v2681
    %v2896 = vpack.c.bf16 %v2683, %v2683
    %v2897 = vpack.c.bf16 %v2686, %v2686
    %v2898 = vpack.c.bf16 %v2688, %v2688
    %v2899 = vpack.c.bf16 %v2691, %v2691
    %v2900 = vpack.c.bf16 %v2693, %v2693
    %v2901 = vpack.c.bf16 %v2696, %v2696
    %v2902 = vpack.c.bf16 %v2698, %v2698
    %v2903 = vpack.c.bf16 %v2701, %v2701
    %v2904 = vpack.c.bf16 %v2703, %v2703
    %v2905 = vpack.c.bf16 %v2706, %v2706
    %v2906 = vpack.c.bf16 %v2708, %v2708
    %v2907 = vpack.c.bf16 %v2711, %v2711
    %v2908 = vpack.c.bf16 %v2713, %v2713
    %v2909 = vpack.c.bf16 %v2716, %v2716
    %v2910 = vpack.c.bf16 %v2718, %v2718
    %v2911 = vpack.c.bf16 %v2721, %v2721
    %v2912 = vpack.c.bf16 %v2723, %v2723
    %v2913 = vpack.c.bf16 %v2726, %v2726
    %v2914 = vpack.c.bf16 %v2728, %v2728
    %v2915 = vpack.c.bf16 %v2731, %v2731
    %v2916 = vpack.c.bf16 %v2733, %v2733
    %v2917 = vpack.c.bf16 %v2736, %v2736
    %v2918 = vpack.c.bf16 %v2738, %v2738
    %v2919 = vpack.c.bf16 %v2741, %v2741
    %v2920 = vpack.c.bf16 %v2743, %v2743
    %v2921 = vpack.c.bf16 %v2746, %v2746
    %v2922 = vpack.c.bf16 %v2748, %v2748
    %v2923 = vpack.c.bf16 %v2751, %v2751
    %v2924 = vpack.c.bf16 %v2753, %v2753
    %v2925 = vpack.c.bf16 %v2756, %v2756
    %v2926 = vpack.c.bf16 %v2758, %v2758
    %v2927 = vpack.c.bf16 %v2761, %v2761
    %v2928 = vpack.c.bf16 %v2763, %v2763
    %v2929 = vpack.c.bf16 %v2766, %v2766
    %v2930 = vpack.c.bf16 %v2768, %v2768
    %v2931 = vpack.c.bf16 %v2771, %v2771
    %v2932 = vpack.c.bf16 %v2773, %v2773
    %v2933 = vpack.c.bf16 %v2776, %v2776
    %v2934 = vpack.c.bf16 %v2778, %v2778
    %v2935 = vpack.c.bf16 %v2781, %v2781
    %v2936 = vpack.c.bf16 %v2783, %v2783
    %v2937 = vpack.c.bf16 %v2786, %v2786
    %v2938 = vpack.c.bf16 %v2788, %v2788
    %v2939 = vpack.c.bf16 %v2791, %v2791
    %v2940 = vpack.c.bf16 %v2793, %v2793
    %v2941 = vpack.c.bf16 %v2796, %v2796
    %v2942 = vpack.c.bf16 %v2798, %v2798
    %v2943 = vpack.c.bf16 %v2801, %v2801
    %v2944 = vpack.c.bf16 %v2803, %v2803
    %v2945 = vpack.c.bf16 %v2806, %v2806
    %v2946 = vpack.c.bf16 %v2808, %v2808
    %v2947 = vpack.c.bf16 %v2811, %v2811
    %v2948 = vpack.c.bf16 %v2813, %v2813
    %v2949 = vpack.c.bf16 %v2816, %v2816
    %v2950 = vpack.c.bf16 %v2818, %v2818
    %v2951 = vpack.c.bf16 %v2821, %v2821
    %v2952 = vpack.c.bf16 %v2823, %v2823
    %2953 = vst [vmem:[#allocation3] sm:$0xf] %v2825
    %2954 = vst [vmem:[#allocation3 + $0x4] sm:$0xf] %v2826
    %2955 = vst [vmem:[#allocation3 + $0x8] sm:$0xf] %v2827
    %2956 = vst [vmem:[#allocation3 + $0xc] sm:$0xf] %v2828
    %2957 = vst [vmem:[#allocation3 + $0x10] sm:$0xf] %v2829
    %2958 = vst [vmem:[#allocation3 + $0x14] sm:$0xf] %v2830
    %2959 = vst [vmem:[#allocation3 + $0x18] sm:$0xf] %v2831
    %2960 = vst [vmem:[#allocation3 + $0x1c] sm:$0xf] %v2832
    %2961 = vst [vmem:[#allocation3 + $0x20] sm:$0xf] %v2833
    %2962 = vst [vmem:[#allocation3 + $0x24] sm:$0xf] %v2834
    %2963 = vst [vmem:[#allocation3 + $0x28] sm:$0xf] %v2835
    %2964 = vst [vmem:[#allocation3 + $0x2c] sm:$0xf] %v2836
    %2965 = vst [vmem:[#allocation3 + $0x30] sm:$0xf] %v2837
    %2966 = vst [vmem:[#allocation3 + $0x34] sm:$0xf] %v2838
    %2967 = vst [vmem:[#allocation3 + $0x38] sm:$0xf] %v2839
    %2968 = vst [vmem:[#allocation3 + $0x3c] sm:$0xf] %v2840
    %2969 = vst [vmem:[#allocation3 + $0x40] sm:$0xf] %v2841
    %2970 = vst [vmem:[#allocation3 + $0x44] sm:$0xf] %v2842
    %2971 = vst [vmem:[#allocation3 + $0x48] sm:$0xf] %v2843
    %2972 = vst [vmem:[#allocation3 + $0x4c] sm:$0xf] %v2844
    %2973 = vst [vmem:[#allocation3 + $0x50] sm:$0xf] %v2845
    %2974 = vst [vmem:[#allocation3 + $0x54] sm:$0xf] %v2846
    %2975 = vst [vmem:[#allocation3 + $0x58] sm:$0xf] %v2847
    %2976 = vst [vmem:[#allocation3 + $0x5c] sm:$0xf] %v2848
    %2977 = vst [vmem:[#allocation3 + $0x60] sm:$0xf] %v2849
    %2978 = vst [vmem:[#allocation3 + $0x64] sm:$0xf] %v2850
    %2979 = vst [vmem:[#allocation3 + $0x68] sm:$0xf] %v2851
    %2980 = vst [vmem:[#allocation3 + $0x6c] sm:$0xf] %v2852
    %2981 = vst [vmem:[#allocation3 + $0x70] sm:$0xf] %v2853
    %2982 = vst [vmem:[#allocation3 + $0x74] sm:$0xf] %v2854
    %2983 = vst [vmem:[#allocation3 + $0x78] sm:$0xf] %v2855
    %2984 = vst [vmem:[#allocation3 + $0x7c] sm:$0xf] %v2856
    %2985 = vst [vmem:[#allocation3 + $0x80] sm:$0xf] %v2857
    %2986 = vst [vmem:[#allocation3 + $0x84] sm:$0xf] %v2858
    %2987 = vst [vmem:[#allocation3 + $0x88] sm:$0xf] %v2859
    %2988 = vst [vmem:[#allocation3 + $0x8c] sm:$0xf] %v2860
    %2989 = vst [vmem:[#allocation3 + $0x90] sm:$0xf] %v2861
    %2990 = vst [vmem:[#allocation3 + $0x94] sm:$0xf] %v2862
    %2991 = vst [vmem:[#allocation3 + $0x98] sm:$0xf] %v2863
    %2992 = vst [vmem:[#allocation3 + $0x9c] sm:$0xf] %v2864
    %2993 = vst [vmem:[#allocation3 + $0xa0] sm:$0xf] %v2865
    %2994 = vst [vmem:[#allocation3 + $0xa4] sm:$0xf] %v2866
    %2995 = vst [vmem:[#allocation3 + $0xa8] sm:$0xf] %v2867
    %2996 = vst [vmem:[#allocation3 + $0xac] sm:$0xf] %v2868
    %2997 = vst [vmem:[#allocation3 + $0xb0] sm:$0xf] %v2869
    %2998 = vst [vmem:[#allocation3 + $0xb4] sm:$0xf] %v2870
    %2999 = vst [vmem:[#allocation3 + $0xb8] sm:$0xf] %v2871
    %3000 = vst [vmem:[#allocation3 + $0xbc] sm:$0xf] %v2872
    %3001 = vst [vmem:[#allocation3 + $0xc0] sm:$0xf] %v2873
    %3002 = vst [vmem:[#allocation3 + $0xc4] sm:$0xf] %v2874
    %3003 = vst [vmem:[#allocation3 + $0xc8] sm:$0xf] %v2875
    %3004 = vst [vmem:[#allocation3 + $0xcc] sm:$0xf] %v2876
    %3005 = vst [vmem:[#allocation3 + $0xd0] sm:$0xf] %v2877
    %3006 = vst [vmem:[#allocation3 + $0xd4] sm:$0xf] %v2878
    %3007 = vst [vmem:[#allocation3 + $0xd8] sm:$0xf] %v2879
    %3008 = vst [vmem:[#allocation3 + $0xdc] sm:$0xf] %v2880
    %3009 = vst [vmem:[#allocation3 + $0xe0] sm:$0xf] %v2881
    %3010 = vst [vmem:[#allocation3 + $0xe4] sm:$0xf] %v2882
    %3011 = vst [vmem:[#allocation3 + $0xe8] sm:$0xf] %v2883
    %3012 = vst [vmem:[#allocation3 + $0xec] sm:$0xf] %v2884
    %3013 = vst [vmem:[#allocation3 + $0xf0] sm:$0xf] %v2885
    %3014 = vst [vmem:[#allocation3 + $0xf4] sm:$0xf] %v2886
    %3015 = vst [vmem:[#allocation3 + $0xf8] sm:$0xf] %v2887
    %3016 = vst [vmem:[#allocation3 + $0xfc] sm:$0xf] %v2888
    %3017 = vst [vmem:[#allocation3 + $0x100] sm:$0xf] %v2889
    %3018 = vst [vmem:[#allocation3 + $0x104] sm:$0xf] %v2890
    %3019 = vst [vmem:[#allocation3 + $0x108] sm:$0xf] %v2891
    %3020 = vst [vmem:[#allocation3 + $0x10c] sm:$0xf] %v2892
    %3021 = vst [vmem:[#allocation3 + $0x110] sm:$0xf] %v2893
    %3022 = vst [vmem:[#allocation3 + $0x114] sm:$0xf] %v2894
    %3023 = vst [vmem:[#allocation3 + $0x118] sm:$0xf] %v2895
    %3024 = vst [vmem:[#allocation3 + $0x11c] sm:$0xf] %v2896
    %3025 = vst [vmem:[#allocation3 + $0x120] sm:$0xf] %v2897
    %3026 = vst [vmem:[#allocation3 + $0x124] sm:$0xf] %v2898
    %3027 = vst [vmem:[#allocation3 + $0x128] sm:$0xf] %v2899
    %3028 = vst [vmem:[#allocation3 + $0x12c] sm:$0xf] %v2900
    %3029 = vst [vmem:[#allocation3 + $0x130] sm:$0xf] %v2901
    %3030 = vst [vmem:[#allocation3 + $0x134] sm:$0xf] %v2902
    %3031 = vst [vmem:[#allocation3 + $0x138] sm:$0xf] %v2903
    %3032 = vst [vmem:[#allocation3 + $0x13c] sm:$0xf] %v2904
    %3033 = vst [vmem:[#allocation3 + $0x140] sm:$0xf] %v2905
    %3034 = vst [vmem:[#allocation3 + $0x144] sm:$0xf] %v2906
    %3035 = vst [vmem:[#allocation3 + $0x148] sm:$0xf] %v2907
    %3036 = vst [vmem:[#allocation3 + $0x14c] sm:$0xf] %v2908
    %3037 = vst [vmem:[#allocation3 + $0x150] sm:$0xf] %v2909
    %3038 = vst [vmem:[#allocation3 + $0x154] sm:$0xf] %v2910
    %3039 = vst [vmem:[#allocation3 + $0x158] sm:$0xf] %v2911
    %3040 = vst [vmem:[#allocation3 + $0x15c] sm:$0xf] %v2912
    %3041 = vst [vmem:[#allocation3 + $0x160] sm:$0xf] %v2913
    %3042 = vst [vmem:[#allocation3 + $0x164] sm:$0xf] %v2914
    %3043 = vst [vmem:[#allocation3 + $0x168] sm:$0xf] %v2915
    %3044 = vst [vmem:[#allocation3 + $0x16c] sm:$0xf] %v2916
    %3045 = vst [vmem:[#allocation3 + $0x170] sm:$0xf] %v2917
    %3046 = vst [vmem:[#allocation3 + $0x174] sm:$0xf] %v2918
    %3047 = vst [vmem:[#allocation3 + $0x178] sm:$0xf] %v2919
    %3048 = vst [vmem:[#allocation3 + $0x17c] sm:$0xf] %v2920
    %3049 = vst [vmem:[#allocation3 + $0x180] sm:$0xf] %v2921
    %3050 = vst [vmem:[#allocation3 + $0x184] sm:$0xf] %v2922
    %3051 = vst [vmem:[#allocation3 + $0x188] sm:$0xf] %v2923
    %3052 = vst [vmem:[#allocation3 + $0x18c] sm:$0xf] %v2924
    %3053 = vst [vmem:[#allocation3 + $0x190] sm:$0xf] %v2925
    %3054 = vst [vmem:[#allocation3 + $0x194] sm:$0xf] %v2926
    %3055 = vst [vmem:[#allocation3 + $0x198] sm:$0xf] %v2927
    %3056 = vst [vmem:[#allocation3 + $0x19c] sm:$0xf] %v2928
    %3057 = vst [vmem:[#allocation3 + $0x1a0] sm:$0xf] %v2929
    %3058 = vst [vmem:[#allocation3 + $0x1a4] sm:$0xf] %v2930
    %3059 = vst [vmem:[#allocation3 + $0x1a8] sm:$0xf] %v2931
    %3060 = vst [vmem:[#allocation3 + $0x1ac] sm:$0xf] %v2932
    %3061 = vst [vmem:[#allocation3 + $0x1b0] sm:$0xf] %v2933
    %3062 = vst [vmem:[#allocation3 + $0x1b4] sm:$0xf] %v2934
    %3063 = vst [vmem:[#allocation3 + $0x1b8] sm:$0xf] %v2935
    %3064 = vst [vmem:[#allocation3 + $0x1bc] sm:$0xf] %v2936
    %3065 = vst [vmem:[#allocation3 + $0x1c0] sm:$0xf] %v2937
    %3066 = vst [vmem:[#allocation3 + $0x1c4] sm:$0xf] %v2938
    %3067 = vst [vmem:[#allocation3 + $0x1c8] sm:$0xf] %v2939
    %3068 = vst [vmem:[#allocation3 + $0x1cc] sm:$0xf] %v2940
    %3069 = vst [vmem:[#allocation3 + $0x1d0] sm:$0xf] %v2941
    %3070 = vst [vmem:[#allocation3 + $0x1d4] sm:$0xf] %v2942
    %3071 = vst [vmem:[#allocation3 + $0x1d8] sm:$0xf] %v2943
    %3072 = vst [vmem:[#allocation3 + $0x1dc] sm:$0xf] %v2944
    %3073 = vst [vmem:[#allocation3 + $0x1e0] sm:$0xf] %v2945
    %3074 = vst [vmem:[#allocation3 + $0x1e4] sm:$0xf] %v2946
    %3075 = vst [vmem:[#allocation3 + $0x1e8] sm:$0xf] %v2947
    %3076 = vst [vmem:[#allocation3 + $0x1ec] sm:$0xf] %v2948
    %3077 = vst [vmem:[#allocation3 + $0x1f0] sm:$0xf] %v2949
    %3078 = vst [vmem:[#allocation3 + $0x1f4] sm:$0xf] %v2950
    %3079 = vst [vmem:[#allocation3 + $0x1f8] sm:$0xf] %v2951
    %3080 = vst [vmem:[#allocation3 + $0x1fc] sm:$0xf] %v2952
    %v3081 = vld [vmem:[#allocation3] sm:$0xf]
    %v3082 = vld [vmem:[#allocation3 + $0x4] sm:$0xf]
    %v3083 = vld [vmem:[#allocation3 + $0x8] sm:$0xf]
    %v3084 = vld [vmem:[#allocation3 + $0xc] sm:$0xf]
    %v3085 = vld [vmem:[#allocation3 + $0x10] sm:$0xf]
    %v3086 = vld [vmem:[#allocation3 + $0x14] sm:$0xf]
    %v3087 = vld [vmem:[#allocation3 + $0x18] sm:$0xf]
    %v3088 = vld [vmem:[#allocation3 + $0x1c] sm:$0xf]
    %3089 = vst [vmem:[#allocation4] sm:$0xf] %v3081
    %3090 = vst [vmem:[#allocation4 + $0x40] sm:$0xf] %v3082
    %3091 = vst [vmem:[#allocation4 + $0x80] sm:$0xf] %v3083
    %3092 = vst [vmem:[#allocation4 + $0xc0] sm:$0xf] %v3084
    %3093 = vst [vmem:[#allocation4 + $0x100] sm:$0xf] %v3085
    %3094 = vst [vmem:[#allocation4 + $0x140] sm:$0xf] %v3086
    %3095 = vst [vmem:[#allocation4 + $0x180] sm:$0xf] %v3087
    %3096 = vst [vmem:[#allocation4 + $0x1c0] sm:$0xf] %v3088
    %v3097 = vld [vmem:[#allocation3 + $0x20] sm:$0xf]
    %v3098 = vld [vmem:[#allocation3 + $0x24] sm:$0xf]
    %v3099 = vld [vmem:[#allocation3 + $0x28] sm:$0xf]
    %v3100 = vld [vmem:[#allocation3 + $0x2c] sm:$0xf]
    %v3101 = vld [vmem:[#allocation3 + $0x30] sm:$0xf]
    %v3102 = vld [vmem:[#allocation3 + $0x34] sm:$0xf]
    %v3103 = vld [vmem:[#allocation3 + $0x38] sm:$0xf]
    %v3104 = vld [vmem:[#allocation3 + $0x3c] sm:$0xf]
    %3105 = vst [vmem:[#allocation4 + $0x4] sm:$0xf] %v3097
    %3106 = vst [vmem:[#allocation4 + $0x44] sm:$0xf] %v3098
    %3107 = vst [vmem:[#allocation4 + $0x84] sm:$0xf] %v3099
    %3108 = vst [vmem:[#allocation4 + $0xc4] sm:$0xf] %v3100
    %3109 = vst [vmem:[#allocation4 + $0x104] sm:$0xf] %v3101
    %3110 = vst [vmem:[#allocation4 + $0x144] sm:$0xf] %v3102
    %3111 = vst [vmem:[#allocation4 + $0x184] sm:$0xf] %v3103
    %3112 = vst [vmem:[#allocation4 + $0x1c4] sm:$0xf] %v3104
    %v3113 = vld [vmem:[#allocation3 + $0x40] sm:$0xf]
    %v3114 = vld [vmem:[#allocation3 + $0x44] sm:$0xf]
    %v3115 = vld [vmem:[#allocation3 + $0x48] sm:$0xf]
    %v3116 = vld [vmem:[#allocation3 + $0x4c] sm:$0xf]
    %v3117 = vld [vmem:[#allocation3 + $0x50] sm:$0xf]
    %v3118 = vld [vmem:[#allocation3 + $0x54] sm:$0xf]
    %v3119 = vld [vmem:[#allocation3 + $0x58] sm:$0xf]
    %v3120 = vld [vmem:[#allocation3 + $0x5c] sm:$0xf]
    %3121 = vst [vmem:[#allocation4 + $0x8] sm:$0xf] %v3113
    %3122 = vst [vmem:[#allocation4 + $0x48] sm:$0xf] %v3114
    %3123 = vst [vmem:[#allocation4 + $0x88] sm:$0xf] %v3115
    %3124 = vst [vmem:[#allocation4 + $0xc8] sm:$0xf] %v3116
    %3125 = vst [vmem:[#allocation4 + $0x108] sm:$0xf] %v3117
    %3126 = vst [vmem:[#allocation4 + $0x148] sm:$0xf] %v3118
    %3127 = vst [vmem:[#allocation4 + $0x188] sm:$0xf] %v3119
    %3128 = vst [vmem:[#allocation4 + $0x1c8] sm:$0xf] %v3120
    %v3129 = vld [vmem:[#allocation3 + $0x60] sm:$0xf]
    %v3130 = vld [vmem:[#allocation3 + $0x64] sm:$0xf]
    %v3131 = vld [vmem:[#allocation3 + $0x68] sm:$0xf]
    %v3132 = vld [vmem:[#allocation3 + $0x6c] sm:$0xf]
    %v3133 = vld [vmem:[#allocation3 + $0x70] sm:$0xf]
    %v3134 = vld [vmem:[#allocation3 + $0x74] sm:$0xf]
    %v3135 = vld [vmem:[#allocation3 + $0x78] sm:$0xf]
    %v3136 = vld [vmem:[#allocation3 + $0x7c] sm:$0xf]
    %3137 = vst [vmem:[#allocation4 + $0xc] sm:$0xf] %v3129
    %3138 = vst [vmem:[#allocation4 + $0x4c] sm:$0xf] %v3130
    %3139 = vst [vmem:[#allocation4 + $0x8c] sm:$0xf] %v3131
    %3140 = vst [vmem:[#allocation4 + $0xcc] sm:$0xf] %v3132
    %3141 = vst [vmem:[#allocation4 + $0x10c] sm:$0xf] %v3133
    %3142 = vst [vmem:[#allocation4 + $0x14c] sm:$0xf] %v3134
    %3143 = vst [vmem:[#allocation4 + $0x18c] sm:$0xf] %v3135
    %3144 = vst [vmem:[#allocation4 + $0x1cc] sm:$0xf] %v3136
    %v3145 = vld [vmem:[#allocation3 + $0x80] sm:$0xf]
    %v3146 = vld [vmem:[#allocation3 + $0x84] sm:$0xf]
    %v3147 = vld [vmem:[#allocation3 + $0x88] sm:$0xf]
    %v3148 = vld [vmem:[#allocation3 + $0x8c] sm:$0xf]
    %v3149 = vld [vmem:[#allocation3 + $0x90] sm:$0xf]
    %v3150 = vld [vmem:[#allocation3 + $0x94] sm:$0xf]
    %v3151 = vld [vmem:[#allocation3 + $0x98] sm:$0xf]
    %v3152 = vld [vmem:[#allocation3 + $0x9c] sm:$0xf]
    %3153 = vst [vmem:[#allocation4 + $0x10] sm:$0xf] %v3145
    %3154 = vst [vmem:[#allocation4 + $0x50] sm:$0xf] %v3146
    %3155 = vst [vmem:[#allocation4 + $0x90] sm:$0xf] %v3147
    %3156 = vst [vmem:[#allocation4 + $0xd0] sm:$0xf] %v3148
    %3157 = vst [vmem:[#allocation4 + $0x110] sm:$0xf] %v3149
    %3158 = vst [vmem:[#allocation4 + $0x150] sm:$0xf] %v3150
    %3159 = vst [vmem:[#allocation4 + $0x190] sm:$0xf] %v3151
    %3160 = vst [vmem:[#allocation4 + $0x1d0] sm:$0xf] %v3152
    %v3161 = vld [vmem:[#allocation3 + $0xa0] sm:$0xf]
    %v3162 = vld [vmem:[#allocation3 + $0xa4] sm:$0xf]
    %v3163 = vld [vmem:[#allocation3 + $0xa8] sm:$0xf]
    %v3164 = vld [vmem:[#allocation3 + $0xac] sm:$0xf]
    %v3165 = vld [vmem:[#allocation3 + $0xb0] sm:$0xf]
    %v3166 = vld [vmem:[#allocation3 + $0xb4] sm:$0xf]
    %v3167 = vld [vmem:[#allocation3 + $0xb8] sm:$0xf]
    %v3168 = vld [vmem:[#allocation3 + $0xbc] sm:$0xf]
    %3169 = vst [vmem:[#allocation4 + $0x14] sm:$0xf] %v3161
    %3170 = vst [vmem:[#allocation4 + $0x54] sm:$0xf] %v3162
    %3171 = vst [vmem:[#allocation4 + $0x94] sm:$0xf] %v3163
    %3172 = vst [vmem:[#allocation4 + $0xd4] sm:$0xf] %v3164
    %3173 = vst [vmem:[#allocation4 + $0x114] sm:$0xf] %v3165
    %3174 = vst [vmem:[#allocation4 + $0x154] sm:$0xf] %v3166
    %3175 = vst [vmem:[#allocation4 + $0x194] sm:$0xf] %v3167
    %3176 = vst [vmem:[#allocation4 + $0x1d4] sm:$0xf] %v3168
    %v3177 = vld [vmem:[#allocation3 + $0xc0] sm:$0xf]
    %v3178 = vld [vmem:[#allocation3 + $0xc4] sm:$0xf]
    %v3179 = vld [vmem:[#allocation3 + $0xc8] sm:$0xf]
    %v3180 = vld [vmem:[#allocation3 + $0xcc] sm:$0xf]
    %v3181 = vld [vmem:[#allocation3 + $0xd0] sm:$0xf]
    %v3182 = vld [vmem:[#allocation3 + $0xd4] sm:$0xf]
    %v3183 = vld [vmem:[#allocation3 + $0xd8] sm:$0xf]
    %v3184 = vld [vmem:[#allocation3 + $0xdc] sm:$0xf]
    %3185 = vst [vmem:[#allocation4 + $0x18] sm:$0xf] %v3177
    %3186 = vst [vmem:[#allocation4 + $0x58] sm:$0xf] %v3178
    %3187 = vst [vmem:[#allocation4 + $0x98] sm:$0xf] %v3179
    %3188 = vst [vmem:[#allocation4 + $0xd8] sm:$0xf] %v3180
    %3189 = vst [vmem:[#allocation4 + $0x118] sm:$0xf] %v3181
    %3190 = vst [vmem:[#allocation4 + $0x158] sm:$0xf] %v3182
    %3191 = vst [vmem:[#allocation4 + $0x198] sm:$0xf] %v3183
    %3192 = vst [vmem:[#allocation4 + $0x1d8] sm:$0xf] %v3184
    %v3193 = vld [vmem:[#allocation3 + $0xe0] sm:$0xf]
    %v3194 = vld [vmem:[#allocation3 + $0xe4] sm:$0xf]
    %v3195 = vld [vmem:[#allocation3 + $0xe8] sm:$0xf]
    %v3196 = vld [vmem:[#allocation3 + $0xec] sm:$0xf]
    %v3197 = vld [vmem:[#allocation3 + $0xf0] sm:$0xf]
    %v3198 = vld [vmem:[#allocation3 + $0xf4] sm:$0xf]
    %v3199 = vld [vmem:[#allocation3 + $0xf8] sm:$0xf]
    %v3200 = vld [vmem:[#allocation3 + $0xfc] sm:$0xf]
    %3201 = vst [vmem:[#allocation4 + $0x1c] sm:$0xf] %v3193
    %3202 = vst [vmem:[#allocation4 + $0x5c] sm:$0xf] %v3194
    %3203 = vst [vmem:[#allocation4 + $0x9c] sm:$0xf] %v3195
    %3204 = vst [vmem:[#allocation4 + $0xdc] sm:$0xf] %v3196
    %3205 = vst [vmem:[#allocation4 + $0x11c] sm:$0xf] %v3197
    %3206 = vst [vmem:[#allocation4 + $0x15c] sm:$0xf] %v3198
    %3207 = vst [vmem:[#allocation4 + $0x19c] sm:$0xf] %v3199
    %3208 = vst [vmem:[#allocation4 + $0x1dc] sm:$0xf] %v3200
    %v3209 = vld [vmem:[#allocation3 + $0x100] sm:$0xf]
    %v3210 = vld [vmem:[#allocation3 + $0x104] sm:$0xf]
    %v3211 = vld [vmem:[#allocation3 + $0x108] sm:$0xf]
    %v3212 = vld [vmem:[#allocation3 + $0x10c] sm:$0xf]
    %v3213 = vld [vmem:[#allocation3 + $0x110] sm:$0xf]
    %v3214 = vld [vmem:[#allocation3 + $0x114] sm:$0xf]
    %v3215 = vld [vmem:[#allocation3 + $0x118] sm:$0xf]
    %v3216 = vld [vmem:[#allocation3 + $0x11c] sm:$0xf]
    %3217 = vst [vmem:[#allocation4 + $0x20] sm:$0xf] %v3209
    %3218 = vst [vmem:[#allocation4 + $0x60] sm:$0xf] %v3210
    %3219 = vst [vmem:[#allocation4 + $0xa0] sm:$0xf] %v3211
    %3220 = vst [vmem:[#allocation4 + $0xe0] sm:$0xf] %v3212
    %3221 = vst [vmem:[#allocation4 + $0x120] sm:$0xf] %v3213
    %3222 = vst [vmem:[#allocation4 + $0x160] sm:$0xf] %v3214
    %3223 = vst [vmem:[#allocation4 + $0x1a0] sm:$0xf] %v3215
    %3224 = vst [vmem:[#allocation4 + $0x1e0] sm:$0xf] %v3216
    %v3225 = vld [vmem:[#allocation3 + $0x120] sm:$0xf]
    %v3226 = vld [vmem:[#allocation3 + $0x124] sm:$0xf]
    %v3227 = vld [vmem:[#allocation3 + $0x128] sm:$0xf]
    %v3228 = vld [vmem:[#allocation3 + $0x12c] sm:$0xf]
    %v3229 = vld [vmem:[#allocation3 + $0x130] sm:$0xf]
    %v3230 = vld [vmem:[#allocation3 + $0x134] sm:$0xf]
    %v3231 = vld [vmem:[#allocation3 + $0x138] sm:$0xf]
    %v3232 = vld [vmem:[#allocation3 + $0x13c] sm:$0xf]
    %3233 = vst [vmem:[#allocation4 + $0x24] sm:$0xf] %v3225
    %3234 = vst [vmem:[#allocation4 + $0x64] sm:$0xf] %v3226
    %3235 = vst [vmem:[#allocation4 + $0xa4] sm:$0xf] %v3227
    %3236 = vst [vmem:[#allocation4 + $0xe4] sm:$0xf] %v3228
    %3237 = vst [vmem:[#allocation4 + $0x124] sm:$0xf] %v3229
    %3238 = vst [vmem:[#allocation4 + $0x164] sm:$0xf] %v3230
    %3239 = vst [vmem:[#allocation4 + $0x1a4] sm:$0xf] %v3231
    %3240 = vst [vmem:[#allocation4 + $0x1e4] sm:$0xf] %v3232
    %v3241 = vld [vmem:[#allocation3 + $0x140] sm:$0xf]
    %v3242 = vld [vmem:[#allocation3 + $0x144] sm:$0xf]
    %v3243 = vld [vmem:[#allocation3 + $0x148] sm:$0xf]
    %v3244 = vld [vmem:[#allocation3 + $0x14c] sm:$0xf]
    %v3245 = vld [vmem:[#allocation3 + $0x150] sm:$0xf]
    %v3246 = vld [vmem:[#allocation3 + $0x154] sm:$0xf]
    %v3247 = vld [vmem:[#allocation3 + $0x158] sm:$0xf]
    %v3248 = vld [vmem:[#allocation3 + $0x15c] sm:$0xf]
    %3249 = vst [vmem:[#allocation4 + $0x28] sm:$0xf] %v3241
    %3250 = vst [vmem:[#allocation4 + $0x68] sm:$0xf] %v3242
    %3251 = vst [vmem:[#allocation4 + $0xa8] sm:$0xf] %v3243
    %3252 = vst [vmem:[#allocation4 + $0xe8] sm:$0xf] %v3244
    %3253 = vst [vmem:[#allocation4 + $0x128] sm:$0xf] %v3245
    %3254 = vst [vmem:[#allocation4 + $0x168] sm:$0xf] %v3246
    %3255 = vst [vmem:[#allocation4 + $0x1a8] sm:$0xf] %v3247
    %3256 = vst [vmem:[#allocation4 + $0x1e8] sm:$0xf] %v3248
    %v3257 = vld [vmem:[#allocation3 + $0x160] sm:$0xf]
    %v3258 = vld [vmem:[#allocation3 + $0x164] sm:$0xf]
    %v3259 = vld [vmem:[#allocation3 + $0x168] sm:$0xf]
    %v3260 = vld [vmem:[#allocation3 + $0x16c] sm:$0xf]
    %v3261 = vld [vmem:[#allocation3 + $0x170] sm:$0xf]
    %v3262 = vld [vmem:[#allocation3 + $0x174] sm:$0xf]
    %v3263 = vld [vmem:[#allocation3 + $0x178] sm:$0xf]
    %v3264 = vld [vmem:[#allocation3 + $0x17c] sm:$0xf]
    %3265 = vst [vmem:[#allocation4 + $0x2c] sm:$0xf] %v3257
    %3266 = vst [vmem:[#allocation4 + $0x6c] sm:$0xf] %v3258
    %3267 = vst [vmem:[#allocation4 + $0xac] sm:$0xf] %v3259
    %3268 = vst [vmem:[#allocation4 + $0xec] sm:$0xf] %v3260
    %3269 = vst [vmem:[#allocation4 + $0x12c] sm:$0xf] %v3261
    %3270 = vst [vmem:[#allocation4 + $0x16c] sm:$0xf] %v3262
    %3271 = vst [vmem:[#allocation4 + $0x1ac] sm:$0xf] %v3263
    %3272 = vst [vmem:[#allocation4 + $0x1ec] sm:$0xf] %v3264
    %v3273 = vld [vmem:[#allocation3 + $0x180] sm:$0xf]
    %v3274 = vld [vmem:[#allocation3 + $0x184] sm:$0xf]
    %v3275 = vld [vmem:[#allocation3 + $0x188] sm:$0xf]
    %v3276 = vld [vmem:[#allocation3 + $0x18c] sm:$0xf]
    %v3277 = vld [vmem:[#allocation3 + $0x190] sm:$0xf]
    %v3278 = vld [vmem:[#allocation3 + $0x194] sm:$0xf]
    %v3279 = vld [vmem:[#allocation3 + $0x198] sm:$0xf]
    %v3280 = vld [vmem:[#allocation3 + $0x19c] sm:$0xf]
    %3281 = vst [vmem:[#allocation4 + $0x30] sm:$0xf] %v3273
    %3282 = vst [vmem:[#allocation4 + $0x70] sm:$0xf] %v3274
    %3283 = vst [vmem:[#allocation4 + $0xb0] sm:$0xf] %v3275
    %3284 = vst [vmem:[#allocation4 + $0xf0] sm:$0xf] %v3276
    %3285 = vst [vmem:[#allocation4 + $0x130] sm:$0xf] %v3277
    %3286 = vst [vmem:[#allocation4 + $0x170] sm:$0xf] %v3278
    %3287 = vst [vmem:[#allocation4 + $0x1b0] sm:$0xf] %v3279
    %3288 = vst [vmem:[#allocation4 + $0x1f0] sm:$0xf] %v3280
    %v3289 = vld [vmem:[#allocation3 + $0x1a0] sm:$0xf]
    %v3290 = vld [vmem:[#allocation3 + $0x1a4] sm:$0xf]
    %v3291 = vld [vmem:[#allocation3 + $0x1a8] sm:$0xf]
    %v3292 = vld [vmem:[#allocation3 + $0x1ac] sm:$0xf]
    %v3293 = vld [vmem:[#allocation3 + $0x1b0] sm:$0xf]
    %v3294 = vld [vmem:[#allocation3 + $0x1b4] sm:$0xf]
    %v3295 = vld [vmem:[#allocation3 + $0x1b8] sm:$0xf]
    %v3296 = vld [vmem:[#allocation3 + $0x1bc] sm:$0xf]
    %3297 = vst [vmem:[#allocation4 + $0x34] sm:$0xf] %v3289
    %3298 = vst [vmem:[#allocation4 + $0x74] sm:$0xf] %v3290
    %3299 = vst [vmem:[#allocation4 + $0xb4] sm:$0xf] %v3291
    %3300 = vst [vmem:[#allocation4 + $0xf4] sm:$0xf] %v3292
    %3301 = vst [vmem:[#allocation4 + $0x134] sm:$0xf] %v3293
    %3302 = vst [vmem:[#allocation4 + $0x174] sm:$0xf] %v3294
    %3303 = vst [vmem:[#allocation4 + $0x1b4] sm:$0xf] %v3295
    %3304 = vst [vmem:[#allocation4 + $0x1f4] sm:$0xf] %v3296
    %v3305 = vld [vmem:[#allocation3 + $0x1c0] sm:$0xf]
    %v3306 = vld [vmem:[#allocation3 + $0x1c4] sm:$0xf]
    %v3307 = vld [vmem:[#allocation3 + $0x1c8] sm:$0xf]
    %v3308 = vld [vmem:[#allocation3 + $0x1cc] sm:$0xf]
    %v3309 = vld [vmem:[#allocation3 + $0x1d0] sm:$0xf]
    %v3310 = vld [vmem:[#allocation3 + $0x1d4] sm:$0xf]
    %v3311 = vld [vmem:[#allocation3 + $0x1d8] sm:$0xf]
    %v3312 = vld [vmem:[#allocation3 + $0x1dc] sm:$0xf]
    %3313 = vst [vmem:[#allocation4 + $0x38] sm:$0xf] %v3305
    %3314 = vst [vmem:[#allocation4 + $0x78] sm:$0xf] %v3306
    %3315 = vst [vmem:[#allocation4 + $0xb8] sm:$0xf] %v3307
    %3316 = vst [vmem:[#allocation4 + $0xf8] sm:$0xf] %v3308
    %3317 = vst [vmem:[#allocation4 + $0x138] sm:$0xf] %v3309
    %3318 = vst [vmem:[#allocation4 + $0x178] sm:$0xf] %v3310
    %3319 = vst [vmem:[#allocation4 + $0x1b8] sm:$0xf] %v3311
    %3320 = vst [vmem:[#allocation4 + $0x1f8] sm:$0xf] %v3312
    %v3321 = vld [vmem:[#allocation3 + $0x1e0] sm:$0xf]
    %v3322 = vld [vmem:[#allocation3 + $0x1e4] sm:$0xf]
    %v3323 = vld [vmem:[#allocation3 + $0x1e8] sm:$0xf]
    %v3324 = vld [vmem:[#allocation3 + $0x1ec] sm:$0xf]
    %v3325 = vld [vmem:[#allocation3 + $0x1f0] sm:$0xf]
    %v3326 = vld [vmem:[#allocation3 + $0x1f4] sm:$0xf]
    %v3327 = vld [vmem:[#allocation3 + $0x1f8] sm:$0xf]
    %v3328 = vld [vmem:[#allocation3 + $0x1fc] sm:$0xf]
    %3329 = vst [vmem:[#allocation4 + $0x3c] sm:$0xf] %v3321
    %3330 = vst [vmem:[#allocation4 + $0x7c] sm:$0xf] %v3322
    %3331 = vst [vmem:[#allocation4 + $0xbc] sm:$0xf] %v3323
    %3332 = vst [vmem:[#allocation4 + $0xfc] sm:$0xf] %v3324
    %3333 = vst [vmem:[#allocation4 + $0x13c] sm:$0xf] %v3325
    %3334 = vst [vmem:[#allocation4 + $0x17c] sm:$0xf] %v3326
    %3335 = vst [vmem:[#allocation4 + $0x1bc] sm:$0xf] %v3327
    %3336 = vst [vmem:[#allocation4 + $0x1fc] sm:$0xf] %v3328
    %v3337 = vld [vmem:[#allocation4] sm:$0xff]
    %v3338 = vld [vmem:[#allocation4 + $0x8] sm:$0xff]
    %v3339 = vld [vmem:[#allocation4 + $0x10] sm:$0xff]
    %v3340 = vld [vmem:[#allocation4 + $0x18] sm:$0xff]
    %v3341 = vld [vmem:[#allocation4 + $0x20] sm:$0xff]
    %v3342 = vld [vmem:[#allocation4 + $0x28] sm:$0xff]
    %v3343 = vld [vmem:[#allocation4 + $0x30] sm:$0xff]
    %v3344 = vld [vmem:[#allocation4 + $0x38] sm:$0xff]
    %v3345 = vld [vmem:[#allocation4 + $0x40] sm:$0xff]
    %v3346 = vld [vmem:[#allocation4 + $0x48] sm:$0xff]
    %v3347 = vld [vmem:[#allocation4 + $0x50] sm:$0xff]
    %v3348 = vld [vmem:[#allocation4 + $0x58] sm:$0xff]
    %v3349 = vld [vmem:[#allocation4 + $0x60] sm:$0xff]
    %v3350 = vld [vmem:[#allocation4 + $0x68] sm:$0xff]
    %v3351 = vld [vmem:[#allocation4 + $0x70] sm:$0xff]
    %v3352 = vld [vmem:[#allocation4 + $0x78] sm:$0xff]
    %v3353 = vld [vmem:[#allocation4 + $0x80] sm:$0xff]
    %v3354 = vld [vmem:[#allocation4 + $0x88] sm:$0xff]
    %v3355 = vld [vmem:[#allocation4 + $0x90] sm:$0xff]
    %v3356 = vld [vmem:[#allocation4 + $0x98] sm:$0xff]
    %v3357 = vld [vmem:[#allocation4 + $0xa0] sm:$0xff]
    %v3358 = vld [vmem:[#allocation4 + $0xa8] sm:$0xff]
    %v3359 = vld [vmem:[#allocation4 + $0xb0] sm:$0xff]
    %v3360 = vld [vmem:[#allocation4 + $0xb8] sm:$0xff]
    %v3361 = vld [vmem:[#allocation4 + $0xc0] sm:$0xff]
    %v3362 = vld [vmem:[#allocation4 + $0xc8] sm:$0xff]
    %v3363 = vld [vmem:[#allocation4 + $0xd0] sm:$0xff]
    %v3364 = vld [vmem:[#allocation4 + $0xd8] sm:$0xff]
    %v3365 = vld [vmem:[#allocation4 + $0xe0] sm:$0xff]
    %v3366 = vld [vmem:[#allocation4 + $0xe8] sm:$0xff]
    %v3367 = vld [vmem:[#allocation4 + $0xf0] sm:$0xff]
    %v3368 = vld [vmem:[#allocation4 + $0xf8] sm:$0xff]
    %v3369 = vld [vmem:[#allocation4 + $0x100] sm:$0xff]
    %v3370 = vld [vmem:[#allocation4 + $0x108] sm:$0xff]
    %v3371 = vld [vmem:[#allocation4 + $0x110] sm:$0xff]
    %v3372 = vld [vmem:[#allocation4 + $0x118] sm:$0xff]
    %v3373 = vld [vmem:[#allocation4 + $0x120] sm:$0xff]
    %v3374 = vld [vmem:[#allocation4 + $0x128] sm:$0xff]
    %v3375 = vld [vmem:[#allocation4 + $0x130] sm:$0xff]
    %v3376 = vld [vmem:[#allocation4 + $0x138] sm:$0xff]
    %v3377 = vld [vmem:[#allocation4 + $0x140] sm:$0xff]
    %v3378 = vld [vmem:[#allocation4 + $0x148] sm:$0xff]
    %v3379 = vld [vmem:[#allocation4 + $0x150] sm:$0xff]
    %v3380 = vld [vmem:[#allocation4 + $0x158] sm:$0xff]
    %v3381 = vld [vmem:[#allocation4 + $0x160] sm:$0xff]
    %v3382 = vld [vmem:[#allocation4 + $0x168] sm:$0xff]
    %v3383 = vld [vmem:[#allocation4 + $0x170] sm:$0xff]
    %v3384 = vld [vmem:[#allocation4 + $0x178] sm:$0xff]
    %v3385 = vld [vmem:[#allocation4 + $0x180] sm:$0xff]
    %v3386 = vld [vmem:[#allocation4 + $0x188] sm:$0xff]
    %v3387 = vld [vmem:[#allocation4 + $0x190] sm:$0xff]
    %v3388 = vld [vmem:[#allocation4 + $0x198] sm:$0xff]
    %v3389 = vld [vmem:[#allocation4 + $0x1a0] sm:$0xff]
    %v3390 = vld [vmem:[#allocation4 + $0x1a8] sm:$0xff]
    %v3391 = vld [vmem:[#allocation4 + $0x1b0] sm:$0xff]
    %v3392 = vld [vmem:[#allocation4 + $0x1b8] sm:$0xff]
    %v3393 = vld [vmem:[#allocation4 + $0x1c0] sm:$0xff]
    %v3394 = vld [vmem:[#allocation4 + $0x1c8] sm:$0xff]
    %v3395 = vld [vmem:[#allocation4 + $0x1d0] sm:$0xff]
    %v3396 = vld [vmem:[#allocation4 + $0x1d8] sm:$0xff]
    %v3397 = vld [vmem:[#allocation4 + $0x1e0] sm:$0xff]
    %v3398 = vld [vmem:[#allocation4 + $0x1e8] sm:$0xff]
    %v3399 = vld [vmem:[#allocation4 + $0x1f0] sm:$0xff]
    %v3400 = vld [vmem:[#allocation4 + $0x1f8] sm:$0xff]
    %v3402 = vperm.slane %v1397, 0
    %v3468 = vunpack.c.l.b16 %v3337
    %v3469 = vunpack.c.h.b16 %v3337
    %v3470 = vunpack.c.l.b16 %v3338
    %v3471 = vunpack.c.h.b16 %v3338
    %v3472 = vunpack.c.l.b16 %v3339
    %v3473 = vunpack.c.h.b16 %v3339
    %v3474 = vunpack.c.l.b16 %v3340
    %v3475 = vunpack.c.h.b16 %v3340
    %v3476 = vunpack.c.l.b16 %v3341
    %v3477 = vunpack.c.h.b16 %v3341
    %v3478 = vunpack.c.l.b16 %v3342
    %v3479 = vunpack.c.h.b16 %v3342
    %v3480 = vunpack.c.l.b16 %v3343
    %v3481 = vunpack.c.h.b16 %v3343
    %v3482 = vunpack.c.l.b16 %v3344
    %v3483 = vunpack.c.h.b16 %v3344
    %v3484 = vunpack.c.l.b16 %v3345
    %v3485 = vunpack.c.h.b16 %v3345
    %v3486 = vunpack.c.l.b16 %v3346
    %v3487 = vunpack.c.h.b16 %v3346
    %v3488 = vunpack.c.l.b16 %v3347
    %v3489 = vunpack.c.h.b16 %v3347
    %v3490 = vunpack.c.l.b16 %v3348
    %v3491 = vunpack.c.h.b16 %v3348
    %v3492 = vunpack.c.l.b16 %v3349
    %v3493 = vunpack.c.h.b16 %v3349
    %v3494 = vunpack.c.l.b16 %v3350
    %v3495 = vunpack.c.h.b16 %v3350
    %v3496 = vunpack.c.l.b16 %v3351
    %v3497 = vunpack.c.h.b16 %v3351
    %v3498 = vunpack.c.l.b16 %v3352
    %v3499 = vunpack.c.h.b16 %v3352
    %v3500 = vunpack.c.l.b16 %v3353
    %v3501 = vunpack.c.h.b16 %v3353
    %v3502 = vunpack.c.l.b16 %v3354
    %v3503 = vunpack.c.h.b16 %v3354
    %v3504 = vunpack.c.l.b16 %v3355
    %v3505 = vunpack.c.h.b16 %v3355
    %v3506 = vunpack.c.l.b16 %v3356
    %v3507 = vunpack.c.h.b16 %v3356
    %v3508 = vunpack.c.l.b16 %v3357
    %v3509 = vunpack.c.h.b16 %v3357
    %v3510 = vunpack.c.l.b16 %v3358
    %v3511 = vunpack.c.h.b16 %v3358
    %v3512 = vunpack.c.l.b16 %v3359
    %v3513 = vunpack.c.h.b16 %v3359
    %v3514 = vunpack.c.l.b16 %v3360
    %v3515 = vunpack.c.h.b16 %v3360
    %v3516 = vunpack.c.l.b16 %v3361
    %v3517 = vunpack.c.h.b16 %v3361
    %v3518 = vunpack.c.l.b16 %v3362
    %v3519 = vunpack.c.h.b16 %v3362
    %v3520 = vunpack.c.l.b16 %v3363
    %v3521 = vunpack.c.h.b16 %v3363
    %v3522 = vunpack.c.l.b16 %v3364
    %v3523 = vunpack.c.h.b16 %v3364
    %v3524 = vunpack.c.l.b16 %v3365
    %v3525 = vunpack.c.h.b16 %v3365
    %v3526 = vunpack.c.l.b16 %v3366
    %v3527 = vunpack.c.h.b16 %v3366
    %v3528 = vunpack.c.l.b16 %v3367
    %v3529 = vunpack.c.h.b16 %v3367
    %v3530 = vunpack.c.l.b16 %v3368
    %v3531 = vunpack.c.h.b16 %v3368
    %v3532 = vunpack.c.l.b16 %v3369
    %v3533 = vunpack.c.h.b16 %v3369
    %v3534 = vunpack.c.l.b16 %v3370
    %v3535 = vunpack.c.h.b16 %v3370
    %v3536 = vunpack.c.l.b16 %v3371
    %v3537 = vunpack.c.h.b16 %v3371
    %v3538 = vunpack.c.l.b16 %v3372
    %v3539 = vunpack.c.h.b16 %v3372
    %v3540 = vunpack.c.l.b16 %v3373
    %v3541 = vunpack.c.h.b16 %v3373
    %v3542 = vunpack.c.l.b16 %v3374
    %v3543 = vunpack.c.h.b16 %v3374
    %v3544 = vunpack.c.l.b16 %v3375
    %v3545 = vunpack.c.h.b16 %v3375
    %v3546 = vunpack.c.l.b16 %v3376
    %v3547 = vunpack.c.h.b16 %v3376
    %v3548 = vunpack.c.l.b16 %v3377
    %v3549 = vunpack.c.h.b16 %v3377
    %v3550 = vunpack.c.l.b16 %v3378
    %v3551 = vunpack.c.h.b16 %v3378
    %v3552 = vunpack.c.l.b16 %v3379
    %v3553 = vunpack.c.h.b16 %v3379
    %v3554 = vunpack.c.l.b16 %v3380
    %v3555 = vunpack.c.h.b16 %v3380
    %v3556 = vunpack.c.l.b16 %v3381
    %v3557 = vunpack.c.h.b16 %v3381
    %v3558 = vunpack.c.l.b16 %v3382
    %v3559 = vunpack.c.h.b16 %v3382
    %v3560 = vunpack.c.l.b16 %v3383
    %v3561 = vunpack.c.h.b16 %v3383
    %v3562 = vunpack.c.l.b16 %v3384
    %v3563 = vunpack.c.h.b16 %v3384
    %v3564 = vunpack.c.l.b16 %v3385
    %v3565 = vunpack.c.h.b16 %v3385
    %v3566 = vunpack.c.l.b16 %v3386
    %v3567 = vunpack.c.h.b16 %v3386
    %v3568 = vunpack.c.l.b16 %v3387
    %v3569 = vunpack.c.h.b16 %v3387
    %v3570 = vunpack.c.l.b16 %v3388
    %v3571 = vunpack.c.h.b16 %v3388
    %v3572 = vunpack.c.l.b16 %v3389
    %v3573 = vunpack.c.h.b16 %v3389
    %v3574 = vunpack.c.l.b16 %v3390
    %v3575 = vunpack.c.h.b16 %v3390
    %v3576 = vunpack.c.l.b16 %v3391
    %v3577 = vunpack.c.h.b16 %v3391
    %v3578 = vunpack.c.l.b16 %v3392
    %v3579 = vunpack.c.h.b16 %v3392
    %v3580 = vunpack.c.l.b16 %v3393
    %v3581 = vunpack.c.h.b16 %v3393
    %v3582 = vunpack.c.l.b16 %v3394
    %v3583 = vunpack.c.h.b16 %v3394
    %v3584 = vunpack.c.l.b16 %v3395
    %v3585 = vunpack.c.h.b16 %v3395
    %v3586 = vunpack.c.l.b16 %v3396
    %v3587 = vunpack.c.h.b16 %v3396
    %v3588 = vunpack.c.l.b16 %v3397
    %v3589 = vunpack.c.h.b16 %v3397
    %v3590 = vunpack.c.l.b16 %v3398
    %v3591 = vunpack.c.h.b16 %v3398
    %v3592 = vunpack.c.l.b16 %v3399
    %v3593 = vunpack.c.h.b16 %v3399
    %v3594 = vunpack.c.l.b16 %v3400
    %v3595 = vunpack.c.h.b16 %v3400
    %v3596 = vpack.c.b16 %v3484, %v3468
    %v3597 = vpack.c.b16 %v3485, %v3469
    %v3598 = vpack.c.b16 %v3486, %v3470
    %v3599 = vpack.c.b16 %v3487, %v3471
    %v3600 = vpack.c.b16 %v3488, %v3472
    %v3601 = vpack.c.b16 %v3489, %v3473
    %v3602 = vpack.c.b16 %v3490, %v3474
    %v3603 = vpack.c.b16 %v3491, %v3475
    %v3604 = vpack.c.b16 %v3492, %v3476
    %v3605 = vpack.c.b16 %v3493, %v3477
    %v3606 = vpack.c.b16 %v3494, %v3478
    %v3607 = vpack.c.b16 %v3495, %v3479
    %v3608 = vpack.c.b16 %v3496, %v3480
    %v3609 = vpack.c.b16 %v3497, %v3481
    %v3610 = vpack.c.b16 %v3498, %v3482
    %v3611 = vpack.c.b16 %v3499, %v3483
    %v3612 = vpack.c.b16 %v3516, %v3500
    %v3613 = vpack.c.b16 %v3517, %v3501
    %v3614 = vpack.c.b16 %v3518, %v3502
    %v3615 = vpack.c.b16 %v3519, %v3503
    %v3616 = vpack.c.b16 %v3520, %v3504
    %v3617 = vpack.c.b16 %v3521, %v3505
    %v3618 = vpack.c.b16 %v3522, %v3506
    %v3619 = vpack.c.b16 %v3523, %v3507
    %v3620 = vpack.c.b16 %v3524, %v3508
    %v3621 = vpack.c.b16 %v3525, %v3509
    %v3622 = vpack.c.b16 %v3526, %v3510
    %v3623 = vpack.c.b16 %v3527, %v3511
    %v3624 = vpack.c.b16 %v3528, %v3512
    %v3625 = vpack.c.b16 %v3529, %v3513
    %v3626 = vpack.c.b16 %v3530, %v3514
    %v3627 = vpack.c.b16 %v3531, %v3515
    %v3628 = vpack.c.b16 %v3548, %v3532
    %v3629 = vpack.c.b16 %v3549, %v3533
    %v3630 = vpack.c.b16 %v3550, %v3534
    %v3631 = vpack.c.b16 %v3551, %v3535
    %v3632 = vpack.c.b16 %v3552, %v3536
    %v3633 = vpack.c.b16 %v3553, %v3537
    %v3634 = vpack.c.b16 %v3554, %v3538
    %v3635 = vpack.c.b16 %v3555, %v3539
    %v3636 = vpack.c.b16 %v3556, %v3540
    %v3637 = vpack.c.b16 %v3557, %v3541
    %v3638 = vpack.c.b16 %v3558, %v3542
    %v3639 = vpack.c.b16 %v3559, %v3543
    %v3640 = vpack.c.b16 %v3560, %v3544
    %v3641 = vpack.c.b16 %v3561, %v3545
    %v3642 = vpack.c.b16 %v3562, %v3546
    %v3643 = vpack.c.b16 %v3563, %v3547
    %v3644 = vpack.c.b16 %v3580, %v3564
    %v3645 = vpack.c.b16 %v3581, %v3565
    %v3646 = vpack.c.b16 %v3582, %v3566
    %v3647 = vpack.c.b16 %v3583, %v3567
    %v3648 = vpack.c.b16 %v3584, %v3568
    %v3649 = vpack.c.b16 %v3585, %v3569
    %v3650 = vpack.c.b16 %v3586, %v3570
    %v3651 = vpack.c.b16 %v3587, %v3571
    %v3652 = vpack.c.b16 %v3588, %v3572
    %v3653 = vpack.c.b16 %v3589, %v3573
    %v3654 = vpack.c.b16 %v3590, %v3574
    %v3655 = vpack.c.b16 %v3591, %v3575
    %v3656 = vpack.c.b16 %v3592, %v3576
    %v3657 = vpack.c.b16 %v3593, %v3577
    %v3658 = vpack.c.b16 %v3594, %v3578
    %v3659 = vpack.c.b16 %v3595, %v3579
    %v3980 = vunpack.c.l.b16 %v853
    %v3981 = vunpack.c.l.b16 %v854
    %v3982 = vunpack.c.l.b16 %v855
    %v3983 = vunpack.c.l.b16 %v856
    %v3984 = vunpack.c.l.b16 %v857
    %v3985 = vunpack.c.l.b16 %v858
    %v3986 = vunpack.c.l.b16 %v859
    %v3987 = vunpack.c.l.b16 %v860
    %v3988 = vunpack.c.l.b16 %v861
    %v3989 = vunpack.c.l.b16 %v862
    %v3990 = vunpack.c.l.b16 %v863
    %v3991 = vunpack.c.l.b16 %v864
    %v3992 = vunpack.c.l.b16 %v865
    %v3993 = vunpack.c.l.b16 %v866
    %v3994 = vunpack.c.l.b16 %v867
    %v3995 = vunpack.c.l.b16 %v868
    %v3996 = vunpack.c.l.b16 %v869
    %v3997 = vunpack.c.l.b16 %v870
    %v3998 = vunpack.c.l.b16 %v871
    %v3999 = vunpack.c.l.b16 %v872
    %v4000 = vunpack.c.l.b16 %v873
    %v4001 = vunpack.c.l.b16 %v874
    %v4002 = vunpack.c.l.b16 %v875
    %v4003 = vunpack.c.l.b16 %v876
    %v4004 = vunpack.c.l.b16 %v877
    %v4005 = vunpack.c.l.b16 %v878
    %v4006 = vunpack.c.l.b16 %v879
    %v4007 = vunpack.c.l.b16 %v880
    %v4008 = vunpack.c.l.b16 %v881
    %v4009 = vunpack.c.l.b16 %v882
    %v4010 = vunpack.c.l.b16 %v883
    %v4011 = vunpack.c.l.b16 %v884
    %v4012 = vunpack.c.l.b16 %v885
    %v4013 = vunpack.c.l.b16 %v886
    %v4014 = vunpack.c.l.b16 %v887
    %v4015 = vunpack.c.l.b16 %v888
    %v4016 = vunpack.c.l.b16 %v889
    %v4017 = vunpack.c.l.b16 %v890
    %v4018 = vunpack.c.l.b16 %v891
    %v4019 = vunpack.c.l.b16 %v892
    %v4020 = vunpack.c.l.b16 %v893
    %v4021 = vunpack.c.l.b16 %v894
    %v4022 = vunpack.c.l.b16 %v895
    %v4023 = vunpack.c.l.b16 %v896
    %v4024 = vunpack.c.l.b16 %v897
    %v4025 = vunpack.c.l.b16 %v898
    %v4026 = vunpack.c.l.b16 %v899
    %v4027 = vunpack.c.l.b16 %v900
    %v4028 = vunpack.c.l.b16 %v901
    %v4029 = vunpack.c.l.b16 %v902
    %v4030 = vunpack.c.l.b16 %v903
    %v4031 = vunpack.c.l.b16 %v904
    %v4032 = vunpack.c.l.b16 %v905
    %v4033 = vunpack.c.l.b16 %v906
    %v4034 = vunpack.c.l.b16 %v907
    %v4035 = vunpack.c.l.b16 %v908
    %v4036 = vunpack.c.l.b16 %v909
    %v4037 = vunpack.c.l.b16 %v910
    %v4038 = vunpack.c.l.b16 %v911
    %v4039 = vunpack.c.l.b16 %v912
    %v4040 = vunpack.c.l.b16 %v913
    %v4041 = vunpack.c.l.b16 %v914
    %v4042 = vunpack.c.l.b16 %v915
    %v4043 = vunpack.c.l.b16 %v916
    %v4044 = vunpack.c.l.b16 %v917
    %v4045 = vunpack.c.l.b16 %v918
    %v4046 = vunpack.c.l.b16 %v919
    %v4047 = vunpack.c.l.b16 %v920
    %v4048 = vunpack.c.l.b16 %v921
    %v4049 = vunpack.c.l.b16 %v922
    %v4050 = vunpack.c.l.b16 %v923
    %v4051 = vunpack.c.l.b16 %v924
    %v4052 = vunpack.c.l.b16 %v925
    %v4053 = vunpack.c.l.b16 %v926
    %v4054 = vunpack.c.l.b16 %v927
    %v4055 = vunpack.c.l.b16 %v928
    %v4056 = vunpack.c.l.b16 %v929
    %v4057 = vunpack.c.l.b16 %v930
    %v4058 = vunpack.c.l.b16 %v931
    %v4059 = vunpack.c.l.b16 %v932
    %v4060 = vunpack.c.l.b16 %v933
    %v4061 = vunpack.c.l.b16 %v934
    %v4062 = vunpack.c.l.b16 %v935
    %v4063 = vunpack.c.l.b16 %v936
    %v4064 = vunpack.c.l.b16 %v937
    %v4065 = vunpack.c.l.b16 %v938
    %v4066 = vunpack.c.l.b16 %v939
    %v4067 = vunpack.c.l.b16 %v940
    %v4068 = vunpack.c.l.b16 %v941
    %v4069 = vunpack.c.l.b16 %v942
    %v4070 = vunpack.c.l.b16 %v943
    %v4071 = vunpack.c.l.b16 %v944
    %v4072 = vunpack.c.l.b16 %v945
    %v4073 = vunpack.c.l.b16 %v946
    %v4074 = vunpack.c.l.b16 %v947
    %v4075 = vunpack.c.l.b16 %v948
    %v4076 = vunpack.c.l.b16 %v949
    %v4077 = vunpack.c.l.b16 %v950
    %v4078 = vunpack.c.l.b16 %v951
    %v4079 = vunpack.c.l.b16 %v952
    %v4080 = vunpack.c.l.b16 %v953
    %v4081 = vunpack.c.l.b16 %v954
    %v4082 = vunpack.c.l.b16 %v955
    %v4083 = vunpack.c.l.b16 %v956
    %v4084 = vunpack.c.l.b16 %v957
    %v4085 = vunpack.c.l.b16 %v958
    %v4086 = vunpack.c.l.b16 %v959
    %v4087 = vunpack.c.l.b16 %v960
    %v4088 = vunpack.c.l.b16 %v961
    %v4089 = vunpack.c.l.b16 %v962
    %v4090 = vunpack.c.l.b16 %v963
    %v4091 = vunpack.c.l.b16 %v964
    %v4092 = vunpack.c.l.b16 %v965
    %v4093 = vunpack.c.l.b16 %v966
    %v4094 = vunpack.c.l.b16 %v967
    %v4095 = vunpack.c.l.b16 %v968
    %v4096 = vunpack.c.l.b16 %v969
    %v4097 = vunpack.c.l.b16 %v970
    %v4098 = vunpack.c.l.b16 %v971
    %v4099 = vunpack.c.l.b16 %v972
    %v4100 = vunpack.c.l.b16 %v973
    %v4101 = vunpack.c.l.b16 %v974
    %v4102 = vunpack.c.l.b16 %v975
    %v4103 = vunpack.c.l.b16 %v976
    %v4104 = vunpack.c.l.b16 %v977
    %v4105 = vunpack.c.l.b16 %v978
    %v4106 = vunpack.c.l.b16 %v979
    %v4107 = vunpack.c.l.b16 %v980
    %v4108 = vunpack.c.l.b16 %v981
    %v4109 = vunpack.c.l.b16 %v982
    %v4110 = vunpack.c.l.b16 %v983
    %v4111 = vunpack.c.l.b16 %v984
    %v4112 = vunpack.c.l.b16 %v985
    %v4113 = vunpack.c.l.b16 %v986
    %v4114 = vunpack.c.l.b16 %v987
    %v4115 = vunpack.c.l.b16 %v988
    %v4116 = vunpack.c.l.b16 %v989
    %v4117 = vunpack.c.l.b16 %v990
    %v4118 = vunpack.c.l.b16 %v991
    %v4119 = vunpack.c.l.b16 %v992
    %v4120 = vunpack.c.l.b16 %v993
    %v4121 = vunpack.c.l.b16 %v994
    %v4122 = vunpack.c.l.b16 %v995
    %v4123 = vunpack.c.l.b16 %v996
    %v4124 = vunpack.c.l.b16 %v997
    %v4125 = vunpack.c.l.b16 %v998
    %v4126 = vunpack.c.l.b16 %v999
    %v4127 = vunpack.c.l.b16 %v1000
    %v4128 = vunpack.c.l.b16 %v1001
    %v4129 = vunpack.c.l.b16 %v1002
    %v4130 = vunpack.c.l.b16 %v1003
    %v4131 = vunpack.c.l.b16 %v1004
    %v4132 = vunpack.c.l.b16 %v1005
    %v4133 = vunpack.c.l.b16 %v1006
    %v4134 = vunpack.c.l.b16 %v1007
    %v4135 = vunpack.c.l.b16 %v1008
    %v4136 = vunpack.c.l.b16 %v1009
    %v4137 = vunpack.c.l.b16 %v1010
    %v4138 = vunpack.c.l.b16 %v1011
    %v4139 = vunpack.c.l.b16 %v1012
    %v4140 = vunpack.c.l.b16 %v1013
    %v4141 = vunpack.c.l.b16 %v1014
    %v4142 = vunpack.c.l.b16 %v1015
    %v4143 = vunpack.c.l.b16 %v1016
    %v4144 = vunpack.c.l.b16 %v1017
    %v4145 = vunpack.c.l.b16 %v1018
    %v4146 = vunpack.c.l.b16 %v1019
    %v4147 = vunpack.c.l.b16 %v1020
    %v4148 = vunpack.c.l.b16 %v1021
    %v4149 = vunpack.c.l.b16 %v1022
    %v4150 = vunpack.c.l.b16 %v1023
    %v4151 = vunpack.c.l.b16 %v1024
    %v4152 = vunpack.c.l.b16 %v1025
    %v4153 = vunpack.c.l.b16 %v1026
    %v4154 = vunpack.c.l.b16 %v1027
    %v4155 = vunpack.c.l.b16 %v1028
    %v4156 = vunpack.c.l.b16 %v1029
    %v4157 = vunpack.c.l.b16 %v1030
    %v4158 = vunpack.c.l.b16 %v1031
    %v4159 = vunpack.c.l.b16 %v1032
    %v4160 = vunpack.c.l.b16 %v1033
    %v4161 = vunpack.c.l.b16 %v1034
    %v4162 = vunpack.c.l.b16 %v1035
    %v4163 = vunpack.c.l.b16 %v1036
    %v4164 = vunpack.c.l.b16 %v1037
    %v4165 = vunpack.c.l.b16 %v1038
    %v4166 = vunpack.c.l.b16 %v1039
    %v4167 = vunpack.c.l.b16 %v1040
    %v4168 = vunpack.c.l.b16 %v1041
    %v4169 = vunpack.c.l.b16 %v1042
    %v4170 = vunpack.c.l.b16 %v1043
    %v4171 = vunpack.c.l.b16 %v1044
    %v4172 = vunpack.c.l.b16 %v1045
    %v4173 = vunpack.c.l.b16 %v1046
    %v4174 = vunpack.c.l.b16 %v1047
    %v4175 = vunpack.c.l.b16 %v1048
    %v4176 = vunpack.c.l.b16 %v1049
    %v4177 = vunpack.c.l.b16 %v1050
    %v4178 = vunpack.c.l.b16 %v1051
    %v4179 = vunpack.c.l.b16 %v1052
    %v4180 = vunpack.c.l.b16 %v1053
    %v4181 = vunpack.c.l.b16 %v1054
    %v4182 = vunpack.c.l.b16 %v1055
    %v4183 = vunpack.c.l.b16 %v1056
    %v4184 = vunpack.c.l.b16 %v1057
    %v4185 = vunpack.c.l.b16 %v1058
    %v4186 = vunpack.c.l.b16 %v1059
    %v4187 = vunpack.c.l.b16 %v1060
    %v4188 = vunpack.c.l.b16 %v1061
    %v4189 = vunpack.c.l.b16 %v1062
    %v4190 = vunpack.c.l.b16 %v1063
    %v4191 = vunpack.c.l.b16 %v1064
    %v4192 = vunpack.c.l.b16 %v1065
    %v4193 = vunpack.c.l.b16 %v1066
    %v4194 = vunpack.c.l.b16 %v1067
    %v4195 = vunpack.c.l.b16 %v1068
    %v4196 = vunpack.c.l.b16 %v1069
    %v4197 = vunpack.c.l.b16 %v1070
    %v4198 = vunpack.c.l.b16 %v1071
    %v4199 = vunpack.c.l.b16 %v1072
    %v4200 = vunpack.c.l.b16 %v1073
    %v4201 = vunpack.c.l.b16 %v1074
    %v4202 = vunpack.c.l.b16 %v1075
    %v4203 = vunpack.c.l.b16 %v1076
    %v4204 = vunpack.c.l.b16 %v1077
    %v4205 = vunpack.c.l.b16 %v1078
    %v4206 = vunpack.c.l.b16 %v1079
    %v4207 = vunpack.c.l.b16 %v1080
    %v4208 = vunpack.c.l.b16 %v1081
    %v4209 = vunpack.c.l.b16 %v1082
    %v4210 = vunpack.c.l.b16 %v1083
    %v4211 = vunpack.c.l.b16 %v1084
    %v4212 = vunpack.c.l.b16 %v1085
    %v4213 = vunpack.c.l.b16 %v1086
    %v4214 = vunpack.c.l.b16 %v1087
    %v4215 = vunpack.c.l.b16 %v1088
    %v4216 = vunpack.c.l.b16 %v1089
    %v4217 = vunpack.c.l.b16 %v1090
    %v4218 = vunpack.c.l.b16 %v1091
    %v4219 = vunpack.c.l.b16 %v1092
    %v4220 = vunpack.c.l.b16 %v1093
    %v4221 = vunpack.c.l.b16 %v1094
    %v4222 = vunpack.c.l.b16 %v1095
    %v4223 = vunpack.c.l.b16 %v1096
    %v4224 = vunpack.c.l.b16 %v1097
    %v4225 = vunpack.c.l.b16 %v1098
    %v4226 = vunpack.c.l.b16 %v1099
    %v4227 = vunpack.c.l.b16 %v1100
    %v4228 = vunpack.c.l.b16 %v1101
    %v4229 = vunpack.c.l.b16 %v1102
    %v4230 = vunpack.c.l.b16 %v1103
    %v4231 = vunpack.c.l.b16 %v1104
    %v4232 = vunpack.c.l.b16 %v1105
    %v4233 = vunpack.c.l.b16 %v1106
    %v4234 = vunpack.c.l.b16 %v1107
    %v4235 = vunpack.c.l.b16 %v1108
    %v4236 = vpack.c.b16 %v3981, %v3980
    %v4237 = vpack.c.b16 %v3983, %v3982
    %v4238 = vpack.c.b16 %v3985, %v3984
    %v4239 = vpack.c.b16 %v3987, %v3986
    %v4240 = vpack.c.b16 %v3989, %v3988
    %v4241 = vpack.c.b16 %v3991, %v3990
    %v4242 = vpack.c.b16 %v3993, %v3992
    %v4243 = vpack.c.b16 %v3995, %v3994
    %v4244 = vpack.c.b16 %v3997, %v3996
    %v4245 = vpack.c.b16 %v3999, %v3998
    %v4246 = vpack.c.b16 %v4001, %v4000
    %v4247 = vpack.c.b16 %v4003, %v4002
    %v4248 = vpack.c.b16 %v4005, %v4004
    %v4249 = vpack.c.b16 %v4007, %v4006
    %v4250 = vpack.c.b16 %v4009, %v4008
    %v4251 = vpack.c.b16 %v4011, %v4010
    %v4252 = vpack.c.b16 %v4013, %v4012
    %v4253 = vpack.c.b16 %v4015, %v4014
    %v4254 = vpack.c.b16 %v4017, %v4016
    %v4255 = vpack.c.b16 %v4019, %v4018
    %v4256 = vpack.c.b16 %v4021, %v4020
    %v4257 = vpack.c.b16 %v4023, %v4022
    %v4258 = vpack.c.b16 %v4025, %v4024
    %v4259 = vpack.c.b16 %v4027, %v4026
    %v4260 = vpack.c.b16 %v4029, %v4028
    %v4261 = vpack.c.b16 %v4031, %v4030
    %v4262 = vpack.c.b16 %v4033, %v4032
    %v4263 = vpack.c.b16 %v4035, %v4034
    %v4264 = vpack.c.b16 %v4037, %v4036
    %v4265 = vpack.c.b16 %v4039, %v4038
    %v4266 = vpack.c.b16 %v4041, %v4040
    %v4267 = vpack.c.b16 %v4043, %v4042
    %v4268 = vpack.c.b16 %v4045, %v4044
    %v4269 = vpack.c.b16 %v4047, %v4046
    %v4270 = vpack.c.b16 %v4049, %v4048
    %v4271 = vpack.c.b16 %v4051, %v4050
    %v4272 = vpack.c.b16 %v4053, %v4052
    %v4273 = vpack.c.b16 %v4055, %v4054
    %v4274 = vpack.c.b16 %v4057, %v4056
    %v4275 = vpack.c.b16 %v4059, %v4058
    %v4276 = vpack.c.b16 %v4061, %v4060
    %v4277 = vpack.c.b16 %v4063, %v4062
    %v4278 = vpack.c.b16 %v4065, %v4064
    %v4279 = vpack.c.b16 %v4067, %v4066
    %v4280 = vpack.c.b16 %v4069, %v4068
    %v4281 = vpack.c.b16 %v4071, %v4070
    %v4282 = vpack.c.b16 %v4073, %v4072
    %v4283 = vpack.c.b16 %v4075, %v4074
    %v4284 = vpack.c.b16 %v4077, %v4076
    %v4285 = vpack.c.b16 %v4079, %v4078
    %v4286 = vpack.c.b16 %v4081, %v4080
    %v4287 = vpack.c.b16 %v4083, %v4082
    %v4288 = vpack.c.b16 %v4085, %v4084
    %v4289 = vpack.c.b16 %v4087, %v4086
    %v4290 = vpack.c.b16 %v4089, %v4088
    %v4291 = vpack.c.b16 %v4091, %v4090
    %v4292 = vpack.c.b16 %v4093, %v4092
    %v4293 = vpack.c.b16 %v4095, %v4094
    %v4294 = vpack.c.b16 %v4097, %v4096
    %v4295 = vpack.c.b16 %v4099, %v4098
    %v4296 = vpack.c.b16 %v4101, %v4100
    %v4297 = vpack.c.b16 %v4103, %v4102
    %v4298 = vpack.c.b16 %v4105, %v4104
    %v4299 = vpack.c.b16 %v4107, %v4106
    %v4300 = vpack.c.b16 %v4109, %v4108
    %v4301 = vpack.c.b16 %v4111, %v4110
    %v4302 = vpack.c.b16 %v4113, %v4112
    %v4303 = vpack.c.b16 %v4115, %v4114
    %v4304 = vpack.c.b16 %v4117, %v4116
    %v4305 = vpack.c.b16 %v4119, %v4118
    %v4306 = vpack.c.b16 %v4121, %v4120
    %v4307 = vpack.c.b16 %v4123, %v4122
    %v4308 = vpack.c.b16 %v4125, %v4124
    %v4309 = vpack.c.b16 %v4127, %v4126
    %v4310 = vpack.c.b16 %v4129, %v4128
    %v4311 = vpack.c.b16 %v4131, %v4130
    %v4312 = vpack.c.b16 %v4133, %v4132
    %v4313 = vpack.c.b16 %v4135, %v4134
    %v4314 = vpack.c.b16 %v4137, %v4136
    %v4315 = vpack.c.b16 %v4139, %v4138
    %v4316 = vpack.c.b16 %v4141, %v4140
    %v4317 = vpack.c.b16 %v4143, %v4142
    %v4318 = vpack.c.b16 %v4145, %v4144
    %v4319 = vpack.c.b16 %v4147, %v4146
    %v4320 = vpack.c.b16 %v4149, %v4148
    %v4321 = vpack.c.b16 %v4151, %v4150
    %v4322 = vpack.c.b16 %v4153, %v4152
    %v4323 = vpack.c.b16 %v4155, %v4154
    %v4324 = vpack.c.b16 %v4157, %v4156
    %v4325 = vpack.c.b16 %v4159, %v4158
    %v4326 = vpack.c.b16 %v4161, %v4160
    %v4327 = vpack.c.b16 %v4163, %v4162
    %v4328 = vpack.c.b16 %v4165, %v4164
    %v4329 = vpack.c.b16 %v4167, %v4166
    %v4330 = vpack.c.b16 %v4169, %v4168
    %v4331 = vpack.c.b16 %v4171, %v4170
    %v4332 = vpack.c.b16 %v4173, %v4172
    %v4333 = vpack.c.b16 %v4175, %v4174
    %v4334 = vpack.c.b16 %v4177, %v4176
    %v4335 = vpack.c.b16 %v4179, %v4178
    %v4336 = vpack.c.b16 %v4181, %v4180
    %v4337 = vpack.c.b16 %v4183, %v4182
    %v4338 = vpack.c.b16 %v4185, %v4184
    %v4339 = vpack.c.b16 %v4187, %v4186
    %v4340 = vpack.c.b16 %v4189, %v4188
    %v4341 = vpack.c.b16 %v4191, %v4190
    %v4342 = vpack.c.b16 %v4193, %v4192
    %v4343 = vpack.c.b16 %v4195, %v4194
    %v4344 = vpack.c.b16 %v4197, %v4196
    %v4345 = vpack.c.b16 %v4199, %v4198
    %v4346 = vpack.c.b16 %v4201, %v4200
    %v4347 = vpack.c.b16 %v4203, %v4202
    %v4348 = vpack.c.b16 %v4205, %v4204
    %v4349 = vpack.c.b16 %v4207, %v4206
    %v4350 = vpack.c.b16 %v4209, %v4208
    %v4351 = vpack.c.b16 %v4211, %v4210
    %v4352 = vpack.c.b16 %v4213, %v4212
    %v4353 = vpack.c.b16 %v4215, %v4214
    %v4354 = vpack.c.b16 %v4217, %v4216
    %v4355 = vpack.c.b16 %v4219, %v4218
    %v4356 = vpack.c.b16 %v4221, %v4220
    %v4357 = vpack.c.b16 %v4223, %v4222
    %v4358 = vpack.c.b16 %v4225, %v4224
    %v4359 = vpack.c.b16 %v4227, %v4226
    %v4360 = vpack.c.b16 %v4229, %v4228
    %v4361 = vpack.c.b16 %v4231, %v4230
    %v4362 = vpack.c.b16 %v4233, %v4232
    %v4363 = vpack.c.b16 %v4235, %v4234
    %4492 = vmatpush.bf16.msra.mxu0 %v4243
    %4493 = vmatpush.bf16.msra.mxu0 %v4242
    %4494 = vmatpush.bf16.msra.mxu0 %v4241
    %4495 = vmatpush.bf16.msra.mxu0 %v4240
    %4496 = vmatpush.bf16.msra.mxu0 %v4239
    %4497 = vmatpush.bf16.msra.mxu0 %v4238
    %4498 = vmatpush.bf16.msra.mxu0 %v4237
    %4499 = vmatpush.bf16.msra.mxu0 %v4236
    %4500 = vmatmul.bf16.gmra.mxu0 %v3596
    %v4501 = vpop.f32.mrf.mxu0
    %v4502 = vadd.f32 %v3402, %v4501
    %v4503 = vpop.f32.mrf.mxu0
    %v4504 = vadd.f32 %v3402, %v4503
    %4505 = vmatmul.bf16.gmra.mxu0 %v3612
    %v4506 = vpop.f32.mrf.mxu0
    %v4507 = vadd.f32 %v3402, %v4506
    %v4508 = vpop.f32.mrf.mxu0
    %v4509 = vadd.f32 %v3402, %v4508
    %4510 = vmatmul.bf16.gmra.mxu0 %v3628
    %v4511 = vpop.f32.mrf.mxu0
    %v4512 = vadd.f32 %v3402, %v4511
    %v4513 = vpop.f32.mrf.mxu0
    %v4514 = vadd.f32 %v3402, %v4513
    %4515 = vmatmul.bf16.gmra.mxu0 %v3644
    %v4516 = vpop.f32.mrf.mxu0
    %v4517 = vadd.f32 %v3402, %v4516
    %v4518 = vpop.f32.mrf.mxu0
    %v4519 = vadd.f32 %v3402, %v4518
    %4520 = vdwg.mxu0
    %4521 = vmatpush.bf16.msra.mxu0 %v4251
    %4522 = vmatpush.bf16.msra.mxu0 %v4250
    %4523 = vmatpush.bf16.msra.mxu0 %v4249
    %4524 = vmatpush.bf16.msra.mxu0 %v4248
    %4525 = vmatpush.bf16.msra.mxu0 %v4247
    %4526 = vmatpush.bf16.msra.mxu0 %v4246
    %4527 = vmatpush.bf16.msra.mxu0 %v4245
    %4528 = vmatpush.bf16.msra.mxu0 %v4244
    %4529 = vmatmul.bf16.gmra.mxu0 %v3597
    %v4530 = vpop.f32.mrf.mxu0
    %v4531 = vadd.f32 %v4502, %v4530
    %v4532 = vpop.f32.mrf.mxu0
    %v4533 = vadd.f32 %v4504, %v4532
    %4534 = vmatmul.bf16.gmra.mxu0 %v3613
    %v4535 = vpop.f32.mrf.mxu0
    %v4536 = vadd.f32 %v4507, %v4535
    %v4537 = vpop.f32.mrf.mxu0
    %v4538 = vadd.f32 %v4509, %v4537
    %4539 = vmatmul.bf16.gmra.mxu0 %v3629
    %v4540 = vpop.f32.mrf.mxu0
    %v4541 = vadd.f32 %v4512, %v4540
    %v4542 = vpop.f32.mrf.mxu0
    %v4543 = vadd.f32 %v4514, %v4542
    %4544 = vmatmul.bf16.gmra.mxu0 %v3645
    %v4545 = vpop.f32.mrf.mxu0
    %v4546 = vadd.f32 %v4517, %v4545
    %v4547 = vpop.f32.mrf.mxu0
    %v4548 = vadd.f32 %v4519, %v4547
    %4549 = vdwg.mxu0
    %4550 = vmatpush.bf16.msra.mxu0 %v4259
    %4551 = vmatpush.bf16.msra.mxu0 %v4258
    %4552 = vmatpush.bf16.msra.mxu0 %v4257
    %4553 = vmatpush.bf16.msra.mxu0 %v4256
    %4554 = vmatpush.bf16.msra.mxu0 %v4255
    %4555 = vmatpush.bf16.msra.mxu0 %v4254
    %4556 = vmatpush.bf16.msra.mxu0 %v4253
    %4557 = vmatpush.bf16.msra.mxu0 %v4252
    %4558 = vmatmul.bf16.gmra.mxu0 %v3598
    %v4559 = vpop.f32.mrf.mxu0
    %v4560 = vadd.f32 %v4531, %v4559
    %v4561 = vpop.f32.mrf.mxu0
    %v4562 = vadd.f32 %v4533, %v4561
    %4563 = vmatmul.bf16.gmra.mxu0 %v3614
    %v4564 = vpop.f32.mrf.mxu0
    %v4565 = vadd.f32 %v4536, %v4564
    %v4566 = vpop.f32.mrf.mxu0
    %v4567 = vadd.f32 %v4538, %v4566
    %4568 = vmatmul.bf16.gmra.mxu0 %v3630
    %v4569 = vpop.f32.mrf.mxu0
    %v4570 = vadd.f32 %v4541, %v4569
    %v4571 = vpop.f32.mrf.mxu0
    %v4572 = vadd.f32 %v4543, %v4571
    %4573 = vmatmul.bf16.gmra.mxu0 %v3646
    %v4574 = vpop.f32.mrf.mxu0
    %v4575 = vadd.f32 %v4546, %v4574
    %v4576 = vpop.f32.mrf.mxu0
    %v4577 = vadd.f32 %v4548, %v4576
    %4578 = vdwg.mxu0
    %4579 = vmatpush.bf16.msra.mxu0 %v4267
    %4580 = vmatpush.bf16.msra.mxu0 %v4266
    %4581 = vmatpush.bf16.msra.mxu0 %v4265
    %4582 = vmatpush.bf16.msra.mxu0 %v4264
    %4583 = vmatpush.bf16.msra.mxu0 %v4263
    %4584 = vmatpush.bf16.msra.mxu0 %v4262
    %4585 = vmatpush.bf16.msra.mxu0 %v4261
    %4586 = vmatpush.bf16.msra.mxu0 %v4260
    %4587 = vmatmul.bf16.gmra.mxu0 %v3599
    %v4588 = vpop.f32.mrf.mxu0
    %v4589 = vadd.f32 %v4560, %v4588
    %v4590 = vpop.f32.mrf.mxu0
    %v4591 = vadd.f32 %v4562, %v4590
    %4592 = vmatmul.bf16.gmra.mxu0 %v3615
    %v4593 = vpop.f32.mrf.mxu0
    %v4594 = vadd.f32 %v4565, %v4593
    %v4595 = vpop.f32.mrf.mxu0
    %v4596 = vadd.f32 %v4567, %v4595
    %4597 = vmatmul.bf16.gmra.mxu0 %v3631
    %v4598 = vpop.f32.mrf.mxu0
    %v4599 = vadd.f32 %v4570, %v4598
    %v4600 = vpop.f32.mrf.mxu0
    %v4601 = vadd.f32 %v4572, %v4600
    %4602 = vmatmul.bf16.gmra.mxu0 %v3647
    %v4603 = vpop.f32.mrf.mxu0
    %v4604 = vadd.f32 %v4575, %v4603
    %v4605 = vpop.f32.mrf.mxu0
    %v4606 = vadd.f32 %v4577, %v4605
    %4607 = vdwg.mxu0
    %4608 = vmatpush.bf16.msra.mxu0 %v4275
    %4609 = vmatpush.bf16.msra.mxu0 %v4274
    %4610 = vmatpush.bf16.msra.mxu0 %v4273
    %4611 = vmatpush.bf16.msra.mxu0 %v4272
    %4612 = vmatpush.bf16.msra.mxu0 %v4271
    %4613 = vmatpush.bf16.msra.mxu0 %v4270
    %4614 = vmatpush.bf16.msra.mxu0 %v4269
    %4615 = vmatpush.bf16.msra.mxu0 %v4268
    %4616 = vmatmul.bf16.gmra.mxu0 %v3600
    %v4617 = vpop.f32.mrf.mxu0
    %v4618 = vadd.f32 %v4589, %v4617
    %v4619 = vpop.f32.mrf.mxu0
    %v4620 = vadd.f32 %v4591, %v4619
    %4621 = vmatmul.bf16.gmra.mxu0 %v3616
    %v4622 = vpop.f32.mrf.mxu0
    %v4623 = vadd.f32 %v4594, %v4622
    %v4624 = vpop.f32.mrf.mxu0
    %v4625 = vadd.f32 %v4596, %v4624
    %4626 = vmatmul.bf16.gmra.mxu0 %v3632
    %v4627 = vpop.f32.mrf.mxu0
    %v4628 = vadd.f32 %v4599, %v4627
    %v4629 = vpop.f32.mrf.mxu0
    %v4630 = vadd.f32 %v4601, %v4629
    %4631 = vmatmul.bf16.gmra.mxu0 %v3648
    %v4632 = vpop.f32.mrf.mxu0
    %v4633 = vadd.f32 %v4604, %v4632
    %v4634 = vpop.f32.mrf.mxu0
    %v4635 = vadd.f32 %v4606, %v4634
    %4636 = vdwg.mxu0
    %4637 = vmatpush.bf16.msra.mxu0 %v4283
    %4638 = vmatpush.bf16.msra.mxu0 %v4282
    %4639 = vmatpush.bf16.msra.mxu0 %v4281
    %4640 = vmatpush.bf16.msra.mxu0 %v4280
    %4641 = vmatpush.bf16.msra.mxu0 %v4279
    %4642 = vmatpush.bf16.msra.mxu0 %v4278
    %4643 = vmatpush.bf16.msra.mxu0 %v4277
    %4644 = vmatpush.bf16.msra.mxu0 %v4276
    %4645 = vmatmul.bf16.gmra.mxu0 %v3601
    %v4646 = vpop.f32.mrf.mxu0
    %v4647 = vadd.f32 %v4618, %v4646
    %v4648 = vpop.f32.mrf.mxu0
    %v4649 = vadd.f32 %v4620, %v4648
    %4650 = vmatmul.bf16.gmra.mxu0 %v3617
    %v4651 = vpop.f32.mrf.mxu0
    %v4652 = vadd.f32 %v4623, %v4651
    %v4653 = vpop.f32.mrf.mxu0
    %v4654 = vadd.f32 %v4625, %v4653
    %4655 = vmatmul.bf16.gmra.mxu0 %v3633
    %v4656 = vpop.f32.mrf.mxu0
    %v4657 = vadd.f32 %v4628, %v4656
    %v4658 = vpop.f32.mrf.mxu0
    %v4659 = vadd.f32 %v4630, %v4658
    %4660 = vmatmul.bf16.gmra.mxu0 %v3649
    %v4661 = vpop.f32.mrf.mxu0
    %v4662 = vadd.f32 %v4633, %v4661
    %v4663 = vpop.f32.mrf.mxu0
    %v4664 = vadd.f32 %v4635, %v4663
    %4665 = vdwg.mxu0
    %4666 = vmatpush.bf16.msra.mxu0 %v4291
    %4667 = vmatpush.bf16.msra.mxu0 %v4290
    %4668 = vmatpush.bf16.msra.mxu0 %v4289
    %4669 = vmatpush.bf16.msra.mxu0 %v4288
    %4670 = vmatpush.bf16.msra.mxu0 %v4287
    %4671 = vmatpush.bf16.msra.mxu0 %v4286
    %4672 = vmatpush.bf16.msra.mxu0 %v4285
    %4673 = vmatpush.bf16.msra.mxu0 %v4284
    %4674 = vmatmul.bf16.gmra.mxu0 %v3602
    %v4675 = vpop.f32.mrf.mxu0
    %v4676 = vadd.f32 %v4647, %v4675
    %v4677 = vpop.f32.mrf.mxu0
    %v4678 = vadd.f32 %v4649, %v4677
    %4679 = vmatmul.bf16.gmra.mxu0 %v3618
    %v4680 = vpop.f32.mrf.mxu0
    %v4681 = vadd.f32 %v4652, %v4680
    %v4682 = vpop.f32.mrf.mxu0
    %v4683 = vadd.f32 %v4654, %v4682
    %4684 = vmatmul.bf16.gmra.mxu0 %v3634
    %v4685 = vpop.f32.mrf.mxu0
    %v4686 = vadd.f32 %v4657, %v4685
    %v4687 = vpop.f32.mrf.mxu0
    %v4688 = vadd.f32 %v4659, %v4687
    %4689 = vmatmul.bf16.gmra.mxu0 %v3650
    %v4690 = vpop.f32.mrf.mxu0
    %v4691 = vadd.f32 %v4662, %v4690
    %v4692 = vpop.f32.mrf.mxu0
    %v4693 = vadd.f32 %v4664, %v4692
    %4694 = vdwg.mxu0
    %4695 = vmatpush.bf16.msra.mxu0 %v4299
    %4696 = vmatpush.bf16.msra.mxu0 %v4298
    %4697 = vmatpush.bf16.msra.mxu0 %v4297
    %4698 = vmatpush.bf16.msra.mxu0 %v4296
    %4699 = vmatpush.bf16.msra.mxu0 %v4295
    %4700 = vmatpush.bf16.msra.mxu0 %v4294
    %4701 = vmatpush.bf16.msra.mxu0 %v4293
    %4702 = vmatpush.bf16.msra.mxu0 %v4292
    %4703 = vmatmul.bf16.gmra.mxu0 %v3603
    %v4704 = vpop.f32.mrf.mxu0
    %v4705 = vadd.f32 %v4676, %v4704
    %v4706 = vpop.f32.mrf.mxu0
    %v4707 = vadd.f32 %v4678, %v4706
    %4708 = vmatmul.bf16.gmra.mxu0 %v3619
    %v4709 = vpop.f32.mrf.mxu0
    %v4710 = vadd.f32 %v4681, %v4709
    %v4711 = vpop.f32.mrf.mxu0
    %v4712 = vadd.f32 %v4683, %v4711
    %4713 = vmatmul.bf16.gmra.mxu0 %v3635
    %v4714 = vpop.f32.mrf.mxu0
    %v4715 = vadd.f32 %v4686, %v4714
    %v4716 = vpop.f32.mrf.mxu0
    %v4717 = vadd.f32 %v4688, %v4716
    %4718 = vmatmul.bf16.gmra.mxu0 %v3651
    %v4719 = vpop.f32.mrf.mxu0
    %v4720 = vadd.f32 %v4691, %v4719
    %v4721 = vpop.f32.mrf.mxu0
    %v4722 = vadd.f32 %v4693, %v4721
    %4723 = vdwg.mxu0
    %4724 = vmatpush.bf16.msra.mxu0 %v4307
    %4725 = vmatpush.bf16.msra.mxu0 %v4306
    %4726 = vmatpush.bf16.msra.mxu0 %v4305
    %4727 = vmatpush.bf16.msra.mxu0 %v4304
    %4728 = vmatpush.bf16.msra.mxu0 %v4303
    %4729 = vmatpush.bf16.msra.mxu0 %v4302
    %4730 = vmatpush.bf16.msra.mxu0 %v4301
    %4731 = vmatpush.bf16.msra.mxu0 %v4300
    %4732 = vmatmul.bf16.gmra.mxu0 %v3604
    %v4733 = vpop.f32.mrf.mxu0
    %v4734 = vadd.f32 %v4705, %v4733
    %v4735 = vpop.f32.mrf.mxu0
    %v4736 = vadd.f32 %v4707, %v4735
    %4737 = vmatmul.bf16.gmra.mxu0 %v3620
    %v4738 = vpop.f32.mrf.mxu0
    %v4739 = vadd.f32 %v4710, %v4738
    %v4740 = vpop.f32.mrf.mxu0
    %v4741 = vadd.f32 %v4712, %v4740
    %4742 = vmatmul.bf16.gmra.mxu0 %v3636
    %v4743 = vpop.f32.mrf.mxu0
    %v4744 = vadd.f32 %v4715, %v4743
    %v4745 = vpop.f32.mrf.mxu0
    %v4746 = vadd.f32 %v4717, %v4745
    %4747 = vmatmul.bf16.gmra.mxu0 %v3652
    %v4748 = vpop.f32.mrf.mxu0
    %v4749 = vadd.f32 %v4720, %v4748
    %v4750 = vpop.f32.mrf.mxu0
    %v4751 = vadd.f32 %v4722, %v4750
    %4752 = vdwg.mxu0
    %4753 = vmatpush.bf16.msra.mxu0 %v4315
    %4754 = vmatpush.bf16.msra.mxu0 %v4314
    %4755 = vmatpush.bf16.msra.mxu0 %v4313
    %4756 = vmatpush.bf16.msra.mxu0 %v4312
    %4757 = vmatpush.bf16.msra.mxu0 %v4311
    %4758 = vmatpush.bf16.msra.mxu0 %v4310
    %4759 = vmatpush.bf16.msra.mxu0 %v4309
    %4760 = vmatpush.bf16.msra.mxu0 %v4308
    %4761 = vmatmul.bf16.gmra.mxu0 %v3605
    %v4762 = vpop.f32.mrf.mxu0
    %v4763 = vadd.f32 %v4734, %v4762
    %v4764 = vpop.f32.mrf.mxu0
    %v4765 = vadd.f32 %v4736, %v4764
    %4766 = vmatmul.bf16.gmra.mxu0 %v3621
    %v4767 = vpop.f32.mrf.mxu0
    %v4768 = vadd.f32 %v4739, %v4767
    %v4769 = vpop.f32.mrf.mxu0
    %v4770 = vadd.f32 %v4741, %v4769
    %4771 = vmatmul.bf16.gmra.mxu0 %v3637
    %v4772 = vpop.f32.mrf.mxu0
    %v4773 = vadd.f32 %v4744, %v4772
    %v4774 = vpop.f32.mrf.mxu0
    %v4775 = vadd.f32 %v4746, %v4774
    %4776 = vmatmul.bf16.gmra.mxu0 %v3653
    %v4777 = vpop.f32.mrf.mxu0
    %v4778 = vadd.f32 %v4749, %v4777
    %v4779 = vpop.f32.mrf.mxu0
    %v4780 = vadd.f32 %v4751, %v4779
    %4781 = vdwg.mxu0
    %4782 = vmatpush.bf16.msra.mxu0 %v4323
    %4783 = vmatpush.bf16.msra.mxu0 %v4322
    %4784 = vmatpush.bf16.msra.mxu0 %v4321
    %4785 = vmatpush.bf16.msra.mxu0 %v4320
    %4786 = vmatpush.bf16.msra.mxu0 %v4319
    %4787 = vmatpush.bf16.msra.mxu0 %v4318
    %4788 = vmatpush.bf16.msra.mxu0 %v4317
    %4789 = vmatpush.bf16.msra.mxu0 %v4316
    %4790 = vmatmul.bf16.gmra.mxu0 %v3606
    %v4791 = vpop.f32.mrf.mxu0
    %v4792 = vadd.f32 %v4763, %v4791
    %v4793 = vpop.f32.mrf.mxu0
    %v4794 = vadd.f32 %v4765, %v4793
    %4795 = vmatmul.bf16.gmra.mxu0 %v3622
    %v4796 = vpop.f32.mrf.mxu0
    %v4797 = vadd.f32 %v4768, %v4796
    %v4798 = vpop.f32.mrf.mxu0
    %v4799 = vadd.f32 %v4770, %v4798
    %4800 = vmatmul.bf16.gmra.mxu0 %v3638
    %v4801 = vpop.f32.mrf.mxu0
    %v4802 = vadd.f32 %v4773, %v4801
    %v4803 = vpop.f32.mrf.mxu0
    %v4804 = vadd.f32 %v4775, %v4803
    %4805 = vmatmul.bf16.gmra.mxu0 %v3654
    %v4806 = vpop.f32.mrf.mxu0
    %v4807 = vadd.f32 %v4778, %v4806
    %v4808 = vpop.f32.mrf.mxu0
    %v4809 = vadd.f32 %v4780, %v4808
    %4810 = vdwg.mxu0
    %4811 = vmatpush.bf16.msra.mxu0 %v4331
    %4812 = vmatpush.bf16.msra.mxu0 %v4330
    %4813 = vmatpush.bf16.msra.mxu0 %v4329
    %4814 = vmatpush.bf16.msra.mxu0 %v4328
    %4815 = vmatpush.bf16.msra.mxu0 %v4327
    %4816 = vmatpush.bf16.msra.mxu0 %v4326
    %4817 = vmatpush.bf16.msra.mxu0 %v4325
    %4818 = vmatpush.bf16.msra.mxu0 %v4324
    %4819 = vmatmul.bf16.gmra.mxu0 %v3607
    %v4820 = vpop.f32.mrf.mxu0
    %v4821 = vadd.f32 %v4792, %v4820
    %v4822 = vpop.f32.mrf.mxu0
    %v4823 = vadd.f32 %v4794, %v4822
    %4824 = vmatmul.bf16.gmra.mxu0 %v3623
    %v4825 = vpop.f32.mrf.mxu0
    %v4826 = vadd.f32 %v4797, %v4825
    %v4827 = vpop.f32.mrf.mxu0
    %v4828 = vadd.f32 %v4799, %v4827
    %4829 = vmatmul.bf16.gmra.mxu0 %v3639
    %v4830 = vpop.f32.mrf.mxu0
    %v4831 = vadd.f32 %v4802, %v4830
    %v4832 = vpop.f32.mrf.mxu0
    %v4833 = vadd.f32 %v4804, %v4832
    %4834 = vmatmul.bf16.gmra.mxu0 %v3655
    %v4835 = vpop.f32.mrf.mxu0
    %v4836 = vadd.f32 %v4807, %v4835
    %v4837 = vpop.f32.mrf.mxu0
    %v4838 = vadd.f32 %v4809, %v4837
    %4839 = vdwg.mxu0
    %4840 = vmatpush.bf16.msra.mxu0 %v4339
    %4841 = vmatpush.bf16.msra.mxu0 %v4338
    %4842 = vmatpush.bf16.msra.mxu0 %v4337
    %4843 = vmatpush.bf16.msra.mxu0 %v4336
    %4844 = vmatpush.bf16.msra.mxu0 %v4335
    %4845 = vmatpush.bf16.msra.mxu0 %v4334
    %4846 = vmatpush.bf16.msra.mxu0 %v4333
    %4847 = vmatpush.bf16.msra.mxu0 %v4332
    %4848 = vmatmul.bf16.gmra.mxu0 %v3608
    %v4849 = vpop.f32.mrf.mxu0
    %v4850 = vadd.f32 %v4821, %v4849
    %v4851 = vpop.f32.mrf.mxu0
    %v4852 = vadd.f32 %v4823, %v4851
    %4853 = vmatmul.bf16.gmra.mxu0 %v3624
    %v4854 = vpop.f32.mrf.mxu0
    %v4855 = vadd.f32 %v4826, %v4854
    %v4856 = vpop.f32.mrf.mxu0
    %v4857 = vadd.f32 %v4828, %v4856
    %4858 = vmatmul.bf16.gmra.mxu0 %v3640
    %v4859 = vpop.f32.mrf.mxu0
    %v4860 = vadd.f32 %v4831, %v4859
    %v4861 = vpop.f32.mrf.mxu0
    %v4862 = vadd.f32 %v4833, %v4861
    %4863 = vmatmul.bf16.gmra.mxu0 %v3656
    %v4864 = vpop.f32.mrf.mxu0
    %v4865 = vadd.f32 %v4836, %v4864
    %v4866 = vpop.f32.mrf.mxu0
    %v4867 = vadd.f32 %v4838, %v4866
    %4868 = vdwg.mxu0
    %4869 = vmatpush.bf16.msra.mxu0 %v4347
    %4870 = vmatpush.bf16.msra.mxu0 %v4346
    %4871 = vmatpush.bf16.msra.mxu0 %v4345
    %4872 = vmatpush.bf16.msra.mxu0 %v4344
    %4873 = vmatpush.bf16.msra.mxu0 %v4343
    %4874 = vmatpush.bf16.msra.mxu0 %v4342
    %4875 = vmatpush.bf16.msra.mxu0 %v4341
    %4876 = vmatpush.bf16.msra.mxu0 %v4340
    %4877 = vmatmul.bf16.gmra.mxu0 %v3609
    %v4878 = vpop.f32.mrf.mxu0
    %v4879 = vadd.f32 %v4850, %v4878
    %v4880 = vpop.f32.mrf.mxu0
    %v4881 = vadd.f32 %v4852, %v4880
    %4882 = vmatmul.bf16.gmra.mxu0 %v3625
    %v4883 = vpop.f32.mrf.mxu0
    %v4884 = vadd.f32 %v4855, %v4883
    %v4885 = vpop.f32.mrf.mxu0
    %v4886 = vadd.f32 %v4857, %v4885
    %4887 = vmatmul.bf16.gmra.mxu0 %v3641
    %v4888 = vpop.f32.mrf.mxu0
    %v4889 = vadd.f32 %v4860, %v4888
    %v4890 = vpop.f32.mrf.mxu0
    %v4891 = vadd.f32 %v4862, %v4890
    %4892 = vmatmul.bf16.gmra.mxu0 %v3657
    %v4893 = vpop.f32.mrf.mxu0
    %v4894 = vadd.f32 %v4865, %v4893
    %v4895 = vpop.f32.mrf.mxu0
    %v4896 = vadd.f32 %v4867, %v4895
    %4897 = vdwg.mxu0
    %4898 = vmatpush.bf16.msra.mxu0 %v4355
    %4899 = vmatpush.bf16.msra.mxu0 %v4354
    %4900 = vmatpush.bf16.msra.mxu0 %v4353
    %4901 = vmatpush.bf16.msra.mxu0 %v4352
    %4902 = vmatpush.bf16.msra.mxu0 %v4351
    %4903 = vmatpush.bf16.msra.mxu0 %v4350
    %4904 = vmatpush.bf16.msra.mxu0 %v4349
    %4905 = vmatpush.bf16.msra.mxu0 %v4348
    %4906 = vmatmul.bf16.gmra.mxu0 %v3610
    %v4907 = vpop.f32.mrf.mxu0
    %v4908 = vadd.f32 %v4879, %v4907
    %v4909 = vpop.f32.mrf.mxu0
    %v4910 = vadd.f32 %v4881, %v4909
    %4911 = vmatmul.bf16.gmra.mxu0 %v3626
    %v4912 = vpop.f32.mrf.mxu0
    %v4913 = vadd.f32 %v4884, %v4912
    %v4914 = vpop.f32.mrf.mxu0
    %v4915 = vadd.f32 %v4886, %v4914
    %4916 = vmatmul.bf16.gmra.mxu0 %v3642
    %v4917 = vpop.f32.mrf.mxu0
    %v4918 = vadd.f32 %v4889, %v4917
    %v4919 = vpop.f32.mrf.mxu0
    %v4920 = vadd.f32 %v4891, %v4919
    %4921 = vmatmul.bf16.gmra.mxu0 %v3658
    %v4922 = vpop.f32.mrf.mxu0
    %v4923 = vadd.f32 %v4894, %v4922
    %v4924 = vpop.f32.mrf.mxu0
    %v4925 = vadd.f32 %v4896, %v4924
    %4926 = vdwg.mxu0
    %4927 = vmatpush.bf16.msra.mxu0 %v4363
    %4928 = vmatpush.bf16.msra.mxu0 %v4362
    %4929 = vmatpush.bf16.msra.mxu0 %v4361
    %4930 = vmatpush.bf16.msra.mxu0 %v4360
    %4931 = vmatpush.bf16.msra.mxu0 %v4359
    %4932 = vmatpush.bf16.msra.mxu0 %v4358
    %4933 = vmatpush.bf16.msra.mxu0 %v4357
    %4934 = vmatpush.bf16.msra.mxu0 %v4356
    %4935 = vmatmul.bf16.gmra.mxu0 %v3611
    %v4936 = vpop.f32.mrf.mxu0
    %v4937 = vadd.f32 %v4908, %v4936
    %v4938 = vpop.f32.mrf.mxu0
    %v4939 = vadd.f32 %v4910, %v4938
    %4940 = vmatmul.bf16.gmra.mxu0 %v3627
    %v4941 = vpop.f32.mrf.mxu0
    %v4942 = vadd.f32 %v4913, %v4941
    %v4943 = vpop.f32.mrf.mxu0
    %v4944 = vadd.f32 %v4915, %v4943
    %4945 = vmatmul.bf16.gmra.mxu0 %v3643
    %v4946 = vpop.f32.mrf.mxu0
    %v4947 = vadd.f32 %v4918, %v4946
    %v4948 = vpop.f32.mrf.mxu0
    %v4949 = vadd.f32 %v4920, %v4948
    %4950 = vmatmul.bf16.gmra.mxu0 %v3659
    %v4951 = vpop.f32.mrf.mxu0
    %v4952 = vadd.f32 %v4923, %v4951
    %v4953 = vpop.f32.mrf.mxu0
    %v4954 = vadd.f32 %v4925, %v4953
    %4955 = vdwg.mxu0
    %v4956 = vmax.f32 %v4937, 0.0
    %v4957 = vmax.f32 %v4939, 0.0
    %v4958 = vmax.f32 %v4942, 0.0
    %v4959 = vmax.f32 %v4944, 0.0
    %v4960 = vmax.f32 %v4947, 0.0
    %v4961 = vmax.f32 %v4949, 0.0
    %v4962 = vmax.f32 %v4952, 0.0
    %v4963 = vmax.f32 %v4954, 0.0
    %v4964 = vpack.c.bf16 %v4956, %v4956
    %v4965 = vpack.c.bf16 %v4957, %v4957
    %v4966 = vpack.c.bf16 %v4958, %v4958
    %v4967 = vpack.c.bf16 %v4959, %v4959
    %v4968 = vpack.c.bf16 %v4960, %v4960
    %v4969 = vpack.c.bf16 %v4961, %v4961
    %v4970 = vpack.c.bf16 %v4962, %v4962
    %v4971 = vpack.c.bf16 %v4963, %v4963
    %v4980 = vunpack.c.l.b16 %v4964
    %v4981 = vunpack.c.l.b16 %v4965
    %v4982 = vunpack.c.l.b16 %v4966
    %v4983 = vunpack.c.l.b16 %v4967
    %v4984 = vunpack.c.l.b16 %v4968
    %v4985 = vunpack.c.l.b16 %v4969
    %v4986 = vunpack.c.l.b16 %v4970
    %v4987 = vunpack.c.l.b16 %v4971
    %v4988 = vpack.c.b16 %v4981, %v4980
    %v4989 = vpack.c.b16 %v4983, %v4982
    %v4990 = vpack.c.b16 %v4985, %v4984
    %v4991 = vpack.c.b16 %v4987, %v4986
    %v5028 = vunpack.c.l.b16 %v1109
    %v5029 = vunpack.c.l.b16 %v1110
    %v5030 = vunpack.c.l.b16 %v1111
    %v5031 = vunpack.c.l.b16 %v1112
    %v5032 = vunpack.c.l.b16 %v1113
    %v5033 = vunpack.c.l.b16 %v1114
    %v5034 = vunpack.c.l.b16 %v1115
    %v5035 = vunpack.c.l.b16 %v1116
    %v5036 = vunpack.c.l.b16 %v1117
    %v5037 = vunpack.c.l.b16 %v1118
    %v5038 = vunpack.c.l.b16 %v1119
    %v5039 = vunpack.c.l.b16 %v1120
    %v5040 = vunpack.c.l.b16 %v1121
    %v5041 = vunpack.c.l.b16 %v1122
    %v5042 = vunpack.c.l.b16 %v1123
    %v5043 = vunpack.c.l.b16 %v1124
    %v5044 = vunpack.c.l.b16 %v1125
    %v5045 = vunpack.c.l.b16 %v1126
    %v5046 = vunpack.c.l.b16 %v1127
    %v5047 = vunpack.c.l.b16 %v1128
    %v5048 = vunpack.c.l.b16 %v1129
    %v5049 = vunpack.c.l.b16 %v1130
    %v5050 = vunpack.c.l.b16 %v1131
    %v5051 = vunpack.c.l.b16 %v1132
    %v5052 = vunpack.c.l.b16 %v1133
    %v5053 = vunpack.c.l.b16 %v1134
    %v5054 = vunpack.c.l.b16 %v1135
    %v5055 = vunpack.c.l.b16 %v1136
    %v5056 = vunpack.c.l.b16 %v1137
    %v5057 = vunpack.c.l.b16 %v1138
    %v5058 = vunpack.c.l.b16 %v1139
    %v5059 = vunpack.c.l.b16 %v1140
    %v5060 = vpack.c.b16 %v5029, %v5028
    %v5061 = vpack.c.b16 %v5031, %v5030
    %v5062 = vpack.c.b16 %v5033, %v5032
    %v5063 = vpack.c.b16 %v5035, %v5034
    %v5064 = vpack.c.b16 %v5037, %v5036
    %v5065 = vpack.c.b16 %v5039, %v5038
    %v5066 = vpack.c.b16 %v5041, %v5040
    %v5067 = vpack.c.b16 %v5043, %v5042
    %v5068 = vpack.c.b16 %v5045, %v5044
    %v5069 = vpack.c.b16 %v5047, %v5046
    %v5070 = vpack.c.b16 %v5049, %v5048
    %v5071 = vpack.c.b16 %v5051, %v5050
    %v5072 = vpack.c.b16 %v5053, %v5052
    %v5073 = vpack.c.b16 %v5055, %v5054
    %v5074 = vpack.c.b16 %v5057, %v5056
    %v5075 = vpack.c.b16 %v5059, %v5058
    %5092 = vmatpush.bf16.msra.mxu0 0
    %5093 = vmatpush.bf16.msra.mxu0 0
    %5094 = vmatpush.bf16.msra.mxu0 0
    %5095 = vmatpush.bf16.msra.mxu0 0
    %5096 = vmatpush.bf16.msra.mxu0 %v4991
    %5097 = vmatpush.bf16.msra.mxu0 %v4990
    %5098 = vmatpush.bf16.msra.mxu0 %v4989
    %5099 = vmatpush.bf16.msra.mxu0 %v4988
    %5100 = vmatmul.bf16.gmra.mxu0 %v5060
    %v5101 = vpop.f32.mrf.mxu0
    %v5102 = vadd.f32 0.0, %v5101
    %v5103 = vpop.f32.mrf.mxu0
    %v5104 = vadd.f32 0.0, %v5103
    %5105 = vmatmul.bf16.gmra.mxu0 %v5061
    %v5106 = vpop.f32.mrf.mxu0
    %v5107 = vadd.f32 0.0, %v5106
    %v5108 = vpop.f32.mrf.mxu0
    %v5109 = vadd.f32 0.0, %v5108
    %5110 = vmatmul.bf16.gmra.mxu0 %v5062
    %v5111 = vpop.f32.mrf.mxu0
    %v5112 = vadd.f32 0.0, %v5111
    %v5113 = vpop.f32.mrf.mxu0
    %v5114 = vadd.f32 0.0, %v5113
    %5115 = vmatmul.bf16.gmra.mxu0 %v5063
    %v5116 = vpop.f32.mrf.mxu0
    %v5117 = vadd.f32 0.0, %v5116
    %v5118 = vpop.f32.mrf.mxu0
    %v5119 = vadd.f32 0.0, %v5118
    %5120 = vmatmul.bf16.gmra.mxu0 %v5064
    %v5121 = vpop.f32.mrf.mxu0
    %v5122 = vadd.f32 0.0, %v5121
    %v5123 = vpop.f32.mrf.mxu0
    %v5124 = vadd.f32 0.0, %v5123
    %5125 = vmatmul.bf16.gmra.mxu0 %v5065
    %v5126 = vpop.f32.mrf.mxu0
    %v5127 = vadd.f32 0.0, %v5126
    %v5128 = vpop.f32.mrf.mxu0
    %v5129 = vadd.f32 0.0, %v5128
    %5130 = vmatmul.bf16.gmra.mxu0 %v5066
    %v5131 = vpop.f32.mrf.mxu0
    %v5132 = vadd.f32 0.0, %v5131
    %v5133 = vpop.f32.mrf.mxu0
    %v5134 = vadd.f32 0.0, %v5133
    %5135 = vmatmul.bf16.gmra.mxu0 %v5067
    %v5136 = vpop.f32.mrf.mxu0
    %v5137 = vadd.f32 0.0, %v5136
    %v5138 = vpop.f32.mrf.mxu0
    %v5139 = vadd.f32 0.0, %v5138
    %5140 = vmatmul.bf16.gmra.mxu0 %v5068
    %v5141 = vpop.f32.mrf.mxu0
    %v5142 = vadd.f32 0.0, %v5141
    %v5143 = vpop.f32.mrf.mxu0
    %v5144 = vadd.f32 0.0, %v5143
    %5145 = vmatmul.bf16.gmra.mxu0 %v5069
    %v5146 = vpop.f32.mrf.mxu0
    %v5147 = vadd.f32 0.0, %v5146
    %v5148 = vpop.f32.mrf.mxu0
    %v5149 = vadd.f32 0.0, %v5148
    %5150 = vmatmul.bf16.gmra.mxu0 %v5070
    %v5151 = vpop.f32.mrf.mxu0
    %v5152 = vadd.f32 0.0, %v5151
    %v5153 = vpop.f32.mrf.mxu0
    %v5154 = vadd.f32 0.0, %v5153
    %5155 = vmatmul.bf16.gmra.mxu0 %v5071
    %v5156 = vpop.f32.mrf.mxu0
    %v5157 = vadd.f32 0.0, %v5156
    %v5158 = vpop.f32.mrf.mxu0
    %v5159 = vadd.f32 0.0, %v5158
    %5160 = vmatmul.bf16.gmra.mxu0 %v5072
    %v5161 = vpop.f32.mrf.mxu0
    %v5162 = vadd.f32 0.0, %v5161
    %v5163 = vpop.f32.mrf.mxu0
    %v5164 = vadd.f32 0.0, %v5163
    %5165 = vmatmul.bf16.gmra.mxu0 %v5073
    %v5166 = vpop.f32.mrf.mxu0
    %v5167 = vadd.f32 0.0, %v5166
    %v5168 = vpop.f32.mrf.mxu0
    %v5169 = vadd.f32 0.0, %v5168
    %5170 = vmatmul.bf16.gmra.mxu0 %v5074
    %v5171 = vpop.f32.mrf.mxu0
    %v5172 = vadd.f32 0.0, %v5171
    %v5173 = vpop.f32.mrf.mxu0
    %v5174 = vadd.f32 0.0, %v5173
    %5175 = vmatmul.bf16.gmra.mxu0 %v5075
    %v5176 = vpop.f32.mrf.mxu0
    %v5177 = vadd.f32 0.0, %v5176
    %v5178 = vpop.f32.mrf.mxu0
    %v5179 = vadd.f32 0.0, %v5178
    %5180 = vdwg.mxu0
    %v5181 = vpack.c.bf16 %v5102, %v5102
    %v5182 = vpack.c.bf16 %v5104, %v5104
    %v5183 = vpack.c.bf16 %v5107, %v5107
    %v5184 = vpack.c.bf16 %v5109, %v5109
    %v5185 = vpack.c.bf16 %v5112, %v5112
    %v5186 = vpack.c.bf16 %v5114, %v5114
    %v5187 = vpack.c.bf16 %v5117, %v5117
    %v5188 = vpack.c.bf16 %v5119, %v5119
    %v5189 = vpack.c.bf16 %v5122, %v5122
    %v5190 = vpack.c.bf16 %v5124, %v5124
    %v5191 = vpack.c.bf16 %v5127, %v5127
    %v5192 = vpack.c.bf16 %v5129, %v5129
    %v5193 = vpack.c.bf16 %v5132, %v5132
    %v5194 = vpack.c.bf16 %v5134, %v5134
    %v5195 = vpack.c.bf16 %v5137, %v5137
    %v5196 = vpack.c.bf16 %v5139, %v5139
    %v5197 = vpack.c.bf16 %v5142, %v5142
    %v5198 = vpack.c.bf16 %v5144, %v5144
    %v5199 = vpack.c.bf16 %v5147, %v5147
    %v5200 = vpack.c.bf16 %v5149, %v5149
    %v5201 = vpack.c.bf16 %v5152, %v5152
    %v5202 = vpack.c.bf16 %v5154, %v5154
    %v5203 = vpack.c.bf16 %v5157, %v5157
    %v5204 = vpack.c.bf16 %v5159, %v5159
    %v5205 = vpack.c.bf16 %v5162, %v5162
    %v5206 = vpack.c.bf16 %v5164, %v5164
    %v5207 = vpack.c.bf16 %v5167, %v5167
    %v5208 = vpack.c.bf16 %v5169, %v5169
    %v5209 = vpack.c.bf16 %v5172, %v5172
    %v5210 = vpack.c.bf16 %v5174, %v5174
    %v5211 = vpack.c.bf16 %v5177, %v5177
    %v5212 = vpack.c.bf16 %v5179, %v5179
    %5213 = vst [vmem:[#allocation3] sm:$0xf] %v5181
    %5214 = vst [vmem:[#allocation3 + $0x4] sm:$0xf] %v5182
    %5215 = vst [vmem:[#allocation3 + $0x8] sm:$0xf] %v5183
    %5216 = vst [vmem:[#allocation3 + $0xc] sm:$0xf] %v5184
    %5217 = vst [vmem:[#allocation3 + $0x10] sm:$0xf] %v5185
    %5218 = vst [vmem:[#allocation3 + $0x14] sm:$0xf] %v5186
    %5219 = vst [vmem:[#allocation3 + $0x18] sm:$0xf] %v5187
    %5220 = vst [vmem:[#allocation3 + $0x1c] sm:$0xf] %v5188
    %5221 = vst [vmem:[#allocation3 + $0x20] sm:$0xf] %v5189
    %5222 = vst [vmem:[#allocation3 + $0x24] sm:$0xf] %v5190
    %5223 = vst [vmem:[#allocation3 + $0x28] sm:$0xf] %v5191
    %5224 = vst [vmem:[#allocation3 + $0x2c] sm:$0xf] %v5192
    %5225 = vst [vmem:[#allocation3 + $0x30] sm:$0xf] %v5193
    %5226 = vst [vmem:[#allocation3 + $0x34] sm:$0xf] %v5194
    %5227 = vst [vmem:[#allocation3 + $0x38] sm:$0xf] %v5195
    %5228 = vst [vmem:[#allocation3 + $0x3c] sm:$0xf] %v5196
    %5229 = vst [vmem:[#allocation3 + $0x40] sm:$0xf] %v5197
    %5230 = vst [vmem:[#allocation3 + $0x44] sm:$0xf] %v5198
    %5231 = vst [vmem:[#allocation3 + $0x48] sm:$0xf] %v5199
    %5232 = vst [vmem:[#allocation3 + $0x4c] sm:$0xf] %v5200
    %5233 = vst [vmem:[#allocation3 + $0x50] sm:$0xf] %v5201
    %5234 = vst [vmem:[#allocation3 + $0x54] sm:$0xf] %v5202
    %5235 = vst [vmem:[#allocation3 + $0x58] sm:$0xf] %v5203
    %5236 = vst [vmem:[#allocation3 + $0x5c] sm:$0xf] %v5204
    %5237 = vst [vmem:[#allocation3 + $0x60] sm:$0xf] %v5205
    %5238 = vst [vmem:[#allocation3 + $0x64] sm:$0xf] %v5206
    %5239 = vst [vmem:[#allocation3 + $0x68] sm:$0xf] %v5207
    %5240 = vst [vmem:[#allocation3 + $0x6c] sm:$0xf] %v5208
    %5241 = vst [vmem:[#allocation3 + $0x70] sm:$0xf] %v5209
    %5242 = vst [vmem:[#allocation3 + $0x74] sm:$0xf] %v5210
    %5243 = vst [vmem:[#allocation3 + $0x78] sm:$0xf] %v5211
    %5244 = vst [vmem:[#allocation3 + $0x7c] sm:$0xf] %v5212
    %v5245 = vld [vmem:[#allocation3] sm:$0xf]
    %v5246 = vld [vmem:[#allocation3 + $0x4] sm:$0xf]
    %5247 = vst [vmem:[#allocation4] sm:$0xf] %v5245
    %5248 = vst [vmem:[#allocation4 + $0x40] sm:$0xf] %v5246
    %v5249 = vld [vmem:[#allocation3 + $0x8] sm:$0xf]
    %v5250 = vld [vmem:[#allocation3 + $0xc] sm:$0xf]
    %5251 = vst [vmem:[#allocation4 + $0x4] sm:$0xf] %v5249
    %5252 = vst [vmem:[#allocation4 + $0x44] sm:$0xf] %v5250
    %v5253 = vld [vmem:[#allocation3 + $0x10] sm:$0xf]
    %v5254 = vld [vmem:[#allocation3 + $0x14] sm:$0xf]
    %5255 = vst [vmem:[#allocation4 + $0x8] sm:$0xf] %v5253
    %5256 = vst [vmem:[#allocation4 + $0x48] sm:$0xf] %v5254
    %v5257 = vld [vmem:[#allocation3 + $0x18] sm:$0xf]
    %v5258 = vld [vmem:[#allocation3 + $0x1c] sm:$0xf]
    %5259 = vst [vmem:[#allocation4 + $0xc] sm:$0xf] %v5257
    %5260 = vst [vmem:[#allocation4 + $0x4c] sm:$0xf] %v5258
    %v5261 = vld [vmem:[#allocation3 + $0x20] sm:$0xf]
    %v5262 = vld [vmem:[#allocation3 + $0x24] sm:$0xf]
    %5263 = vst [vmem:[#allocation4 + $0x10] sm:$0xf] %v5261
    %5264 = vst [vmem:[#allocation4 + $0x50] sm:$0xf] %v5262
    %v5265 = vld [vmem:[#allocation3 + $0x28] sm:$0xf]
    %v5266 = vld [vmem:[#allocation3 + $0x2c] sm:$0xf]
    %5267 = vst [vmem:[#allocation4 + $0x14] sm:$0xf] %v5265
    %5268 = vst [vmem:[#allocation4 + $0x54] sm:$0xf] %v5266
    %v5269 = vld [vmem:[#allocation3 + $0x30] sm:$0xf]
    %v5270 = vld [vmem:[#allocation3 + $0x34] sm:$0xf]
    %5271 = vst [vmem:[#allocation4 + $0x18] sm:$0xf] %v5269
    %5272 = vst [vmem:[#allocation4 + $0x58] sm:$0xf] %v5270
    %v5273 = vld [vmem:[#allocation3 + $0x38] sm:$0xf]
    %v5274 = vld [vmem:[#allocation3 + $0x3c] sm:$0xf]
    %5275 = vst [vmem:[#allocation4 + $0x1c] sm:$0xf] %v5273
    %5276 = vst [vmem:[#allocation4 + $0x5c] sm:$0xf] %v5274
    %v5277 = vld [vmem:[#allocation3 + $0x40] sm:$0xf]
    %v5278 = vld [vmem:[#allocation3 + $0x44] sm:$0xf]
    %5279 = vst [vmem:[#allocation4 + $0x20] sm:$0xf] %v5277
    %5280 = vst [vmem:[#allocation4 + $0x60] sm:$0xf] %v5278
    %v5281 = vld [vmem:[#allocation3 + $0x48] sm:$0xf]
    %v5282 = vld [vmem:[#allocation3 + $0x4c] sm:$0xf]
    %5283 = vst [vmem:[#allocation4 + $0x24] sm:$0xf] %v5281
    %5284 = vst [vmem:[#allocation4 + $0x64] sm:$0xf] %v5282
    %v5285 = vld [vmem:[#allocation3 + $0x50] sm:$0xf]
    %v5286 = vld [vmem:[#allocation3 + $0x54] sm:$0xf]
    %5287 = vst [vmem:[#allocation4 + $0x28] sm:$0xf] %v5285
    %5288 = vst [vmem:[#allocation4 + $0x68] sm:$0xf] %v5286
    %v5289 = vld [vmem:[#allocation3 + $0x58] sm:$0xf]
    %v5290 = vld [vmem:[#allocation3 + $0x5c] sm:$0xf]
    %5291 = vst [vmem:[#allocation4 + $0x2c] sm:$0xf] %v5289
    %5292 = vst [vmem:[#allocation4 + $0x6c] sm:$0xf] %v5290
    %v5293 = vld [vmem:[#allocation3 + $0x60] sm:$0xf]
    %v5294 = vld [vmem:[#allocation3 + $0x64] sm:$0xf]
    %5295 = vst [vmem:[#allocation4 + $0x30] sm:$0xf] %v5293
    %5296 = vst [vmem:[#allocation4 + $0x70] sm:$0xf] %v5294
    %v5297 = vld [vmem:[#allocation3 + $0x68] sm:$0xf]
    %v5298 = vld [vmem:[#allocation3 + $0x6c] sm:$0xf]
    %5299 = vst [vmem:[#allocation4 + $0x34] sm:$0xf] %v5297
    %5300 = vst [vmem:[#allocation4 + $0x74] sm:$0xf] %v5298
    %v5301 = vld [vmem:[#allocation3 + $0x70] sm:$0xf]
    %v5302 = vld [vmem:[#allocation3 + $0x74] sm:$0xf]
    %5303 = vst [vmem:[#allocation4 + $0x38] sm:$0xf] %v5301
    %5304 = vst [vmem:[#allocation4 + $0x78] sm:$0xf] %v5302
    %v5305 = vld [vmem:[#allocation3 + $0x78] sm:$0xf]
    %v5306 = vld [vmem:[#allocation3 + $0x7c] sm:$0xf]
    %5307 = vst [vmem:[#allocation4 + $0x3c] sm:$0xf] %v5305
    %5308 = vst [vmem:[#allocation4 + $0x7c] sm:$0xf] %v5306
    %v5309 = vld [vmem:[#allocation4] sm:$0xff]
    %v5310 = vld [vmem:[#allocation4 + $0x8] sm:$0xff]
    %v5311 = vld [vmem:[#allocation4 + $0x10] sm:$0xff]
    %v5312 = vld [vmem:[#allocation4 + $0x18] sm:$0xff]
    %v5313 = vld [vmem:[#allocation4 + $0x20] sm:$0xff]
    %v5314 = vld [vmem:[#allocation4 + $0x28] sm:$0xff]
    %v5315 = vld [vmem:[#allocation4 + $0x30] sm:$0xff]
    %v5316 = vld [vmem:[#allocation4 + $0x38] sm:$0xff]
    %v5317 = vld [vmem:[#allocation4 + $0x40] sm:$0xff]
    %v5318 = vld [vmem:[#allocation4 + $0x48] sm:$0xff]
    %v5319 = vld [vmem:[#allocation4 + $0x50] sm:$0xff]
    %v5320 = vld [vmem:[#allocation4 + $0x58] sm:$0xff]
    %v5321 = vld [vmem:[#allocation4 + $0x60] sm:$0xff]
    %v5322 = vld [vmem:[#allocation4 + $0x68] sm:$0xff]
    %v5323 = vld [vmem:[#allocation4 + $0x70] sm:$0xff]
    %v5324 = vld [vmem:[#allocation4 + $0x78] sm:$0xff]
    %v5326 = vperm.slane %v1398, 0
    %v5344 = vunpack.c.l.b16 %v5309
    %v5345 = vunpack.c.h.b16 %v5309
    %v5346 = vunpack.c.l.b16 %v5310
    %v5347 = vunpack.c.h.b16 %v5310
    %v5348 = vunpack.c.l.b16 %v5311
    %v5349 = vunpack.c.h.b16 %v5311
    %v5350 = vunpack.c.l.b16 %v5312
    %v5351 = vunpack.c.h.b16 %v5312
    %v5352 = vunpack.c.l.b16 %v5313
    %v5353 = vunpack.c.h.b16 %v5313
    %v5354 = vunpack.c.l.b16 %v5314
    %v5355 = vunpack.c.h.b16 %v5314
    %v5356 = vunpack.c.l.b16 %v5315
    %v5357 = vunpack.c.h.b16 %v5315
    %v5358 = vunpack.c.l.b16 %v5316
    %v5359 = vunpack.c.h.b16 %v5316
    %v5360 = vunpack.c.l.b16 %v5317
    %v5361 = vunpack.c.h.b16 %v5317
    %v5362 = vunpack.c.l.b16 %v5318
    %v5363 = vunpack.c.h.b16 %v5318
    %v5364 = vunpack.c.l.b16 %v5319
    %v5365 = vunpack.c.h.b16 %v5319
    %v5366 = vunpack.c.l.b16 %v5320
    %v5367 = vunpack.c.h.b16 %v5320
    %v5368 = vunpack.c.l.b16 %v5321
    %v5369 = vunpack.c.h.b16 %v5321
    %v5370 = vunpack.c.l.b16 %v5322
    %v5371 = vunpack.c.h.b16 %v5322
    %v5372 = vunpack.c.l.b16 %v5323
    %v5373 = vunpack.c.h.b16 %v5323
    %v5374 = vunpack.c.l.b16 %v5324
    %v5375 = vunpack.c.h.b16 %v5324
    %v5376 = vpack.c.b16 %v5360, %v5344
    %v5377 = vpack.c.b16 %v5361, %v5345
    %v5378 = vpack.c.b16 %v5362, %v5346
    %v5379 = vpack.c.b16 %v5363, %v5347
    %v5380 = vpack.c.b16 %v5364, %v5348
    %v5381 = vpack.c.b16 %v5365, %v5349
    %v5382 = vpack.c.b16 %v5366, %v5350
    %v5383 = vpack.c.b16 %v5367, %v5351
    %v5384 = vpack.c.b16 %v5368, %v5352
    %v5385 = vpack.c.b16 %v5369, %v5353
    %v5386 = vpack.c.b16 %v5370, %v5354
    %v5387 = vpack.c.b16 %v5371, %v5355
    %v5388 = vpack.c.b16 %v5372, %v5356
    %v5389 = vpack.c.b16 %v5373, %v5357
    %v5390 = vpack.c.b16 %v5374, %v5358
    %v5391 = vpack.c.b16 %v5375, %v5359
    %v5664 = vunpack.c.l.b16 %v1141
    %v5665 = vunpack.c.l.b16 %v1142
    %v5666 = vunpack.c.l.b16 %v1143
    %v5667 = vunpack.c.l.b16 %v1144
    %v5668 = vunpack.c.l.b16 %v1145
    %v5669 = vunpack.c.l.b16 %v1146
    %v5670 = vunpack.c.l.b16 %v1147
    %v5671 = vunpack.c.l.b16 %v1148
    %v5672 = vunpack.c.l.b16 %v1149
    %v5673 = vunpack.c.l.b16 %v1150
    %v5674 = vunpack.c.l.b16 %v1151
    %v5675 = vunpack.c.l.b16 %v1152
    %v5676 = vunpack.c.l.b16 %v1153
    %v5677 = vunpack.c.l.b16 %v1154
    %v5678 = vunpack.c.l.b16 %v1155
    %v5679 = vunpack.c.l.b16 %v1156
    %v5680 = vunpack.c.l.b16 %v1157
    %v5681 = vunpack.c.l.b16 %v1158
    %v5682 = vunpack.c.l.b16 %v1159
    %v5683 = vunpack.c.l.b16 %v1160
    %v5684 = vunpack.c.l.b16 %v1161
    %v5685 = vunpack.c.l.b16 %v1162
    %v5686 = vunpack.c.l.b16 %v1163
    %v5687 = vunpack.c.l.b16 %v1164
    %v5688 = vunpack.c.l.b16 %v1165
    %v5689 = vunpack.c.l.b16 %v1166
    %v5690 = vunpack.c.l.b16 %v1167
    %v5691 = vunpack.c.l.b16 %v1168
    %v5692 = vunpack.c.l.b16 %v1169
    %v5693 = vunpack.c.l.b16 %v1170
    %v5694 = vunpack.c.l.b16 %v1171
    %v5695 = vunpack.c.l.b16 %v1172
    %v5696 = vunpack.c.l.b16 %v1173
    %v5697 = vunpack.c.l.b16 %v1174
    %v5698 = vunpack.c.l.b16 %v1175
    %v5699 = vunpack.c.l.b16 %v1176
    %v5700 = vunpack.c.l.b16 %v1177
    %v5701 = vunpack.c.l.b16 %v1178
    %v5702 = vunpack.c.l.b16 %v1179
    %v5703 = vunpack.c.l.b16 %v1180
    %v5704 = vunpack.c.l.b16 %v1181
    %v5705 = vunpack.c.l.b16 %v1182
    %v5706 = vunpack.c.l.b16 %v1183
    %v5707 = vunpack.c.l.b16 %v1184
    %v5708 = vunpack.c.l.b16 %v1185
    %v5709 = vunpack.c.l.b16 %v1186
    %v5710 = vunpack.c.l.b16 %v1187
    %v5711 = vunpack.c.l.b16 %v1188
    %v5712 = vunpack.c.l.b16 %v1189
    %v5713 = vunpack.c.l.b16 %v1190
    %v5714 = vunpack.c.l.b16 %v1191
    %v5715 = vunpack.c.l.b16 %v1192
    %v5716 = vunpack.c.l.b16 %v1193
    %v5717 = vunpack.c.l.b16 %v1194
    %v5718 = vunpack.c.l.b16 %v1195
    %v5719 = vunpack.c.l.b16 %v1196
    %v5720 = vunpack.c.l.b16 %v1197
    %v5721 = vunpack.c.l.b16 %v1198
    %v5722 = vunpack.c.l.b16 %v1199
    %v5723 = vunpack.c.l.b16 %v1200
    %v5724 = vunpack.c.l.b16 %v1201
    %v5725 = vunpack.c.l.b16 %v1202
    %v5726 = vunpack.c.l.b16 %v1203
    %v5727 = vunpack.c.l.b16 %v1204
    %v5728 = vunpack.c.l.b16 %v1205
    %v5729 = vunpack.c.l.b16 %v1206
    %v5730 = vunpack.c.l.b16 %v1207
    %v5731 = vunpack.c.l.b16 %v1208
    %v5732 = vunpack.c.l.b16 %v1209
    %v5733 = vunpack.c.l.b16 %v1210
    %v5734 = vunpack.c.l.b16 %v1211
    %v5735 = vunpack.c.l.b16 %v1212
    %v5736 = vunpack.c.l.b16 %v1213
    %v5737 = vunpack.c.l.b16 %v1214
    %v5738 = vunpack.c.l.b16 %v1215
    %v5739 = vunpack.c.l.b16 %v1216
    %v5740 = vunpack.c.l.b16 %v1217
    %v5741 = vunpack.c.l.b16 %v1218
    %v5742 = vunpack.c.l.b16 %v1219
    %v5743 = vunpack.c.l.b16 %v1220
    %v5744 = vunpack.c.l.b16 %v1221
    %v5745 = vunpack.c.l.b16 %v1222
    %v5746 = vunpack.c.l.b16 %v1223
    %v5747 = vunpack.c.l.b16 %v1224
    %v5748 = vunpack.c.l.b16 %v1225
    %v5749 = vunpack.c.l.b16 %v1226
    %v5750 = vunpack.c.l.b16 %v1227
    %v5751 = vunpack.c.l.b16 %v1228
    %v5752 = vunpack.c.l.b16 %v1229
    %v5753 = vunpack.c.l.b16 %v1230
    %v5754 = vunpack.c.l.b16 %v1231
    %v5755 = vunpack.c.l.b16 %v1232
    %v5756 = vunpack.c.l.b16 %v1233
    %v5757 = vunpack.c.l.b16 %v1234
    %v5758 = vunpack.c.l.b16 %v1235
    %v5759 = vunpack.c.l.b16 %v1236
    %v5760 = vunpack.c.l.b16 %v1237
    %v5761 = vunpack.c.l.b16 %v1238
    %v5762 = vunpack.c.l.b16 %v1239
    %v5763 = vunpack.c.l.b16 %v1240
    %v5764 = vunpack.c.l.b16 %v1241
    %v5765 = vunpack.c.l.b16 %v1242
    %v5766 = vunpack.c.l.b16 %v1243
    %v5767 = vunpack.c.l.b16 %v1244
    %v5768 = vunpack.c.l.b16 %v1245
    %v5769 = vunpack.c.l.b16 %v1246
    %v5770 = vunpack.c.l.b16 %v1247
    %v5771 = vunpack.c.l.b16 %v1248
    %v5772 = vunpack.c.l.b16 %v1249
    %v5773 = vunpack.c.l.b16 %v1250
    %v5774 = vunpack.c.l.b16 %v1251
    %v5775 = vunpack.c.l.b16 %v1252
    %v5776 = vunpack.c.l.b16 %v1253
    %v5777 = vunpack.c.l.b16 %v1254
    %v5778 = vunpack.c.l.b16 %v1255
    %v5779 = vunpack.c.l.b16 %v1256
    %v5780 = vunpack.c.l.b16 %v1257
    %v5781 = vunpack.c.l.b16 %v1258
    %v5782 = vunpack.c.l.b16 %v1259
    %v5783 = vunpack.c.l.b16 %v1260
    %v5784 = vunpack.c.l.b16 %v1261
    %v5785 = vunpack.c.l.b16 %v1262
    %v5786 = vunpack.c.l.b16 %v1263
    %v5787 = vunpack.c.l.b16 %v1264
    %v5788 = vunpack.c.l.b16 %v1265
    %v5789 = vunpack.c.l.b16 %v1266
    %v5790 = vunpack.c.l.b16 %v1267
    %v5791 = vunpack.c.l.b16 %v1268
    %v5792 = vunpack.c.l.b16 %v1269
    %v5793 = vunpack.c.l.b16 %v1270
    %v5794 = vunpack.c.l.b16 %v1271
    %v5795 = vunpack.c.l.b16 %v1272
    %v5796 = vunpack.c.l.b16 %v1273
    %v5797 = vunpack.c.l.b16 %v1274
    %v5798 = vunpack.c.l.b16 %v1275
    %v5799 = vunpack.c.l.b16 %v1276
    %v5800 = vunpack.c.l.b16 %v1277
    %v5801 = vunpack.c.l.b16 %v1278
    %v5802 = vunpack.c.l.b16 %v1279
    %v5803 = vunpack.c.l.b16 %v1280
    %v5804 = vunpack.c.l.b16 %v1281
    %v5805 = vunpack.c.l.b16 %v1282
    %v5806 = vunpack.c.l.b16 %v1283
    %v5807 = vunpack.c.l.b16 %v1284
    %v5808 = vunpack.c.l.b16 %v1285
    %v5809 = vunpack.c.l.b16 %v1286
    %v5810 = vunpack.c.l.b16 %v1287
    %v5811 = vunpack.c.l.b16 %v1288
    %v5812 = vunpack.c.l.b16 %v1289
    %v5813 = vunpack.c.l.b16 %v1290
    %v5814 = vunpack.c.l.b16 %v1291
    %v5815 = vunpack.c.l.b16 %v1292
    %v5816 = vunpack.c.l.b16 %v1293
    %v5817 = vunpack.c.l.b16 %v1294
    %v5818 = vunpack.c.l.b16 %v1295
    %v5819 = vunpack.c.l.b16 %v1296
    %v5820 = vunpack.c.l.b16 %v1297
    %v5821 = vunpack.c.l.b16 %v1298
    %v5822 = vunpack.c.l.b16 %v1299
    %v5823 = vunpack.c.l.b16 %v1300
    %v5824 = vunpack.c.l.b16 %v1301
    %v5825 = vunpack.c.l.b16 %v1302
    %v5826 = vunpack.c.l.b16 %v1303
    %v5827 = vunpack.c.l.b16 %v1304
    %v5828 = vunpack.c.l.b16 %v1305
    %v5829 = vunpack.c.l.b16 %v1306
    %v5830 = vunpack.c.l.b16 %v1307
    %v5831 = vunpack.c.l.b16 %v1308
    %v5832 = vunpack.c.l.b16 %v1309
    %v5833 = vunpack.c.l.b16 %v1310
    %v5834 = vunpack.c.l.b16 %v1311
    %v5835 = vunpack.c.l.b16 %v1312
    %v5836 = vunpack.c.l.b16 %v1313
    %v5837 = vunpack.c.l.b16 %v1314
    %v5838 = vunpack.c.l.b16 %v1315
    %v5839 = vunpack.c.l.b16 %v1316
    %v5840 = vunpack.c.l.b16 %v1317
    %v5841 = vunpack.c.l.b16 %v1318
    %v5842 = vunpack.c.l.b16 %v1319
    %v5843 = vunpack.c.l.b16 %v1320
    %v5844 = vunpack.c.l.b16 %v1321
    %v5845 = vunpack.c.l.b16 %v1322
    %v5846 = vunpack.c.l.b16 %v1323
    %v5847 = vunpack.c.l.b16 %v1324
    %v5848 = vunpack.c.l.b16 %v1325
    %v5849 = vunpack.c.l.b16 %v1326
    %v5850 = vunpack.c.l.b16 %v1327
    %v5851 = vunpack.c.l.b16 %v1328
    %v5852 = vunpack.c.l.b16 %v1329
    %v5853 = vunpack.c.l.b16 %v1330
    %v5854 = vunpack.c.l.b16 %v1331
    %v5855 = vunpack.c.l.b16 %v1332
    %v5856 = vunpack.c.l.b16 %v1333
    %v5857 = vunpack.c.l.b16 %v1334
    %v5858 = vunpack.c.l.b16 %v1335
    %v5859 = vunpack.c.l.b16 %v1336
    %v5860 = vunpack.c.l.b16 %v1337
    %v5861 = vunpack.c.l.b16 %v1338
    %v5862 = vunpack.c.l.b16 %v1339
    %v5863 = vunpack.c.l.b16 %v1340
    %v5864 = vunpack.c.l.b16 %v1341
    %v5865 = vunpack.c.l.b16 %v1342
    %v5866 = vunpack.c.l.b16 %v1343
    %v5867 = vunpack.c.l.b16 %v1344
    %v5868 = vunpack.c.l.b16 %v1345
    %v5869 = vunpack.c.l.b16 %v1346
    %v5870 = vunpack.c.l.b16 %v1347
    %v5871 = vunpack.c.l.b16 %v1348
    %v5872 = vunpack.c.l.b16 %v1349
    %v5873 = vunpack.c.l.b16 %v1350
    %v5874 = vunpack.c.l.b16 %v1351
    %v5875 = vunpack.c.l.b16 %v1352
    %v5876 = vunpack.c.l.b16 %v1353
    %v5877 = vunpack.c.l.b16 %v1354
    %v5878 = vunpack.c.l.b16 %v1355
    %v5879 = vunpack.c.l.b16 %v1356
    %v5880 = vunpack.c.l.b16 %v1357
    %v5881 = vunpack.c.l.b16 %v1358
    %v5882 = vunpack.c.l.b16 %v1359
    %v5883 = vunpack.c.l.b16 %v1360
    %v5884 = vunpack.c.l.b16 %v1361
    %v5885 = vunpack.c.l.b16 %v1362
    %v5886 = vunpack.c.l.b16 %v1363
    %v5887 = vunpack.c.l.b16 %v1364
    %v5888 = vunpack.c.l.b16 %v1365
    %v5889 = vunpack.c.l.b16 %v1366
    %v5890 = vunpack.c.l.b16 %v1367
    %v5891 = vunpack.c.l.b16 %v1368
    %v5892 = vunpack.c.l.b16 %v1369
    %v5893 = vunpack.c.l.b16 %v1370
    %v5894 = vunpack.c.l.b16 %v1371
    %v5895 = vunpack.c.l.b16 %v1372
    %v5896 = vunpack.c.l.b16 %v1373
    %v5897 = vunpack.c.l.b16 %v1374
    %v5898 = vunpack.c.l.b16 %v1375
    %v5899 = vunpack.c.l.b16 %v1376
    %v5900 = vunpack.c.l.b16 %v1377
    %v5901 = vunpack.c.l.b16 %v1378
    %v5902 = vunpack.c.l.b16 %v1379
    %v5903 = vunpack.c.l.b16 %v1380
    %v5904 = vunpack.c.l.b16 %v1381
    %v5905 = vunpack.c.l.b16 %v1382
    %v5906 = vunpack.c.l.b16 %v1383
    %v5907 = vunpack.c.l.b16 %v1384
    %v5908 = vunpack.c.l.b16 %v1385
    %v5909 = vunpack.c.l.b16 %v1386
    %v5910 = vunpack.c.l.b16 %v1387
    %v5911 = vunpack.c.l.b16 %v1388
    %v5912 = vunpack.c.l.b16 %v1389
    %v5913 = vunpack.c.l.b16 %v1390
    %v5914 = vunpack.c.l.b16 %v1391
    %v5915 = vunpack.c.l.b16 %v1392
    %v5916 = vunpack.c.l.b16 %v1393
    %v5917 = vunpack.c.l.b16 %v1394
    %v5918 = vunpack.c.l.b16 %v1395
    %v5919 = vunpack.c.l.b16 %v1396
    %v5920 = vpack.c.b16 %v5665, %v5664
    %v5921 = vpack.c.b16 %v5667, %v5666
    %v5922 = vpack.c.b16 %v5669, %v5668
    %v5923 = vpack.c.b16 %v5671, %v5670
    %v5924 = vpack.c.b16 %v5673, %v5672
    %v5925 = vpack.c.b16 %v5675, %v5674
    %v5926 = vpack.c.b16 %v5677, %v5676
    %v5927 = vpack.c.b16 %v5679, %v5678
    %v5928 = vpack.c.b16 %v5681, %v5680
    %v5929 = vpack.c.b16 %v5683, %v5682
    %v5930 = vpack.c.b16 %v5685, %v5684
    %v5931 = vpack.c.b16 %v5687, %v5686
    %v5932 = vpack.c.b16 %v5689, %v5688
    %v5933 = vpack.c.b16 %v5691, %v5690
    %v5934 = vpack.c.b16 %v5693, %v5692
    %v5935 = vpack.c.b16 %v5695, %v5694
    %v5936 = vpack.c.b16 %v5697, %v5696
    %v5937 = vpack.c.b16 %v5699, %v5698
    %v5938 = vpack.c.b16 %v5701, %v5700
    %v5939 = vpack.c.b16 %v5703, %v5702
    %v5940 = vpack.c.b16 %v5705, %v5704
    %v5941 = vpack.c.b16 %v5707, %v5706
    %v5942 = vpack.c.b16 %v5709, %v5708
    %v5943 = vpack.c.b16 %v5711, %v5710
    %v5944 = vpack.c.b16 %v5713, %v5712
    %v5945 = vpack.c.b16 %v5715, %v5714
    %v5946 = vpack.c.b16 %v5717, %v5716
    %v5947 = vpack.c.b16 %v5719, %v5718
    %v5948 = vpack.c.b16 %v5721, %v5720
    %v5949 = vpack.c.b16 %v5723, %v5722
    %v5950 = vpack.c.b16 %v5725, %v5724
    %v5951 = vpack.c.b16 %v5727, %v5726
    %v5952 = vpack.c.b16 %v5729, %v5728
    %v5953 = vpack.c.b16 %v5731, %v5730
    %v5954 = vpack.c.b16 %v5733, %v5732
    %v5955 = vpack.c.b16 %v5735, %v5734
    %v5956 = vpack.c.b16 %v5737, %v5736
    %v5957 = vpack.c.b16 %v5739, %v5738
    %v5958 = vpack.c.b16 %v5741, %v5740
    %v5959 = vpack.c.b16 %v5743, %v5742
    %v5960 = vpack.c.b16 %v5745, %v5744
    %v5961 = vpack.c.b16 %v5747, %v5746
    %v5962 = vpack.c.b16 %v5749, %v5748
    %v5963 = vpack.c.b16 %v5751, %v5750
    %v5964 = vpack.c.b16 %v5753, %v5752
    %v5965 = vpack.c.b16 %v5755, %v5754
    %v5966 = vpack.c.b16 %v5757, %v5756
    %v5967 = vpack.c.b16 %v5759, %v5758
    %v5968 = vpack.c.b16 %v5761, %v5760
    %v5969 = vpack.c.b16 %v5763, %v5762
    %v5970 = vpack.c.b16 %v5765, %v5764
    %v5971 = vpack.c.b16 %v5767, %v5766
    %v5972 = vpack.c.b16 %v5769, %v5768
    %v5973 = vpack.c.b16 %v5771, %v5770
    %v5974 = vpack.c.b16 %v5773, %v5772
    %v5975 = vpack.c.b16 %v5775, %v5774
    %v5976 = vpack.c.b16 %v5777, %v5776
    %v5977 = vpack.c.b16 %v5779, %v5778
    %v5978 = vpack.c.b16 %v5781, %v5780
    %v5979 = vpack.c.b16 %v5783, %v5782
    %v5980 = vpack.c.b16 %v5785, %v5784
    %v5981 = vpack.c.b16 %v5787, %v5786
    %v5982 = vpack.c.b16 %v5789, %v5788
    %v5983 = vpack.c.b16 %v5791, %v5790
    %v5984 = vpack.c.b16 %v5793, %v5792
    %v5985 = vpack.c.b16 %v5795, %v5794
    %v5986 = vpack.c.b16 %v5797, %v5796
    %v5987 = vpack.c.b16 %v5799, %v5798
    %v5988 = vpack.c.b16 %v5801, %v5800
    %v5989 = vpack.c.b16 %v5803, %v5802
    %v5990 = vpack.c.b16 %v5805, %v5804
    %v5991 = vpack.c.b16 %v5807, %v5806
    %v5992 = vpack.c.b16 %v5809, %v5808
    %v5993 = vpack.c.b16 %v5811, %v5810
    %v5994 = vpack.c.b16 %v5813, %v5812
    %v5995 = vpack.c.b16 %v5815, %v5814
    %v5996 = vpack.c.b16 %v5817, %v5816
    %v5997 = vpack.c.b16 %v5819, %v5818
    %v5998 = vpack.c.b16 %v5821, %v5820
    %v5999 = vpack.c.b16 %v5823, %v5822
    %v6000 = vpack.c.b16 %v5825, %v5824
    %v6001 = vpack.c.b16 %v5827, %v5826
    %v6002 = vpack.c.b16 %v5829, %v5828
    %v6003 = vpack.c.b16 %v5831, %v5830
    %v6004 = vpack.c.b16 %v5833, %v5832
    %v6005 = vpack.c.b16 %v5835, %v5834
    %v6006 = vpack.c.b16 %v5837, %v5836
    %v6007 = vpack.c.b16 %v5839, %v5838
    %v6008 = vpack.c.b16 %v5841, %v5840
    %v6009 = vpack.c.b16 %v5843, %v5842
    %v6010 = vpack.c.b16 %v5845, %v5844
    %v6011 = vpack.c.b16 %v5847, %v5846
    %v6012 = vpack.c.b16 %v5849, %v5848
    %v6013 = vpack.c.b16 %v5851, %v5850
    %v6014 = vpack.c.b16 %v5853, %v5852
    %v6015 = vpack.c.b16 %v5855, %v5854
    %v6016 = vpack.c.b16 %v5857, %v5856
    %v6017 = vpack.c.b16 %v5859, %v5858
    %v6018 = vpack.c.b16 %v5861, %v5860
    %v6019 = vpack.c.b16 %v5863, %v5862
    %v6020 = vpack.c.b16 %v5865, %v5864
    %v6021 = vpack.c.b16 %v5867, %v5866
    %v6022 = vpack.c.b16 %v5869, %v5868
    %v6023 = vpack.c.b16 %v5871, %v5870
    %v6024 = vpack.c.b16 %v5873, %v5872
    %v6025 = vpack.c.b16 %v5875, %v5874
    %v6026 = vpack.c.b16 %v5877, %v5876
    %v6027 = vpack.c.b16 %v5879, %v5878
    %v6028 = vpack.c.b16 %v5881, %v5880
    %v6029 = vpack.c.b16 %v5883, %v5882
    %v6030 = vpack.c.b16 %v5885, %v5884
    %v6031 = vpack.c.b16 %v5887, %v5886
    %v6032 = vpack.c.b16 %v5889, %v5888
    %v6033 = vpack.c.b16 %v5891, %v5890
    %v6034 = vpack.c.b16 %v5893, %v5892
    %v6035 = vpack.c.b16 %v5895, %v5894
    %v6036 = vpack.c.b16 %v5897, %v5896
    %v6037 = vpack.c.b16 %v5899, %v5898
    %v6038 = vpack.c.b16 %v5901, %v5900
    %v6039 = vpack.c.b16 %v5903, %v5902
    %v6040 = vpack.c.b16 %v5905, %v5904
    %v6041 = vpack.c.b16 %v5907, %v5906
    %v6042 = vpack.c.b16 %v5909, %v5908
    %v6043 = vpack.c.b16 %v5911, %v5910
    %v6044 = vpack.c.b16 %v5913, %v5912
    %v6045 = vpack.c.b16 %v5915, %v5914
    %v6046 = vpack.c.b16 %v5917, %v5916
    %v6047 = vpack.c.b16 %v5919, %v5918
    %6176 = vmatpush.bf16.msra.mxu0 %v5927
    %6177 = vmatpush.bf16.msra.mxu0 %v5926
    %6178 = vmatpush.bf16.msra.mxu0 %v5925
    %6179 = vmatpush.bf16.msra.mxu0 %v5924
    %6180 = vmatpush.bf16.msra.mxu0 %v5923
    %6181 = vmatpush.bf16.msra.mxu0 %v5922
    %6182 = vmatpush.bf16.msra.mxu0 %v5921
    %6183 = vmatpush.bf16.msra.mxu0 %v5920
    %6184 = vmatmul.bf16.gmra.mxu0 %v5376
    %v6185 = vpop.f32.mrf.mxu0
    %v6186 = vadd.f32 %v5326, %v6185
    %v6187 = vpop.f32.mrf.mxu0
    %v6188 = vadd.f32 %v5326, %v6187
    %6189 = vdwg.mxu0
    %6190 = vmatpush.bf16.msra.mxu0 %v5935
    %6191 = vmatpush.bf16.msra.mxu0 %v5934
    %6192 = vmatpush.bf16.msra.mxu0 %v5933
    %6193 = vmatpush.bf16.msra.mxu0 %v5932
    %6194 = vmatpush.bf16.msra.mxu0 %v5931
    %6195 = vmatpush.bf16.msra.mxu0 %v5930
    %6196 = vmatpush.bf16.msra.mxu0 %v5929
    %6197 = vmatpush.bf16.msra.mxu0 %v5928
    %6198 = vmatmul.bf16.gmra.mxu0 %v5377
    %v6199 = vpop.f32.mrf.mxu0
    %v6200 = vadd.f32 %v6186, %v6199
    %v6201 = vpop.f32.mrf.mxu0
    %v6202 = vadd.f32 %v6188, %v6201
    %6203 = vdwg.mxu0
    %6204 = vmatpush.bf16.msra.mxu0 %v5943
    %6205 = vmatpush.bf16.msra.mxu0 %v5942
    %6206 = vmatpush.bf16.msra.mxu0 %v5941
    %6207 = vmatpush.bf16.msra.mxu0 %v5940
    %6208 = vmatpush.bf16.msra.mxu0 %v5939
    %6209 = vmatpush.bf16.msra.mxu0 %v5938
    %6210 = vmatpush.bf16.msra.mxu0 %v5937
    %6211 = vmatpush.bf16.msra.mxu0 %v5936
    %6212 = vmatmul.bf16.gmra.mxu0 %v5378
    %v6213 = vpop.f32.mrf.mxu0
    %v6214 = vadd.f32 %v6200, %v6213
    %v6215 = vpop.f32.mrf.mxu0
    %v6216 = vadd.f32 %v6202, %v6215
    %6217 = vdwg.mxu0
    %6218 = vmatpush.bf16.msra.mxu0 %v5951
    %6219 = vmatpush.bf16.msra.mxu0 %v5950
    %6220 = vmatpush.bf16.msra.mxu0 %v5949
    %6221 = vmatpush.bf16.msra.mxu0 %v5948
    %6222 = vmatpush.bf16.msra.mxu0 %v5947
    %6223 = vmatpush.bf16.msra.mxu0 %v5946
    %6224 = vmatpush.bf16.msra.mxu0 %v5945
    %6225 = vmatpush.bf16.msra.mxu0 %v5944
    %6226 = vmatmul.bf16.gmra.mxu0 %v5379
    %v6227 = vpop.f32.mrf.mxu0
    %v6228 = vadd.f32 %v6214, %v6227
    %v6229 = vpop.f32.mrf.mxu0
    %v6230 = vadd.f32 %v6216, %v6229
    %6231 = vdwg.mxu0
    %6232 = vmatpush.bf16.msra.mxu0 %v5959
    %6233 = vmatpush.bf16.msra.mxu0 %v5958
    %6234 = vmatpush.bf16.msra.mxu0 %v5957
    %6235 = vmatpush.bf16.msra.mxu0 %v5956
    %6236 = vmatpush.bf16.msra.mxu0 %v5955
    %6237 = vmatpush.bf16.msra.mxu0 %v5954
    %6238 = vmatpush.bf16.msra.mxu0 %v5953
    %6239 = vmatpush.bf16.msra.mxu0 %v5952
    %6240 = vmatmul.bf16.gmra.mxu0 %v5380
    %v6241 = vpop.f32.mrf.mxu0
    %v6242 = vadd.f32 %v6228, %v6241
    %v6243 = vpop.f32.mrf.mxu0
    %v6244 = vadd.f32 %v6230, %v6243
    %6245 = vdwg.mxu0
    %6246 = vmatpush.bf16.msra.mxu0 %v5967
    %6247 = vmatpush.bf16.msra.mxu0 %v5966
    %6248 = vmatpush.bf16.msra.mxu0 %v5965
    %6249 = vmatpush.bf16.msra.mxu0 %v5964
    %6250 = vmatpush.bf16.msra.mxu0 %v5963
    %6251 = vmatpush.bf16.msra.mxu0 %v5962
    %6252 = vmatpush.bf16.msra.mxu0 %v5961
    %6253 = vmatpush.bf16.msra.mxu0 %v5960
    %6254 = vmatmul.bf16.gmra.mxu0 %v5381
    %v6255 = vpop.f32.mrf.mxu0
    %v6256 = vadd.f32 %v6242, %v6255
    %v6257 = vpop.f32.mrf.mxu0
    %v6258 = vadd.f32 %v6244, %v6257
    %6259 = vdwg.mxu0
    %6260 = vmatpush.bf16.msra.mxu0 %v5975
    %6261 = vmatpush.bf16.msra.mxu0 %v5974
    %6262 = vmatpush.bf16.msra.mxu0 %v5973
    %6263 = vmatpush.bf16.msra.mxu0 %v5972
    %6264 = vmatpush.bf16.msra.mxu0 %v5971
    %6265 = vmatpush.bf16.msra.mxu0 %v5970
    %6266 = vmatpush.bf16.msra.mxu0 %v5969
    %6267 = vmatpush.bf16.msra.mxu0 %v5968
    %6268 = vmatmul.bf16.gmra.mxu0 %v5382
    %v6269 = vpop.f32.mrf.mxu0
    %v6270 = vadd.f32 %v6256, %v6269
    %v6271 = vpop.f32.mrf.mxu0
    %v6272 = vadd.f32 %v6258, %v6271
    %6273 = vdwg.mxu0
    %6274 = vmatpush.bf16.msra.mxu0 %v5983
    %6275 = vmatpush.bf16.msra.mxu0 %v5982
    %6276 = vmatpush.bf16.msra.mxu0 %v5981
    %6277 = vmatpush.bf16.msra.mxu0 %v5980
    %6278 = vmatpush.bf16.msra.mxu0 %v5979
    %6279 = vmatpush.bf16.msra.mxu0 %v5978
    %6280 = vmatpush.bf16.msra.mxu0 %v5977
    %6281 = vmatpush.bf16.msra.mxu0 %v5976
    %6282 = vmatmul.bf16.gmra.mxu0 %v5383
    %v6283 = vpop.f32.mrf.mxu0
    %v6284 = vadd.f32 %v6270, %v6283
    %v6285 = vpop.f32.mrf.mxu0
    %v6286 = vadd.f32 %v6272, %v6285
    %6287 = vdwg.mxu0
    %6288 = vmatpush.bf16.msra.mxu0 %v5991
    %6289 = vmatpush.bf16.msra.mxu0 %v5990
    %6290 = vmatpush.bf16.msra.mxu0 %v5989
    %6291 = vmatpush.bf16.msra.mxu0 %v5988
    %6292 = vmatpush.bf16.msra.mxu0 %v5987
    %6293 = vmatpush.bf16.msra.mxu0 %v5986
    %6294 = vmatpush.bf16.msra.mxu0 %v5985
    %6295 = vmatpush.bf16.msra.mxu0 %v5984
    %6296 = vmatmul.bf16.gmra.mxu0 %v5384
    %v6297 = vpop.f32.mrf.mxu0
    %v6298 = vadd.f32 %v6284, %v6297
    %v6299 = vpop.f32.mrf.mxu0
    %v6300 = vadd.f32 %v6286, %v6299
    %6301 = vdwg.mxu0
    %6302 = vmatpush.bf16.msra.mxu0 %v5999
    %6303 = vmatpush.bf16.msra.mxu0 %v5998
    %6304 = vmatpush.bf16.msra.mxu0 %v5997
    %6305 = vmatpush.bf16.msra.mxu0 %v5996
    %6306 = vmatpush.bf16.msra.mxu0 %v5995
    %6307 = vmatpush.bf16.msra.mxu0 %v5994
    %6308 = vmatpush.bf16.msra.mxu0 %v5993
    %6309 = vmatpush.bf16.msra.mxu0 %v5992
    %6310 = vmatmul.bf16.gmra.mxu0 %v5385
    %v6311 = vpop.f32.mrf.mxu0
    %v6312 = vadd.f32 %v6298, %v6311
    %v6313 = vpop.f32.mrf.mxu0
    %v6314 = vadd.f32 %v6300, %v6313
    %6315 = vdwg.mxu0
    %6316 = vmatpush.bf16.msra.mxu0 %v6007
    %6317 = vmatpush.bf16.msra.mxu0 %v6006
    %6318 = vmatpush.bf16.msra.mxu0 %v6005
    %6319 = vmatpush.bf16.msra.mxu0 %v6004
    %6320 = vmatpush.bf16.msra.mxu0 %v6003
    %6321 = vmatpush.bf16.msra.mxu0 %v6002
    %6322 = vmatpush.bf16.msra.mxu0 %v6001
    %6323 = vmatpush.bf16.msra.mxu0 %v6000
    %6324 = vmatmul.bf16.gmra.mxu0 %v5386
    %v6325 = vpop.f32.mrf.mxu0
    %v6326 = vadd.f32 %v6312, %v6325
    %v6327 = vpop.f32.mrf.mxu0
    %v6328 = vadd.f32 %v6314, %v6327
    %6329 = vdwg.mxu0
    %6330 = vmatpush.bf16.msra.mxu0 %v6015
    %6331 = vmatpush.bf16.msra.mxu0 %v6014
    %6332 = vmatpush.bf16.msra.mxu0 %v6013
    %6333 = vmatpush.bf16.msra.mxu0 %v6012
    %6334 = vmatpush.bf16.msra.mxu0 %v6011
    %6335 = vmatpush.bf16.msra.mxu0 %v6010
    %6336 = vmatpush.bf16.msra.mxu0 %v6009
    %6337 = vmatpush.bf16.msra.mxu0 %v6008
    %6338 = vmatmul.bf16.gmra.mxu0 %v5387
    %v6339 = vpop.f32.mrf.mxu0
    %v6340 = vadd.f32 %v6326, %v6339
    %v6341 = vpop.f32.mrf.mxu0
    %v6342 = vadd.f32 %v6328, %v6341
    %6343 = vdwg.mxu0
    %6344 = vmatpush.bf16.msra.mxu0 %v6023
    %6345 = vmatpush.bf16.msra.mxu0 %v6022
    %6346 = vmatpush.bf16.msra.mxu0 %v6021
    %6347 = vmatpush.bf16.msra.mxu0 %v6020
    %6348 = vmatpush.bf16.msra.mxu0 %v6019
    %6349 = vmatpush.bf16.msra.mxu0 %v6018
    %6350 = vmatpush.bf16.msra.mxu0 %v6017
    %6351 = vmatpush.bf16.msra.mxu0 %v6016
    %6352 = vmatmul.bf16.gmra.mxu0 %v5388
    %v6353 = vpop.f32.mrf.mxu0
    %v6354 = vadd.f32 %v6340, %v6353
    %v6355 = vpop.f32.mrf.mxu0
    %v6356 = vadd.f32 %v6342, %v6355
    %6357 = vdwg.mxu0
    %6358 = vmatpush.bf16.msra.mxu0 %v6031
    %6359 = vmatpush.bf16.msra.mxu0 %v6030
    %6360 = vmatpush.bf16.msra.mxu0 %v6029
    %6361 = vmatpush.bf16.msra.mxu0 %v6028
    %6362 = vmatpush.bf16.msra.mxu0 %v6027
    %6363 = vmatpush.bf16.msra.mxu0 %v6026
    %6364 = vmatpush.bf16.msra.mxu0 %v6025
    %6365 = vmatpush.bf16.msra.mxu0 %v6024
    %6366 = vmatmul.bf16.gmra.mxu0 %v5389
    %v6367 = vpop.f32.mrf.mxu0
    %v6368 = vadd.f32 %v6354, %v6367
    %v6369 = vpop.f32.mrf.mxu0
    %v6370 = vadd.f32 %v6356, %v6369
    %6371 = vdwg.mxu0
    %6372 = vmatpush.bf16.msra.mxu0 %v6039
    %6373 = vmatpush.bf16.msra.mxu0 %v6038
    %6374 = vmatpush.bf16.msra.mxu0 %v6037
    %6375 = vmatpush.bf16.msra.mxu0 %v6036
    %6376 = vmatpush.bf16.msra.mxu0 %v6035
    %6377 = vmatpush.bf16.msra.mxu0 %v6034
    %6378 = vmatpush.bf16.msra.mxu0 %v6033
    %6379 = vmatpush.bf16.msra.mxu0 %v6032
    %6380 = vmatmul.bf16.gmra.mxu0 %v5390
    %v6381 = vpop.f32.mrf.mxu0
    %v6382 = vadd.f32 %v6368, %v6381
    %v6383 = vpop.f32.mrf.mxu0
    %v6384 = vadd.f32 %v6370, %v6383
    %6385 = vdwg.mxu0
    %6386 = vmatpush.bf16.msra.mxu0 %v6047
    %6387 = vmatpush.bf16.msra.mxu0 %v6046
    %6388 = vmatpush.bf16.msra.mxu0 %v6045
    %6389 = vmatpush.bf16.msra.mxu0 %v6044
    %6390 = vmatpush.bf16.msra.mxu0 %v6043
    %6391 = vmatpush.bf16.msra.mxu0 %v6042
    %6392 = vmatpush.bf16.msra.mxu0 %v6041
    %6393 = vmatpush.bf16.msra.mxu0 %v6040
    %6394 = vmatmul.bf16.gmra.mxu0 %v5391
    %v6395 = vpop.f32.mrf.mxu0
    %v6396 = vadd.f32 %v6382, %v6395
    %v6397 = vpop.f32.mrf.mxu0
    %v6398 = vadd.f32 %v6384, %v6397
    %6399 = vdwg.mxu0
    %v6400 = vmax.f32 %v6396, 0.0
    %v6401 = vmax.f32 %v6398, 0.0
    %v6402 = vpack.c.bf16 %v6400, %v6400
    %v6403 = vpack.c.bf16 %v6401, %v6401
    %vm6404 = vcmask 1040384
    %vm6405 = vsmask.f32 256
    %vm6406 = vmand %vm6404, %vm6405
    %v6407 = vld [vmem:[#allocation5] sm:$0x1]
    %v6408 = vsel %vm6406, %v6402, %v6407
    %6409 = vst [vmem:[#allocation5] sm:$0x1] %v6408
    %v6411 = vrot.slane %v6402, 3
    %vm6412 = vcmask 1040384
    %v6415 = vsel %vm6412, %v6402, %v6411
    %v6416 = vshrl.u32 %v6415, 16
    %v6418 = vrot.slane %v6416, 7
    %v6419 = vrot.slane %v6418, 1
    %v6421 = vld [vmem:[#allocation5 + $0x1] sm:$0x1]
    %v6422 = vsel %vm6406, %v6419, %v6421
    %6423 = vst [vmem:[#allocation5 + $0x1] sm:$0x1] %v6422
    %6424 = vst [vmem:[#allocation1] sm:$0xff] %v6402
    %s6425 = scalar_lea.vmem [#allocation1], 1
    %v6426 = vld [vmem:[%s6425] ss:$4 sm:$0xff]
    %v6428 = vld [vmem:[#allocation5 + $0x2] sm:$0x1]
    %v6429 = vsel %vm6406, %v6426, %v6428
    %6430 = vst [vmem:[#allocation5 + $0x2] sm:$0x1] %v6429
    %6431 = vst [vmem:[#allocation1] sm:$0xff] %v6402
    %s6432 = scalar_lea.vmem [#allocation1], 1
    %v6433 = vld [vmem:[%s6432] ss:$4 sm:$0xff]
    %v6434 = vshrl.u32 %v6433, 16
    %v6436 = vrot.slane %v6434, 7
    %v6437 = vrot.slane %v6436, 1
    %v6439 = vld [vmem:[#allocation5 + $0x3] sm:$0x1]
    %v6440 = vsel %vm6406, %v6437, %v6439
    %6441 = vst [vmem:[#allocation5 + $0x3] sm:$0x1] %v6440
    %6442 = vst [vmem:[#allocation1] sm:$0xff] %v6402
    %s6443 = scalar_lea.vmem [#allocation1], 2
    %v6444 = vld [vmem:[%s6443] ss:$4 sm:$0xff]
    %v6446 = vld [vmem:[#allocation5 + $0x4] sm:$0x1]
    %v6447 = vsel %vm6406, %v6444, %v6446
    %6448 = vst [vmem:[#allocation5 + $0x4] sm:$0x1] %v6447
    %6449 = vst [vmem:[#allocation1] sm:$0xff] %v6402
    %s6450 = scalar_lea.vmem [#allocation1], 2
    %v6451 = vld [vmem:[%s6450] ss:$4 sm:$0xff]
    %v6452 = vshrl.u32 %v6451, 16
    %v6454 = vrot.slane %v6452, 7
    %v6455 = vrot.slane %v6454, 1
    %v6457 = vld [vmem:[#allocation5 + $0x5] sm:$0x1]
    %v6458 = vsel %vm6406, %v6455, %v6457
    %6459 = vst [vmem:[#allocation5 + $0x5] sm:$0x1] %v6458
    %6460 = vst [vmem:[#allocation1] sm:$0xff] %v6402
    %s6461 = scalar_lea.vmem [#allocation1], 3
    %v6462 = vld [vmem:[%s6461] ss:$4 sm:$0xff]
    %v6464 = vld [vmem:[#allocation5 + $0x6] sm:$0x1]
    %v6465 = vsel %vm6406, %v6462, %v6464
    %6466 = vst [vmem:[#allocation5 + $0x6] sm:$0x1] %v6465
    %6467 = vst [vmem:[#allocation1] sm:$0xff] %v6402
    %s6468 = scalar_lea.vmem [#allocation1], 3
    %v6469 = vld [vmem:[%s6468] ss:$4 sm:$0xff]
    %v6470 = vshrl.u32 %v6469, 16
    %v6472 = vrot.slane %v6470, 7
    %v6473 = vrot.slane %v6472, 1
    %v6475 = vld [vmem:[#allocation5 + $0x7] sm:$0x1]
    %v6476 = vsel %vm6406, %v6473, %v6475
    %6477 = vst [vmem:[#allocation5 + $0x7] sm:$0x1] %v6476
    %v6478 = vld [vmem:[#allocation5 + $0x8] sm:$0x1]
    %v6479 = vsel %vm6406, %v6403, %v6478
    %6480 = vst [vmem:[#allocation5 + $0x8] sm:$0x1] %v6479
    %v6482 = vrot.slane %v6403, 3
    %v6485 = vsel %vm6412, %v6403, %v6482
    %v6486 = vshrl.u32 %v6485, 16
    %v6488 = vrot.slane %v6486, 7
    %v6489 = vrot.slane %v6488, 1
    %v6491 = vld [vmem:[#allocation5 + $0x9] sm:$0x1]
    %v6492 = vsel %vm6406, %v6489, %v6491
    %6493 = vst [vmem:[#allocation5 + $0x9] sm:$0x1] %v6492
    %6494 = vst [vmem:[#allocation1] sm:$0xff] %v6403
    %s6495 = scalar_lea.vmem [#allocation1], 1
    %v6496 = vld [vmem:[%s6495] ss:$4 sm:$0xff]
    %v6498 = vld [vmem:[#allocation5 + $0xa] sm:$0x1]
    %v6499 = vsel %vm6406, %v6496, %v6498
    %6500 = vst [vmem:[#allocation5 + $0xa] sm:$0x1] %v6499
    %6501 = vst [vmem:[#allocation1] sm:$0xff] %v6403
    %s6502 = scalar_lea.vmem [#allocation1], 1
    %v6503 = vld [vmem:[%s6502] ss:$4 sm:$0xff]
    %v6504 = vshrl.u32 %v6503, 16
    %v6506 = vrot.slane %v6504, 7
    %v6507 = vrot.slane %v6506, 1
    %v6509 = vld [vmem:[#allocation5 + $0xb] sm:$0x1]
    %v6510 = vsel %vm6406, %v6507, %v6509
    %6511 = vst [vmem:[#allocation5 + $0xb] sm:$0x1] %v6510
    %6512 = vst [vmem:[#allocation1] sm:$0xff] %v6403
    %s6513 = scalar_lea.vmem [#allocation1], 2
    %v6514 = vld [vmem:[%s6513] ss:$4 sm:$0xff]
    %v6516 = vld [vmem:[#allocation5 + $0xc] sm:$0x1]
    %v6517 = vsel %vm6406, %v6514, %v6516
    %6518 = vst [vmem:[#allocation5 + $0xc] sm:$0x1] %v6517
    %6519 = vst [vmem:[#allocation1] sm:$0xff] %v6403
    %s6520 = scalar_lea.vmem [#allocation1], 2
    %v6521 = vld [vmem:[%s6520] ss:$4 sm:$0xff]
    %v6522 = vshrl.u32 %v6521, 16
    %v6524 = vrot.slane %v6522, 7
    %v6525 = vrot.slane %v6524, 1
    %v6527 = vld [vmem:[#allocation5 + $0xd] sm:$0x1]
    %v6528 = vsel %vm6406, %v6525, %v6527
    %6529 = vst [vmem:[#allocation5 + $0xd] sm:$0x1] %v6528
    %6530 = vst [vmem:[#allocation1] sm:$0xff] %v6403
    %s6531 = scalar_lea.vmem [#allocation1], 3
    %v6532 = vld [vmem:[%s6531] ss:$4 sm:$0xff]
    %v6534 = vld [vmem:[#allocation5 + $0xe] sm:$0x1]
    %v6535 = vsel %vm6406, %v6532, %v6534
    %6536 = vst [vmem:[#allocation5 + $0xe] sm:$0x1] %v6535
    %6537 = vst [vmem:[#allocation1] sm:$0xff] %v6403
    %s6538 = scalar_lea.vmem [#allocation1], 3
    %v6539 = vld [vmem:[%s6538] ss:$4 sm:$0xff]
    %v6540 = vshrl.u32 %v6539, 16
    %v6542 = vrot.slane %v6540, 7
    %v6543 = vrot.slane %v6542, 1
    %v6545 = vld [vmem:[#allocation5 + $0xf] sm:$0x1]
    %v6546 = vsel %vm6406, %v6543, %v6545
    %6547 = vst [vmem:[#allocation5 + $0xf] sm:$0x1] %v6546
    %v6548 = vld [vmem:[#allocation2 + $0x80] sm:$0xf]
    %v6549 = vld [vmem:[#allocation2 + $0x84] sm:$0xf]
    %v6550 = vld [vmem:[#allocation2 + $0x88] sm:$0xf]
    %v6551 = vld [vmem:[#allocation2 + $0x8c] sm:$0xf]
    %v6552 = vld [vmem:[#allocation2 + $0x90] sm:$0xf]
    %v6553 = vld [vmem:[#allocation2 + $0x94] sm:$0xf]
    %v6554 = vld [vmem:[#allocation2 + $0x98] sm:$0xf]
    %v6555 = vld [vmem:[#allocation2 + $0x9c] sm:$0xf]
    %v6556 = vld [vmem:[#allocation2 + $0xa0] sm:$0xf]
    %v6557 = vld [vmem:[#allocation2 + $0xa4] sm:$0xf]
    %v6558 = vld [vmem:[#allocation2 + $0xa8] sm:$0xf]
    %v6559 = vld [vmem:[#allocation2 + $0xac] sm:$0xf]
    %v6560 = vld [vmem:[#allocation2 + $0xb0] sm:$0xf]
    %v6561 = vld [vmem:[#allocation2 + $0xb4] sm:$0xf]
    %v6562 = vld [vmem:[#allocation2 + $0xb8] sm:$0xf]
    %v6563 = vld [vmem:[#allocation2 + $0xbc] sm:$0xf]
    %v6564 = vld [vmem:[#allocation2 + $0xc0] sm:$0xf]
    %v6565 = vld [vmem:[#allocation2 + $0xc4] sm:$0xf]
    %v6566 = vld [vmem:[#allocation2 + $0xc8] sm:$0xf]
    %v6567 = vld [vmem:[#allocation2 + $0xcc] sm:$0xf]
    %v6568 = vld [vmem:[#allocation2 + $0xd0] sm:$0xf]
    %v6569 = vld [vmem:[#allocation2 + $0xd4] sm:$0xf]
    %v6570 = vld [vmem:[#allocation2 + $0xd8] sm:$0xf]
    %v6571 = vld [vmem:[#allocation2 + $0xdc] sm:$0xf]
    %v6572 = vld [vmem:[#allocation2 + $0xe0] sm:$0xf]
    %v6573 = vld [vmem:[#allocation2 + $0xe4] sm:$0xf]
    %v6574 = vld [vmem:[#allocation2 + $0xe8] sm:$0xf]
    %v6575 = vld [vmem:[#allocation2 + $0xec] sm:$0xf]
    %v6576 = vld [vmem:[#allocation2 + $0xf0] sm:$0xf]
    %v6577 = vld [vmem:[#allocation2 + $0xf4] sm:$0xf]
    %v6578 = vld [vmem:[#allocation2 + $0xf8] sm:$0xf]
    %v6579 = vld [vmem:[#allocation2 + $0xfc] sm:$0xf]
    %v6612 = vunpack.c.l.b16 %v6548
    %v6613 = vunpack.c.l.b16 %v6549
    %v6614 = vunpack.c.l.b16 %v6550
    %v6615 = vunpack.c.l.b16 %v6551
    %v6616 = vunpack.c.l.b16 %v6552
    %v6617 = vunpack.c.l.b16 %v6553
    %v6618 = vunpack.c.l.b16 %v6554
    %v6619 = vunpack.c.l.b16 %v6555
    %v6620 = vunpack.c.l.b16 %v6556
    %v6621 = vunpack.c.l.b16 %v6557
    %v6622 = vunpack.c.l.b16 %v6558
    %v6623 = vunpack.c.l.b16 %v6559
    %v6624 = vunpack.c.l.b16 %v6560
    %v6625 = vunpack.c.l.b16 %v6561
    %v6626 = vunpack.c.l.b16 %v6562
    %v6627 = vunpack.c.l.b16 %v6563
    %v6628 = vunpack.c.l.b16 %v6564
    %v6629 = vunpack.c.l.b16 %v6565
    %v6630 = vunpack.c.l.b16 %v6566
    %v6631 = vunpack.c.l.b16 %v6567
    %v6632 = vunpack.c.l.b16 %v6568
    %v6633 = vunpack.c.l.b16 %v6569
    %v6634 = vunpack.c.l.b16 %v6570
    %v6635 = vunpack.c.l.b16 %v6571
    %v6636 = vunpack.c.l.b16 %v6572
    %v6637 = vunpack.c.l.b16 %v6573
    %v6638 = vunpack.c.l.b16 %v6574
    %v6639 = vunpack.c.l.b16 %v6575
    %v6640 = vunpack.c.l.b16 %v6576
    %v6641 = vunpack.c.l.b16 %v6577
    %v6642 = vunpack.c.l.b16 %v6578
    %v6643 = vunpack.c.l.b16 %v6579
    %v6644 = vpack.c.b16 %v6613, %v6612
    %v6645 = vpack.c.b16 %v6615, %v6614
    %v6646 = vpack.c.b16 %v6617, %v6616
    %v6647 = vpack.c.b16 %v6619, %v6618
    %v6648 = vpack.c.b16 %v6621, %v6620
    %v6649 = vpack.c.b16 %v6623, %v6622
    %v6650 = vpack.c.b16 %v6625, %v6624
    %v6651 = vpack.c.b16 %v6627, %v6626
    %v6652 = vpack.c.b16 %v6629, %v6628
    %v6653 = vpack.c.b16 %v6631, %v6630
    %v6654 = vpack.c.b16 %v6633, %v6632
    %v6655 = vpack.c.b16 %v6635, %v6634
    %v6656 = vpack.c.b16 %v6637, %v6636
    %v6657 = vpack.c.b16 %v6639, %v6638
    %v6658 = vpack.c.b16 %v6641, %v6640
    %v6659 = vpack.c.b16 %v6643, %v6642
    %6676 = vmatpush.bf16.msra.mxu0 %v6651
    %6677 = vmatpush.bf16.msra.mxu0 %v6650
    %6678 = vmatpush.bf16.msra.mxu0 %v6649
    %6679 = vmatpush.bf16.msra.mxu0 %v6648
    %6680 = vmatpush.bf16.msra.mxu0 %v6647
    %6681 = vmatpush.bf16.msra.mxu0 %v6646
    %6682 = vmatpush.bf16.msra.mxu0 %v6645
    %6683 = vmatpush.bf16.msra.mxu0 %v6644
    %6684 = vmatmul.bf16.gmra.mxu0 %v1815
    %v6685 = vpop.f32.mrf.mxu0
    %v6686 = vadd.f32 0.0, %v6685
    %v6687 = vpop.f32.mrf.mxu0
    %v6688 = vadd.f32 0.0, %v6687
    %6689 = vmatmul.bf16.gmra.mxu0 %v1817
    %v6690 = vpop.f32.mrf.mxu0
    %v6691 = vadd.f32 0.0, %v6690
    %v6692 = vpop.f32.mrf.mxu0
    %v6693 = vadd.f32 0.0, %v6692
    %6694 = vmatmul.bf16.gmra.mxu0 %v1819
    %v6695 = vpop.f32.mrf.mxu0
    %v6696 = vadd.f32 0.0, %v6695
    %v6697 = vpop.f32.mrf.mxu0
    %v6698 = vadd.f32 0.0, %v6697
    %6699 = vmatmul.bf16.gmra.mxu0 %v1821
    %v6700 = vpop.f32.mrf.mxu0
    %v6701 = vadd.f32 0.0, %v6700
    %v6702 = vpop.f32.mrf.mxu0
    %v6703 = vadd.f32 0.0, %v6702
    %6704 = vmatmul.bf16.gmra.mxu0 %v1823
    %v6705 = vpop.f32.mrf.mxu0
    %v6706 = vadd.f32 0.0, %v6705
    %v6707 = vpop.f32.mrf.mxu0
    %v6708 = vadd.f32 0.0, %v6707
    %6709 = vmatmul.bf16.gmra.mxu0 %v1825
    %v6710 = vpop.f32.mrf.mxu0
    %v6711 = vadd.f32 0.0, %v6710
    %v6712 = vpop.f32.mrf.mxu0
    %v6713 = vadd.f32 0.0, %v6712
    %6714 = vmatmul.bf16.gmra.mxu0 %v1827
    %v6715 = vpop.f32.mrf.mxu0
    %v6716 = vadd.f32 0.0, %v6715
    %v6717 = vpop.f32.mrf.mxu0
    %v6718 = vadd.f32 0.0, %v6717
    %6719 = vmatmul.bf16.gmra.mxu0 %v1829
    %v6720 = vpop.f32.mrf.mxu0
    %v6721 = vadd.f32 0.0, %v6720
    %v6722 = vpop.f32.mrf.mxu0
    %v6723 = vadd.f32 0.0, %v6722
    %6724 = vmatmul.bf16.gmra.mxu0 %v1831
    %v6725 = vpop.f32.mrf.mxu0
    %v6726 = vadd.f32 0.0, %v6725
    %v6727 = vpop.f32.mrf.mxu0
    %v6728 = vadd.f32 0.0, %v6727
    %6729 = vmatmul.bf16.gmra.mxu0 %v1833
    %v6730 = vpop.f32.mrf.mxu0
    %v6731 = vadd.f32 0.0, %v6730
    %v6732 = vpop.f32.mrf.mxu0
    %v6733 = vadd.f32 0.0, %v6732
    %6734 = vmatmul.bf16.gmra.mxu0 %v1835
    %v6735 = vpop.f32.mrf.mxu0
    %v6736 = vadd.f32 0.0, %v6735
    %v6737 = vpop.f32.mrf.mxu0
    %v6738 = vadd.f32 0.0, %v6737
    %6739 = vmatmul.bf16.gmra.mxu0 %v1837
    %v6740 = vpop.f32.mrf.mxu0
    %v6741 = vadd.f32 0.0, %v6740
    %v6742 = vpop.f32.mrf.mxu0
    %v6743 = vadd.f32 0.0, %v6742
    %6744 = vmatmul.bf16.gmra.mxu0 %v1839
    %v6745 = vpop.f32.mrf.mxu0
    %v6746 = vadd.f32 0.0, %v6745
    %v6747 = vpop.f32.mrf.mxu0
    %v6748 = vadd.f32 0.0, %v6747
    %6749 = vmatmul.bf16.gmra.mxu0 %v1841
    %v6750 = vpop.f32.mrf.mxu0
    %v6751 = vadd.f32 0.0, %v6750
    %v6752 = vpop.f32.mrf.mxu0
    %v6753 = vadd.f32 0.0, %v6752
    %6754 = vmatmul.bf16.gmra.mxu0 %v1843
    %v6755 = vpop.f32.mrf.mxu0
    %v6756 = vadd.f32 0.0, %v6755
    %v6757 = vpop.f32.mrf.mxu0
    %v6758 = vadd.f32 0.0, %v6757
    %6759 = vmatmul.bf16.gmra.mxu0 %v1845
    %v6760 = vpop.f32.mrf.mxu0
    %v6761 = vadd.f32 0.0, %v6760
    %v6762 = vpop.f32.mrf.mxu0
    %v6763 = vadd.f32 0.0, %v6762
    %6764 = vmatmul.bf16.gmra.mxu0 %v1847
    %v6765 = vpop.f32.mrf.mxu0
    %v6766 = vadd.f32 0.0, %v6765
    %v6767 = vpop.f32.mrf.mxu0
    %v6768 = vadd.f32 0.0, %v6767
    %6769 = vmatmul.bf16.gmra.mxu0 %v1849
    %v6770 = vpop.f32.mrf.mxu0
    %v6771 = vadd.f32 0.0, %v6770
    %v6772 = vpop.f32.mrf.mxu0
    %v6773 = vadd.f32 0.0, %v6772
    %6774 = vmatmul.bf16.gmra.mxu0 %v1851
    %v6775 = vpop.f32.mrf.mxu0
    %v6776 = vadd.f32 0.0, %v6775
    %v6777 = vpop.f32.mrf.mxu0
    %v6778 = vadd.f32 0.0, %v6777
    %6779 = vmatmul.bf16.gmra.mxu0 %v1853
    %v6780 = vpop.f32.mrf.mxu0
    %v6781 = vadd.f32 0.0, %v6780
    %v6782 = vpop.f32.mrf.mxu0
    %v6783 = vadd.f32 0.0, %v6782
    %6784 = vmatmul.bf16.gmra.mxu0 %v1855
    %v6785 = vpop.f32.mrf.mxu0
    %v6786 = vadd.f32 0.0, %v6785
    %v6787 = vpop.f32.mrf.mxu0
    %v6788 = vadd.f32 0.0, %v6787
    %6789 = vmatmul.bf16.gmra.mxu0 %v1857
    %v6790 = vpop.f32.mrf.mxu0
    %v6791 = vadd.f32 0.0, %v6790
    %v6792 = vpop.f32.mrf.mxu0
    %v6793 = vadd.f32 0.0, %v6792
    %6794 = vmatmul.bf16.gmra.mxu0 %v1859
    %v6795 = vpop.f32.mrf.mxu0
    %v6796 = vadd.f32 0.0, %v6795
    %v6797 = vpop.f32.mrf.mxu0
    %v6798 = vadd.f32 0.0, %v6797
    %6799 = vmatmul.bf16.gmra.mxu0 %v1861
    %v6800 = vpop.f32.mrf.mxu0
    %v6801 = vadd.f32 0.0, %v6800
    %v6802 = vpop.f32.mrf.mxu0
    %v6803 = vadd.f32 0.0, %v6802
    %6804 = vmatmul.bf16.gmra.mxu0 %v1863
    %v6805 = vpop.f32.mrf.mxu0
    %v6806 = vadd.f32 0.0, %v6805
    %v6807 = vpop.f32.mrf.mxu0
    %v6808 = vadd.f32 0.0, %v6807
    %6809 = vmatmul.bf16.gmra.mxu0 %v1865
    %v6810 = vpop.f32.mrf.mxu0
    %v6811 = vadd.f32 0.0, %v6810
    %v6812 = vpop.f32.mrf.mxu0
    %v6813 = vadd.f32 0.0, %v6812
    %6814 = vmatmul.bf16.gmra.mxu0 %v1867
    %v6815 = vpop.f32.mrf.mxu0
    %v6816 = vadd.f32 0.0, %v6815
    %v6817 = vpop.f32.mrf.mxu0
    %v6818 = vadd.f32 0.0, %v6817
    %6819 = vmatmul.bf16.gmra.mxu0 %v1869
    %v6820 = vpop.f32.mrf.mxu0
    %v6821 = vadd.f32 0.0, %v6820
    %v6822 = vpop.f32.mrf.mxu0
    %v6823 = vadd.f32 0.0, %v6822
    %6824 = vmatmul.bf16.gmra.mxu0 %v1871
    %v6825 = vpop.f32.mrf.mxu0
    %v6826 = vadd.f32 0.0, %v6825
    %v6827 = vpop.f32.mrf.mxu0
    %v6828 = vadd.f32 0.0, %v6827
    %6829 = vmatmul.bf16.gmra.mxu0 %v1873
    %v6830 = vpop.f32.mrf.mxu0
    %v6831 = vadd.f32 0.0, %v6830
    %v6832 = vpop.f32.mrf.mxu0
    %v6833 = vadd.f32 0.0, %v6832
    %6834 = vmatmul.bf16.gmra.mxu0 %v1875
    %v6835 = vpop.f32.mrf.mxu0
    %v6836 = vadd.f32 0.0, %v6835
    %v6837 = vpop.f32.mrf.mxu0
    %v6838 = vadd.f32 0.0, %v6837
    %6839 = vmatmul.bf16.gmra.mxu0 %v1877
    %v6840 = vpop.f32.mrf.mxu0
    %v6841 = vadd.f32 0.0, %v6840
    %v6842 = vpop.f32.mrf.mxu0
    %v6843 = vadd.f32 0.0, %v6842
    %6844 = vmatmul.bf16.gmra.mxu0 %v1879
    %v6845 = vpop.f32.mrf.mxu0
    %v6846 = vadd.f32 0.0, %v6845
    %v6847 = vpop.f32.mrf.mxu0
    %v6848 = vadd.f32 0.0, %v6847
    %6849 = vmatmul.bf16.gmra.mxu0 %v1881
    %v6850 = vpop.f32.mrf.mxu0
    %v6851 = vadd.f32 0.0, %v6850
    %v6852 = vpop.f32.mrf.mxu0
    %v6853 = vadd.f32 0.0, %v6852
    %6854 = vmatmul.bf16.gmra.mxu0 %v1883
    %v6855 = vpop.f32.mrf.mxu0
    %v6856 = vadd.f32 0.0, %v6855
    %v6857 = vpop.f32.mrf.mxu0
    %v6858 = vadd.f32 0.0, %v6857
    %6859 = vmatmul.bf16.gmra.mxu0 %v1885
    %v6860 = vpop.f32.mrf.mxu0
    %v6861 = vadd.f32 0.0, %v6860
    %v6862 = vpop.f32.mrf.mxu0
    %v6863 = vadd.f32 0.0, %v6862
    %6864 = vmatmul.bf16.gmra.mxu0 %v1887
    %v6865 = vpop.f32.mrf.mxu0
    %v6866 = vadd.f32 0.0, %v6865
    %v6867 = vpop.f32.mrf.mxu0
    %v6868 = vadd.f32 0.0, %v6867
    %6869 = vmatmul.bf16.gmra.mxu0 %v1889
    %v6870 = vpop.f32.mrf.mxu0
    %v6871 = vadd.f32 0.0, %v6870
    %v6872 = vpop.f32.mrf.mxu0
    %v6873 = vadd.f32 0.0, %v6872
    %6874 = vmatmul.bf16.gmra.mxu0 %v1891
    %v6875 = vpop.f32.mrf.mxu0
    %v6876 = vadd.f32 0.0, %v6875
    %v6877 = vpop.f32.mrf.mxu0
    %v6878 = vadd.f32 0.0, %v6877
    %6879 = vmatmul.bf16.gmra.mxu0 %v1893
    %v6880 = vpop.f32.mrf.mxu0
    %v6881 = vadd.f32 0.0, %v6880
    %v6882 = vpop.f32.mrf.mxu0
    %v6883 = vadd.f32 0.0, %v6882
    %6884 = vmatmul.bf16.gmra.mxu0 %v1895
    %v6885 = vpop.f32.mrf.mxu0
    %v6886 = vadd.f32 0.0, %v6885
    %v6887 = vpop.f32.mrf.mxu0
    %v6888 = vadd.f32 0.0, %v6887
    %6889 = vmatmul.bf16.gmra.mxu0 %v1897
    %v6890 = vpop.f32.mrf.mxu0
    %v6891 = vadd.f32 0.0, %v6890
    %v6892 = vpop.f32.mrf.mxu0
    %v6893 = vadd.f32 0.0, %v6892
    %6894 = vmatmul.bf16.gmra.mxu0 %v1899
    %v6895 = vpop.f32.mrf.mxu0
    %v6896 = vadd.f32 0.0, %v6895
    %v6897 = vpop.f32.mrf.mxu0
    %v6898 = vadd.f32 0.0, %v6897
    %6899 = vmatmul.bf16.gmra.mxu0 %v1901
    %v6900 = vpop.f32.mrf.mxu0
    %v6901 = vadd.f32 0.0, %v6900
    %v6902 = vpop.f32.mrf.mxu0
    %v6903 = vadd.f32 0.0, %v6902
    %6904 = vmatmul.bf16.gmra.mxu0 %v1903
    %v6905 = vpop.f32.mrf.mxu0
    %v6906 = vadd.f32 0.0, %v6905
    %v6907 = vpop.f32.mrf.mxu0
    %v6908 = vadd.f32 0.0, %v6907
    %6909 = vmatmul.bf16.gmra.mxu0 %v1905
    %v6910 = vpop.f32.mrf.mxu0
    %v6911 = vadd.f32 0.0, %v6910
    %v6912 = vpop.f32.mrf.mxu0
    %v6913 = vadd.f32 0.0, %v6912
    %6914 = vmatmul.bf16.gmra.mxu0 %v1907
    %v6915 = vpop.f32.mrf.mxu0
    %v6916 = vadd.f32 0.0, %v6915
    %v6917 = vpop.f32.mrf.mxu0
    %v6918 = vadd.f32 0.0, %v6917
    %6919 = vmatmul.bf16.gmra.mxu0 %v1909
    %v6920 = vpop.f32.mrf.mxu0
    %v6921 = vadd.f32 0.0, %v6920
    %v6922 = vpop.f32.mrf.mxu0
    %v6923 = vadd.f32 0.0, %v6922
    %6924 = vmatmul.bf16.gmra.mxu0 %v1911
    %v6925 = vpop.f32.mrf.mxu0
    %v6926 = vadd.f32 0.0, %v6925
    %v6927 = vpop.f32.mrf.mxu0
    %v6928 = vadd.f32 0.0, %v6927
    %6929 = vmatmul.bf16.gmra.mxu0 %v1913
    %v6930 = vpop.f32.mrf.mxu0
    %v6931 = vadd.f32 0.0, %v6930
    %v6932 = vpop.f32.mrf.mxu0
    %v6933 = vadd.f32 0.0, %v6932
    %6934 = vmatmul.bf16.gmra.mxu0 %v1915
    %v6935 = vpop.f32.mrf.mxu0
    %v6936 = vadd.f32 0.0, %v6935
    %v6937 = vpop.f32.mrf.mxu0
    %v6938 = vadd.f32 0.0, %v6937
    %6939 = vmatmul.bf16.gmra.mxu0 %v1917
    %v6940 = vpop.f32.mrf.mxu0
    %v6941 = vadd.f32 0.0, %v6940
    %v6942 = vpop.f32.mrf.mxu0
    %v6943 = vadd.f32 0.0, %v6942
    %6944 = vmatmul.bf16.gmra.mxu0 %v1919
    %v6945 = vpop.f32.mrf.mxu0
    %v6946 = vadd.f32 0.0, %v6945
    %v6947 = vpop.f32.mrf.mxu0
    %v6948 = vadd.f32 0.0, %v6947
    %6949 = vmatmul.bf16.gmra.mxu0 %v1921
    %v6950 = vpop.f32.mrf.mxu0
    %v6951 = vadd.f32 0.0, %v6950
    %v6952 = vpop.f32.mrf.mxu0
    %v6953 = vadd.f32 0.0, %v6952
    %6954 = vmatmul.bf16.gmra.mxu0 %v1923
    %v6955 = vpop.f32.mrf.mxu0
    %v6956 = vadd.f32 0.0, %v6955
    %v6957 = vpop.f32.mrf.mxu0
    %v6958 = vadd.f32 0.0, %v6957
    %6959 = vmatmul.bf16.gmra.mxu0 %v1925
    %v6960 = vpop.f32.mrf.mxu0
    %v6961 = vadd.f32 0.0, %v6960
    %v6962 = vpop.f32.mrf.mxu0
    %v6963 = vadd.f32 0.0, %v6962
    %6964 = vmatmul.bf16.gmra.mxu0 %v1927
    %v6965 = vpop.f32.mrf.mxu0
    %v6966 = vadd.f32 0.0, %v6965
    %v6967 = vpop.f32.mrf.mxu0
    %v6968 = vadd.f32 0.0, %v6967
    %6969 = vmatmul.bf16.gmra.mxu0 %v1929
    %v6970 = vpop.f32.mrf.mxu0
    %v6971 = vadd.f32 0.0, %v6970
    %v6972 = vpop.f32.mrf.mxu0
    %v6973 = vadd.f32 0.0, %v6972
    %6974 = vmatmul.bf16.gmra.mxu0 %v1931
    %v6975 = vpop.f32.mrf.mxu0
    %v6976 = vadd.f32 0.0, %v6975
    %v6977 = vpop.f32.mrf.mxu0
    %v6978 = vadd.f32 0.0, %v6977
    %6979 = vmatmul.bf16.gmra.mxu0 %v1933
    %v6980 = vpop.f32.mrf.mxu0
    %v6981 = vadd.f32 0.0, %v6980
    %v6982 = vpop.f32.mrf.mxu0
    %v6983 = vadd.f32 0.0, %v6982
    %6984 = vmatmul.bf16.gmra.mxu0 %v1935
    %v6985 = vpop.f32.mrf.mxu0
    %v6986 = vadd.f32 0.0, %v6985
    %v6987 = vpop.f32.mrf.mxu0
    %v6988 = vadd.f32 0.0, %v6987
    %6989 = vmatmul.bf16.gmra.mxu0 %v1937
    %v6990 = vpop.f32.mrf.mxu0
    %v6991 = vadd.f32 0.0, %v6990
    %v6992 = vpop.f32.mrf.mxu0
    %v6993 = vadd.f32 0.0, %v6992
    %6994 = vmatmul.bf16.gmra.mxu0 %v1939
    %v6995 = vpop.f32.mrf.mxu0
    %v6996 = vadd.f32 0.0, %v6995
    %v6997 = vpop.f32.mrf.mxu0
    %v6998 = vadd.f32 0.0, %v6997
    %6999 = vmatmul.bf16.gmra.mxu0 %v1941
    %v7000 = vpop.f32.mrf.mxu0
    %v7001 = vadd.f32 0.0, %v7000
    %v7002 = vpop.f32.mrf.mxu0
    %v7003 = vadd.f32 0.0, %v7002
    %7004 = vdwg.mxu0
    %7005 = vmatpush.bf16.msra.mxu0 %v6659
    %7006 = vmatpush.bf16.msra.mxu0 %v6658
    %7007 = vmatpush.bf16.msra.mxu0 %v6657
    %7008 = vmatpush.bf16.msra.mxu0 %v6656
    %7009 = vmatpush.bf16.msra.mxu0 %v6655
    %7010 = vmatpush.bf16.msra.mxu0 %v6654
    %7011 = vmatpush.bf16.msra.mxu0 %v6653
    %7012 = vmatpush.bf16.msra.mxu0 %v6652
    %7013 = vmatmul.bf16.gmra.mxu0 %v1816
    %v7014 = vpop.f32.mrf.mxu0
    %v7015 = vadd.f32 %v6686, %v7014
    %v7016 = vpop.f32.mrf.mxu0
    %v7017 = vadd.f32 %v6688, %v7016
    %7018 = vmatmul.bf16.gmra.mxu0 %v1818
    %v7019 = vpop.f32.mrf.mxu0
    %v7020 = vadd.f32 %v6691, %v7019
    %v7021 = vpop.f32.mrf.mxu0
    %v7022 = vadd.f32 %v6693, %v7021
    %7023 = vmatmul.bf16.gmra.mxu0 %v1820
    %v7024 = vpop.f32.mrf.mxu0
    %v7025 = vadd.f32 %v6696, %v7024
    %v7026 = vpop.f32.mrf.mxu0
    %v7027 = vadd.f32 %v6698, %v7026
    %7028 = vmatmul.bf16.gmra.mxu0 %v1822
    %v7029 = vpop.f32.mrf.mxu0
    %v7030 = vadd.f32 %v6701, %v7029
    %v7031 = vpop.f32.mrf.mxu0
    %v7032 = vadd.f32 %v6703, %v7031
    %7033 = vmatmul.bf16.gmra.mxu0 %v1824
    %v7034 = vpop.f32.mrf.mxu0
    %v7035 = vadd.f32 %v6706, %v7034
    %v7036 = vpop.f32.mrf.mxu0
    %v7037 = vadd.f32 %v6708, %v7036
    %7038 = vmatmul.bf16.gmra.mxu0 %v1826
    %v7039 = vpop.f32.mrf.mxu0
    %v7040 = vadd.f32 %v6711, %v7039
    %v7041 = vpop.f32.mrf.mxu0
    %v7042 = vadd.f32 %v6713, %v7041
    %7043 = vmatmul.bf16.gmra.mxu0 %v1828
    %v7044 = vpop.f32.mrf.mxu0
    %v7045 = vadd.f32 %v6716, %v7044
    %v7046 = vpop.f32.mrf.mxu0
    %v7047 = vadd.f32 %v6718, %v7046
    %7048 = vmatmul.bf16.gmra.mxu0 %v1830
    %v7049 = vpop.f32.mrf.mxu0
    %v7050 = vadd.f32 %v6721, %v7049
    %v7051 = vpop.f32.mrf.mxu0
    %v7052 = vadd.f32 %v6723, %v7051
    %7053 = vmatmul.bf16.gmra.mxu0 %v1832
    %v7054 = vpop.f32.mrf.mxu0
    %v7055 = vadd.f32 %v6726, %v7054
    %v7056 = vpop.f32.mrf.mxu0
    %v7057 = vadd.f32 %v6728, %v7056
    %7058 = vmatmul.bf16.gmra.mxu0 %v1834
    %v7059 = vpop.f32.mrf.mxu0
    %v7060 = vadd.f32 %v6731, %v7059
    %v7061 = vpop.f32.mrf.mxu0
    %v7062 = vadd.f32 %v6733, %v7061
    %7063 = vmatmul.bf16.gmra.mxu0 %v1836
    %v7064 = vpop.f32.mrf.mxu0
    %v7065 = vadd.f32 %v6736, %v7064
    %v7066 = vpop.f32.mrf.mxu0
    %v7067 = vadd.f32 %v6738, %v7066
    %7068 = vmatmul.bf16.gmra.mxu0 %v1838
    %v7069 = vpop.f32.mrf.mxu0
    %v7070 = vadd.f32 %v6741, %v7069
    %v7071 = vpop.f32.mrf.mxu0
    %v7072 = vadd.f32 %v6743, %v7071
    %7073 = vmatmul.bf16.gmra.mxu0 %v1840
    %v7074 = vpop.f32.mrf.mxu0
    %v7075 = vadd.f32 %v6746, %v7074
    %v7076 = vpop.f32.mrf.mxu0
    %v7077 = vadd.f32 %v6748, %v7076
    %7078 = vmatmul.bf16.gmra.mxu0 %v1842
    %v7079 = vpop.f32.mrf.mxu0
    %v7080 = vadd.f32 %v6751, %v7079
    %v7081 = vpop.f32.mrf.mxu0
    %v7082 = vadd.f32 %v6753, %v7081
    %7083 = vmatmul.bf16.gmra.mxu0 %v1844
    %v7084 = vpop.f32.mrf.mxu0
    %v7085 = vadd.f32 %v6756, %v7084
    %v7086 = vpop.f32.mrf.mxu0
    %v7087 = vadd.f32 %v6758, %v7086
    %7088 = vmatmul.bf16.gmra.mxu0 %v1846
    %v7089 = vpop.f32.mrf.mxu0
    %v7090 = vadd.f32 %v6761, %v7089
    %v7091 = vpop.f32.mrf.mxu0
    %v7092 = vadd.f32 %v6763, %v7091
    %7093 = vmatmul.bf16.gmra.mxu0 %v1848
    %v7094 = vpop.f32.mrf.mxu0
    %v7095 = vadd.f32 %v6766, %v7094
    %v7096 = vpop.f32.mrf.mxu0
    %v7097 = vadd.f32 %v6768, %v7096
    %7098 = vmatmul.bf16.gmra.mxu0 %v1850
    %v7099 = vpop.f32.mrf.mxu0
    %v7100 = vadd.f32 %v6771, %v7099
    %v7101 = vpop.f32.mrf.mxu0
    %v7102 = vadd.f32 %v6773, %v7101
    %7103 = vmatmul.bf16.gmra.mxu0 %v1852
    %v7104 = vpop.f32.mrf.mxu0
    %v7105 = vadd.f32 %v6776, %v7104
    %v7106 = vpop.f32.mrf.mxu0
    %v7107 = vadd.f32 %v6778, %v7106
    %7108 = vmatmul.bf16.gmra.mxu0 %v1854
    %v7109 = vpop.f32.mrf.mxu0
    %v7110 = vadd.f32 %v6781, %v7109
    %v7111 = vpop.f32.mrf.mxu0
    %v7112 = vadd.f32 %v6783, %v7111
    %7113 = vmatmul.bf16.gmra.mxu0 %v1856
    %v7114 = vpop.f32.mrf.mxu0
    %v7115 = vadd.f32 %v6786, %v7114
    %v7116 = vpop.f32.mrf.mxu0
    %v7117 = vadd.f32 %v6788, %v7116
    %7118 = vmatmul.bf16.gmra.mxu0 %v1858
    %v7119 = vpop.f32.mrf.mxu0
    %v7120 = vadd.f32 %v6791, %v7119
    %v7121 = vpop.f32.mrf.mxu0
    %v7122 = vadd.f32 %v6793, %v7121
    %7123 = vmatmul.bf16.gmra.mxu0 %v1860
    %v7124 = vpop.f32.mrf.mxu0
    %v7125 = vadd.f32 %v6796, %v7124
    %v7126 = vpop.f32.mrf.mxu0
    %v7127 = vadd.f32 %v6798, %v7126
    %7128 = vmatmul.bf16.gmra.mxu0 %v1862
    %v7129 = vpop.f32.mrf.mxu0
    %v7130 = vadd.f32 %v6801, %v7129
    %v7131 = vpop.f32.mrf.mxu0
    %v7132 = vadd.f32 %v6803, %v7131
    %7133 = vmatmul.bf16.gmra.mxu0 %v1864
    %v7134 = vpop.f32.mrf.mxu0
    %v7135 = vadd.f32 %v6806, %v7134
    %v7136 = vpop.f32.mrf.mxu0
    %v7137 = vadd.f32 %v6808, %v7136
    %7138 = vmatmul.bf16.gmra.mxu0 %v1866
    %v7139 = vpop.f32.mrf.mxu0
    %v7140 = vadd.f32 %v6811, %v7139
    %v7141 = vpop.f32.mrf.mxu0
    %v7142 = vadd.f32 %v6813, %v7141
    %7143 = vmatmul.bf16.gmra.mxu0 %v1868
    %v7144 = vpop.f32.mrf.mxu0
    %v7145 = vadd.f32 %v6816, %v7144
    %v7146 = vpop.f32.mrf.mxu0
    %v7147 = vadd.f32 %v6818, %v7146
    %7148 = vmatmul.bf16.gmra.mxu0 %v1870
    %v7149 = vpop.f32.mrf.mxu0
    %v7150 = vadd.f32 %v6821, %v7149
    %v7151 = vpop.f32.mrf.mxu0
    %v7152 = vadd.f32 %v6823, %v7151
    %7153 = vmatmul.bf16.gmra.mxu0 %v1872
    %v7154 = vpop.f32.mrf.mxu0
    %v7155 = vadd.f32 %v6826, %v7154
    %v7156 = vpop.f32.mrf.mxu0
    %v7157 = vadd.f32 %v6828, %v7156
    %7158 = vmatmul.bf16.gmra.mxu0 %v1874
    %v7159 = vpop.f32.mrf.mxu0
    %v7160 = vadd.f32 %v6831, %v7159
    %v7161 = vpop.f32.mrf.mxu0
    %v7162 = vadd.f32 %v6833, %v7161
    %7163 = vmatmul.bf16.gmra.mxu0 %v1876
    %v7164 = vpop.f32.mrf.mxu0
    %v7165 = vadd.f32 %v6836, %v7164
    %v7166 = vpop.f32.mrf.mxu0
    %v7167 = vadd.f32 %v6838, %v7166
    %7168 = vmatmul.bf16.gmra.mxu0 %v1878
    %v7169 = vpop.f32.mrf.mxu0
    %v7170 = vadd.f32 %v6841, %v7169
    %v7171 = vpop.f32.mrf.mxu0
    %v7172 = vadd.f32 %v6843, %v7171
    %7173 = vmatmul.bf16.gmra.mxu0 %v1880
    %v7174 = vpop.f32.mrf.mxu0
    %v7175 = vadd.f32 %v6846, %v7174
    %v7176 = vpop.f32.mrf.mxu0
    %v7177 = vadd.f32 %v6848, %v7176
    %7178 = vmatmul.bf16.gmra.mxu0 %v1882
    %v7179 = vpop.f32.mrf.mxu0
    %v7180 = vadd.f32 %v6851, %v7179
    %v7181 = vpop.f32.mrf.mxu0
    %v7182 = vadd.f32 %v6853, %v7181
    %7183 = vmatmul.bf16.gmra.mxu0 %v1884
    %v7184 = vpop.f32.mrf.mxu0
    %v7185 = vadd.f32 %v6856, %v7184
    %v7186 = vpop.f32.mrf.mxu0
    %v7187 = vadd.f32 %v6858, %v7186
    %7188 = vmatmul.bf16.gmra.mxu0 %v1886
    %v7189 = vpop.f32.mrf.mxu0
    %v7190 = vadd.f32 %v6861, %v7189
    %v7191 = vpop.f32.mrf.mxu0
    %v7192 = vadd.f32 %v6863, %v7191
    %7193 = vmatmul.bf16.gmra.mxu0 %v1888
    %v7194 = vpop.f32.mrf.mxu0
    %v7195 = vadd.f32 %v6866, %v7194
    %v7196 = vpop.f32.mrf.mxu0
    %v7197 = vadd.f32 %v6868, %v7196
    %7198 = vmatmul.bf16.gmra.mxu0 %v1890
    %v7199 = vpop.f32.mrf.mxu0
    %v7200 = vadd.f32 %v6871, %v7199
    %v7201 = vpop.f32.mrf.mxu0
    %v7202 = vadd.f32 %v6873, %v7201
    %7203 = vmatmul.bf16.gmra.mxu0 %v1892
    %v7204 = vpop.f32.mrf.mxu0
    %v7205 = vadd.f32 %v6876, %v7204
    %v7206 = vpop.f32.mrf.mxu0
    %v7207 = vadd.f32 %v6878, %v7206
    %7208 = vmatmul.bf16.gmra.mxu0 %v1894
    %v7209 = vpop.f32.mrf.mxu0
    %v7210 = vadd.f32 %v6881, %v7209
    %v7211 = vpop.f32.mrf.mxu0
    %v7212 = vadd.f32 %v6883, %v7211
    %7213 = vmatmul.bf16.gmra.mxu0 %v1896
    %v7214 = vpop.f32.mrf.mxu0
    %v7215 = vadd.f32 %v6886, %v7214
    %v7216 = vpop.f32.mrf.mxu0
    %v7217 = vadd.f32 %v6888, %v7216
    %7218 = vmatmul.bf16.gmra.mxu0 %v1898
    %v7219 = vpop.f32.mrf.mxu0
    %v7220 = vadd.f32 %v6891, %v7219
    %v7221 = vpop.f32.mrf.mxu0
    %v7222 = vadd.f32 %v6893, %v7221
    %7223 = vmatmul.bf16.gmra.mxu0 %v1900
    %v7224 = vpop.f32.mrf.mxu0
    %v7225 = vadd.f32 %v6896, %v7224
    %v7226 = vpop.f32.mrf.mxu0
    %v7227 = vadd.f32 %v6898, %v7226
    %7228 = vmatmul.bf16.gmra.mxu0 %v1902
    %v7229 = vpop.f32.mrf.mxu0
    %v7230 = vadd.f32 %v6901, %v7229
    %v7231 = vpop.f32.mrf.mxu0
    %v7232 = vadd.f32 %v6903, %v7231
    %7233 = vmatmul.bf16.gmra.mxu0 %v1904
    %v7234 = vpop.f32.mrf.mxu0
    %v7235 = vadd.f32 %v6906, %v7234
    %v7236 = vpop.f32.mrf.mxu0
    %v7237 = vadd.f32 %v6908, %v7236
    %7238 = vmatmul.bf16.gmra.mxu0 %v1906
    %v7239 = vpop.f32.mrf.mxu0
    %v7240 = vadd.f32 %v6911, %v7239
    %v7241 = vpop.f32.mrf.mxu0
    %v7242 = vadd.f32 %v6913, %v7241
    %7243 = vmatmul.bf16.gmra.mxu0 %v1908
    %v7244 = vpop.f32.mrf.mxu0
    %v7245 = vadd.f32 %v6916, %v7244
    %v7246 = vpop.f32.mrf.mxu0
    %v7247 = vadd.f32 %v6918, %v7246
    %7248 = vmatmul.bf16.gmra.mxu0 %v1910
    %v7249 = vpop.f32.mrf.mxu0
    %v7250 = vadd.f32 %v6921, %v7249
    %v7251 = vpop.f32.mrf.mxu0
    %v7252 = vadd.f32 %v6923, %v7251
    %7253 = vmatmul.bf16.gmra.mxu0 %v1912
    %v7254 = vpop.f32.mrf.mxu0
    %v7255 = vadd.f32 %v6926, %v7254
    %v7256 = vpop.f32.mrf.mxu0
    %v7257 = vadd.f32 %v6928, %v7256
    %7258 = vmatmul.bf16.gmra.mxu0 %v1914
    %v7259 = vpop.f32.mrf.mxu0
    %v7260 = vadd.f32 %v6931, %v7259
    %v7261 = vpop.f32.mrf.mxu0
    %v7262 = vadd.f32 %v6933, %v7261
    %7263 = vmatmul.bf16.gmra.mxu0 %v1916
    %v7264 = vpop.f32.mrf.mxu0
    %v7265 = vadd.f32 %v6936, %v7264
    %v7266 = vpop.f32.mrf.mxu0
    %v7267 = vadd.f32 %v6938, %v7266
    %7268 = vmatmul.bf16.gmra.mxu0 %v1918
    %v7269 = vpop.f32.mrf.mxu0
    %v7270 = vadd.f32 %v6941, %v7269
    %v7271 = vpop.f32.mrf.mxu0
    %v7272 = vadd.f32 %v6943, %v7271
    %7273 = vmatmul.bf16.gmra.mxu0 %v1920
    %v7274 = vpop.f32.mrf.mxu0
    %v7275 = vadd.f32 %v6946, %v7274
    %v7276 = vpop.f32.mrf.mxu0
    %v7277 = vadd.f32 %v6948, %v7276
    %7278 = vmatmul.bf16.gmra.mxu0 %v1922
    %v7279 = vpop.f32.mrf.mxu0
    %v7280 = vadd.f32 %v6951, %v7279
    %v7281 = vpop.f32.mrf.mxu0
    %v7282 = vadd.f32 %v6953, %v7281
    %7283 = vmatmul.bf16.gmra.mxu0 %v1924
    %v7284 = vpop.f32.mrf.mxu0
    %v7285 = vadd.f32 %v6956, %v7284
    %v7286 = vpop.f32.mrf.mxu0
    %v7287 = vadd.f32 %v6958, %v7286
    %7288 = vmatmul.bf16.gmra.mxu0 %v1926
    %v7289 = vpop.f32.mrf.mxu0
    %v7290 = vadd.f32 %v6961, %v7289
    %v7291 = vpop.f32.mrf.mxu0
    %v7292 = vadd.f32 %v6963, %v7291
    %7293 = vmatmul.bf16.gmra.mxu0 %v1928
    %v7294 = vpop.f32.mrf.mxu0
    %v7295 = vadd.f32 %v6966, %v7294
    %v7296 = vpop.f32.mrf.mxu0
    %v7297 = vadd.f32 %v6968, %v7296
    %7298 = vmatmul.bf16.gmra.mxu0 %v1930
    %v7299 = vpop.f32.mrf.mxu0
    %v7300 = vadd.f32 %v6971, %v7299
    %v7301 = vpop.f32.mrf.mxu0
    %v7302 = vadd.f32 %v6973, %v7301
    %7303 = vmatmul.bf16.gmra.mxu0 %v1932
    %v7304 = vpop.f32.mrf.mxu0
    %v7305 = vadd.f32 %v6976, %v7304
    %v7306 = vpop.f32.mrf.mxu0
    %v7307 = vadd.f32 %v6978, %v7306
    %7308 = vmatmul.bf16.gmra.mxu0 %v1934
    %v7309 = vpop.f32.mrf.mxu0
    %v7310 = vadd.f32 %v6981, %v7309
    %v7311 = vpop.f32.mrf.mxu0
    %v7312 = vadd.f32 %v6983, %v7311
    %7313 = vmatmul.bf16.gmra.mxu0 %v1936
    %v7314 = vpop.f32.mrf.mxu0
    %v7315 = vadd.f32 %v6986, %v7314
    %v7316 = vpop.f32.mrf.mxu0
    %v7317 = vadd.f32 %v6988, %v7316
    %7318 = vmatmul.bf16.gmra.mxu0 %v1938
    %v7319 = vpop.f32.mrf.mxu0
    %v7320 = vadd.f32 %v6991, %v7319
    %v7321 = vpop.f32.mrf.mxu0
    %v7322 = vadd.f32 %v6993, %v7321
    %7323 = vmatmul.bf16.gmra.mxu0 %v1940
    %v7324 = vpop.f32.mrf.mxu0
    %v7325 = vadd.f32 %v6996, %v7324
    %v7326 = vpop.f32.mrf.mxu0
    %v7327 = vadd.f32 %v6998, %v7326
    %7328 = vmatmul.bf16.gmra.mxu0 %v1942
    %v7329 = vpop.f32.mrf.mxu0
    %v7330 = vadd.f32 %v7001, %v7329
    %v7331 = vpop.f32.mrf.mxu0
    %v7332 = vadd.f32 %v7003, %v7331
    %7333 = vdwg.mxu0
    %v7334 = vpack.c.bf16 %v7015, %v7015
    %v7335 = vpack.c.bf16 %v7017, %v7017
    %v7336 = vpack.c.bf16 %v7020, %v7020
    %v7337 = vpack.c.bf16 %v7022, %v7022
    %v7338 = vpack.c.bf16 %v7025, %v7025
    %v7339 = vpack.c.bf16 %v7027, %v7027
    %v7340 = vpack.c.bf16 %v7030, %v7030
    %v7341 = vpack.c.bf16 %v7032, %v7032
    %v7342 = vpack.c.bf16 %v7035, %v7035
    %v7343 = vpack.c.bf16 %v7037, %v7037
    %v7344 = vpack.c.bf16 %v7040, %v7040
    %v7345 = vpack.c.bf16 %v7042, %v7042
    %v7346 = vpack.c.bf16 %v7045, %v7045
    %v7347 = vpack.c.bf16 %v7047, %v7047
    %v7348 = vpack.c.bf16 %v7050, %v7050
    %v7349 = vpack.c.bf16 %v7052, %v7052
    %v7350 = vpack.c.bf16 %v7055, %v7055
    %v7351 = vpack.c.bf16 %v7057, %v7057
    %v7352 = vpack.c.bf16 %v7060, %v7060
    %v7353 = vpack.c.bf16 %v7062, %v7062
    %v7354 = vpack.c.bf16 %v7065, %v7065
    %v7355 = vpack.c.bf16 %v7067, %v7067
    %v7356 = vpack.c.bf16 %v7070, %v7070
    %v7357 = vpack.c.bf16 %v7072, %v7072
    %v7358 = vpack.c.bf16 %v7075, %v7075
    %v7359 = vpack.c.bf16 %v7077, %v7077
    %v7360 = vpack.c.bf16 %v7080, %v7080
    %v7361 = vpack.c.bf16 %v7082, %v7082
    %v7362 = vpack.c.bf16 %v7085, %v7085
    %v7363 = vpack.c.bf16 %v7087, %v7087
    %v7364 = vpack.c.bf16 %v7090, %v7090
    %v7365 = vpack.c.bf16 %v7092, %v7092
    %v7366 = vpack.c.bf16 %v7095, %v7095
    %v7367 = vpack.c.bf16 %v7097, %v7097
    %v7368 = vpack.c.bf16 %v7100, %v7100
    %v7369 = vpack.c.bf16 %v7102, %v7102
    %v7370 = vpack.c.bf16 %v7105, %v7105
    %v7371 = vpack.c.bf16 %v7107, %v7107
    %v7372 = vpack.c.bf16 %v7110, %v7110
    %v7373 = vpack.c.bf16 %v7112, %v7112
    %v7374 = vpack.c.bf16 %v7115, %v7115
    %v7375 = vpack.c.bf16 %v7117, %v7117
    %v7376 = vpack.c.bf16 %v7120, %v7120
    %v7377 = vpack.c.bf16 %v7122, %v7122
    %v7378 = vpack.c.bf16 %v7125, %v7125
    %v7379 = vpack.c.bf16 %v7127, %v7127
    %v7380 = vpack.c.bf16 %v7130, %v7130
    %v7381 = vpack.c.bf16 %v7132, %v7132
    %v7382 = vpack.c.bf16 %v7135, %v7135
    %v7383 = vpack.c.bf16 %v7137, %v7137
    %v7384 = vpack.c.bf16 %v7140, %v7140
    %v7385 = vpack.c.bf16 %v7142, %v7142
    %v7386 = vpack.c.bf16 %v7145, %v7145
    %v7387 = vpack.c.bf16 %v7147, %v7147
    %v7388 = vpack.c.bf16 %v7150, %v7150
    %v7389 = vpack.c.bf16 %v7152, %v7152
    %v7390 = vpack.c.bf16 %v7155, %v7155
    %v7391 = vpack.c.bf16 %v7157, %v7157
    %v7392 = vpack.c.bf16 %v7160, %v7160
    %v7393 = vpack.c.bf16 %v7162, %v7162
    %v7394 = vpack.c.bf16 %v7165, %v7165
    %v7395 = vpack.c.bf16 %v7167, %v7167
    %v7396 = vpack.c.bf16 %v7170, %v7170
    %v7397 = vpack.c.bf16 %v7172, %v7172
    %v7398 = vpack.c.bf16 %v7175, %v7175
    %v7399 = vpack.c.bf16 %v7177, %v7177
    %v7400 = vpack.c.bf16 %v7180, %v7180
    %v7401 = vpack.c.bf16 %v7182, %v7182
    %v7402 = vpack.c.bf16 %v7185, %v7185
    %v7403 = vpack.c.bf16 %v7187, %v7187
    %v7404 = vpack.c.bf16 %v7190, %v7190
    %v7405 = vpack.c.bf16 %v7192, %v7192
    %v7406 = vpack.c.bf16 %v7195, %v7195
    %v7407 = vpack.c.bf16 %v7197, %v7197
    %v7408 = vpack.c.bf16 %v7200, %v7200
    %v7409 = vpack.c.bf16 %v7202, %v7202
    %v7410 = vpack.c.bf16 %v7205, %v7205
    %v7411 = vpack.c.bf16 %v7207, %v7207
    %v7412 = vpack.c.bf16 %v7210, %v7210
    %v7413 = vpack.c.bf16 %v7212, %v7212
    %v7414 = vpack.c.bf16 %v7215, %v7215
    %v7415 = vpack.c.bf16 %v7217, %v7217
    %v7416 = vpack.c.bf16 %v7220, %v7220
    %v7417 = vpack.c.bf16 %v7222, %v7222
    %v7418 = vpack.c.bf16 %v7225, %v7225
    %v7419 = vpack.c.bf16 %v7227, %v7227
    %v7420 = vpack.c.bf16 %v7230, %v7230
    %v7421 = vpack.c.bf16 %v7232, %v7232
    %v7422 = vpack.c.bf16 %v7235, %v7235
    %v7423 = vpack.c.bf16 %v7237, %v7237
    %v7424 = vpack.c.bf16 %v7240, %v7240
    %v7425 = vpack.c.bf16 %v7242, %v7242
    %v7426 = vpack.c.bf16 %v7245, %v7245
    %v7427 = vpack.c.bf16 %v7247, %v7247
    %v7428 = vpack.c.bf16 %v7250, %v7250
    %v7429 = vpack.c.bf16 %v7252, %v7252
    %v7430 = vpack.c.bf16 %v7255, %v7255
    %v7431 = vpack.c.bf16 %v7257, %v7257
    %v7432 = vpack.c.bf16 %v7260, %v7260
    %v7433 = vpack.c.bf16 %v7262, %v7262
    %v7434 = vpack.c.bf16 %v7265, %v7265
    %v7435 = vpack.c.bf16 %v7267, %v7267
    %v7436 = vpack.c.bf16 %v7270, %v7270
    %v7437 = vpack.c.bf16 %v7272, %v7272
    %v7438 = vpack.c.bf16 %v7275, %v7275
    %v7439 = vpack.c.bf16 %v7277, %v7277
    %v7440 = vpack.c.bf16 %v7280, %v7280
    %v7441 = vpack.c.bf16 %v7282, %v7282
    %v7442 = vpack.c.bf16 %v7285, %v7285
    %v7443 = vpack.c.bf16 %v7287, %v7287
    %v7444 = vpack.c.bf16 %v7290, %v7290
    %v7445 = vpack.c.bf16 %v7292, %v7292
    %v7446 = vpack.c.bf16 %v7295, %v7295
    %v7447 = vpack.c.bf16 %v7297, %v7297
    %v7448 = vpack.c.bf16 %v7300, %v7300
    %v7449 = vpack.c.bf16 %v7302, %v7302
    %v7450 = vpack.c.bf16 %v7305, %v7305
    %v7451 = vpack.c.bf16 %v7307, %v7307
    %v7452 = vpack.c.bf16 %v7310, %v7310
    %v7453 = vpack.c.bf16 %v7312, %v7312
    %v7454 = vpack.c.bf16 %v7315, %v7315
    %v7455 = vpack.c.bf16 %v7317, %v7317
    %v7456 = vpack.c.bf16 %v7320, %v7320
    %v7457 = vpack.c.bf16 %v7322, %v7322
    %v7458 = vpack.c.bf16 %v7325, %v7325
    %v7459 = vpack.c.bf16 %v7327, %v7327
    %v7460 = vpack.c.bf16 %v7330, %v7330
    %v7461 = vpack.c.bf16 %v7332, %v7332
    %7462 = vst [vmem:[#allocation3] sm:$0xf] %v7334
    %7463 = vst [vmem:[#allocation3 + $0x4] sm:$0xf] %v7335
    %7464 = vst [vmem:[#allocation3 + $0x8] sm:$0xf] %v7336
    %7465 = vst [vmem:[#allocation3 + $0xc] sm:$0xf] %v7337
    %7466 = vst [vmem:[#allocation3 + $0x10] sm:$0xf] %v7338
    %7467 = vst [vmem:[#allocation3 + $0x14] sm:$0xf] %v7339
    %7468 = vst [vmem:[#allocation3 + $0x18] sm:$0xf] %v7340
    %7469 = vst [vmem:[#allocation3 + $0x1c] sm:$0xf] %v7341
    %7470 = vst [vmem:[#allocation3 + $0x20] sm:$0xf] %v7342
    %7471 = vst [vmem:[#allocation3 + $0x24] sm:$0xf] %v7343
    %7472 = vst [vmem:[#allocation3 + $0x28] sm:$0xf] %v7344
    %7473 = vst [vmem:[#allocation3 + $0x2c] sm:$0xf] %v7345
    %7474 = vst [vmem:[#allocation3 + $0x30] sm:$0xf] %v7346
    %7475 = vst [vmem:[#allocation3 + $0x34] sm:$0xf] %v7347
    %7476 = vst [vmem:[#allocation3 + $0x38] sm:$0xf] %v7348
    %7477 = vst [vmem:[#allocation3 + $0x3c] sm:$0xf] %v7349
    %7478 = vst [vmem:[#allocation3 + $0x40] sm:$0xf] %v7350
    %7479 = vst [vmem:[#allocation3 + $0x44] sm:$0xf] %v7351
    %7480 = vst [vmem:[#allocation3 + $0x48] sm:$0xf] %v7352
    %7481 = vst [vmem:[#allocation3 + $0x4c] sm:$0xf] %v7353
    %7482 = vst [vmem:[#allocation3 + $0x50] sm:$0xf] %v7354
    %7483 = vst [vmem:[#allocation3 + $0x54] sm:$0xf] %v7355
    %7484 = vst [vmem:[#allocation3 + $0x58] sm:$0xf] %v7356
    %7485 = vst [vmem:[#allocation3 + $0x5c] sm:$0xf] %v7357
    %7486 = vst [vmem:[#allocation3 + $0x60] sm:$0xf] %v7358
    %7487 = vst [vmem:[#allocation3 + $0x64] sm:$0xf] %v7359
    %7488 = vst [vmem:[#allocation3 + $0x68] sm:$0xf] %v7360
    %7489 = vst [vmem:[#allocation3 + $0x6c] sm:$0xf] %v7361
    %7490 = vst [vmem:[#allocation3 + $0x70] sm:$0xf] %v7362
    %7491 = vst [vmem:[#allocation3 + $0x74] sm:$0xf] %v7363
    %7492 = vst [vmem:[#allocation3 + $0x78] sm:$0xf] %v7364
    %7493 = vst [vmem:[#allocation3 + $0x7c] sm:$0xf] %v7365
    %7494 = vst [vmem:[#allocation3 + $0x80] sm:$0xf] %v7366
    %7495 = vst [vmem:[#allocation3 + $0x84] sm:$0xf] %v7367
    %7496 = vst [vmem:[#allocation3 + $0x88] sm:$0xf] %v7368
    %7497 = vst [vmem:[#allocation3 + $0x8c] sm:$0xf] %v7369
    %7498 = vst [vmem:[#allocation3 + $0x90] sm:$0xf] %v7370
    %7499 = vst [vmem:[#allocation3 + $0x94] sm:$0xf] %v7371
    %7500 = vst [vmem:[#allocation3 + $0x98] sm:$0xf] %v7372
    %7501 = vst [vmem:[#allocation3 + $0x9c] sm:$0xf] %v7373
    %7502 = vst [vmem:[#allocation3 + $0xa0] sm:$0xf] %v7374
    %7503 = vst [vmem:[#allocation3 + $0xa4] sm:$0xf] %v7375
    %7504 = vst [vmem:[#allocation3 + $0xa8] sm:$0xf] %v7376
    %7505 = vst [vmem:[#allocation3 + $0xac] sm:$0xf] %v7377
    %7506 = vst [vmem:[#allocation3 + $0xb0] sm:$0xf] %v7378
    %7507 = vst [vmem:[#allocation3 + $0xb4] sm:$0xf] %v7379
    %7508 = vst [vmem:[#allocation3 + $0xb8] sm:$0xf] %v7380
    %7509 = vst [vmem:[#allocation3 + $0xbc] sm:$0xf] %v7381
    %7510 = vst [vmem:[#allocation3 + $0xc0] sm:$0xf] %v7382
    %7511 = vst [vmem:[#allocation3 + $0xc4] sm:$0xf] %v7383
    %7512 = vst [vmem:[#allocation3 + $0xc8] sm:$0xf] %v7384
    %7513 = vst [vmem:[#allocation3 + $0xcc] sm:$0xf] %v7385
    %7514 = vst [vmem:[#allocation3 + $0xd0] sm:$0xf] %v7386
    %7515 = vst [vmem:[#allocation3 + $0xd4] sm:$0xf] %v7387
    %7516 = vst [vmem:[#allocation3 + $0xd8] sm:$0xf] %v7388
    %7517 = vst [vmem:[#allocation3 + $0xdc] sm:$0xf] %v7389
    %7518 = vst [vmem:[#allocation3 + $0xe0] sm:$0xf] %v7390
    %7519 = vst [vmem:[#allocation3 + $0xe4] sm:$0xf] %v7391
    %7520 = vst [vmem:[#allocation3 + $0xe8] sm:$0xf] %v7392
    %7521 = vst [vmem:[#allocation3 + $0xec] sm:$0xf] %v7393
    %7522 = vst [vmem:[#allocation3 + $0xf0] sm:$0xf] %v7394
    %7523 = vst [vmem:[#allocation3 + $0xf4] sm:$0xf] %v7395
    %7524 = vst [vmem:[#allocation3 + $0xf8] sm:$0xf] %v7396
    %7525 = vst [vmem:[#allocation3 + $0xfc] sm:$0xf] %v7397
    %7526 = vst [vmem:[#allocation3 + $0x100] sm:$0xf] %v7398
    %7527 = vst [vmem:[#allocation3 + $0x104] sm:$0xf] %v7399
    %7528 = vst [vmem:[#allocation3 + $0x108] sm:$0xf] %v7400
    %7529 = vst [vmem:[#allocation3 + $0x10c] sm:$0xf] %v7401
    %7530 = vst [vmem:[#allocation3 + $0x110] sm:$0xf] %v7402
    %7531 = vst [vmem:[#allocation3 + $0x114] sm:$0xf] %v7403
    %7532 = vst [vmem:[#allocation3 + $0x118] sm:$0xf] %v7404
    %7533 = vst [vmem:[#allocation3 + $0x11c] sm:$0xf] %v7405
    %7534 = vst [vmem:[#allocation3 + $0x120] sm:$0xf] %v7406
    %7535 = vst [vmem:[#allocation3 + $0x124] sm:$0xf] %v7407
    %7536 = vst [vmem:[#allocation3 + $0x128] sm:$0xf] %v7408
    %7537 = vst [vmem:[#allocation3 + $0x12c] sm:$0xf] %v7409
    %7538 = vst [vmem:[#allocation3 + $0x130] sm:$0xf] %v7410
    %7539 = vst [vmem:[#allocation3 + $0x134] sm:$0xf] %v7411
    %7540 = vst [vmem:[#allocation3 + $0x138] sm:$0xf] %v7412
    %7541 = vst [vmem:[#allocation3 + $0x13c] sm:$0xf] %v7413
    %7542 = vst [vmem:[#allocation3 + $0x140] sm:$0xf] %v7414
    %7543 = vst [vmem:[#allocation3 + $0x144] sm:$0xf] %v7415
    %7544 = vst [vmem:[#allocation3 + $0x148] sm:$0xf] %v7416
    %7545 = vst [vmem:[#allocation3 + $0x14c] sm:$0xf] %v7417
    %7546 = vst [vmem:[#allocation3 + $0x150] sm:$0xf] %v7418
    %7547 = vst [vmem:[#allocation3 + $0x154] sm:$0xf] %v7419
    %7548 = vst [vmem:[#allocation3 + $0x158] sm:$0xf] %v7420
    %7549 = vst [vmem:[#allocation3 + $0x15c] sm:$0xf] %v7421
    %7550 = vst [vmem:[#allocation3 + $0x160] sm:$0xf] %v7422
    %7551 = vst [vmem:[#allocation3 + $0x164] sm:$0xf] %v7423
    %7552 = vst [vmem:[#allocation3 + $0x168] sm:$0xf] %v7424
    %7553 = vst [vmem:[#allocation3 + $0x16c] sm:$0xf] %v7425
    %7554 = vst [vmem:[#allocation3 + $0x170] sm:$0xf] %v7426
    %7555 = vst [vmem:[#allocation3 + $0x174] sm:$0xf] %v7427
    %7556 = vst [vmem:[#allocation3 + $0x178] sm:$0xf] %v7428
    %7557 = vst [vmem:[#allocation3 + $0x17c] sm:$0xf] %v7429
    %7558 = vst [vmem:[#allocation3 + $0x180] sm:$0xf] %v7430
    %7559 = vst [vmem:[#allocation3 + $0x184] sm:$0xf] %v7431
    %7560 = vst [vmem:[#allocation3 + $0x188] sm:$0xf] %v7432
    %7561 = vst [vmem:[#allocation3 + $0x18c] sm:$0xf] %v7433
    %7562 = vst [vmem:[#allocation3 + $0x190] sm:$0xf] %v7434
    %7563 = vst [vmem:[#allocation3 + $0x194] sm:$0xf] %v7435
    %7564 = vst [vmem:[#allocation3 + $0x198] sm:$0xf] %v7436
    %7565 = vst [vmem:[#allocation3 + $0x19c] sm:$0xf] %v7437
    %7566 = vst [vmem:[#allocation3 + $0x1a0] sm:$0xf] %v7438
    %7567 = vst [vmem:[#allocation3 + $0x1a4] sm:$0xf] %v7439
    %7568 = vst [vmem:[#allocation3 + $0x1a8] sm:$0xf] %v7440
    %7569 = vst [vmem:[#allocation3 + $0x1ac] sm:$0xf] %v7441
    %7570 = vst [vmem:[#allocation3 + $0x1b0] sm:$0xf] %v7442
    %7571 = vst [vmem:[#allocation3 + $0x1b4] sm:$0xf] %v7443
    %7572 = vst [vmem:[#allocation3 + $0x1b8] sm:$0xf] %v7444
    %7573 = vst [vmem:[#allocation3 + $0x1bc] sm:$0xf] %v7445
    %7574 = vst [vmem:[#allocation3 + $0x1c0] sm:$0xf] %v7446
    %7575 = vst [vmem:[#allocation3 + $0x1c4] sm:$0xf] %v7447
    %7576 = vst [vmem:[#allocation3 + $0x1c8] sm:$0xf] %v7448
    %7577 = vst [vmem:[#allocation3 + $0x1cc] sm:$0xf] %v7449
    %7578 = vst [vmem:[#allocation3 + $0x1d0] sm:$0xf] %v7450
    %7579 = vst [vmem:[#allocation3 + $0x1d4] sm:$0xf] %v7451
    %7580 = vst [vmem:[#allocation3 + $0x1d8] sm:$0xf] %v7452
    %7581 = vst [vmem:[#allocation3 + $0x1dc] sm:$0xf] %v7453
    %7582 = vst [vmem:[#allocation3 + $0x1e0] sm:$0xf] %v7454
    %7583 = vst [vmem:[#allocation3 + $0x1e4] sm:$0xf] %v7455
    %7584 = vst [vmem:[#allocation3 + $0x1e8] sm:$0xf] %v7456
    %7585 = vst [vmem:[#allocation3 + $0x1ec] sm:$0xf] %v7457
    %7586 = vst [vmem:[#allocation3 + $0x1f0] sm:$0xf] %v7458
    %7587 = vst [vmem:[#allocation3 + $0x1f4] sm:$0xf] %v7459
    %7588 = vst [vmem:[#allocation3 + $0x1f8] sm:$0xf] %v7460
    %7589 = vst [vmem:[#allocation3 + $0x1fc] sm:$0xf] %v7461
    %v7590 = vld [vmem:[#allocation3] sm:$0xf]
    %v7591 = vld [vmem:[#allocation3 + $0x4] sm:$0xf]
    %v7592 = vld [vmem:[#allocation3 + $0x8] sm:$0xf]
    %v7593 = vld [vmem:[#allocation3 + $0xc] sm:$0xf]
    %v7594 = vld [vmem:[#allocation3 + $0x10] sm:$0xf]
    %v7595 = vld [vmem:[#allocation3 + $0x14] sm:$0xf]
    %v7596 = vld [vmem:[#allocation3 + $0x18] sm:$0xf]
    %v7597 = vld [vmem:[#allocation3 + $0x1c] sm:$0xf]
    %7598 = vst [vmem:[#allocation4] sm:$0xf] %v7590
    %7599 = vst [vmem:[#allocation4 + $0x40] sm:$0xf] %v7591
    %7600 = vst [vmem:[#allocation4 + $0x80] sm:$0xf] %v7592
    %7601 = vst [vmem:[#allocation4 + $0xc0] sm:$0xf] %v7593
    %7602 = vst [vmem:[#allocation4 + $0x100] sm:$0xf] %v7594
    %7603 = vst [vmem:[#allocation4 + $0x140] sm:$0xf] %v7595
    %7604 = vst [vmem:[#allocation4 + $0x180] sm:$0xf] %v7596
    %7605 = vst [vmem:[#allocation4 + $0x1c0] sm:$0xf] %v7597
    %v7606 = vld [vmem:[#allocation3 + $0x20] sm:$0xf]
    %v7607 = vld [vmem:[#allocation3 + $0x24] sm:$0xf]
    %v7608 = vld [vmem:[#allocation3 + $0x28] sm:$0xf]
    %v7609 = vld [vmem:[#allocation3 + $0x2c] sm:$0xf]
    %v7610 = vld [vmem:[#allocation3 + $0x30] sm:$0xf]
    %v7611 = vld [vmem:[#allocation3 + $0x34] sm:$0xf]
    %v7612 = vld [vmem:[#allocation3 + $0x38] sm:$0xf]
    %v7613 = vld [vmem:[#allocation3 + $0x3c] sm:$0xf]
    %7614 = vst [vmem:[#allocation4 + $0x4] sm:$0xf] %v7606
    %7615 = vst [vmem:[#allocation4 + $0x44] sm:$0xf] %v7607
    %7616 = vst [vmem:[#allocation4 + $0x84] sm:$0xf] %v7608
    %7617 = vst [vmem:[#allocation4 + $0xc4] sm:$0xf] %v7609
    %7618 = vst [vmem:[#allocation4 + $0x104] sm:$0xf] %v7610
    %7619 = vst [vmem:[#allocation4 + $0x144] sm:$0xf] %v7611
    %7620 = vst [vmem:[#allocation4 + $0x184] sm:$0xf] %v7612
    %7621 = vst [vmem:[#allocation4 + $0x1c4] sm:$0xf] %v7613
    %v7622 = vld [vmem:[#allocation3 + $0x40] sm:$0xf]
    %v7623 = vld [vmem:[#allocation3 + $0x44] sm:$0xf]
    %v7624 = vld [vmem:[#allocation3 + $0x48] sm:$0xf]
    %v7625 = vld [vmem:[#allocation3 + $0x4c] sm:$0xf]
    %v7626 = vld [vmem:[#allocation3 + $0x50] sm:$0xf]
    %v7627 = vld [vmem:[#allocation3 + $0x54] sm:$0xf]
    %v7628 = vld [vmem:[#allocation3 + $0x58] sm:$0xf]
    %v7629 = vld [vmem:[#allocation3 + $0x5c] sm:$0xf]
    %7630 = vst [vmem:[#allocation4 + $0x8] sm:$0xf] %v7622
    %7631 = vst [vmem:[#allocation4 + $0x48] sm:$0xf] %v7623
    %7632 = vst [vmem:[#allocation4 + $0x88] sm:$0xf] %v7624
    %7633 = vst [vmem:[#allocation4 + $0xc8] sm:$0xf] %v7625
    %7634 = vst [vmem:[#allocation4 + $0x108] sm:$0xf] %v7626
    %7635 = vst [vmem:[#allocation4 + $0x148] sm:$0xf] %v7627
    %7636 = vst [vmem:[#allocation4 + $0x188] sm:$0xf] %v7628
    %7637 = vst [vmem:[#allocation4 + $0x1c8] sm:$0xf] %v7629
    %v7638 = vld [vmem:[#allocation3 + $0x60] sm:$0xf]
    %v7639 = vld [vmem:[#allocation3 + $0x64] sm:$0xf]
    %v7640 = vld [vmem:[#allocation3 + $0x68] sm:$0xf]
    %v7641 = vld [vmem:[#allocation3 + $0x6c] sm:$0xf]
    %v7642 = vld [vmem:[#allocation3 + $0x70] sm:$0xf]
    %v7643 = vld [vmem:[#allocation3 + $0x74] sm:$0xf]
    %v7644 = vld [vmem:[#allocation3 + $0x78] sm:$0xf]
    %v7645 = vld [vmem:[#allocation3 + $0x7c] sm:$0xf]
    %7646 = vst [vmem:[#allocation4 + $0xc] sm:$0xf] %v7638
    %7647 = vst [vmem:[#allocation4 + $0x4c] sm:$0xf] %v7639
    %7648 = vst [vmem:[#allocation4 + $0x8c] sm:$0xf] %v7640
    %7649 = vst [vmem:[#allocation4 + $0xcc] sm:$0xf] %v7641
    %7650 = vst [vmem:[#allocation4 + $0x10c] sm:$0xf] %v7642
    %7651 = vst [vmem:[#allocation4 + $0x14c] sm:$0xf] %v7643
    %7652 = vst [vmem:[#allocation4 + $0x18c] sm:$0xf] %v7644
    %7653 = vst [vmem:[#allocation4 + $0x1cc] sm:$0xf] %v7645
    %v7654 = vld [vmem:[#allocation3 + $0x80] sm:$0xf]
    %v7655 = vld [vmem:[#allocation3 + $0x84] sm:$0xf]
    %v7656 = vld [vmem:[#allocation3 + $0x88] sm:$0xf]
    %v7657 = vld [vmem:[#allocation3 + $0x8c] sm:$0xf]
    %v7658 = vld [vmem:[#allocation3 + $0x90] sm:$0xf]
    %v7659 = vld [vmem:[#allocation3 + $0x94] sm:$0xf]
    %v7660 = vld [vmem:[#allocation3 + $0x98] sm:$0xf]
    %v7661 = vld [vmem:[#allocation3 + $0x9c] sm:$0xf]
    %7662 = vst [vmem:[#allocation4 + $0x10] sm:$0xf] %v7654
    %7663 = vst [vmem:[#allocation4 + $0x50] sm:$0xf] %v7655
    %7664 = vst [vmem:[#allocation4 + $0x90] sm:$0xf] %v7656
    %7665 = vst [vmem:[#allocation4 + $0xd0] sm:$0xf] %v7657
    %7666 = vst [vmem:[#allocation4 + $0x110] sm:$0xf] %v7658
    %7667 = vst [vmem:[#allocation4 + $0x150] sm:$0xf] %v7659
    %7668 = vst [vmem:[#allocation4 + $0x190] sm:$0xf] %v7660
    %7669 = vst [vmem:[#allocation4 + $0x1d0] sm:$0xf] %v7661
    %v7670 = vld [vmem:[#allocation3 + $0xa0] sm:$0xf]
    %v7671 = vld [vmem:[#allocation3 + $0xa4] sm:$0xf]
    %v7672 = vld [vmem:[#allocation3 + $0xa8] sm:$0xf]
    %v7673 = vld [vmem:[#allocation3 + $0xac] sm:$0xf]
    %v7674 = vld [vmem:[#allocation3 + $0xb0] sm:$0xf]
    %v7675 = vld [vmem:[#allocation3 + $0xb4] sm:$0xf]
    %v7676 = vld [vmem:[#allocation3 + $0xb8] sm:$0xf]
    %v7677 = vld [vmem:[#allocation3 + $0xbc] sm:$0xf]
    %7678 = vst [vmem:[#allocation4 + $0x14] sm:$0xf] %v7670
    %7679 = vst [vmem:[#allocation4 + $0x54] sm:$0xf] %v7671
    %7680 = vst [vmem:[#allocation4 + $0x94] sm:$0xf] %v7672
    %7681 = vst [vmem:[#allocation4 + $0xd4] sm:$0xf] %v7673
    %7682 = vst [vmem:[#allocation4 + $0x114] sm:$0xf] %v7674
    %7683 = vst [vmem:[#allocation4 + $0x154] sm:$0xf] %v7675
    %7684 = vst [vmem:[#allocation4 + $0x194] sm:$0xf] %v7676
    %7685 = vst [vmem:[#allocation4 + $0x1d4] sm:$0xf] %v7677
    %v7686 = vld [vmem:[#allocation3 + $0xc0] sm:$0xf]
    %v7687 = vld [vmem:[#allocation3 + $0xc4] sm:$0xf]
    %v7688 = vld [vmem:[#allocation3 + $0xc8] sm:$0xf]
    %v7689 = vld [vmem:[#allocation3 + $0xcc] sm:$0xf]
    %v7690 = vld [vmem:[#allocation3 + $0xd0] sm:$0xf]
    %v7691 = vld [vmem:[#allocation3 + $0xd4] sm:$0xf]
    %v7692 = vld [vmem:[#allocation3 + $0xd8] sm:$0xf]
    %v7693 = vld [vmem:[#allocation3 + $0xdc] sm:$0xf]
    %7694 = vst [vmem:[#allocation4 + $0x18] sm:$0xf] %v7686
    %7695 = vst [vmem:[#allocation4 + $0x58] sm:$0xf] %v7687
    %7696 = vst [vmem:[#allocation4 + $0x98] sm:$0xf] %v7688
    %7697 = vst [vmem:[#allocation4 + $0xd8] sm:$0xf] %v7689
    %7698 = vst [vmem:[#allocation4 + $0x118] sm:$0xf] %v7690
    %7699 = vst [vmem:[#allocation4 + $0x158] sm:$0xf] %v7691
    %7700 = vst [vmem:[#allocation4 + $0x198] sm:$0xf] %v7692
    %7701 = vst [vmem:[#allocation4 + $0x1d8] sm:$0xf] %v7693
    %v7702 = vld [vmem:[#allocation3 + $0xe0] sm:$0xf]
    %v7703 = vld [vmem:[#allocation3 + $0xe4] sm:$0xf]
    %v7704 = vld [vmem:[#allocation3 + $0xe8] sm:$0xf]
    %v7705 = vld [vmem:[#allocation3 + $0xec] sm:$0xf]
    %v7706 = vld [vmem:[#allocation3 + $0xf0] sm:$0xf]
    %v7707 = vld [vmem:[#allocation3 + $0xf4] sm:$0xf]
    %v7708 = vld [vmem:[#allocation3 + $0xf8] sm:$0xf]
    %v7709 = vld [vmem:[#allocation3 + $0xfc] sm:$0xf]
    %7710 = vst [vmem:[#allocation4 + $0x1c] sm:$0xf] %v7702
    %7711 = vst [vmem:[#allocation4 + $0x5c] sm:$0xf] %v7703
    %7712 = vst [vmem:[#allocation4 + $0x9c] sm:$0xf] %v7704
    %7713 = vst [vmem:[#allocation4 + $0xdc] sm:$0xf] %v7705
    %7714 = vst [vmem:[#allocation4 + $0x11c] sm:$0xf] %v7706
    %7715 = vst [vmem:[#allocation4 + $0x15c] sm:$0xf] %v7707
    %7716 = vst [vmem:[#allocation4 + $0x19c] sm:$0xf] %v7708
    %7717 = vst [vmem:[#allocation4 + $0x1dc] sm:$0xf] %v7709
    %v7718 = vld [vmem:[#allocation3 + $0x100] sm:$0xf]
    %v7719 = vld [vmem:[#allocation3 + $0x104] sm:$0xf]
    %v7720 = vld [vmem:[#allocation3 + $0x108] sm:$0xf]
    %v7721 = vld [vmem:[#allocation3 + $0x10c] sm:$0xf]
    %v7722 = vld [vmem:[#allocation3 + $0x110] sm:$0xf]
    %v7723 = vld [vmem:[#allocation3 + $0x114] sm:$0xf]
    %v7724 = vld [vmem:[#allocation3 + $0x118] sm:$0xf]
    %v7725 = vld [vmem:[#allocation3 + $0x11c] sm:$0xf]
    %7726 = vst [vmem:[#allocation4 + $0x20] sm:$0xf] %v7718
    %7727 = vst [vmem:[#allocation4 + $0x60] sm:$0xf] %v7719
    %7728 = vst [vmem:[#allocation4 + $0xa0] sm:$0xf] %v7720
    %7729 = vst [vmem:[#allocation4 + $0xe0] sm:$0xf] %v7721
    %7730 = vst [vmem:[#allocation4 + $0x120] sm:$0xf] %v7722
    %7731 = vst [vmem:[#allocation4 + $0x160] sm:$0xf] %v7723
    %7732 = vst [vmem:[#allocation4 + $0x1a0] sm:$0xf] %v7724
    %7733 = vst [vmem:[#allocation4 + $0x1e0] sm:$0xf] %v7725
    %v7734 = vld [vmem:[#allocation3 + $0x120] sm:$0xf]
    %v7735 = vld [vmem:[#allocation3 + $0x124] sm:$0xf]
    %v7736 = vld [vmem:[#allocation3 + $0x128] sm:$0xf]
    %v7737 = vld [vmem:[#allocation3 + $0x12c] sm:$0xf]
    %v7738 = vld [vmem:[#allocation3 + $0x130] sm:$0xf]
    %v7739 = vld [vmem:[#allocation3 + $0x134] sm:$0xf]
    %v7740 = vld [vmem:[#allocation3 + $0x138] sm:$0xf]
    %v7741 = vld [vmem:[#allocation3 + $0x13c] sm:$0xf]
    %7742 = vst [vmem:[#allocation4 + $0x24] sm:$0xf] %v7734
    %7743 = vst [vmem:[#allocation4 + $0x64] sm:$0xf] %v7735
    %7744 = vst [vmem:[#allocation4 + $0xa4] sm:$0xf] %v7736
    %7745 = vst [vmem:[#allocation4 + $0xe4] sm:$0xf] %v7737
    %7746 = vst [vmem:[#allocation4 + $0x124] sm:$0xf] %v7738
    %7747 = vst [vmem:[#allocation4 + $0x164] sm:$0xf] %v7739
    %7748 = vst [vmem:[#allocation4 + $0x1a4] sm:$0xf] %v7740
    %7749 = vst [vmem:[#allocation4 + $0x1e4] sm:$0xf] %v7741
    %v7750 = vld [vmem:[#allocation3 + $0x140] sm:$0xf]
    %v7751 = vld [vmem:[#allocation3 + $0x144] sm:$0xf]
    %v7752 = vld [vmem:[#allocation3 + $0x148] sm:$0xf]
    %v7753 = vld [vmem:[#allocation3 + $0x14c] sm:$0xf]
    %v7754 = vld [vmem:[#allocation3 + $0x150] sm:$0xf]
    %v7755 = vld [vmem:[#allocation3 + $0x154] sm:$0xf]
    %v7756 = vld [vmem:[#allocation3 + $0x158] sm:$0xf]
    %v7757 = vld [vmem:[#allocation3 + $0x15c] sm:$0xf]
    %7758 = vst [vmem:[#allocation4 + $0x28] sm:$0xf] %v7750
    %7759 = vst [vmem:[#allocation4 + $0x68] sm:$0xf] %v7751
    %7760 = vst [vmem:[#allocation4 + $0xa8] sm:$0xf] %v7752
    %7761 = vst [vmem:[#allocation4 + $0xe8] sm:$0xf] %v7753
    %7762 = vst [vmem:[#allocation4 + $0x128] sm:$0xf] %v7754
    %7763 = vst [vmem:[#allocation4 + $0x168] sm:$0xf] %v7755
    %7764 = vst [vmem:[#allocation4 + $0x1a8] sm:$0xf] %v7756
    %7765 = vst [vmem:[#allocation4 + $0x1e8] sm:$0xf] %v7757
    %v7766 = vld [vmem:[#allocation3 + $0x160] sm:$0xf]
    %v7767 = vld [vmem:[#allocation3 + $0x164] sm:$0xf]
    %v7768 = vld [vmem:[#allocation3 + $0x168] sm:$0xf]
    %v7769 = vld [vmem:[#allocation3 + $0x16c] sm:$0xf]
    %v7770 = vld [vmem:[#allocation3 + $0x170] sm:$0xf]
    %v7771 = vld [vmem:[#allocation3 + $0x174] sm:$0xf]
    %v7772 = vld [vmem:[#allocation3 + $0x178] sm:$0xf]
    %v7773 = vld [vmem:[#allocation3 + $0x17c] sm:$0xf]
    %7774 = vst [vmem:[#allocation4 + $0x2c] sm:$0xf] %v7766
    %7775 = vst [vmem:[#allocation4 + $0x6c] sm:$0xf] %v7767
    %7776 = vst [vmem:[#allocation4 + $0xac] sm:$0xf] %v7768
    %7777 = vst [vmem:[#allocation4 + $0xec] sm:$0xf] %v7769
    %7778 = vst [vmem:[#allocation4 + $0x12c] sm:$0xf] %v7770
    %7779 = vst [vmem:[#allocation4 + $0x16c] sm:$0xf] %v7771
    %7780 = vst [vmem:[#allocation4 + $0x1ac] sm:$0xf] %v7772
    %7781 = vst [vmem:[#allocation4 + $0x1ec] sm:$0xf] %v7773
    %v7782 = vld [vmem:[#allocation3 + $0x180] sm:$0xf]
    %v7783 = vld [vmem:[#allocation3 + $0x184] sm:$0xf]
    %v7784 = vld [vmem:[#allocation3 + $0x188] sm:$0xf]
    %v7785 = vld [vmem:[#allocation3 + $0x18c] sm:$0xf]
    %v7786 = vld [vmem:[#allocation3 + $0x190] sm:$0xf]
    %v7787 = vld [vmem:[#allocation3 + $0x194] sm:$0xf]
    %v7788 = vld [vmem:[#allocation3 + $0x198] sm:$0xf]
    %v7789 = vld [vmem:[#allocation3 + $0x19c] sm:$0xf]
    %7790 = vst [vmem:[#allocation4 + $0x30] sm:$0xf] %v7782
    %7791 = vst [vmem:[#allocation4 + $0x70] sm:$0xf] %v7783
    %7792 = vst [vmem:[#allocation4 + $0xb0] sm:$0xf] %v7784
    %7793 = vst [vmem:[#allocation4 + $0xf0] sm:$0xf] %v7785
    %7794 = vst [vmem:[#allocation4 + $0x130] sm:$0xf] %v7786
    %7795 = vst [vmem:[#allocation4 + $0x170] sm:$0xf] %v7787
    %7796 = vst [vmem:[#allocation4 + $0x1b0] sm:$0xf] %v7788
    %7797 = vst [vmem:[#allocation4 + $0x1f0] sm:$0xf] %v7789
    %v7798 = vld [vmem:[#allocation3 + $0x1a0] sm:$0xf]
    %v7799 = vld [vmem:[#allocation3 + $0x1a4] sm:$0xf]
    %v7800 = vld [vmem:[#allocation3 + $0x1a8] sm:$0xf]
    %v7801 = vld [vmem:[#allocation3 + $0x1ac] sm:$0xf]
    %v7802 = vld [vmem:[#allocation3 + $0x1b0] sm:$0xf]
    %v7803 = vld [vmem:[#allocation3 + $0x1b4] sm:$0xf]
    %v7804 = vld [vmem:[#allocation3 + $0x1b8] sm:$0xf]
    %v7805 = vld [vmem:[#allocation3 + $0x1bc] sm:$0xf]
    %7806 = vst [vmem:[#allocation4 + $0x34] sm:$0xf] %v7798
    %7807 = vst [vmem:[#allocation4 + $0x74] sm:$0xf] %v7799
    %7808 = vst [vmem:[#allocation4 + $0xb4] sm:$0xf] %v7800
    %7809 = vst [vmem:[#allocation4 + $0xf4] sm:$0xf] %v7801
    %7810 = vst [vmem:[#allocation4 + $0x134] sm:$0xf] %v7802
    %7811 = vst [vmem:[#allocation4 + $0x174] sm:$0xf] %v7803
    %7812 = vst [vmem:[#allocation4 + $0x1b4] sm:$0xf] %v7804
    %7813 = vst [vmem:[#allocation4 + $0x1f4] sm:$0xf] %v7805
    %v7814 = vld [vmem:[#allocation3 + $0x1c0] sm:$0xf]
    %v7815 = vld [vmem:[#allocation3 + $0x1c4] sm:$0xf]
    %v7816 = vld [vmem:[#allocation3 + $0x1c8] sm:$0xf]
    %v7817 = vld [vmem:[#allocation3 + $0x1cc] sm:$0xf]
    %v7818 = vld [vmem:[#allocation3 + $0x1d0] sm:$0xf]
    %v7819 = vld [vmem:[#allocation3 + $0x1d4] sm:$0xf]
    %v7820 = vld [vmem:[#allocation3 + $0x1d8] sm:$0xf]
    %v7821 = vld [vmem:[#allocation3 + $0x1dc] sm:$0xf]
    %7822 = vst [vmem:[#allocation4 + $0x38] sm:$0xf] %v7814
    %7823 = vst [vmem:[#allocation4 + $0x78] sm:$0xf] %v7815
    %7824 = vst [vmem:[#allocation4 + $0xb8] sm:$0xf] %v7816
    %7825 = vst [vmem:[#allocation4 + $0xf8] sm:$0xf] %v7817
    %7826 = vst [vmem:[#allocation4 + $0x138] sm:$0xf] %v7818
    %7827 = vst [vmem:[#allocation4 + $0x178] sm:$0xf] %v7819
    %7828 = vst [vmem:[#allocation4 + $0x1b8] sm:$0xf] %v7820
    %7829 = vst [vmem:[#allocation4 + $0x1f8] sm:$0xf] %v7821
    %v7830 = vld [vmem:[#allocation3 + $0x1e0] sm:$0xf]
    %v7831 = vld [vmem:[#allocation3 + $0x1e4] sm:$0xf]
    %v7832 = vld [vmem:[#allocation3 + $0x1e8] sm:$0xf]
    %v7833 = vld [vmem:[#allocation3 + $0x1ec] sm:$0xf]
    %v7834 = vld [vmem:[#allocation3 + $0x1f0] sm:$0xf]
    %v7835 = vld [vmem:[#allocation3 + $0x1f4] sm:$0xf]
    %v7836 = vld [vmem:[#allocation3 + $0x1f8] sm:$0xf]
    %v7837 = vld [vmem:[#allocation3 + $0x1fc] sm:$0xf]
    %7838 = vst [vmem:[#allocation4 + $0x3c] sm:$0xf] %v7830
    %7839 = vst [vmem:[#allocation4 + $0x7c] sm:$0xf] %v7831
    %7840 = vst [vmem:[#allocation4 + $0xbc] sm:$0xf] %v7832
    %7841 = vst [vmem:[#allocation4 + $0xfc] sm:$0xf] %v7833
    %7842 = vst [vmem:[#allocation4 + $0x13c] sm:$0xf] %v7834
    %7843 = vst [vmem:[#allocation4 + $0x17c] sm:$0xf] %v7835
    %7844 = vst [vmem:[#allocation4 + $0x1bc] sm:$0xf] %v7836
    %7845 = vst [vmem:[#allocation4 + $0x1fc] sm:$0xf] %v7837
    %v7846 = vld [vmem:[#allocation4] sm:$0xff]
    %v7847 = vld [vmem:[#allocation4 + $0x8] sm:$0xff]
    %v7848 = vld [vmem:[#allocation4 + $0x10] sm:$0xff]
    %v7849 = vld [vmem:[#allocation4 + $0x18] sm:$0xff]
    %v7850 = vld [vmem:[#allocation4 + $0x20] sm:$0xff]
    %v7851 = vld [vmem:[#allocation4 + $0x28] sm:$0xff]
    %v7852 = vld [vmem:[#allocation4 + $0x30] sm:$0xff]
    %v7853 = vld [vmem:[#allocation4 + $0x38] sm:$0xff]
    %v7854 = vld [vmem:[#allocation4 + $0x40] sm:$0xff]
    %v7855 = vld [vmem:[#allocation4 + $0x48] sm:$0xff]
    %v7856 = vld [vmem:[#allocation4 + $0x50] sm:$0xff]
    %v7857 = vld [vmem:[#allocation4 + $0x58] sm:$0xff]
    %v7858 = vld [vmem:[#allocation4 + $0x60] sm:$0xff]
    %v7859 = vld [vmem:[#allocation4 + $0x68] sm:$0xff]
    %v7860 = vld [vmem:[#allocation4 + $0x70] sm:$0xff]
    %v7861 = vld [vmem:[#allocation4 + $0x78] sm:$0xff]
    %v7862 = vld [vmem:[#allocation4 + $0x80] sm:$0xff]
    %v7863 = vld [vmem:[#allocation4 + $0x88] sm:$0xff]
    %v7864 = vld [vmem:[#allocation4 + $0x90] sm:$0xff]
    %v7865 = vld [vmem:[#allocation4 + $0x98] sm:$0xff]
    %v7866 = vld [vmem:[#allocation4 + $0xa0] sm:$0xff]
    %v7867 = vld [vmem:[#allocation4 + $0xa8] sm:$0xff]
    %v7868 = vld [vmem:[#allocation4 + $0xb0] sm:$0xff]
    %v7869 = vld [vmem:[#allocation4 + $0xb8] sm:$0xff]
    %v7870 = vld [vmem:[#allocation4 + $0xc0] sm:$0xff]
    %v7871 = vld [vmem:[#allocation4 + $0xc8] sm:$0xff]
    %v7872 = vld [vmem:[#allocation4 + $0xd0] sm:$0xff]
    %v7873 = vld [vmem:[#allocation4 + $0xd8] sm:$0xff]
    %v7874 = vld [vmem:[#allocation4 + $0xe0] sm:$0xff]
    %v7875 = vld [vmem:[#allocation4 + $0xe8] sm:$0xff]
    %v7876 = vld [vmem:[#allocation4 + $0xf0] sm:$0xff]
    %v7877 = vld [vmem:[#allocation4 + $0xf8] sm:$0xff]
    %v7878 = vld [vmem:[#allocation4 + $0x100] sm:$0xff]
    %v7879 = vld [vmem:[#allocation4 + $0x108] sm:$0xff]
    %v7880 = vld [vmem:[#allocation4 + $0x110] sm:$0xff]
    %v7881 = vld [vmem:[#allocation4 + $0x118] sm:$0xff]
    %v7882 = vld [vmem:[#allocation4 + $0x120] sm:$0xff]
    %v7883 = vld [vmem:[#allocation4 + $0x128] sm:$0xff]
    %v7884 = vld [vmem:[#allocation4 + $0x130] sm:$0xff]
    %v7885 = vld [vmem:[#allocation4 + $0x138] sm:$0xff]
    %v7886 = vld [vmem:[#allocation4 + $0x140] sm:$0xff]
    %v7887 = vld [vmem:[#allocation4 + $0x148] sm:$0xff]
    %v7888 = vld [vmem:[#allocation4 + $0x150] sm:$0xff]
    %v7889 = vld [vmem:[#allocation4 + $0x158] sm:$0xff]
    %v7890 = vld [vmem:[#allocation4 + $0x160] sm:$0xff]
    %v7891 = vld [vmem:[#allocation4 + $0x168] sm:$0xff]
    %v7892 = vld [vmem:[#allocation4 + $0x170] sm:$0xff]
    %v7893 = vld [vmem:[#allocation4 + $0x178] sm:$0xff]
    %v7894 = vld [vmem:[#allocation4 + $0x180] sm:$0xff]
    %v7895 = vld [vmem:[#allocation4 + $0x188] sm:$0xff]
    %v7896 = vld [vmem:[#allocation4 + $0x190] sm:$0xff]
    %v7897 = vld [vmem:[#allocation4 + $0x198] sm:$0xff]
    %v7898 = vld [vmem:[#allocation4 + $0x1a0] sm:$0xff]
    %v7899 = vld [vmem:[#allocation4 + $0x1a8] sm:$0xff]
    %v7900 = vld [vmem:[#allocation4 + $0x1b0] sm:$0xff]
    %v7901 = vld [vmem:[#allocation4 + $0x1b8] sm:$0xff]
    %v7902 = vld [vmem:[#allocation4 + $0x1c0] sm:$0xff]
    %v7903 = vld [vmem:[#allocation4 + $0x1c8] sm:$0xff]
    %v7904 = vld [vmem:[#allocation4 + $0x1d0] sm:$0xff]
    %v7905 = vld [vmem:[#allocation4 + $0x1d8] sm:$0xff]
    %v7906 = vld [vmem:[#allocation4 + $0x1e0] sm:$0xff]
    %v7907 = vld [vmem:[#allocation4 + $0x1e8] sm:$0xff]
    %v7908 = vld [vmem:[#allocation4 + $0x1f0] sm:$0xff]
    %v7909 = vld [vmem:[#allocation4 + $0x1f8] sm:$0xff]
    %v7974 = vunpack.c.l.b16 %v7846
    %v7975 = vunpack.c.h.b16 %v7846
    %v7976 = vunpack.c.l.b16 %v7847
    %v7977 = vunpack.c.h.b16 %v7847
    %v7978 = vunpack.c.l.b16 %v7848
    %v7979 = vunpack.c.h.b16 %v7848
    %v7980 = vunpack.c.l.b16 %v7849
    %v7981 = vunpack.c.h.b16 %v7849
    %v7982 = vunpack.c.l.b16 %v7850
    %v7983 = vunpack.c.h.b16 %v7850
    %v7984 = vunpack.c.l.b16 %v7851
    %v7985 = vunpack.c.h.b16 %v7851
    %v7986 = vunpack.c.l.b16 %v7852
    %v7987 = vunpack.c.h.b16 %v7852
    %v7988 = vunpack.c.l.b16 %v7853
    %v7989 = vunpack.c.h.b16 %v7853
    %v7990 = vunpack.c.l.b16 %v7854
    %v7991 = vunpack.c.h.b16 %v7854
    %v7992 = vunpack.c.l.b16 %v7855
    %v7993 = vunpack.c.h.b16 %v7855
    %v7994 = vunpack.c.l.b16 %v7856
    %v7995 = vunpack.c.h.b16 %v7856
    %v7996 = vunpack.c.l.b16 %v7857
    %v7997 = vunpack.c.h.b16 %v7857
    %v7998 = vunpack.c.l.b16 %v7858
    %v7999 = vunpack.c.h.b16 %v7858
    %v8000 = vunpack.c.l.b16 %v7859
    %v8001 = vunpack.c.h.b16 %v7859
    %v8002 = vunpack.c.l.b16 %v7860
    %v8003 = vunpack.c.h.b16 %v7860
    %v8004 = vunpack.c.l.b16 %v7861
    %v8005 = vunpack.c.h.b16 %v7861
    %v8006 = vunpack.c.l.b16 %v7862
    %v8007 = vunpack.c.h.b16 %v7862
    %v8008 = vunpack.c.l.b16 %v7863
    %v8009 = vunpack.c.h.b16 %v7863
    %v8010 = vunpack.c.l.b16 %v7864
    %v8011 = vunpack.c.h.b16 %v7864
    %v8012 = vunpack.c.l.b16 %v7865
    %v8013 = vunpack.c.h.b16 %v7865
    %v8014 = vunpack.c.l.b16 %v7866
    %v8015 = vunpack.c.h.b16 %v7866
    %v8016 = vunpack.c.l.b16 %v7867
    %v8017 = vunpack.c.h.b16 %v7867
    %v8018 = vunpack.c.l.b16 %v7868
    %v8019 = vunpack.c.h.b16 %v7868
    %v8020 = vunpack.c.l.b16 %v7869
    %v8021 = vunpack.c.h.b16 %v7869
    %v8022 = vunpack.c.l.b16 %v7870
    %v8023 = vunpack.c.h.b16 %v7870
    %v8024 = vunpack.c.l.b16 %v7871
    %v8025 = vunpack.c.h.b16 %v7871
    %v8026 = vunpack.c.l.b16 %v7872
    %v8027 = vunpack.c.h.b16 %v7872
    %v8028 = vunpack.c.l.b16 %v7873
    %v8029 = vunpack.c.h.b16 %v7873
    %v8030 = vunpack.c.l.b16 %v7874
    %v8031 = vunpack.c.h.b16 %v7874
    %v8032 = vunpack.c.l.b16 %v7875
    %v8033 = vunpack.c.h.b16 %v7875
    %v8034 = vunpack.c.l.b16 %v7876
    %v8035 = vunpack.c.h.b16 %v7876
    %v8036 = vunpack.c.l.b16 %v7877
    %v8037 = vunpack.c.h.b16 %v7877
    %v8038 = vunpack.c.l.b16 %v7878
    %v8039 = vunpack.c.h.b16 %v7878
    %v8040 = vunpack.c.l.b16 %v7879
    %v8041 = vunpack.c.h.b16 %v7879
    %v8042 = vunpack.c.l.b16 %v7880
    %v8043 = vunpack.c.h.b16 %v7880
    %v8044 = vunpack.c.l.b16 %v7881
    %v8045 = vunpack.c.h.b16 %v7881
    %v8046 = vunpack.c.l.b16 %v7882
    %v8047 = vunpack.c.h.b16 %v7882
    %v8048 = vunpack.c.l.b16 %v7883
    %v8049 = vunpack.c.h.b16 %v7883
    %v8050 = vunpack.c.l.b16 %v7884
    %v8051 = vunpack.c.h.b16 %v7884
    %v8052 = vunpack.c.l.b16 %v7885
    %v8053 = vunpack.c.h.b16 %v7885
    %v8054 = vunpack.c.l.b16 %v7886
    %v8055 = vunpack.c.h.b16 %v7886
    %v8056 = vunpack.c.l.b16 %v7887
    %v8057 = vunpack.c.h.b16 %v7887
    %v8058 = vunpack.c.l.b16 %v7888
    %v8059 = vunpack.c.h.b16 %v7888
    %v8060 = vunpack.c.l.b16 %v7889
    %v8061 = vunpack.c.h.b16 %v7889
    %v8062 = vunpack.c.l.b16 %v7890
    %v8063 = vunpack.c.h.b16 %v7890
    %v8064 = vunpack.c.l.b16 %v7891
    %v8065 = vunpack.c.h.b16 %v7891
    %v8066 = vunpack.c.l.b16 %v7892
    %v8067 = vunpack.c.h.b16 %v7892
    %v8068 = vunpack.c.l.b16 %v7893
    %v8069 = vunpack.c.h.b16 %v7893
    %v8070 = vunpack.c.l.b16 %v7894
    %v8071 = vunpack.c.h.b16 %v7894
    %v8072 = vunpack.c.l.b16 %v7895
    %v8073 = vunpack.c.h.b16 %v7895
    %v8074 = vunpack.c.l.b16 %v7896
    %v8075 = vunpack.c.h.b16 %v7896
    %v8076 = vunpack.c.l.b16 %v7897
    %v8077 = vunpack.c.h.b16 %v7897
    %v8078 = vunpack.c.l.b16 %v7898
    %v8079 = vunpack.c.h.b16 %v7898
    %v8080 = vunpack.c.l.b16 %v7899
    %v8081 = vunpack.c.h.b16 %v7899
    %v8082 = vunpack.c.l.b16 %v7900
    %v8083 = vunpack.c.h.b16 %v7900
    %v8084 = vunpack.c.l.b16 %v7901
    %v8085 = vunpack.c.h.b16 %v7901
    %v8086 = vunpack.c.l.b16 %v7902
    %v8087 = vunpack.c.h.b16 %v7902
    %v8088 = vunpack.c.l.b16 %v7903
    %v8089 = vunpack.c.h.b16 %v7903
    %v8090 = vunpack.c.l.b16 %v7904
    %v8091 = vunpack.c.h.b16 %v7904
    %v8092 = vunpack.c.l.b16 %v7905
    %v8093 = vunpack.c.h.b16 %v7905
    %v8094 = vunpack.c.l.b16 %v7906
    %v8095 = vunpack.c.h.b16 %v7906
    %v8096 = vunpack.c.l.b16 %v7907
    %v8097 = vunpack.c.h.b16 %v7907
    %v8098 = vunpack.c.l.b16 %v7908
    %v8099 = vunpack.c.h.b16 %v7908
    %v8100 = vunpack.c.l.b16 %v7909
    %v8101 = vunpack.c.h.b16 %v7909
    %v8102 = vpack.c.b16 %v7990, %v7974
    %v8103 = vpack.c.b16 %v7991, %v7975
    %v8104 = vpack.c.b16 %v7992, %v7976
    %v8105 = vpack.c.b16 %v7993, %v7977
    %v8106 = vpack.c.b16 %v7994, %v7978
    %v8107 = vpack.c.b16 %v7995, %v7979
    %v8108 = vpack.c.b16 %v7996, %v7980
    %v8109 = vpack.c.b16 %v7997, %v7981
    %v8110 = vpack.c.b16 %v7998, %v7982
    %v8111 = vpack.c.b16 %v7999, %v7983
    %v8112 = vpack.c.b16 %v8000, %v7984
    %v8113 = vpack.c.b16 %v8001, %v7985
    %v8114 = vpack.c.b16 %v8002, %v7986
    %v8115 = vpack.c.b16 %v8003, %v7987
    %v8116 = vpack.c.b16 %v8004, %v7988
    %v8117 = vpack.c.b16 %v8005, %v7989
    %v8118 = vpack.c.b16 %v8022, %v8006
    %v8119 = vpack.c.b16 %v8023, %v8007
    %v8120 = vpack.c.b16 %v8024, %v8008
    %v8121 = vpack.c.b16 %v8025, %v8009
    %v8122 = vpack.c.b16 %v8026, %v8010
    %v8123 = vpack.c.b16 %v8027, %v8011
    %v8124 = vpack.c.b16 %v8028, %v8012
    %v8125 = vpack.c.b16 %v8029, %v8013
    %v8126 = vpack.c.b16 %v8030, %v8014
    %v8127 = vpack.c.b16 %v8031, %v8015
    %v8128 = vpack.c.b16 %v8032, %v8016
    %v8129 = vpack.c.b16 %v8033, %v8017
    %v8130 = vpack.c.b16 %v8034, %v8018
    %v8131 = vpack.c.b16 %v8035, %v8019
    %v8132 = vpack.c.b16 %v8036, %v8020
    %v8133 = vpack.c.b16 %v8037, %v8021
    %v8134 = vpack.c.b16 %v8054, %v8038
    %v8135 = vpack.c.b16 %v8055, %v8039
    %v8136 = vpack.c.b16 %v8056, %v8040
    %v8137 = vpack.c.b16 %v8057, %v8041
    %v8138 = vpack.c.b16 %v8058, %v8042
    %v8139 = vpack.c.b16 %v8059, %v8043
    %v8140 = vpack.c.b16 %v8060, %v8044
    %v8141 = vpack.c.b16 %v8061, %v8045
    %v8142 = vpack.c.b16 %v8062, %v8046
    %v8143 = vpack.c.b16 %v8063, %v8047
    %v8144 = vpack.c.b16 %v8064, %v8048
    %v8145 = vpack.c.b16 %v8065, %v8049
    %v8146 = vpack.c.b16 %v8066, %v8050
    %v8147 = vpack.c.b16 %v8067, %v8051
    %v8148 = vpack.c.b16 %v8068, %v8052
    %v8149 = vpack.c.b16 %v8069, %v8053
    %v8150 = vpack.c.b16 %v8086, %v8070
    %v8151 = vpack.c.b16 %v8087, %v8071
    %v8152 = vpack.c.b16 %v8088, %v8072
    %v8153 = vpack.c.b16 %v8089, %v8073
    %v8154 = vpack.c.b16 %v8090, %v8074
    %v8155 = vpack.c.b16 %v8091, %v8075
    %v8156 = vpack.c.b16 %v8092, %v8076
    %v8157 = vpack.c.b16 %v8093, %v8077
    %v8158 = vpack.c.b16 %v8094, %v8078
    %v8159 = vpack.c.b16 %v8095, %v8079
    %v8160 = vpack.c.b16 %v8096, %v8080
    %v8161 = vpack.c.b16 %v8097, %v8081
    %v8162 = vpack.c.b16 %v8098, %v8082
    %v8163 = vpack.c.b16 %v8099, %v8083
    %v8164 = vpack.c.b16 %v8100, %v8084
    %v8165 = vpack.c.b16 %v8101, %v8085
    %8230 = vmatpush.bf16.msra.mxu0 %v4243
    %8231 = vmatpush.bf16.msra.mxu0 %v4242
    %8232 = vmatpush.bf16.msra.mxu0 %v4241
    %8233 = vmatpush.bf16.msra.mxu0 %v4240
    %8234 = vmatpush.bf16.msra.mxu0 %v4239
    %8235 = vmatpush.bf16.msra.mxu0 %v4238
    %8236 = vmatpush.bf16.msra.mxu0 %v4237
    %8237 = vmatpush.bf16.msra.mxu0 %v4236
    %8238 = vmatmul.bf16.gmra.mxu0 %v8102
    %v8239 = vpop.f32.mrf.mxu0
    %v8240 = vadd.f32 %v3402, %v8239
    %v8241 = vpop.f32.mrf.mxu0
    %v8242 = vadd.f32 %v3402, %v8241
    %8243 = vmatmul.bf16.gmra.mxu0 %v8118
    %v8244 = vpop.f32.mrf.mxu0
    %v8245 = vadd.f32 %v3402, %v8244
    %v8246 = vpop.f32.mrf.mxu0
    %v8247 = vadd.f32 %v3402, %v8246
    %8248 = vmatmul.bf16.gmra.mxu0 %v8134
    %v8249 = vpop.f32.mrf.mxu0
    %v8250 = vadd.f32 %v3402, %v8249
    %v8251 = vpop.f32.mrf.mxu0
    %v8252 = vadd.f32 %v3402, %v8251
    %8253 = vmatmul.bf16.gmra.mxu0 %v8150
    %v8254 = vpop.f32.mrf.mxu0
    %v8255 = vadd.f32 %v3402, %v8254
    %v8256 = vpop.f32.mrf.mxu0
    %v8257 = vadd.f32 %v3402, %v8256
    %8258 = vdwg.mxu0
    %8259 = vmatpush.bf16.msra.mxu0 %v4251
    %8260 = vmatpush.bf16.msra.mxu0 %v4250
    %8261 = vmatpush.bf16.msra.mxu0 %v4249
    %8262 = vmatpush.bf16.msra.mxu0 %v4248
    %8263 = vmatpush.bf16.msra.mxu0 %v4247
    %8264 = vmatpush.bf16.msra.mxu0 %v4246
    %8265 = vmatpush.bf16.msra.mxu0 %v4245
    %8266 = vmatpush.bf16.msra.mxu0 %v4244
    %8267 = vmatmul.bf16.gmra.mxu0 %v8103
    %v8268 = vpop.f32.mrf.mxu0
    %v8269 = vadd.f32 %v8240, %v8268
    %v8270 = vpop.f32.mrf.mxu0
    %v8271 = vadd.f32 %v8242, %v8270
    %8272 = vmatmul.bf16.gmra.mxu0 %v8119
    %v8273 = vpop.f32.mrf.mxu0
    %v8274 = vadd.f32 %v8245, %v8273
    %v8275 = vpop.f32.mrf.mxu0
    %v8276 = vadd.f32 %v8247, %v8275
    %8277 = vmatmul.bf16.gmra.mxu0 %v8135
    %v8278 = vpop.f32.mrf.mxu0
    %v8279 = vadd.f32 %v8250, %v8278
    %v8280 = vpop.f32.mrf.mxu0
    %v8281 = vadd.f32 %v8252, %v8280
    %8282 = vmatmul.bf16.gmra.mxu0 %v8151
    %v8283 = vpop.f32.mrf.mxu0
    %v8284 = vadd.f32 %v8255, %v8283
    %v8285 = vpop.f32.mrf.mxu0
    %v8286 = vadd.f32 %v8257, %v8285
    %8287 = vdwg.mxu0
    %8288 = vmatpush.bf16.msra.mxu0 %v4259
    %8289 = vmatpush.bf16.msra.mxu0 %v4258
    %8290 = vmatpush.bf16.msra.mxu0 %v4257
    %8291 = vmatpush.bf16.msra.mxu0 %v4256
    %8292 = vmatpush.bf16.msra.mxu0 %v4255
    %8293 = vmatpush.bf16.msra.mxu0 %v4254
    %8294 = vmatpush.bf16.msra.mxu0 %v4253
    %8295 = vmatpush.bf16.msra.mxu0 %v4252
    %8296 = vmatmul.bf16.gmra.mxu0 %v8104
    %v8297 = vpop.f32.mrf.mxu0
    %v8298 = vadd.f32 %v8269, %v8297
    %v8299 = vpop.f32.mrf.mxu0
    %v8300 = vadd.f32 %v8271, %v8299
    %8301 = vmatmul.bf16.gmra.mxu0 %v8120
    %v8302 = vpop.f32.mrf.mxu0
    %v8303 = vadd.f32 %v8274, %v8302
    %v8304 = vpop.f32.mrf.mxu0
    %v8305 = vadd.f32 %v8276, %v8304
    %8306 = vmatmul.bf16.gmra.mxu0 %v8136
    %v8307 = vpop.f32.mrf.mxu0
    %v8308 = vadd.f32 %v8279, %v8307
    %v8309 = vpop.f32.mrf.mxu0
    %v8310 = vadd.f32 %v8281, %v8309
    %8311 = vmatmul.bf16.gmra.mxu0 %v8152
    %v8312 = vpop.f32.mrf.mxu0
    %v8313 = vadd.f32 %v8284, %v8312
    %v8314 = vpop.f32.mrf.mxu0
    %v8315 = vadd.f32 %v8286, %v8314
    %8316 = vdwg.mxu0
    %8317 = vmatpush.bf16.msra.mxu0 %v4267
    %8318 = vmatpush.bf16.msra.mxu0 %v4266
    %8319 = vmatpush.bf16.msra.mxu0 %v4265
    %8320 = vmatpush.bf16.msra.mxu0 %v4264
    %8321 = vmatpush.bf16.msra.mxu0 %v4263
    %8322 = vmatpush.bf16.msra.mxu0 %v4262
    %8323 = vmatpush.bf16.msra.mxu0 %v4261
    %8324 = vmatpush.bf16.msra.mxu0 %v4260
    %8325 = vmatmul.bf16.gmra.mxu0 %v8105
    %v8326 = vpop.f32.mrf.mxu0
    %v8327 = vadd.f32 %v8298, %v8326
    %v8328 = vpop.f32.mrf.mxu0
    %v8329 = vadd.f32 %v8300, %v8328
    %8330 = vmatmul.bf16.gmra.mxu0 %v8121
    %v8331 = vpop.f32.mrf.mxu0
    %v8332 = vadd.f32 %v8303, %v8331
    %v8333 = vpop.f32.mrf.mxu0
    %v8334 = vadd.f32 %v8305, %v8333
    %8335 = vmatmul.bf16.gmra.mxu0 %v8137
    %v8336 = vpop.f32.mrf.mxu0
    %v8337 = vadd.f32 %v8308, %v8336
    %v8338 = vpop.f32.mrf.mxu0
    %v8339 = vadd.f32 %v8310, %v8338
    %8340 = vmatmul.bf16.gmra.mxu0 %v8153
    %v8341 = vpop.f32.mrf.mxu0
    %v8342 = vadd.f32 %v8313, %v8341
    %v8343 = vpop.f32.mrf.mxu0
    %v8344 = vadd.f32 %v8315, %v8343
    %8345 = vdwg.mxu0
    %8346 = vmatpush.bf16.msra.mxu0 %v4275
    %8347 = vmatpush.bf16.msra.mxu0 %v4274
    %8348 = vmatpush.bf16.msra.mxu0 %v4273
    %8349 = vmatpush.bf16.msra.mxu0 %v4272
    %8350 = vmatpush.bf16.msra.mxu0 %v4271
    %8351 = vmatpush.bf16.msra.mxu0 %v4270
    %8352 = vmatpush.bf16.msra.mxu0 %v4269
    %8353 = vmatpush.bf16.msra.mxu0 %v4268
    %8354 = vmatmul.bf16.gmra.mxu0 %v8106
    %v8355 = vpop.f32.mrf.mxu0
    %v8356 = vadd.f32 %v8327, %v8355
    %v8357 = vpop.f32.mrf.mxu0
    %v8358 = vadd.f32 %v8329, %v8357
    %8359 = vmatmul.bf16.gmra.mxu0 %v8122
    %v8360 = vpop.f32.mrf.mxu0
    %v8361 = vadd.f32 %v8332, %v8360
    %v8362 = vpop.f32.mrf.mxu0
    %v8363 = vadd.f32 %v8334, %v8362
    %8364 = vmatmul.bf16.gmra.mxu0 %v8138
    %v8365 = vpop.f32.mrf.mxu0
    %v8366 = vadd.f32 %v8337, %v8365
    %v8367 = vpop.f32.mrf.mxu0
    %v8368 = vadd.f32 %v8339, %v8367
    %8369 = vmatmul.bf16.gmra.mxu0 %v8154
    %v8370 = vpop.f32.mrf.mxu0
    %v8371 = vadd.f32 %v8342, %v8370
    %v8372 = vpop.f32.mrf.mxu0
    %v8373 = vadd.f32 %v8344, %v8372
    %8374 = vdwg.mxu0
    %8375 = vmatpush.bf16.msra.mxu0 %v4283
    %8376 = vmatpush.bf16.msra.mxu0 %v4282
    %8377 = vmatpush.bf16.msra.mxu0 %v4281
    %8378 = vmatpush.bf16.msra.mxu0 %v4280
    %8379 = vmatpush.bf16.msra.mxu0 %v4279
    %8380 = vmatpush.bf16.msra.mxu0 %v4278
    %8381 = vmatpush.bf16.msra.mxu0 %v4277
    %8382 = vmatpush.bf16.msra.mxu0 %v4276
    %8383 = vmatmul.bf16.gmra.mxu0 %v8107
    %v8384 = vpop.f32.mrf.mxu0
    %v8385 = vadd.f32 %v8356, %v8384
    %v8386 = vpop.f32.mrf.mxu0
    %v8387 = vadd.f32 %v8358, %v8386
    %8388 = vmatmul.bf16.gmra.mxu0 %v8123
    %v8389 = vpop.f32.mrf.mxu0
    %v8390 = vadd.f32 %v8361, %v8389
    %v8391 = vpop.f32.mrf.mxu0
    %v8392 = vadd.f32 %v8363, %v8391
    %8393 = vmatmul.bf16.gmra.mxu0 %v8139
    %v8394 = vpop.f32.mrf.mxu0
    %v8395 = vadd.f32 %v8366, %v8394
    %v8396 = vpop.f32.mrf.mxu0
    %v8397 = vadd.f32 %v8368, %v8396
    %8398 = vmatmul.bf16.gmra.mxu0 %v8155
    %v8399 = vpop.f32.mrf.mxu0
    %v8400 = vadd.f32 %v8371, %v8399
    %v8401 = vpop.f32.mrf.mxu0
    %v8402 = vadd.f32 %v8373, %v8401
    %8403 = vdwg.mxu0
    %8404 = vmatpush.bf16.msra.mxu0 %v4291
    %8405 = vmatpush.bf16.msra.mxu0 %v4290
    %8406 = vmatpush.bf16.msra.mxu0 %v4289
    %8407 = vmatpush.bf16.msra.mxu0 %v4288
    %8408 = vmatpush.bf16.msra.mxu0 %v4287
    %8409 = vmatpush.bf16.msra.mxu0 %v4286
    %8410 = vmatpush.bf16.msra.mxu0 %v4285
    %8411 = vmatpush.bf16.msra.mxu0 %v4284
    %8412 = vmatmul.bf16.gmra.mxu0 %v8108
    %v8413 = vpop.f32.mrf.mxu0
    %v8414 = vadd.f32 %v8385, %v8413
    %v8415 = vpop.f32.mrf.mxu0
    %v8416 = vadd.f32 %v8387, %v8415
    %8417 = vmatmul.bf16.gmra.mxu0 %v8124
    %v8418 = vpop.f32.mrf.mxu0
    %v8419 = vadd.f32 %v8390, %v8418
    %v8420 = vpop.f32.mrf.mxu0
    %v8421 = vadd.f32 %v8392, %v8420
    %8422 = vmatmul.bf16.gmra.mxu0 %v8140
    %v8423 = vpop.f32.mrf.mxu0
    %v8424 = vadd.f32 %v8395, %v8423
    %v8425 = vpop.f32.mrf.mxu0
    %v8426 = vadd.f32 %v8397, %v8425
    %8427 = vmatmul.bf16.gmra.mxu0 %v8156
    %v8428 = vpop.f32.mrf.mxu0
    %v8429 = vadd.f32 %v8400, %v8428
    %v8430 = vpop.f32.mrf.mxu0
    %v8431 = vadd.f32 %v8402, %v8430
    %8432 = vdwg.mxu0
    %8433 = vmatpush.bf16.msra.mxu0 %v4299
    %8434 = vmatpush.bf16.msra.mxu0 %v4298
    %8435 = vmatpush.bf16.msra.mxu0 %v4297
    %8436 = vmatpush.bf16.msra.mxu0 %v4296
    %8437 = vmatpush.bf16.msra.mxu0 %v4295
    %8438 = vmatpush.bf16.msra.mxu0 %v4294
    %8439 = vmatpush.bf16.msra.mxu0 %v4293
    %8440 = vmatpush.bf16.msra.mxu0 %v4292
    %8441 = vmatmul.bf16.gmra.mxu0 %v8109
    %v8442 = vpop.f32.mrf.mxu0
    %v8443 = vadd.f32 %v8414, %v8442
    %v8444 = vpop.f32.mrf.mxu0
    %v8445 = vadd.f32 %v8416, %v8444
    %8446 = vmatmul.bf16.gmra.mxu0 %v8125
    %v8447 = vpop.f32.mrf.mxu0
    %v8448 = vadd.f32 %v8419, %v8447
    %v8449 = vpop.f32.mrf.mxu0
    %v8450 = vadd.f32 %v8421, %v8449
    %8451 = vmatmul.bf16.gmra.mxu0 %v8141
    %v8452 = vpop.f32.mrf.mxu0
    %v8453 = vadd.f32 %v8424, %v8452
    %v8454 = vpop.f32.mrf.mxu0
    %v8455 = vadd.f32 %v8426, %v8454
    %8456 = vmatmul.bf16.gmra.mxu0 %v8157
    %v8457 = vpop.f32.mrf.mxu0
    %v8458 = vadd.f32 %v8429, %v8457
    %v8459 = vpop.f32.mrf.mxu0
    %v8460 = vadd.f32 %v8431, %v8459
    %8461 = vdwg.mxu0
    %8462 = vmatpush.bf16.msra.mxu0 %v4307
    %8463 = vmatpush.bf16.msra.mxu0 %v4306
    %8464 = vmatpush.bf16.msra.mxu0 %v4305
    %8465 = vmatpush.bf16.msra.mxu0 %v4304
    %8466 = vmatpush.bf16.msra.mxu0 %v4303
    %8467 = vmatpush.bf16.msra.mxu0 %v4302
    %8468 = vmatpush.bf16.msra.mxu0 %v4301
    %8469 = vmatpush.bf16.msra.mxu0 %v4300
    %8470 = vmatmul.bf16.gmra.mxu0 %v8110
    %v8471 = vpop.f32.mrf.mxu0
    %v8472 = vadd.f32 %v8443, %v8471
    %v8473 = vpop.f32.mrf.mxu0
    %v8474 = vadd.f32 %v8445, %v8473
    %8475 = vmatmul.bf16.gmra.mxu0 %v8126
    %v8476 = vpop.f32.mrf.mxu0
    %v8477 = vadd.f32 %v8448, %v8476
    %v8478 = vpop.f32.mrf.mxu0
    %v8479 = vadd.f32 %v8450, %v8478
    %8480 = vmatmul.bf16.gmra.mxu0 %v8142
    %v8481 = vpop.f32.mrf.mxu0
    %v8482 = vadd.f32 %v8453, %v8481
    %v8483 = vpop.f32.mrf.mxu0
    %v8484 = vadd.f32 %v8455, %v8483
    %8485 = vmatmul.bf16.gmra.mxu0 %v8158
    %v8486 = vpop.f32.mrf.mxu0
    %v8487 = vadd.f32 %v8458, %v8486
    %v8488 = vpop.f32.mrf.mxu0
    %v8489 = vadd.f32 %v8460, %v8488
    %8490 = vdwg.mxu0
    %8491 = vmatpush.bf16.msra.mxu0 %v4315
    %8492 = vmatpush.bf16.msra.mxu0 %v4314
    %8493 = vmatpush.bf16.msra.mxu0 %v4313
    %8494 = vmatpush.bf16.msra.mxu0 %v4312
    %8495 = vmatpush.bf16.msra.mxu0 %v4311
    %8496 = vmatpush.bf16.msra.mxu0 %v4310
    %8497 = vmatpush.bf16.msra.mxu0 %v4309
    %8498 = vmatpush.bf16.msra.mxu0 %v4308
    %8499 = vmatmul.bf16.gmra.mxu0 %v8111
    %v8500 = vpop.f32.mrf.mxu0
    %v8501 = vadd.f32 %v8472, %v8500
    %v8502 = vpop.f32.mrf.mxu0
    %v8503 = vadd.f32 %v8474, %v8502
    %8504 = vmatmul.bf16.gmra.mxu0 %v8127
    %v8505 = vpop.f32.mrf.mxu0
    %v8506 = vadd.f32 %v8477, %v8505
    %v8507 = vpop.f32.mrf.mxu0
    %v8508 = vadd.f32 %v8479, %v8507
    %8509 = vmatmul.bf16.gmra.mxu0 %v8143
    %v8510 = vpop.f32.mrf.mxu0
    %v8511 = vadd.f32 %v8482, %v8510
    %v8512 = vpop.f32.mrf.mxu0
    %v8513 = vadd.f32 %v8484, %v8512
    %8514 = vmatmul.bf16.gmra.mxu0 %v8159
    %v8515 = vpop.f32.mrf.mxu0
    %v8516 = vadd.f32 %v8487, %v8515
    %v8517 = vpop.f32.mrf.mxu0
    %v8518 = vadd.f32 %v8489, %v8517
    %8519 = vdwg.mxu0
    %8520 = vmatpush.bf16.msra.mxu0 %v4323
    %8521 = vmatpush.bf16.msra.mxu0 %v4322
    %8522 = vmatpush.bf16.msra.mxu0 %v4321
    %8523 = vmatpush.bf16.msra.mxu0 %v4320
    %8524 = vmatpush.bf16.msra.mxu0 %v4319
    %8525 = vmatpush.bf16.msra.mxu0 %v4318
    %8526 = vmatpush.bf16.msra.mxu0 %v4317
    %8527 = vmatpush.bf16.msra.mxu0 %v4316
    %8528 = vmatmul.bf16.gmra.mxu0 %v8112
    %v8529 = vpop.f32.mrf.mxu0
    %v8530 = vadd.f32 %v8501, %v8529
    %v8531 = vpop.f32.mrf.mxu0
    %v8532 = vadd.f32 %v8503, %v8531
    %8533 = vmatmul.bf16.gmra.mxu0 %v8128
    %v8534 = vpop.f32.mrf.mxu0
    %v8535 = vadd.f32 %v8506, %v8534
    %v8536 = vpop.f32.mrf.mxu0
    %v8537 = vadd.f32 %v8508, %v8536
    %8538 = vmatmul.bf16.gmra.mxu0 %v8144
    %v8539 = vpop.f32.mrf.mxu0
    %v8540 = vadd.f32 %v8511, %v8539
    %v8541 = vpop.f32.mrf.mxu0
    %v8542 = vadd.f32 %v8513, %v8541
    %8543 = vmatmul.bf16.gmra.mxu0 %v8160
    %v8544 = vpop.f32.mrf.mxu0
    %v8545 = vadd.f32 %v8516, %v8544
    %v8546 = vpop.f32.mrf.mxu0
    %v8547 = vadd.f32 %v8518, %v8546
    %8548 = vdwg.mxu0
    %8549 = vmatpush.bf16.msra.mxu0 %v4331
    %8550 = vmatpush.bf16.msra.mxu0 %v4330
    %8551 = vmatpush.bf16.msra.mxu0 %v4329
    %8552 = vmatpush.bf16.msra.mxu0 %v4328
    %8553 = vmatpush.bf16.msra.mxu0 %v4327
    %8554 = vmatpush.bf16.msra.mxu0 %v4326
    %8555 = vmatpush.bf16.msra.mxu0 %v4325
    %8556 = vmatpush.bf16.msra.mxu0 %v4324
    %8557 = vmatmul.bf16.gmra.mxu0 %v8113
    %v8558 = vpop.f32.mrf.mxu0
    %v8559 = vadd.f32 %v8530, %v8558
    %v8560 = vpop.f32.mrf.mxu0
    %v8561 = vadd.f32 %v8532, %v8560
    %8562 = vmatmul.bf16.gmra.mxu0 %v8129
    %v8563 = vpop.f32.mrf.mxu0
    %v8564 = vadd.f32 %v8535, %v8563
    %v8565 = vpop.f32.mrf.mxu0
    %v8566 = vadd.f32 %v8537, %v8565
    %8567 = vmatmul.bf16.gmra.mxu0 %v8145
    %v8568 = vpop.f32.mrf.mxu0
    %v8569 = vadd.f32 %v8540, %v8568
    %v8570 = vpop.f32.mrf.mxu0
    %v8571 = vadd.f32 %v8542, %v8570
    %8572 = vmatmul.bf16.gmra.mxu0 %v8161
    %v8573 = vpop.f32.mrf.mxu0
    %v8574 = vadd.f32 %v8545, %v8573
    %v8575 = vpop.f32.mrf.mxu0
    %v8576 = vadd.f32 %v8547, %v8575
    %8577 = vdwg.mxu0
    %8578 = vmatpush.bf16.msra.mxu0 %v4339
    %8579 = vmatpush.bf16.msra.mxu0 %v4338
    %8580 = vmatpush.bf16.msra.mxu0 %v4337
    %8581 = vmatpush.bf16.msra.mxu0 %v4336
    %8582 = vmatpush.bf16.msra.mxu0 %v4335
    %8583 = vmatpush.bf16.msra.mxu0 %v4334
    %8584 = vmatpush.bf16.msra.mxu0 %v4333
    %8585 = vmatpush.bf16.msra.mxu0 %v4332
    %8586 = vmatmul.bf16.gmra.mxu0 %v8114
    %v8587 = vpop.f32.mrf.mxu0
    %v8588 = vadd.f32 %v8559, %v8587
    %v8589 = vpop.f32.mrf.mxu0
    %v8590 = vadd.f32 %v8561, %v8589
    %8591 = vmatmul.bf16.gmra.mxu0 %v8130
    %v8592 = vpop.f32.mrf.mxu0
    %v8593 = vadd.f32 %v8564, %v8592
    %v8594 = vpop.f32.mrf.mxu0
    %v8595 = vadd.f32 %v8566, %v8594
    %8596 = vmatmul.bf16.gmra.mxu0 %v8146
    %v8597 = vpop.f32.mrf.mxu0
    %v8598 = vadd.f32 %v8569, %v8597
    %v8599 = vpop.f32.mrf.mxu0
    %v8600 = vadd.f32 %v8571, %v8599
    %8601 = vmatmul.bf16.gmra.mxu0 %v8162
    %v8602 = vpop.f32.mrf.mxu0
    %v8603 = vadd.f32 %v8574, %v8602
    %v8604 = vpop.f32.mrf.mxu0
    %v8605 = vadd.f32 %v8576, %v8604
    %8606 = vdwg.mxu0
    %8607 = vmatpush.bf16.msra.mxu0 %v4347
    %8608 = vmatpush.bf16.msra.mxu0 %v4346
    %8609 = vmatpush.bf16.msra.mxu0 %v4345
    %8610 = vmatpush.bf16.msra.mxu0 %v4344
    %8611 = vmatpush.bf16.msra.mxu0 %v4343
    %8612 = vmatpush.bf16.msra.mxu0 %v4342
    %8613 = vmatpush.bf16.msra.mxu0 %v4341
    %8614 = vmatpush.bf16.msra.mxu0 %v4340
    %8615 = vmatmul.bf16.gmra.mxu0 %v8115
    %v8616 = vpop.f32.mrf.mxu0
    %v8617 = vadd.f32 %v8588, %v8616
    %v8618 = vpop.f32.mrf.mxu0
    %v8619 = vadd.f32 %v8590, %v8618
    %8620 = vmatmul.bf16.gmra.mxu0 %v8131
    %v8621 = vpop.f32.mrf.mxu0
    %v8622 = vadd.f32 %v8593, %v8621
    %v8623 = vpop.f32.mrf.mxu0
    %v8624 = vadd.f32 %v8595, %v8623
    %8625 = vmatmul.bf16.gmra.mxu0 %v8147
    %v8626 = vpop.f32.mrf.mxu0
    %v8627 = vadd.f32 %v8598, %v8626
    %v8628 = vpop.f32.mrf.mxu0
    %v8629 = vadd.f32 %v8600, %v8628
    %8630 = vmatmul.bf16.gmra.mxu0 %v8163
    %v8631 = vpop.f32.mrf.mxu0
    %v8632 = vadd.f32 %v8603, %v8631
    %v8633 = vpop.f32.mrf.mxu0
    %v8634 = vadd.f32 %v8605, %v8633
    %8635 = vdwg.mxu0
    %8636 = vmatpush.bf16.msra.mxu0 %v4355
    %8637 = vmatpush.bf16.msra.mxu0 %v4354
    %8638 = vmatpush.bf16.msra.mxu0 %v4353
    %8639 = vmatpush.bf16.msra.mxu0 %v4352
    %8640 = vmatpush.bf16.msra.mxu0 %v4351
    %8641 = vmatpush.bf16.msra.mxu0 %v4350
    %8642 = vmatpush.bf16.msra.mxu0 %v4349
    %8643 = vmatpush.bf16.msra.mxu0 %v4348
    %8644 = vmatmul.bf16.gmra.mxu0 %v8116
    %v8645 = vpop.f32.mrf.mxu0
    %v8646 = vadd.f32 %v8617, %v8645
    %v8647 = vpop.f32.mrf.mxu0
    %v8648 = vadd.f32 %v8619, %v8647
    %8649 = vmatmul.bf16.gmra.mxu0 %v8132
    %v8650 = vpop.f32.mrf.mxu0
    %v8651 = vadd.f32 %v8622, %v8650
    %v8652 = vpop.f32.mrf.mxu0
    %v8653 = vadd.f32 %v8624, %v8652
    %8654 = vmatmul.bf16.gmra.mxu0 %v8148
    %v8655 = vpop.f32.mrf.mxu0
    %v8656 = vadd.f32 %v8627, %v8655
    %v8657 = vpop.f32.mrf.mxu0
    %v8658 = vadd.f32 %v8629, %v8657
    %8659 = vmatmul.bf16.gmra.mxu0 %v8164
    %v8660 = vpop.f32.mrf.mxu0
    %v8661 = vadd.f32 %v8632, %v8660
    %v8662 = vpop.f32.mrf.mxu0
    %v8663 = vadd.f32 %v8634, %v8662
    %8664 = vdwg.mxu0
    %8665 = vmatpush.bf16.msra.mxu0 %v4363
    %8666 = vmatpush.bf16.msra.mxu0 %v4362
    %8667 = vmatpush.bf16.msra.mxu0 %v4361
    %8668 = vmatpush.bf16.msra.mxu0 %v4360
    %8669 = vmatpush.bf16.msra.mxu0 %v4359
    %8670 = vmatpush.bf16.msra.mxu0 %v4358
    %8671 = vmatpush.bf16.msra.mxu0 %v4357
    %8672 = vmatpush.bf16.msra.mxu0 %v4356
    %8673 = vmatmul.bf16.gmra.mxu0 %v8117
    %v8674 = vpop.f32.mrf.mxu0
    %v8675 = vadd.f32 %v8646, %v8674
    %v8676 = vpop.f32.mrf.mxu0
    %v8677 = vadd.f32 %v8648, %v8676
    %8678 = vmatmul.bf16.gmra.mxu0 %v8133
    %v8679 = vpop.f32.mrf.mxu0
    %v8680 = vadd.f32 %v8651, %v8679
    %v8681 = vpop.f32.mrf.mxu0
    %v8682 = vadd.f32 %v8653, %v8681
    %8683 = vmatmul.bf16.gmra.mxu0 %v8149
    %v8684 = vpop.f32.mrf.mxu0
    %v8685 = vadd.f32 %v8656, %v8684
    %v8686 = vpop.f32.mrf.mxu0
    %v8687 = vadd.f32 %v8658, %v8686
    %8688 = vmatmul.bf16.gmra.mxu0 %v8165
    %v8689 = vpop.f32.mrf.mxu0
    %v8690 = vadd.f32 %v8661, %v8689
    %v8691 = vpop.f32.mrf.mxu0
    %v8692 = vadd.f32 %v8663, %v8691
    %8693 = vdwg.mxu0
    %v8694 = vmax.f32 %v8675, 0.0
    %v8695 = vmax.f32 %v8677, 0.0
    %v8696 = vmax.f32 %v8680, 0.0
    %v8697 = vmax.f32 %v8682, 0.0
    %v8698 = vmax.f32 %v8685, 0.0
    %v8699 = vmax.f32 %v8687, 0.0
    %v8700 = vmax.f32 %v8690, 0.0
    %v8701 = vmax.f32 %v8692, 0.0
    %v8702 = vpack.c.bf16 %v8694, %v8694
    %v8703 = vpack.c.bf16 %v8695, %v8695
    %v8704 = vpack.c.bf16 %v8696, %v8696
    %v8705 = vpack.c.bf16 %v8697, %v8697
    %v8706 = vpack.c.bf16 %v8698, %v8698
    %v8707 = vpack.c.bf16 %v8699, %v8699
    %v8708 = vpack.c.bf16 %v8700, %v8700
    %v8709 = vpack.c.bf16 %v8701, %v8701
    %v8718 = vunpack.c.l.b16 %v8702
    %v8719 = vunpack.c.l.b16 %v8703
    %v8720 = vunpack.c.l.b16 %v8704
    %v8721 = vunpack.c.l.b16 %v8705
    %v8722 = vunpack.c.l.b16 %v8706
    %v8723 = vunpack.c.l.b16 %v8707
    %v8724 = vunpack.c.l.b16 %v8708
    %v8725 = vunpack.c.l.b16 %v8709
    %v8726 = vpack.c.b16 %v8719, %v8718
    %v8727 = vpack.c.b16 %v8721, %v8720
    %v8728 = vpack.c.b16 %v8723, %v8722
    %v8729 = vpack.c.b16 %v8725, %v8724
    %8734 = vmatpush.bf16.msra.mxu0 0
    %8735 = vmatpush.bf16.msra.mxu0 0
    %8736 = vmatpush.bf16.msra.mxu0 0
    %8737 = vmatpush.bf16.msra.mxu0 0
    %8738 = vmatpush.bf16.msra.mxu0 %v8729
    %8739 = vmatpush.bf16.msra.mxu0 %v8728
    %8740 = vmatpush.bf16.msra.mxu0 %v8727
    %8741 = vmatpush.bf16.msra.mxu0 %v8726
    %8742 = vmatmul.bf16.gmra.mxu0 %v5060
    %v8743 = vpop.f32.mrf.mxu0
    %v8744 = vadd.f32 0.0, %v8743
    %v8745 = vpop.f32.mrf.mxu0
    %v8746 = vadd.f32 0.0, %v8745
    %8747 = vmatmul.bf16.gmra.mxu0 %v5061
    %v8748 = vpop.f32.mrf.mxu0
    %v8749 = vadd.f32 0.0, %v8748
    %v8750 = vpop.f32.mrf.mxu0
    %v8751 = vadd.f32 0.0, %v8750
    %8752 = vmatmul.bf16.gmra.mxu0 %v5062
    %v8753 = vpop.f32.mrf.mxu0
    %v8754 = vadd.f32 0.0, %v8753
    %v8755 = vpop.f32.mrf.mxu0
    %v8756 = vadd.f32 0.0, %v8755
    %8757 = vmatmul.bf16.gmra.mxu0 %v5063
    %v8758 = vpop.f32.mrf.mxu0
    %v8759 = vadd.f32 0.0, %v8758
    %v8760 = vpop.f32.mrf.mxu0
    %v8761 = vadd.f32 0.0, %v8760
    %8762 = vmatmul.bf16.gmra.mxu0 %v5064
    %v8763 = vpop.f32.mrf.mxu0
    %v8764 = vadd.f32 0.0, %v8763
    %v8765 = vpop.f32.mrf.mxu0
    %v8766 = vadd.f32 0.0, %v8765
    %8767 = vmatmul.bf16.gmra.mxu0 %v5065
    %v8768 = vpop.f32.mrf.mxu0
    %v8769 = vadd.f32 0.0, %v8768
    %v8770 = vpop.f32.mrf.mxu0
    %v8771 = vadd.f32 0.0, %v8770
    %8772 = vmatmul.bf16.gmra.mxu0 %v5066
    %v8773 = vpop.f32.mrf.mxu0
    %v8774 = vadd.f32 0.0, %v8773
    %v8775 = vpop.f32.mrf.mxu0
    %v8776 = vadd.f32 0.0, %v8775
    %8777 = vmatmul.bf16.gmra.mxu0 %v5067
    %v8778 = vpop.f32.mrf.mxu0
    %v8779 = vadd.f32 0.0, %v8778
    %v8780 = vpop.f32.mrf.mxu0
    %v8781 = vadd.f32 0.0, %v8780
    %8782 = vmatmul.bf16.gmra.mxu0 %v5068
    %v8783 = vpop.f32.mrf.mxu0
    %v8784 = vadd.f32 0.0, %v8783
    %v8785 = vpop.f32.mrf.mxu0
    %v8786 = vadd.f32 0.0, %v8785
    %8787 = vmatmul.bf16.gmra.mxu0 %v5069
    %v8788 = vpop.f32.mrf.mxu0
    %v8789 = vadd.f32 0.0, %v8788
    %v8790 = vpop.f32.mrf.mxu0
    %v8791 = vadd.f32 0.0, %v8790
    %8792 = vmatmul.bf16.gmra.mxu0 %v5070
    %v8793 = vpop.f32.mrf.mxu0
    %v8794 = vadd.f32 0.0, %v8793
    %v8795 = vpop.f32.mrf.mxu0
    %v8796 = vadd.f32 0.0, %v8795
    %8797 = vmatmul.bf16.gmra.mxu0 %v5071
    %v8798 = vpop.f32.mrf.mxu0
    %v8799 = vadd.f32 0.0, %v8798
    %v8800 = vpop.f32.mrf.mxu0
    %v8801 = vadd.f32 0.0, %v8800
    %8802 = vmatmul.bf16.gmra.mxu0 %v5072
    %v8803 = vpop.f32.mrf.mxu0
    %v8804 = vadd.f32 0.0, %v8803
    %v8805 = vpop.f32.mrf.mxu0
    %v8806 = vadd.f32 0.0, %v8805
    %8807 = vmatmul.bf16.gmra.mxu0 %v5073
    %v8808 = vpop.f32.mrf.mxu0
    %v8809 = vadd.f32 0.0, %v8808
    %v8810 = vpop.f32.mrf.mxu0
    %v8811 = vadd.f32 0.0, %v8810
    %8812 = vmatmul.bf16.gmra.mxu0 %v5074
    %v8813 = vpop.f32.mrf.mxu0
    %v8814 = vadd.f32 0.0, %v8813
    %v8815 = vpop.f32.mrf.mxu0
    %v8816 = vadd.f32 0.0, %v8815
    %8817 = vmatmul.bf16.gmra.mxu0 %v5075
    %v8818 = vpop.f32.mrf.mxu0
    %v8819 = vadd.f32 0.0, %v8818
    %v8820 = vpop.f32.mrf.mxu0
    %v8821 = vadd.f32 0.0, %v8820
    %8822 = vdwg.mxu0
    %v8823 = vpack.c.bf16 %v8744, %v8744
    %v8824 = vpack.c.bf16 %v8746, %v8746
    %v8825 = vpack.c.bf16 %v8749, %v8749
    %v8826 = vpack.c.bf16 %v8751, %v8751
    %v8827 = vpack.c.bf16 %v8754, %v8754
    %v8828 = vpack.c.bf16 %v8756, %v8756
    %v8829 = vpack.c.bf16 %v8759, %v8759
    %v8830 = vpack.c.bf16 %v8761, %v8761
    %v8831 = vpack.c.bf16 %v8764, %v8764
    %v8832 = vpack.c.bf16 %v8766, %v8766
    %v8833 = vpack.c.bf16 %v8769, %v8769
    %v8834 = vpack.c.bf16 %v8771, %v8771
    %v8835 = vpack.c.bf16 %v8774, %v8774
    %v8836 = vpack.c.bf16 %v8776, %v8776
    %v8837 = vpack.c.bf16 %v8779, %v8779
    %v8838 = vpack.c.bf16 %v8781, %v8781
    %v8839 = vpack.c.bf16 %v8784, %v8784
    %v8840 = vpack.c.bf16 %v8786, %v8786
    %v8841 = vpack.c.bf16 %v8789, %v8789
    %v8842 = vpack.c.bf16 %v8791, %v8791
    %v8843 = vpack.c.bf16 %v8794, %v8794
    %v8844 = vpack.c.bf16 %v8796, %v8796
    %v8845 = vpack.c.bf16 %v8799, %v8799
    %v8846 = vpack.c.bf16 %v8801, %v8801
    %v8847 = vpack.c.bf16 %v8804, %v8804
    %v8848 = vpack.c.bf16 %v8806, %v8806
    %v8849 = vpack.c.bf16 %v8809, %v8809
    %v8850 = vpack.c.bf16 %v8811, %v8811
    %v8851 = vpack.c.bf16 %v8814, %v8814
    %v8852 = vpack.c.bf16 %v8816, %v8816
    %v8853 = vpack.c.bf16 %v8819, %v8819
    %v8854 = vpack.c.bf16 %v8821, %v8821
    %8855 = vst [vmem:[#allocation3] sm:$0xf] %v8823
    %8856 = vst [vmem:[#allocation3 + $0x4] sm:$0xf] %v8824
    %8857 = vst [vmem:[#allocation3 + $0x8] sm:$0xf] %v8825
    %8858 = vst [vmem:[#allocation3 + $0xc] sm:$0xf] %v8826
    %8859 = vst [vmem:[#allocation3 + $0x10] sm:$0xf] %v8827
    %8860 = vst [vmem:[#allocation3 + $0x14] sm:$0xf] %v8828
    %8861 = vst [vmem:[#allocation3 + $0x18] sm:$0xf] %v8829
    %8862 = vst [vmem:[#allocation3 + $0x1c] sm:$0xf] %v8830
    %8863 = vst [vmem:[#allocation3 + $0x20] sm:$0xf] %v8831
    %8864 = vst [vmem:[#allocation3 + $0x24] sm:$0xf] %v8832
    %8865 = vst [vmem:[#allocation3 + $0x28] sm:$0xf] %v8833
    %8866 = vst [vmem:[#allocation3 + $0x2c] sm:$0xf] %v8834
    %8867 = vst [vmem:[#allocation3 + $0x30] sm:$0xf] %v8835
    %8868 = vst [vmem:[#allocation3 + $0x34] sm:$0xf] %v8836
    %8869 = vst [vmem:[#allocation3 + $0x38] sm:$0xf] %v8837
    %8870 = vst [vmem:[#allocation3 + $0x3c] sm:$0xf] %v8838
    %8871 = vst [vmem:[#allocation3 + $0x40] sm:$0xf] %v8839
    %8872 = vst [vmem:[#allocation3 + $0x44] sm:$0xf] %v8840
    %8873 = vst [vmem:[#allocation3 + $0x48] sm:$0xf] %v8841
    %8874 = vst [vmem:[#allocation3 + $0x4c] sm:$0xf] %v8842
    %8875 = vst [vmem:[#allocation3 + $0x50] sm:$0xf] %v8843
    %8876 = vst [vmem:[#allocation3 + $0x54] sm:$0xf] %v8844
    %8877 = vst [vmem:[#allocation3 + $0x58] sm:$0xf] %v8845
    %8878 = vst [vmem:[#allocation3 + $0x5c] sm:$0xf] %v8846
    %8879 = vst [vmem:[#allocation3 + $0x60] sm:$0xf] %v8847
    %8880 = vst [vmem:[#allocation3 + $0x64] sm:$0xf] %v8848
    %8881 = vst [vmem:[#allocation3 + $0x68] sm:$0xf] %v8849
    %8882 = vst [vmem:[#allocation3 + $0x6c] sm:$0xf] %v8850
    %8883 = vst [vmem:[#allocation3 + $0x70] sm:$0xf] %v8851
    %8884 = vst [vmem:[#allocation3 + $0x74] sm:$0xf] %v8852
    %8885 = vst [vmem:[#allocation3 + $0x78] sm:$0xf] %v8853
    %8886 = vst [vmem:[#allocation3 + $0x7c] sm:$0xf] %v8854
    %v8887 = vld [vmem:[#allocation3] sm:$0xf]
    %v8888 = vld [vmem:[#allocation3 + $0x4] sm:$0xf]
    %8889 = vst [vmem:[#allocation4] sm:$0xf] %v8887
    %8890 = vst [vmem:[#allocation4 + $0x40] sm:$0xf] %v8888
    %v8891 = vld [vmem:[#allocation3 + $0x8] sm:$0xf]
    %v8892 = vld [vmem:[#allocation3 + $0xc] sm:$0xf]
    %8893 = vst [vmem:[#allocation4 + $0x4] sm:$0xf] %v8891
    %8894 = vst [vmem:[#allocation4 + $0x44] sm:$0xf] %v8892
    %v8895 = vld [vmem:[#allocation3 + $0x10] sm:$0xf]
    %v8896 = vld [vmem:[#allocation3 + $0x14] sm:$0xf]
    %8897 = vst [vmem:[#allocation4 + $0x8] sm:$0xf] %v8895
    %8898 = vst [vmem:[#allocation4 + $0x48] sm:$0xf] %v8896
    %v8899 = vld [vmem:[#allocation3 + $0x18] sm:$0xf]
    %v8900 = vld [vmem:[#allocation3 + $0x1c] sm:$0xf]
    %8901 = vst [vmem:[#allocation4 + $0xc] sm:$0xf] %v8899
    %8902 = vst [vmem:[#allocation4 + $0x4c] sm:$0xf] %v8900
    %v8903 = vld [vmem:[#allocation3 + $0x20] sm:$0xf]
    %v8904 = vld [vmem:[#allocation3 + $0x24] sm:$0xf]
    %8905 = vst [vmem:[#allocation4 + $0x10] sm:$0xf] %v8903
    %8906 = vst [vmem:[#allocation4 + $0x50] sm:$0xf] %v8904
    %v8907 = vld [vmem:[#allocation3 + $0x28] sm:$0xf]
    %v8908 = vld [vmem:[#allocation3 + $0x2c] sm:$0xf]
    %8909 = vst [vmem:[#allocation4 + $0x14] sm:$0xf] %v8907
    %8910 = vst [vmem:[#allocation4 + $0x54] sm:$0xf] %v8908
    %v8911 = vld [vmem:[#allocation3 + $0x30] sm:$0xf]
    %v8912 = vld [vmem:[#allocation3 + $0x34] sm:$0xf]
    %8913 = vst [vmem:[#allocation4 + $0x18] sm:$0xf] %v8911
    %8914 = vst [vmem:[#allocation4 + $0x58] sm:$0xf] %v8912
    %v8915 = vld [vmem:[#allocation3 + $0x38] sm:$0xf]
    %v8916 = vld [vmem:[#allocation3 + $0x3c] sm:$0xf]
    %8917 = vst [vmem:[#allocation4 + $0x1c] sm:$0xf] %v8915
    %8918 = vst [vmem:[#allocation4 + $0x5c] sm:$0xf] %v8916
    %v8919 = vld [vmem:[#allocation3 + $0x40] sm:$0xf]
    %v8920 = vld [vmem:[#allocation3 + $0x44] sm:$0xf]
    %8921 = vst [vmem:[#allocation4 + $0x20] sm:$0xf] %v8919
    %8922 = vst [vmem:[#allocation4 + $0x60] sm:$0xf] %v8920
    %v8923 = vld [vmem:[#allocation3 + $0x48] sm:$0xf]
    %v8924 = vld [vmem:[#allocation3 + $0x4c] sm:$0xf]
    %8925 = vst [vmem:[#allocation4 + $0x24] sm:$0xf] %v8923
    %8926 = vst [vmem:[#allocation4 + $0x64] sm:$0xf] %v8924
    %v8927 = vld [vmem:[#allocation3 + $0x50] sm:$0xf]
    %v8928 = vld [vmem:[#allocation3 + $0x54] sm:$0xf]
    %8929 = vst [vmem:[#allocation4 + $0x28] sm:$0xf] %v8927
    %8930 = vst [vmem:[#allocation4 + $0x68] sm:$0xf] %v8928
    %v8931 = vld [vmem:[#allocation3 + $0x58] sm:$0xf]
    %v8932 = vld [vmem:[#allocation3 + $0x5c] sm:$0xf]
    %8933 = vst [vmem:[#allocation4 + $0x2c] sm:$0xf] %v8931
    %8934 = vst [vmem:[#allocation4 + $0x6c] sm:$0xf] %v8932
    %v8935 = vld [vmem:[#allocation3 + $0x60] sm:$0xf]
    %v8936 = vld [vmem:[#allocation3 + $0x64] sm:$0xf]
    %8937 = vst [vmem:[#allocation4 + $0x30] sm:$0xf] %v8935
    %8938 = vst [vmem:[#allocation4 + $0x70] sm:$0xf] %v8936
    %v8939 = vld [vmem:[#allocation3 + $0x68] sm:$0xf]
    %v8940 = vld [vmem:[#allocation3 + $0x6c] sm:$0xf]
    %8941 = vst [vmem:[#allocation4 + $0x34] sm:$0xf] %v8939
    %8942 = vst [vmem:[#allocation4 + $0x74] sm:$0xf] %v8940
    %v8943 = vld [vmem:[#allocation3 + $0x70] sm:$0xf]
    %v8944 = vld [vmem:[#allocation3 + $0x74] sm:$0xf]
    %8945 = vst [vmem:[#allocation4 + $0x38] sm:$0xf] %v8943
    %8946 = vst [vmem:[#allocation4 + $0x78] sm:$0xf] %v8944
    %v8947 = vld [vmem:[#allocation3 + $0x78] sm:$0xf]
    %v8948 = vld [vmem:[#allocation3 + $0x7c] sm:$0xf]
    %8949 = vst [vmem:[#allocation4 + $0x3c] sm:$0xf] %v8947
    %8950 = vst [vmem:[#allocation4 + $0x7c] sm:$0xf] %v8948
    %v8951 = vld [vmem:[#allocation4] sm:$0xff]
    %v8952 = vld [vmem:[#allocation4 + $0x8] sm:$0xff]
    %v8953 = vld [vmem:[#allocation4 + $0x10] sm:$0xff]
    %v8954 = vld [vmem:[#allocation4 + $0x18] sm:$0xff]
    %v8955 = vld [vmem:[#allocation4 + $0x20] sm:$0xff]
    %v8956 = vld [vmem:[#allocation4 + $0x28] sm:$0xff]
    %v8957 = vld [vmem:[#allocation4 + $0x30] sm:$0xff]
    %v8958 = vld [vmem:[#allocation4 + $0x38] sm:$0xff]
    %v8959 = vld [vmem:[#allocation4 + $0x40] sm:$0xff]
    %v8960 = vld [vmem:[#allocation4 + $0x48] sm:$0xff]
    %v8961 = vld [vmem:[#allocation4 + $0x50] sm:$0xff]
    %v8962 = vld [vmem:[#allocation4 + $0x58] sm:$0xff]
    %v8963 = vld [vmem:[#allocation4 + $0x60] sm:$0xff]
    %v8964 = vld [vmem:[#allocation4 + $0x68] sm:$0xff]
    %v8965 = vld [vmem:[#allocation4 + $0x70] sm:$0xff]
    %v8966 = vld [vmem:[#allocation4 + $0x78] sm:$0xff]
    %v8983 = vunpack.c.l.b16 %v8951
    %v8984 = vunpack.c.h.b16 %v8951
    %v8985 = vunpack.c.l.b16 %v8952
    %v8986 = vunpack.c.h.b16 %v8952
    %v8987 = vunpack.c.l.b16 %v8953
    %v8988 = vunpack.c.h.b16 %v8953
    %v8989 = vunpack.c.l.b16 %v8954
    %v8990 = vunpack.c.h.b16 %v8954
    %v8991 = vunpack.c.l.b16 %v8955
    %v8992 = vunpack.c.h.b16 %v8955
    %v8993 = vunpack.c.l.b16 %v8956
    %v8994 = vunpack.c.h.b16 %v8956
    %v8995 = vunpack.c.l.b16 %v8957
    %v8996 = vunpack.c.h.b16 %v8957
    %v8997 = vunpack.c.l.b16 %v8958
    %v8998 = vunpack.c.h.b16 %v8958
    %v8999 = vunpack.c.l.b16 %v8959
    %v9000 = vunpack.c.h.b16 %v8959
    %v9001 = vunpack.c.l.b16 %v8960
    %v9002 = vunpack.c.h.b16 %v8960
    %v9003 = vunpack.c.l.b16 %v8961
    %v9004 = vunpack.c.h.b16 %v8961
    %v9005 = vunpack.c.l.b16 %v8962
    %v9006 = vunpack.c.h.b16 %v8962
    %v9007 = vunpack.c.l.b16 %v8963
    %v9008 = vunpack.c.h.b16 %v8963
    %v9009 = vunpack.c.l.b16 %v8964
    %v9010 = vunpack.c.h.b16 %v8964
    %v9011 = vunpack.c.l.b16 %v8965
    %v9012 = vunpack.c.h.b16 %v8965
    %v9013 = vunpack.c.l.b16 %v8966
    %v9014 = vunpack.c.h.b16 %v8966
    %v9015 = vpack.c.b16 %v8999, %v8983
    %v9016 = vpack.c.b16 %v9000, %v8984
    %v9017 = vpack.c.b16 %v9001, %v8985
    %v9018 = vpack.c.b16 %v9002, %v8986
    %v9019 = vpack.c.b16 %v9003, %v8987
    %v9020 = vpack.c.b16 %v9004, %v8988
    %v9021 = vpack.c.b16 %v9005, %v8989
    %v9022 = vpack.c.b16 %v9006, %v8990
    %v9023 = vpack.c.b16 %v9007, %v8991
    %v9024 = vpack.c.b16 %v9008, %v8992
    %v9025 = vpack.c.b16 %v9009, %v8993
    %v9026 = vpack.c.b16 %v9010, %v8994
    %v9027 = vpack.c.b16 %v9011, %v8995
    %v9028 = vpack.c.b16 %v9012, %v8996
    %v9029 = vpack.c.b16 %v9013, %v8997
    %v9030 = vpack.c.b16 %v9014, %v8998
    %9047 = vmatpush.bf16.msra.mxu0 %v5927
    %9048 = vmatpush.bf16.msra.mxu0 %v5926
    %9049 = vmatpush.bf16.msra.mxu0 %v5925
    %9050 = vmatpush.bf16.msra.mxu0 %v5924
    %9051 = vmatpush.bf16.msra.mxu0 %v5923
    %9052 = vmatpush.bf16.msra.mxu0 %v5922
    %9053 = vmatpush.bf16.msra.mxu0 %v5921
    %9054 = vmatpush.bf16.msra.mxu0 %v5920
    %9055 = vmatmul.bf16.gmra.mxu0 %v9015
    %v9056 = vpop.f32.mrf.mxu0
    %v9057 = vadd.f32 %v5326, %v9056
    %v9058 = vpop.f32.mrf.mxu0
    %v9059 = vadd.f32 %v5326, %v9058
    %9060 = vdwg.mxu0
    %9061 = vmatpush.bf16.msra.mxu0 %v5935
    %9062 = vmatpush.bf16.msra.mxu0 %v5934
    %9063 = vmatpush.bf16.msra.mxu0 %v5933
    %9064 = vmatpush.bf16.msra.mxu0 %v5932
    %9065 = vmatpush.bf16.msra.mxu0 %v5931
    %9066 = vmatpush.bf16.msra.mxu0 %v5930
    %9067 = vmatpush.bf16.msra.mxu0 %v5929
    %9068 = vmatpush.bf16.msra.mxu0 %v5928
    %9069 = vmatmul.bf16.gmra.mxu0 %v9016
    %v9070 = vpop.f32.mrf.mxu0
    %v9071 = vadd.f32 %v9057, %v9070
    %v9072 = vpop.f32.mrf.mxu0
    %v9073 = vadd.f32 %v9059, %v9072
    %9074 = vdwg.mxu0
    %9075 = vmatpush.bf16.msra.mxu0 %v5943
    %9076 = vmatpush.bf16.msra.mxu0 %v5942
    %9077 = vmatpush.bf16.msra.mxu0 %v5941
    %9078 = vmatpush.bf16.msra.mxu0 %v5940
    %9079 = vmatpush.bf16.msra.mxu0 %v5939
    %9080 = vmatpush.bf16.msra.mxu0 %v5938
    %9081 = vmatpush.bf16.msra.mxu0 %v5937
    %9082 = vmatpush.bf16.msra.mxu0 %v5936
    %9083 = vmatmul.bf16.gmra.mxu0 %v9017
    %v9084 = vpop.f32.mrf.mxu0
    %v9085 = vadd.f32 %v9071, %v9084
    %v9086 = vpop.f32.mrf.mxu0
    %v9087 = vadd.f32 %v9073, %v9086
    %9088 = vdwg.mxu0
    %9089 = vmatpush.bf16.msra.mxu0 %v5951
    %9090 = vmatpush.bf16.msra.mxu0 %v5950
    %9091 = vmatpush.bf16.msra.mxu0 %v5949
    %9092 = vmatpush.bf16.msra.mxu0 %v5948
    %9093 = vmatpush.bf16.msra.mxu0 %v5947
    %9094 = vmatpush.bf16.msra.mxu0 %v5946
    %9095 = vmatpush.bf16.msra.mxu0 %v5945
    %9096 = vmatpush.bf16.msra.mxu0 %v5944
    %9097 = vmatmul.bf16.gmra.mxu0 %v9018
    %v9098 = vpop.f32.mrf.mxu0
    %v9099 = vadd.f32 %v9085, %v9098
    %v9100 = vpop.f32.mrf.mxu0
    %v9101 = vadd.f32 %v9087, %v9100
    %9102 = vdwg.mxu0
    %9103 = vmatpush.bf16.msra.mxu0 %v5959
    %9104 = vmatpush.bf16.msra.mxu0 %v5958
    %9105 = vmatpush.bf16.msra.mxu0 %v5957
    %9106 = vmatpush.bf16.msra.mxu0 %v5956
    %9107 = vmatpush.bf16.msra.mxu0 %v5955
    %9108 = vmatpush.bf16.msra.mxu0 %v5954
    %9109 = vmatpush.bf16.msra.mxu0 %v5953
    %9110 = vmatpush.bf16.msra.mxu0 %v5952
    %9111 = vmatmul.bf16.gmra.mxu0 %v9019
    %v9112 = vpop.f32.mrf.mxu0
    %v9113 = vadd.f32 %v9099, %v9112
    %v9114 = vpop.f32.mrf.mxu0
    %v9115 = vadd.f32 %v9101, %v9114
    %9116 = vdwg.mxu0
    %9117 = vmatpush.bf16.msra.mxu0 %v5967
    %9118 = vmatpush.bf16.msra.mxu0 %v5966
    %9119 = vmatpush.bf16.msra.mxu0 %v5965
    %9120 = vmatpush.bf16.msra.mxu0 %v5964
    %9121 = vmatpush.bf16.msra.mxu0 %v5963
    %9122 = vmatpush.bf16.msra.mxu0 %v5962
    %9123 = vmatpush.bf16.msra.mxu0 %v5961
    %9124 = vmatpush.bf16.msra.mxu0 %v5960
    %9125 = vmatmul.bf16.gmra.mxu0 %v9020
    %v9126 = vpop.f32.mrf.mxu0
    %v9127 = vadd.f32 %v9113, %v9126
    %v9128 = vpop.f32.mrf.mxu0
    %v9129 = vadd.f32 %v9115, %v9128
    %9130 = vdwg.mxu0
    %9131 = vmatpush.bf16.msra.mxu0 %v5975
    %9132 = vmatpush.bf16.msra.mxu0 %v5974
    %9133 = vmatpush.bf16.msra.mxu0 %v5973
    %9134 = vmatpush.bf16.msra.mxu0 %v5972
    %9135 = vmatpush.bf16.msra.mxu0 %v5971
    %9136 = vmatpush.bf16.msra.mxu0 %v5970
    %9137 = vmatpush.bf16.msra.mxu0 %v5969
    %9138 = vmatpush.bf16.msra.mxu0 %v5968
    %9139 = vmatmul.bf16.gmra.mxu0 %v9021
    %v9140 = vpop.f32.mrf.mxu0
    %v9141 = vadd.f32 %v9127, %v9140
    %v9142 = vpop.f32.mrf.mxu0
    %v9143 = vadd.f32 %v9129, %v9142
    %9144 = vdwg.mxu0
    %9145 = vmatpush.bf16.msra.mxu0 %v5983
    %9146 = vmatpush.bf16.msra.mxu0 %v5982
    %9147 = vmatpush.bf16.msra.mxu0 %v5981
    %9148 = vmatpush.bf16.msra.mxu0 %v5980
    %9149 = vmatpush.bf16.msra.mxu0 %v5979
    %9150 = vmatpush.bf16.msra.mxu0 %v5978
    %9151 = vmatpush.bf16.msra.mxu0 %v5977
    %9152 = vmatpush.bf16.msra.mxu0 %v5976
    %9153 = vmatmul.bf16.gmra.mxu0 %v9022
    %v9154 = vpop.f32.mrf.mxu0
    %v9155 = vadd.f32 %v9141, %v9154
    %v9156 = vpop.f32.mrf.mxu0
    %v9157 = vadd.f32 %v9143, %v9156
    %9158 = vdwg.mxu0
    %9159 = vmatpush.bf16.msra.mxu0 %v5991
    %9160 = vmatpush.bf16.msra.mxu0 %v5990
    %9161 = vmatpush.bf16.msra.mxu0 %v5989
    %9162 = vmatpush.bf16.msra.mxu0 %v5988
    %9163 = vmatpush.bf16.msra.mxu0 %v5987
    %9164 = vmatpush.bf16.msra.mxu0 %v5986
    %9165 = vmatpush.bf16.msra.mxu0 %v5985
    %9166 = vmatpush.bf16.msra.mxu0 %v5984
    %9167 = vmatmul.bf16.gmra.mxu0 %v9023
    %v9168 = vpop.f32.mrf.mxu0
    %v9169 = vadd.f32 %v9155, %v9168
    %v9170 = vpop.f32.mrf.mxu0
    %v9171 = vadd.f32 %v9157, %v9170
    %9172 = vdwg.mxu0
    %9173 = vmatpush.bf16.msra.mxu0 %v5999
    %9174 = vmatpush.bf16.msra.mxu0 %v5998
    %9175 = vmatpush.bf16.msra.mxu0 %v5997
    %9176 = vmatpush.bf16.msra.mxu0 %v5996
    %9177 = vmatpush.bf16.msra.mxu0 %v5995
    %9178 = vmatpush.bf16.msra.mxu0 %v5994
    %9179 = vmatpush.bf16.msra.mxu0 %v5993
    %9180 = vmatpush.bf16.msra.mxu0 %v5992
    %9181 = vmatmul.bf16.gmra.mxu0 %v9024
    %v9182 = vpop.f32.mrf.mxu0
    %v9183 = vadd.f32 %v9169, %v9182
    %v9184 = vpop.f32.mrf.mxu0
    %v9185 = vadd.f32 %v9171, %v9184
    %9186 = vdwg.mxu0
    %9187 = vmatpush.bf16.msra.mxu0 %v6007
    %9188 = vmatpush.bf16.msra.mxu0 %v6006
    %9189 = vmatpush.bf16.msra.mxu0 %v6005
    %9190 = vmatpush.bf16.msra.mxu0 %v6004
    %9191 = vmatpush.bf16.msra.mxu0 %v6003
    %9192 = vmatpush.bf16.msra.mxu0 %v6002
    %9193 = vmatpush.bf16.msra.mxu0 %v6001
    %9194 = vmatpush.bf16.msra.mxu0 %v6000
    %9195 = vmatmul.bf16.gmra.mxu0 %v9025
    %v9196 = vpop.f32.mrf.mxu0
    %v9197 = vadd.f32 %v9183, %v9196
    %v9198 = vpop.f32.mrf.mxu0
    %v9199 = vadd.f32 %v9185, %v9198
    %9200 = vdwg.mxu0
    %9201 = vmatpush.bf16.msra.mxu0 %v6015
    %9202 = vmatpush.bf16.msra.mxu0 %v6014
    %9203 = vmatpush.bf16.msra.mxu0 %v6013
    %9204 = vmatpush.bf16.msra.mxu0 %v6012
    %9205 = vmatpush.bf16.msra.mxu0 %v6011
    %9206 = vmatpush.bf16.msra.mxu0 %v6010
    %9207 = vmatpush.bf16.msra.mxu0 %v6009
    %9208 = vmatpush.bf16.msra.mxu0 %v6008
    %9209 = vmatmul.bf16.gmra.mxu0 %v9026
    %v9210 = vpop.f32.mrf.mxu0
    %v9211 = vadd.f32 %v9197, %v9210
    %v9212 = vpop.f32.mrf.mxu0
    %v9213 = vadd.f32 %v9199, %v9212
    %9214 = vdwg.mxu0
    %9215 = vmatpush.bf16.msra.mxu0 %v6023
    %9216 = vmatpush.bf16.msra.mxu0 %v6022
    %9217 = vmatpush.bf16.msra.mxu0 %v6021
    %9218 = vmatpush.bf16.msra.mxu0 %v6020
    %9219 = vmatpush.bf16.msra.mxu0 %v6019
    %9220 = vmatpush.bf16.msra.mxu0 %v6018
    %9221 = vmatpush.bf16.msra.mxu0 %v6017
    %9222 = vmatpush.bf16.msra.mxu0 %v6016
    %9223 = vmatmul.bf16.gmra.mxu0 %v9027
    %v9224 = vpop.f32.mrf.mxu0
    %v9225 = vadd.f32 %v9211, %v9224
    %v9226 = vpop.f32.mrf.mxu0
    %v9227 = vadd.f32 %v9213, %v9226
    %9228 = vdwg.mxu0
    %9229 = vmatpush.bf16.msra.mxu0 %v6031
    %9230 = vmatpush.bf16.msra.mxu0 %v6030
    %9231 = vmatpush.bf16.msra.mxu0 %v6029
    %9232 = vmatpush.bf16.msra.mxu0 %v6028
    %9233 = vmatpush.bf16.msra.mxu0 %v6027
    %9234 = vmatpush.bf16.msra.mxu0 %v6026
    %9235 = vmatpush.bf16.msra.mxu0 %v6025
    %9236 = vmatpush.bf16.msra.mxu0 %v6024
    %9237 = vmatmul.bf16.gmra.mxu0 %v9028
    %v9238 = vpop.f32.mrf.mxu0
    %v9239 = vadd.f32 %v9225, %v9238
    %v9240 = vpop.f32.mrf.mxu0
    %v9241 = vadd.f32 %v9227, %v9240
    %9242 = vdwg.mxu0
    %9243 = vmatpush.bf16.msra.mxu0 %v6039
    %9244 = vmatpush.bf16.msra.mxu0 %v6038
    %9245 = vmatpush.bf16.msra.mxu0 %v6037
    %9246 = vmatpush.bf16.msra.mxu0 %v6036
    %9247 = vmatpush.bf16.msra.mxu0 %v6035
    %9248 = vmatpush.bf16.msra.mxu0 %v6034
    %9249 = vmatpush.bf16.msra.mxu0 %v6033
    %9250 = vmatpush.bf16.msra.mxu0 %v6032
    %9251 = vmatmul.bf16.gmra.mxu0 %v9029
    %v9252 = vpop.f32.mrf.mxu0
    %v9253 = vadd.f32 %v9239, %v9252
    %v9254 = vpop.f32.mrf.mxu0
    %v9255 = vadd.f32 %v9241, %v9254
    %9256 = vdwg.mxu0
    %9257 = vmatpush.bf16.msra.mxu0 %v6047
    %9258 = vmatpush.bf16.msra.mxu0 %v6046
    %9259 = vmatpush.bf16.msra.mxu0 %v6045
    %9260 = vmatpush.bf16.msra.mxu0 %v6044
    %9261 = vmatpush.bf16.msra.mxu0 %v6043
    %9262 = vmatpush.bf16.msra.mxu0 %v6042
    %9263 = vmatpush.bf16.msra.mxu0 %v6041
    %9264 = vmatpush.bf16.msra.mxu0 %v6040
    %9265 = vmatmul.bf16.gmra.mxu0 %v9030
    %v9266 = vpop.f32.mrf.mxu0
    %v9267 = vadd.f32 %v9253, %v9266
    %v9268 = vpop.f32.mrf.mxu0
    %v9269 = vadd.f32 %v9255, %v9268
    %9270 = vdwg.mxu0
    %v9271 = vmax.f32 %v9267, 0.0
    %v9272 = vmax.f32 %v9269, 0.0
    %v9273 = vpack.c.bf16 %v9271, %v9271
    %v9274 = vpack.c.bf16 %v9272, %v9272
    %v9276 = vrot.slane %v9273, 3
    %v9279 = vsel %vm6412, %v9273, %v9276
    %v9280 = vshll.u32 %v9279, 16
    %vm9283 = vsmask.f32 7938
    %vm9284 = vmand %vm6404, %vm9283
    %v9285 = vld [vmem:[#allocation5] sm:$0x1]
    %v9286 = vsel %vm9284, %v9280, %v9285
    %9287 = vst [vmem:[#allocation5] sm:$0x1] %v9286
    %v9288 = vld [vmem:[#allocation5 + $0x1] sm:$0x1]
    %v9289 = vsel %vm9284, %v9273, %v9288
    %9290 = vst [vmem:[#allocation5 + $0x1] sm:$0x1] %v9289
    %9291 = vst [vmem:[#allocation1] sm:$0xff] %v9273
    %s9292 = scalar_lea.vmem [#allocation1], 1
    %v9293 = vld [vmem:[%s9292] ss:$4 sm:$0xff]
    %v9294 = vshll.u32 %v9293, 16
    %v9297 = vld [vmem:[#allocation5 + $0x2] sm:$0x1]
    %v9298 = vsel %vm9284, %v9294, %v9297
    %9299 = vst [vmem:[#allocation5 + $0x2] sm:$0x1] %v9298
    %9300 = vst [vmem:[#allocation1] sm:$0xff] %v9273
    %s9301 = scalar_lea.vmem [#allocation1], 1
    %v9302 = vld [vmem:[%s9301] ss:$4 sm:$0xff]
    %v9304 = vld [vmem:[#allocation5 + $0x3] sm:$0x1]
    %v9305 = vsel %vm9284, %v9302, %v9304
    %9306 = vst [vmem:[#allocation5 + $0x3] sm:$0x1] %v9305
    %9307 = vst [vmem:[#allocation1] sm:$0xff] %v9273
    %s9308 = scalar_lea.vmem [#allocation1], 2
    %v9309 = vld [vmem:[%s9308] ss:$4 sm:$0xff]
    %v9310 = vshll.u32 %v9309, 16
    %v9313 = vld [vmem:[#allocation5 + $0x4] sm:$0x1]
    %v9314 = vsel %vm9284, %v9310, %v9313
    %9315 = vst [vmem:[#allocation5 + $0x4] sm:$0x1] %v9314
    %9316 = vst [vmem:[#allocation1] sm:$0xff] %v9273
    %s9317 = scalar_lea.vmem [#allocation1], 2
    %v9318 = vld [vmem:[%s9317] ss:$4 sm:$0xff]
    %v9320 = vld [vmem:[#allocation5 + $0x5] sm:$0x1]
    %v9321 = vsel %vm9284, %v9318, %v9320
    %9322 = vst [vmem:[#allocation5 + $0x5] sm:$0x1] %v9321
    %9323 = vst [vmem:[#allocation1] sm:$0xff] %v9273
    %s9324 = scalar_lea.vmem [#allocation1], 3
    %v9325 = vld [vmem:[%s9324] ss:$4 sm:$0xff]
    %v9326 = vshll.u32 %v9325, 16
    %v9329 = vld [vmem:[#allocation5 + $0x6] sm:$0x1]
    %v9330 = vsel %vm9284, %v9326, %v9329
    %9331 = vst [vmem:[#allocation5 + $0x6] sm:$0x1] %v9330
    %9332 = vst [vmem:[#allocation1] sm:$0xff] %v9273
    %s9333 = scalar_lea.vmem [#allocation1], 3
    %v9334 = vld [vmem:[%s9333] ss:$4 sm:$0xff]
    %v9336 = vld [vmem:[#allocation5 + $0x7] sm:$0x1]
    %v9337 = vsel %vm9284, %v9334, %v9336
    %9338 = vst [vmem:[#allocation5 + $0x7] sm:$0x1] %v9337
    %v9340 = vrot.slane %v9274, 3
    %v9343 = vsel %vm6412, %v9274, %v9340
    %v9344 = vshll.u32 %v9343, 16
    %v9347 = vld [vmem:[#allocation5 + $0x8] sm:$0x1]
    %v9348 = vsel %vm9284, %v9344, %v9347
    %9349 = vst [vmem:[#allocation5 + $0x8] sm:$0x1] %v9348
    %v9350 = vld [vmem:[#allocation5 + $0x9] sm:$0x1]
    %v9351 = vsel %vm9284, %v9274, %v9350
    %9352 = vst [vmem:[#allocation5 + $0x9] sm:$0x1] %v9351
    %9353 = vst [vmem:[#allocation1] sm:$0xff] %v9274
    %s9354 = scalar_lea.vmem [#allocation1], 1
    %v9355 = vld [vmem:[%s9354] ss:$4 sm:$0xff]
    %v9356 = vshll.u32 %v9355, 16
    %v9359 = vld [vmem:[#allocation5 + $0xa] sm:$0x1]
    %v9360 = vsel %vm9284, %v9356, %v9359
    %9361 = vst [vmem:[#allocation5 + $0xa] sm:$0x1] %v9360
    %9362 = vst [vmem:[#allocation1] sm:$0xff] %v9274
    %s9363 = scalar_lea.vmem [#allocation1], 1
    %v9364 = vld [vmem:[%s9363] ss:$4 sm:$0xff]
    %v9366 = vld [vmem:[#allocation5 + $0xb] sm:$0x1]
    %v9367 = vsel %vm9284, %v9364, %v9366
    %9368 = vst [vmem:[#allocation5 + $0xb] sm:$0x1] %v9367
    %9369 = vst [vmem:[#allocation1] sm:$0xff] %v9274
    %s9370 = scalar_lea.vmem [#allocation1], 2
    %v9371 = vld [vmem:[%s9370] ss:$4 sm:$0xff]
    %v9372 = vshll.u32 %v9371, 16
    %v9375 = vld [vmem:[#allocation5 + $0xc] sm:$0x1]
    %v9376 = vsel %vm9284, %v9372, %v9375
    %9377 = vst [vmem:[#allocation5 + $0xc] sm:$0x1] %v9376
    %9378 = vst [vmem:[#allocation1] sm:$0xff] %v9274
    %s9379 = scalar_lea.vmem [#allocation1], 2
    %v9380 = vld [vmem:[%s9379] ss:$4 sm:$0xff]
    %v9382 = vld [vmem:[#allocation5 + $0xd] sm:$0x1]
    %v9383 = vsel %vm9284, %v9380, %v9382
    %9384 = vst [vmem:[#allocation5 + $0xd] sm:$0x1] %v9383
    %9385 = vst [vmem:[#allocation1] sm:$0xff] %v9274
    %s9386 = scalar_lea.vmem [#allocation1], 3
    %v9387 = vld [vmem:[%s9386] ss:$4 sm:$0xff]
    %v9388 = vshll.u32 %v9387, 16
    %v9391 = vld [vmem:[#allocation5 + $0xe] sm:$0x1]
    %v9392 = vsel %vm9284, %v9388, %v9391
    %9393 = vst [vmem:[#allocation5 + $0xe] sm:$0x1] %v9392
    %9394 = vst [vmem:[#allocation1] sm:$0xff] %v9274
    %s9395 = scalar_lea.vmem [#allocation1], 3
    %v9396 = vld [vmem:[%s9395] ss:$4 sm:$0xff]
    %v9398 = vld [vmem:[#allocation5 + $0xf] sm:$0x1]
    %v9399 = vsel %vm9284, %v9396, %v9398
    %9400 = vst [vmem:[#allocation5 + $0xf] sm:$0x1] %v9399
    %v9401 = vld [vmem:[#allocation5] sm:$0xff]
    %v9402 = vld [vmem:[#allocation5 + $0x8] sm:$0xff]
    %v9403 = vld [vmem:[%s9] sm:$0xf]
    %v9404 = vld [vmem:[%s9 + $0x4] sm:$0xf]
    %v9405 = vld [vmem:[%s9 + $0x8] sm:$0xf]
    %v9406 = vld [vmem:[%s9 + $0xc] sm:$0xf]
    %v9407 = vld [vmem:[%s9 + $0x10] sm:$0xf]
    %v9408 = vld [vmem:[%s9 + $0x14] sm:$0xf]
    %v9409 = vld [vmem:[%s9 + $0x18] sm:$0xf]
    %v9410 = vld [vmem:[%s9 + $0x1c] sm:$0xf]
    %v9411 = vld [vmem:[%s9 + $0x20] sm:$0xf]
    %v9412 = vld [vmem:[%s9 + $0x24] sm:$0xf]
    %v9413 = vld [vmem:[%s9 + $0x28] sm:$0xf]
    %v9414 = vld [vmem:[%s9 + $0x2c] sm:$0xf]
    %v9415 = vld [vmem:[%s9 + $0x30] sm:$0xf]
    %v9416 = vld [vmem:[%s9 + $0x34] sm:$0xf]
    %v9417 = vld [vmem:[%s9 + $0x38] sm:$0xf]
    %v9418 = vld [vmem:[%s9 + $0x3c] sm:$0xf]
    %v9419 = vld [vmem:[%s9 + $0x40] sm:$0xf]
    %v9420 = vld [vmem:[%s9 + $0x44] sm:$0xf]
    %v9421 = vld [vmem:[%s9 + $0x48] sm:$0xf]
    %v9422 = vld [vmem:[%s9 + $0x4c] sm:$0xf]
    %v9423 = vld [vmem:[%s9 + $0x50] sm:$0xf]
    %v9424 = vld [vmem:[%s9 + $0x54] sm:$0xf]
    %v9425 = vld [vmem:[%s9 + $0x58] sm:$0xf]
    %v9426 = vld [vmem:[%s9 + $0x5c] sm:$0xf]
    %v9427 = vld [vmem:[%s9 + $0x60] sm:$0xf]
    %v9428 = vld [vmem:[%s9 + $0x64] sm:$0xf]
    %v9429 = vld [vmem:[%s9 + $0x68] sm:$0xf]
    %v9430 = vld [vmem:[%s9 + $0x6c] sm:$0xf]
    %v9431 = vld [vmem:[%s9 + $0x70] sm:$0xf]
    %v9432 = vld [vmem:[%s9 + $0x74] sm:$0xf]
    %v9433 = vld [vmem:[%s9 + $0x78] sm:$0xf]
    %v9434 = vld [vmem:[%s9 + $0x7c] sm:$0xf]
    %v9435 = vld [vmem:[%s9 + $0x80] sm:$0xf]
    %v9436 = vld [vmem:[%s9 + $0x84] sm:$0xf]
    %v9437 = vld [vmem:[%s9 + $0x88] sm:$0xf]
    %v9438 = vld [vmem:[%s9 + $0x8c] sm:$0xf]
    %v9439 = vld [vmem:[%s9 + $0x90] sm:$0xf]
    %v9440 = vld [vmem:[%s9 + $0x94] sm:$0xf]
    %v9441 = vld [vmem:[%s9 + $0x98] sm:$0xf]
    %v9442 = vld [vmem:[%s9 + $0x9c] sm:$0xf]
    %v9443 = vld [vmem:[%s9 + $0xa0] sm:$0xf]
    %v9444 = vld [vmem:[%s9 + $0xa4] sm:$0xf]
    %v9445 = vld [vmem:[%s9 + $0xa8] sm:$0xf]
    %v9446 = vld [vmem:[%s9 + $0xac] sm:$0xf]
    %v9447 = vld [vmem:[%s9 + $0xb0] sm:$0xf]
    %v9448 = vld [vmem:[%s9 + $0xb4] sm:$0xf]
    %v9449 = vld [vmem:[%s9 + $0xb8] sm:$0xf]
    %v9450 = vld [vmem:[%s9 + $0xbc] sm:$0xf]
    %v9451 = vld [vmem:[%s9 + $0xc0] sm:$0xf]
    %v9452 = vld [vmem:[%s9 + $0xc4] sm:$0xf]
    %v9453 = vld [vmem:[%s9 + $0xc8] sm:$0xf]
    %v9454 = vld [vmem:[%s9 + $0xcc] sm:$0xf]
    %v9455 = vld [vmem:[%s9 + $0xd0] sm:$0xf]
    %v9456 = vld [vmem:[%s9 + $0xd4] sm:$0xf]
    %v9457 = vld [vmem:[%s9 + $0xd8] sm:$0xf]
    %v9458 = vld [vmem:[%s9 + $0xdc] sm:$0xf]
    %v9459 = vld [vmem:[%s9 + $0xe0] sm:$0xf]
    %v9460 = vld [vmem:[%s9 + $0xe4] sm:$0xf]
    %v9461 = vld [vmem:[%s9 + $0xe8] sm:$0xf]
    %v9462 = vld [vmem:[%s9 + $0xec] sm:$0xf]
    %v9463 = vld [vmem:[%s9 + $0xf0] sm:$0xf]
    %v9464 = vld [vmem:[%s9 + $0xf4] sm:$0xf]
    %v9465 = vld [vmem:[%s9 + $0xf8] sm:$0xf]
    %v9466 = vld [vmem:[%s9 + $0xfc] sm:$0xf]
    %v9467 = vld [vmem:[%s9 + $0x100] sm:$0xf]
    %v9468 = vld [vmem:[%s9 + $0x104] sm:$0xf]
    %v9469 = vld [vmem:[%s9 + $0x108] sm:$0xf]
    %v9470 = vld [vmem:[%s9 + $0x10c] sm:$0xf]
    %v9471 = vld [vmem:[%s9 + $0x110] sm:$0xf]
    %v9472 = vld [vmem:[%s9 + $0x114] sm:$0xf]
    %v9473 = vld [vmem:[%s9 + $0x118] sm:$0xf]
    %v9474 = vld [vmem:[%s9 + $0x11c] sm:$0xf]
    %v9475 = vld [vmem:[%s9 + $0x120] sm:$0xf]
    %v9476 = vld [vmem:[%s9 + $0x124] sm:$0xf]
    %v9477 = vld [vmem:[%s9 + $0x128] sm:$0xf]
    %v9478 = vld [vmem:[%s9 + $0x12c] sm:$0xf]
    %v9479 = vld [vmem:[%s9 + $0x130] sm:$0xf]
    %v9480 = vld [vmem:[%s9 + $0x134] sm:$0xf]
    %v9481 = vld [vmem:[%s9 + $0x138] sm:$0xf]
    %v9482 = vld [vmem:[%s9 + $0x13c] sm:$0xf]
    %v9483 = vld [vmem:[%s9 + $0x140] sm:$0xf]
    %v9484 = vld [vmem:[%s9 + $0x144] sm:$0xf]
    %v9485 = vld [vmem:[%s9 + $0x148] sm:$0xf]
    %v9486 = vld [vmem:[%s9 + $0x14c] sm:$0xf]
    %v9487 = vld [vmem:[%s9 + $0x150] sm:$0xf]
    %v9488 = vld [vmem:[%s9 + $0x154] sm:$0xf]
    %v9489 = vld [vmem:[%s9 + $0x158] sm:$0xf]
    %v9490 = vld [vmem:[%s9 + $0x15c] sm:$0xf]
    %v9491 = vld [vmem:[%s9 + $0x160] sm:$0xf]
    %v9492 = vld [vmem:[%s9 + $0x164] sm:$0xf]
    %v9493 = vld [vmem:[%s9 + $0x168] sm:$0xf]
    %v9494 = vld [vmem:[%s9 + $0x16c] sm:$0xf]
    %v9495 = vld [vmem:[%s9 + $0x170] sm:$0xf]
    %v9496 = vld [vmem:[%s9 + $0x174] sm:$0xf]
    %v9497 = vld [vmem:[%s9 + $0x178] sm:$0xf]
    %v9498 = vld [vmem:[%s9 + $0x17c] sm:$0xf]
    %v9499 = vld [vmem:[%s9 + $0x180] sm:$0xf]
    %v9500 = vld [vmem:[%s9 + $0x184] sm:$0xf]
    %v9501 = vld [vmem:[%s9 + $0x188] sm:$0xf]
    %v9502 = vld [vmem:[%s9 + $0x18c] sm:$0xf]
    %v9503 = vld [vmem:[%s9 + $0x190] sm:$0xf]
    %v9504 = vld [vmem:[%s9 + $0x194] sm:$0xf]
    %v9505 = vld [vmem:[%s9 + $0x198] sm:$0xf]
    %v9506 = vld [vmem:[%s9 + $0x19c] sm:$0xf]
    %v9507 = vld [vmem:[%s9 + $0x1a0] sm:$0xf]
    %v9508 = vld [vmem:[%s9 + $0x1a4] sm:$0xf]
    %v9509 = vld [vmem:[%s9 + $0x1a8] sm:$0xf]
    %v9510 = vld [vmem:[%s9 + $0x1ac] sm:$0xf]
    %v9511 = vld [vmem:[%s9 + $0x1b0] sm:$0xf]
    %v9512 = vld [vmem:[%s9 + $0x1b4] sm:$0xf]
    %v9513 = vld [vmem:[%s9 + $0x1b8] sm:$0xf]
    %v9514 = vld [vmem:[%s9 + $0x1bc] sm:$0xf]
    %v9515 = vld [vmem:[%s9 + $0x1c0] sm:$0xf]
    %v9516 = vld [vmem:[%s9 + $0x1c4] sm:$0xf]
    %v9517 = vld [vmem:[%s9 + $0x1c8] sm:$0xf]
    %v9518 = vld [vmem:[%s9 + $0x1cc] sm:$0xf]
    %v9519 = vld [vmem:[%s9 + $0x1d0] sm:$0xf]
    %v9520 = vld [vmem:[%s9 + $0x1d4] sm:$0xf]
    %v9521 = vld [vmem:[%s9 + $0x1d8] sm:$0xf]
    %v9522 = vld [vmem:[%s9 + $0x1dc] sm:$0xf]
    %v9523 = vld [vmem:[%s9 + $0x1e0] sm:$0xf]
    %v9524 = vld [vmem:[%s9 + $0x1e4] sm:$0xf]
    %v9525 = vld [vmem:[%s9 + $0x1e8] sm:$0xf]
    %v9526 = vld [vmem:[%s9 + $0x1ec] sm:$0xf]
    %v9527 = vld [vmem:[%s9 + $0x1f0] sm:$0xf]
    %v9528 = vld [vmem:[%s9 + $0x1f4] sm:$0xf]
    %v9529 = vld [vmem:[%s9 + $0x1f8] sm:$0xf]
    %v9530 = vld [vmem:[%s9 + $0x1fc] sm:$0xf]
    %v9531 = vld [vmem:[%s9 + $0x200] sm:$0xf]
    %v9532 = vld [vmem:[%s9 + $0x204] sm:$0xf]
    %v9533 = vld [vmem:[%s9 + $0x208] sm:$0xf]
    %v9534 = vld [vmem:[%s9 + $0x20c] sm:$0xf]
    %v9535 = vld [vmem:[%s9 + $0x210] sm:$0xf]
    %v9536 = vld [vmem:[%s9 + $0x214] sm:$0xf]
    %v9537 = vld [vmem:[%s9 + $0x218] sm:$0xf]
    %v9538 = vld [vmem:[%s9 + $0x21c] sm:$0xf]
    %v9539 = vld [vmem:[%s9 + $0x220] sm:$0xf]
    %v9540 = vld [vmem:[%s9 + $0x224] sm:$0xf]
    %v9541 = vld [vmem:[%s9 + $0x228] sm:$0xf]
    %v9542 = vld [vmem:[%s9 + $0x22c] sm:$0xf]
    %v9543 = vld [vmem:[%s9 + $0x230] sm:$0xf]
    %v9544 = vld [vmem:[%s9 + $0x234] sm:$0xf]
    %v9545 = vld [vmem:[%s9 + $0x238] sm:$0xf]
    %v9546 = vld [vmem:[%s9 + $0x23c] sm:$0xf]
    %v9547 = vld [vmem:[%s9 + $0x240] sm:$0xf]
    %v9548 = vld [vmem:[%s9 + $0x244] sm:$0xf]
    %v9549 = vld [vmem:[%s9 + $0x248] sm:$0xf]
    %v9550 = vld [vmem:[%s9 + $0x24c] sm:$0xf]
    %v9551 = vld [vmem:[%s9 + $0x250] sm:$0xf]
    %v9552 = vld [vmem:[%s9 + $0x254] sm:$0xf]
    %v9553 = vld [vmem:[%s9 + $0x258] sm:$0xf]
    %v9554 = vld [vmem:[%s9 + $0x25c] sm:$0xf]
    %v9555 = vld [vmem:[%s9 + $0x260] sm:$0xf]
    %v9556 = vld [vmem:[%s9 + $0x264] sm:$0xf]
    %v9557 = vld [vmem:[%s9 + $0x268] sm:$0xf]
    %v9558 = vld [vmem:[%s9 + $0x26c] sm:$0xf]
    %v9559 = vld [vmem:[%s9 + $0x270] sm:$0xf]
    %v9560 = vld [vmem:[%s9 + $0x274] sm:$0xf]
    %v9561 = vld [vmem:[%s9 + $0x278] sm:$0xf]
    %v9562 = vld [vmem:[%s9 + $0x27c] sm:$0xf]
    %v9563 = vld [vmem:[%s9 + $0x280] sm:$0xf]
    %v9564 = vld [vmem:[%s9 + $0x284] sm:$0xf]
    %v9565 = vld [vmem:[%s9 + $0x288] sm:$0xf]
    %v9566 = vld [vmem:[%s9 + $0x28c] sm:$0xf]
    %v9567 = vld [vmem:[%s9 + $0x290] sm:$0xf]
    %v9568 = vld [vmem:[%s9 + $0x294] sm:$0xf]
    %v9569 = vld [vmem:[%s9 + $0x298] sm:$0xf]
    %v9570 = vld [vmem:[%s9 + $0x29c] sm:$0xf]
    %v9571 = vld [vmem:[%s9 + $0x2a0] sm:$0xf]
    %v9572 = vld [vmem:[%s9 + $0x2a4] sm:$0xf]
    %v9573 = vld [vmem:[%s9 + $0x2a8] sm:$0xf]
    %v9574 = vld [vmem:[%s9 + $0x2ac] sm:$0xf]
    %v9575 = vld [vmem:[%s9 + $0x2b0] sm:$0xf]
    %v9576 = vld [vmem:[%s9 + $0x2b4] sm:$0xf]
    %v9577 = vld [vmem:[%s9 + $0x2b8] sm:$0xf]
    %v9578 = vld [vmem:[%s9 + $0x2bc] sm:$0xf]
    %v9579 = vld [vmem:[%s9 + $0x2c0] sm:$0xf]
    %v9580 = vld [vmem:[%s9 + $0x2c4] sm:$0xf]
    %v9581 = vld [vmem:[%s9 + $0x2c8] sm:$0xf]
    %v9582 = vld [vmem:[%s9 + $0x2cc] sm:$0xf]
    %v9583 = vld [vmem:[%s9 + $0x2d0] sm:$0xf]
    %v9584 = vld [vmem:[%s9 + $0x2d4] sm:$0xf]
    %v9585 = vld [vmem:[%s9 + $0x2d8] sm:$0xf]
    %v9586 = vld [vmem:[%s9 + $0x2dc] sm:$0xf]
    %v9587 = vld [vmem:[%s9 + $0x2e0] sm:$0xf]
    %v9588 = vld [vmem:[%s9 + $0x2e4] sm:$0xf]
    %v9589 = vld [vmem:[%s9 + $0x2e8] sm:$0xf]
    %v9590 = vld [vmem:[%s9 + $0x2ec] sm:$0xf]
    %v9591 = vld [vmem:[%s9 + $0x2f0] sm:$0xf]
    %v9592 = vld [vmem:[%s9 + $0x2f4] sm:$0xf]
    %v9593 = vld [vmem:[%s9 + $0x2f8] sm:$0xf]
    %v9594 = vld [vmem:[%s9 + $0x2fc] sm:$0xf]
    %v9595 = vld [vmem:[%s9 + $0x300] sm:$0xf]
    %v9596 = vld [vmem:[%s9 + $0x304] sm:$0xf]
    %v9597 = vld [vmem:[%s9 + $0x308] sm:$0xf]
    %v9598 = vld [vmem:[%s9 + $0x30c] sm:$0xf]
    %v9599 = vld [vmem:[%s9 + $0x310] sm:$0xf]
    %v9600 = vld [vmem:[%s9 + $0x314] sm:$0xf]
    %v9601 = vld [vmem:[%s9 + $0x318] sm:$0xf]
    %v9602 = vld [vmem:[%s9 + $0x31c] sm:$0xf]
    %v9603 = vld [vmem:[%s9 + $0x320] sm:$0xf]
    %v9604 = vld [vmem:[%s9 + $0x324] sm:$0xf]
    %v9605 = vld [vmem:[%s9 + $0x328] sm:$0xf]
    %v9606 = vld [vmem:[%s9 + $0x32c] sm:$0xf]
    %v9607 = vld [vmem:[%s9 + $0x330] sm:$0xf]
    %v9608 = vld [vmem:[%s9 + $0x334] sm:$0xf]
    %v9609 = vld [vmem:[%s9 + $0x338] sm:$0xf]
    %v9610 = vld [vmem:[%s9 + $0x33c] sm:$0xf]
    %v9611 = vld [vmem:[%s9 + $0x340] sm:$0xf]
    %v9612 = vld [vmem:[%s9 + $0x344] sm:$0xf]
    %v9613 = vld [vmem:[%s9 + $0x348] sm:$0xf]
    %v9614 = vld [vmem:[%s9 + $0x34c] sm:$0xf]
    %v9615 = vld [vmem:[%s9 + $0x350] sm:$0xf]
    %v9616 = vld [vmem:[%s9 + $0x354] sm:$0xf]
    %v9617 = vld [vmem:[%s9 + $0x358] sm:$0xf]
    %v9618 = vld [vmem:[%s9 + $0x35c] sm:$0xf]
    %v9619 = vld [vmem:[%s9 + $0x360] sm:$0xf]
    %v9620 = vld [vmem:[%s9 + $0x364] sm:$0xf]
    %v9621 = vld [vmem:[%s9 + $0x368] sm:$0xf]
    %v9622 = vld [vmem:[%s9 + $0x36c] sm:$0xf]
    %v9623 = vld [vmem:[%s9 + $0x370] sm:$0xf]
    %v9624 = vld [vmem:[%s9 + $0x374] sm:$0xf]
    %v9625 = vld [vmem:[%s9 + $0x378] sm:$0xf]
    %v9626 = vld [vmem:[%s9 + $0x37c] sm:$0xf]
    %v9627 = vld [vmem:[%s9 + $0x380] sm:$0xf]
    %v9628 = vld [vmem:[%s9 + $0x384] sm:$0xf]
    %v9629 = vld [vmem:[%s9 + $0x388] sm:$0xf]
    %v9630 = vld [vmem:[%s9 + $0x38c] sm:$0xf]
    %v9631 = vld [vmem:[%s9 + $0x390] sm:$0xf]
    %v9632 = vld [vmem:[%s9 + $0x394] sm:$0xf]
    %v9633 = vld [vmem:[%s9 + $0x398] sm:$0xf]
    %v9634 = vld [vmem:[%s9 + $0x39c] sm:$0xf]
    %v9635 = vld [vmem:[%s9 + $0x3a0] sm:$0xf]
    %v9636 = vld [vmem:[%s9 + $0x3a4] sm:$0xf]
    %v9637 = vld [vmem:[%s9 + $0x3a8] sm:$0xf]
    %v9638 = vld [vmem:[%s9 + $0x3ac] sm:$0xf]
    %v9639 = vld [vmem:[%s9 + $0x3b0] sm:$0xf]
    %v9640 = vld [vmem:[%s9 + $0x3b4] sm:$0xf]
    %v9641 = vld [vmem:[%s9 + $0x3b8] sm:$0xf]
    %v9642 = vld [vmem:[%s9 + $0x3bc] sm:$0xf]
    %v9643 = vld [vmem:[%s9 + $0x3c0] sm:$0xf]
    %v9644 = vld [vmem:[%s9 + $0x3c4] sm:$0xf]
    %v9645 = vld [vmem:[%s9 + $0x3c8] sm:$0xf]
    %v9646 = vld [vmem:[%s9 + $0x3cc] sm:$0xf]
    %v9647 = vld [vmem:[%s9 + $0x3d0] sm:$0xf]
    %v9648 = vld [vmem:[%s9 + $0x3d4] sm:$0xf]
    %v9649 = vld [vmem:[%s9 + $0x3d8] sm:$0xf]
    %v9650 = vld [vmem:[%s9 + $0x3dc] sm:$0xf]
    %v9651 = vld [vmem:[%s9 + $0x3e0] sm:$0xf]
    %v9652 = vld [vmem:[%s9 + $0x3e4] sm:$0xf]
    %v9653 = vld [vmem:[%s9 + $0x3e8] sm:$0xf]
    %v9654 = vld [vmem:[%s9 + $0x3ec] sm:$0xf]
    %v9655 = vld [vmem:[%s9 + $0x3f0] sm:$0xf]
    %v9656 = vld [vmem:[%s9 + $0x3f4] sm:$0xf]
    %v9657 = vld [vmem:[%s9 + $0x3f8] sm:$0xf]
    %v9658 = vld [vmem:[%s9 + $0x3fc] sm:$0xf]
    %v9659 = vld [vmem:[%s10] sm:$0x1]
    %v9661 = vperm.slane %v9659, 0
    %9664 = vst [vmem:[#allocation1] ss:$9 sm:$0xff] %v9401
    %v9665 = vld [vmem:[#allocation1] sm:$0xff]
    %v9666 = vld [vmem:[#allocation1 + $0x9] sm:$0xff]
    %v9667 = vld [vmem:[#allocation1 + $0x12] sm:$0xff]
    %v9668 = vld [vmem:[#allocation1 + $0x1b] sm:$0xff]
    %v9669 = vld [vmem:[#allocation1 + $0x24] sm:$0xff]
    %v9670 = vld [vmem:[#allocation1 + $0x2d] sm:$0xff]
    %v9671 = vld [vmem:[#allocation1 + $0x36] sm:$0xff]
    %v9672 = vld [vmem:[#allocation1 + $0x3f] sm:$0xff]
    %9674 = vst [vmem:[#allocation1] ss:$9 sm:$0xff] %v9402
    %v9675 = vld [vmem:[#allocation1] sm:$0xff]
    %v9676 = vld [vmem:[#allocation1 + $0x9] sm:$0xff]
    %v9677 = vld [vmem:[#allocation1 + $0x12] sm:$0xff]
    %v9678 = vld [vmem:[#allocation1 + $0x1b] sm:$0xff]
    %v9679 = vld [vmem:[#allocation1 + $0x24] sm:$0xff]
    %v9680 = vld [vmem:[#allocation1 + $0x2d] sm:$0xff]
    %v9681 = vld [vmem:[#allocation1 + $0x36] sm:$0xff]
    %v9682 = vld [vmem:[#allocation1 + $0x3f] sm:$0xff]
    %v9955 = vunpack.c.l.b16 %v9403
    %v9956 = vunpack.c.l.b16 %v9404
    %v9957 = vunpack.c.l.b16 %v9405
    %v9958 = vunpack.c.l.b16 %v9406
    %v9959 = vunpack.c.l.b16 %v9407
    %v9960 = vunpack.c.l.b16 %v9408
    %v9961 = vunpack.c.l.b16 %v9409
    %v9962 = vunpack.c.l.b16 %v9410
    %v9963 = vunpack.c.l.b16 %v9411
    %v9964 = vunpack.c.l.b16 %v9412
    %v9965 = vunpack.c.l.b16 %v9413
    %v9966 = vunpack.c.l.b16 %v9414
    %v9967 = vunpack.c.l.b16 %v9415
    %v9968 = vunpack.c.l.b16 %v9416
    %v9969 = vunpack.c.l.b16 %v9417
    %v9970 = vunpack.c.l.b16 %v9418
    %v9971 = vunpack.c.l.b16 %v9419
    %v9972 = vunpack.c.l.b16 %v9420
    %v9973 = vunpack.c.l.b16 %v9421
    %v9974 = vunpack.c.l.b16 %v9422
    %v9975 = vunpack.c.l.b16 %v9423
    %v9976 = vunpack.c.l.b16 %v9424
    %v9977 = vunpack.c.l.b16 %v9425
    %v9978 = vunpack.c.l.b16 %v9426
    %v9979 = vunpack.c.l.b16 %v9427
    %v9980 = vunpack.c.l.b16 %v9428
    %v9981 = vunpack.c.l.b16 %v9429
    %v9982 = vunpack.c.l.b16 %v9430
    %v9983 = vunpack.c.l.b16 %v9431
    %v9984 = vunpack.c.l.b16 %v9432
    %v9985 = vunpack.c.l.b16 %v9433
    %v9986 = vunpack.c.l.b16 %v9434
    %v9987 = vunpack.c.l.b16 %v9435
    %v9988 = vunpack.c.l.b16 %v9436
    %v9989 = vunpack.c.l.b16 %v9437
    %v9990 = vunpack.c.l.b16 %v9438
    %v9991 = vunpack.c.l.b16 %v9439
    %v9992 = vunpack.c.l.b16 %v9440
    %v9993 = vunpack.c.l.b16 %v9441
    %v9994 = vunpack.c.l.b16 %v9442
    %v9995 = vunpack.c.l.b16 %v9443
    %v9996 = vunpack.c.l.b16 %v9444
    %v9997 = vunpack.c.l.b16 %v9445
    %v9998 = vunpack.c.l.b16 %v9446
    %v9999 = vunpack.c.l.b16 %v9447
    %v10000 = vunpack.c.l.b16 %v9448
    %v10001 = vunpack.c.l.b16 %v9449
    %v10002 = vunpack.c.l.b16 %v9450
    %v10003 = vunpack.c.l.b16 %v9451
    %v10004 = vunpack.c.l.b16 %v9452
    %v10005 = vunpack.c.l.b16 %v9453
    %v10006 = vunpack.c.l.b16 %v9454
    %v10007 = vunpack.c.l.b16 %v9455
    %v10008 = vunpack.c.l.b16 %v9456
    %v10009 = vunpack.c.l.b16 %v9457
    %v10010 = vunpack.c.l.b16 %v9458
    %v10011 = vunpack.c.l.b16 %v9459
    %v10012 = vunpack.c.l.b16 %v9460
    %v10013 = vunpack.c.l.b16 %v9461
    %v10014 = vunpack.c.l.b16 %v9462
    %v10015 = vunpack.c.l.b16 %v9463
    %v10016 = vunpack.c.l.b16 %v9464
    %v10017 = vunpack.c.l.b16 %v9465
    %v10018 = vunpack.c.l.b16 %v9466
    %v10019 = vunpack.c.l.b16 %v9467
    %v10020 = vunpack.c.l.b16 %v9468
    %v10021 = vunpack.c.l.b16 %v9469
    %v10022 = vunpack.c.l.b16 %v9470
    %v10023 = vunpack.c.l.b16 %v9471
    %v10024 = vunpack.c.l.b16 %v9472
    %v10025 = vunpack.c.l.b16 %v9473
    %v10026 = vunpack.c.l.b16 %v9474
    %v10027 = vunpack.c.l.b16 %v9475
    %v10028 = vunpack.c.l.b16 %v9476
    %v10029 = vunpack.c.l.b16 %v9477
    %v10030 = vunpack.c.l.b16 %v9478
    %v10031 = vunpack.c.l.b16 %v9479
    %v10032 = vunpack.c.l.b16 %v9480
    %v10033 = vunpack.c.l.b16 %v9481
    %v10034 = vunpack.c.l.b16 %v9482
    %v10035 = vunpack.c.l.b16 %v9483
    %v10036 = vunpack.c.l.b16 %v9484
    %v10037 = vunpack.c.l.b16 %v9485
    %v10038 = vunpack.c.l.b16 %v9486
    %v10039 = vunpack.c.l.b16 %v9487
    %v10040 = vunpack.c.l.b16 %v9488
    %v10041 = vunpack.c.l.b16 %v9489
    %v10042 = vunpack.c.l.b16 %v9490
    %v10043 = vunpack.c.l.b16 %v9491
    %v10044 = vunpack.c.l.b16 %v9492
    %v10045 = vunpack.c.l.b16 %v9493
    %v10046 = vunpack.c.l.b16 %v9494
    %v10047 = vunpack.c.l.b16 %v9495
    %v10048 = vunpack.c.l.b16 %v9496
    %v10049 = vunpack.c.l.b16 %v9497
    %v10050 = vunpack.c.l.b16 %v9498
    %v10051 = vunpack.c.l.b16 %v9499
    %v10052 = vunpack.c.l.b16 %v9500
    %v10053 = vunpack.c.l.b16 %v9501
    %v10054 = vunpack.c.l.b16 %v9502
    %v10055 = vunpack.c.l.b16 %v9503
    %v10056 = vunpack.c.l.b16 %v9504
    %v10057 = vunpack.c.l.b16 %v9505
    %v10058 = vunpack.c.l.b16 %v9506
    %v10059 = vunpack.c.l.b16 %v9507
    %v10060 = vunpack.c.l.b16 %v9508
    %v10061 = vunpack.c.l.b16 %v9509
    %v10062 = vunpack.c.l.b16 %v9510
    %v10063 = vunpack.c.l.b16 %v9511
    %v10064 = vunpack.c.l.b16 %v9512
    %v10065 = vunpack.c.l.b16 %v9513
    %v10066 = vunpack.c.l.b16 %v9514
    %v10067 = vunpack.c.l.b16 %v9515
    %v10068 = vunpack.c.l.b16 %v9516
    %v10069 = vunpack.c.l.b16 %v9517
    %v10070 = vunpack.c.l.b16 %v9518
    %v10071 = vunpack.c.l.b16 %v9519
    %v10072 = vunpack.c.l.b16 %v9520
    %v10073 = vunpack.c.l.b16 %v9521
    %v10074 = vunpack.c.l.b16 %v9522
    %v10075 = vunpack.c.l.b16 %v9523
    %v10076 = vunpack.c.l.b16 %v9524
    %v10077 = vunpack.c.l.b16 %v9525
    %v10078 = vunpack.c.l.b16 %v9526
    %v10079 = vunpack.c.l.b16 %v9527
    %v10080 = vunpack.c.l.b16 %v9528
    %v10081 = vunpack.c.l.b16 %v9529
    %v10082 = vunpack.c.l.b16 %v9530
    %v10083 = vunpack.c.l.b16 %v9531
    %v10084 = vunpack.c.l.b16 %v9532
    %v10085 = vunpack.c.l.b16 %v9533
    %v10086 = vunpack.c.l.b16 %v9534
    %v10087 = vunpack.c.l.b16 %v9535
    %v10088 = vunpack.c.l.b16 %v9536
    %v10089 = vunpack.c.l.b16 %v9537
    %v10090 = vunpack.c.l.b16 %v9538
    %v10091 = vunpack.c.l.b16 %v9539
    %v10092 = vunpack.c.l.b16 %v9540
    %v10093 = vunpack.c.l.b16 %v9541
    %v10094 = vunpack.c.l.b16 %v9542
    %v10095 = vunpack.c.l.b16 %v9543
    %v10096 = vunpack.c.l.b16 %v9544
    %v10097 = vunpack.c.l.b16 %v9545
    %v10098 = vunpack.c.l.b16 %v9546
    %v10099 = vunpack.c.l.b16 %v9547
    %v10100 = vunpack.c.l.b16 %v9548
    %v10101 = vunpack.c.l.b16 %v9549
    %v10102 = vunpack.c.l.b16 %v9550
    %v10103 = vunpack.c.l.b16 %v9551
    %v10104 = vunpack.c.l.b16 %v9552
    %v10105 = vunpack.c.l.b16 %v9553
    %v10106 = vunpack.c.l.b16 %v9554
    %v10107 = vunpack.c.l.b16 %v9555
    %v10108 = vunpack.c.l.b16 %v9556
    %v10109 = vunpack.c.l.b16 %v9557
    %v10110 = vunpack.c.l.b16 %v9558
    %v10111 = vunpack.c.l.b16 %v9559
    %v10112 = vunpack.c.l.b16 %v9560
    %v10113 = vunpack.c.l.b16 %v9561
    %v10114 = vunpack.c.l.b16 %v9562
    %v10115 = vunpack.c.l.b16 %v9563
    %v10116 = vunpack.c.l.b16 %v9564
    %v10117 = vunpack.c.l.b16 %v9565
    %v10118 = vunpack.c.l.b16 %v9566
    %v10119 = vunpack.c.l.b16 %v9567
    %v10120 = vunpack.c.l.b16 %v9568
    %v10121 = vunpack.c.l.b16 %v9569
    %v10122 = vunpack.c.l.b16 %v9570
    %v10123 = vunpack.c.l.b16 %v9571
    %v10124 = vunpack.c.l.b16 %v9572
    %v10125 = vunpack.c.l.b16 %v9573
    %v10126 = vunpack.c.l.b16 %v9574
    %v10127 = vunpack.c.l.b16 %v9575
    %v10128 = vunpack.c.l.b16 %v9576
    %v10129 = vunpack.c.l.b16 %v9577
    %v10130 = vunpack.c.l.b16 %v9578
    %v10131 = vunpack.c.l.b16 %v9579
    %v10132 = vunpack.c.l.b16 %v9580
    %v10133 = vunpack.c.l.b16 %v9581
    %v10134 = vunpack.c.l.b16 %v9582
    %v10135 = vunpack.c.l.b16 %v9583
    %v10136 = vunpack.c.l.b16 %v9584
    %v10137 = vunpack.c.l.b16 %v9585
    %v10138 = vunpack.c.l.b16 %v9586
    %v10139 = vunpack.c.l.b16 %v9587
    %v10140 = vunpack.c.l.b16 %v9588
    %v10141 = vunpack.c.l.b16 %v9589
    %v10142 = vunpack.c.l.b16 %v9590
    %v10143 = vunpack.c.l.b16 %v9591
    %v10144 = vunpack.c.l.b16 %v9592
    %v10145 = vunpack.c.l.b16 %v9593
    %v10146 = vunpack.c.l.b16 %v9594
    %v10147 = vunpack.c.l.b16 %v9595
    %v10148 = vunpack.c.l.b16 %v9596
    %v10149 = vunpack.c.l.b16 %v9597
    %v10150 = vunpack.c.l.b16 %v9598
    %v10151 = vunpack.c.l.b16 %v9599
    %v10152 = vunpack.c.l.b16 %v9600
    %v10153 = vunpack.c.l.b16 %v9601
    %v10154 = vunpack.c.l.b16 %v9602
    %v10155 = vunpack.c.l.b16 %v9603
    %v10156 = vunpack.c.l.b16 %v9604
    %v10157 = vunpack.c.l.b16 %v9605
    %v10158 = vunpack.c.l.b16 %v9606
    %v10159 = vunpack.c.l.b16 %v9607
    %v10160 = vunpack.c.l.b16 %v9608
    %v10161 = vunpack.c.l.b16 %v9609
    %v10162 = vunpack.c.l.b16 %v9610
    %v10163 = vunpack.c.l.b16 %v9611
    %v10164 = vunpack.c.l.b16 %v9612
    %v10165 = vunpack.c.l.b16 %v9613
    %v10166 = vunpack.c.l.b16 %v9614
    %v10167 = vunpack.c.l.b16 %v9615
    %v10168 = vunpack.c.l.b16 %v9616
    %v10169 = vunpack.c.l.b16 %v9617
    %v10170 = vunpack.c.l.b16 %v9618
    %v10171 = vunpack.c.l.b16 %v9619
    %v10172 = vunpack.c.l.b16 %v9620
    %v10173 = vunpack.c.l.b16 %v9621
    %v10174 = vunpack.c.l.b16 %v9622
    %v10175 = vunpack.c.l.b16 %v9623
    %v10176 = vunpack.c.l.b16 %v9624
    %v10177 = vunpack.c.l.b16 %v9625
    %v10178 = vunpack.c.l.b16 %v9626
    %v10179 = vunpack.c.l.b16 %v9627
    %v10180 = vunpack.c.l.b16 %v9628
    %v10181 = vunpack.c.l.b16 %v9629
    %v10182 = vunpack.c.l.b16 %v9630
    %v10183 = vunpack.c.l.b16 %v9631
    %v10184 = vunpack.c.l.b16 %v9632
    %v10185 = vunpack.c.l.b16 %v9633
    %v10186 = vunpack.c.l.b16 %v9634
    %v10187 = vunpack.c.l.b16 %v9635
    %v10188 = vunpack.c.l.b16 %v9636
    %v10189 = vunpack.c.l.b16 %v9637
    %v10190 = vunpack.c.l.b16 %v9638
    %v10191 = vunpack.c.l.b16 %v9639
    %v10192 = vunpack.c.l.b16 %v9640
    %v10193 = vunpack.c.l.b16 %v9641
    %v10194 = vunpack.c.l.b16 %v9642
    %v10195 = vunpack.c.l.b16 %v9643
    %v10196 = vunpack.c.l.b16 %v9644
    %v10197 = vunpack.c.l.b16 %v9645
    %v10198 = vunpack.c.l.b16 %v9646
    %v10199 = vunpack.c.l.b16 %v9647
    %v10200 = vunpack.c.l.b16 %v9648
    %v10201 = vunpack.c.l.b16 %v9649
    %v10202 = vunpack.c.l.b16 %v9650
    %v10203 = vunpack.c.l.b16 %v9651
    %v10204 = vunpack.c.l.b16 %v9652
    %v10205 = vunpack.c.l.b16 %v9653
    %v10206 = vunpack.c.l.b16 %v9654
    %v10207 = vunpack.c.l.b16 %v9655
    %v10208 = vunpack.c.l.b16 %v9656
    %v10209 = vunpack.c.l.b16 %v9657
    %v10210 = vunpack.c.l.b16 %v9658
    %v10211 = vpack.c.b16 %v9956, %v9955
    %v10212 = vpack.c.b16 %v9958, %v9957
    %v10213 = vpack.c.b16 %v9960, %v9959
    %v10214 = vpack.c.b16 %v9962, %v9961
    %v10215 = vpack.c.b16 %v9964, %v9963
    %v10216 = vpack.c.b16 %v9966, %v9965
    %v10217 = vpack.c.b16 %v9968, %v9967
    %v10218 = vpack.c.b16 %v9970, %v9969
    %v10219 = vpack.c.b16 %v9972, %v9971
    %v10220 = vpack.c.b16 %v9974, %v9973
    %v10221 = vpack.c.b16 %v9976, %v9975
    %v10222 = vpack.c.b16 %v9978, %v9977
    %v10223 = vpack.c.b16 %v9980, %v9979
    %v10224 = vpack.c.b16 %v9982, %v9981
    %v10225 = vpack.c.b16 %v9984, %v9983
    %v10226 = vpack.c.b16 %v9986, %v9985
    %v10227 = vpack.c.b16 %v9988, %v9987
    %v10228 = vpack.c.b16 %v9990, %v9989
    %v10229 = vpack.c.b16 %v9992, %v9991
    %v10230 = vpack.c.b16 %v9994, %v9993
    %v10231 = vpack.c.b16 %v9996, %v9995
    %v10232 = vpack.c.b16 %v9998, %v9997
    %v10233 = vpack.c.b16 %v10000, %v9999
    %v10234 = vpack.c.b16 %v10002, %v10001
    %v10235 = vpack.c.b16 %v10004, %v10003
    %v10236 = vpack.c.b16 %v10006, %v10005
    %v10237 = vpack.c.b16 %v10008, %v10007
    %v10238 = vpack.c.b16 %v10010, %v10009
    %v10239 = vpack.c.b16 %v10012, %v10011
    %v10240 = vpack.c.b16 %v10014, %v10013
    %v10241 = vpack.c.b16 %v10016, %v10015
    %v10242 = vpack.c.b16 %v10018, %v10017
    %v10243 = vpack.c.b16 %v10020, %v10019
    %v10244 = vpack.c.b16 %v10022, %v10021
    %v10245 = vpack.c.b16 %v10024, %v10023
    %v10246 = vpack.c.b16 %v10026, %v10025
    %v10247 = vpack.c.b16 %v10028, %v10027
    %v10248 = vpack.c.b16 %v10030, %v10029
    %v10249 = vpack.c.b16 %v10032, %v10031
    %v10250 = vpack.c.b16 %v10034, %v10033
    %v10251 = vpack.c.b16 %v10036, %v10035
    %v10252 = vpack.c.b16 %v10038, %v10037
    %v10253 = vpack.c.b16 %v10040, %v10039
    %v10254 = vpack.c.b16 %v10042, %v10041
    %v10255 = vpack.c.b16 %v10044, %v10043
    %v10256 = vpack.c.b16 %v10046, %v10045
    %v10257 = vpack.c.b16 %v10048, %v10047
    %v10258 = vpack.c.b16 %v10050, %v10049
    %v10259 = vpack.c.b16 %v10052, %v10051
    %v10260 = vpack.c.b16 %v10054, %v10053
    %v10261 = vpack.c.b16 %v10056, %v10055
    %v10262 = vpack.c.b16 %v10058, %v10057
    %v10263 = vpack.c.b16 %v10060, %v10059
    %v10264 = vpack.c.b16 %v10062, %v10061
    %v10265 = vpack.c.b16 %v10064, %v10063
    %v10266 = vpack.c.b16 %v10066, %v10065
    %v10267 = vpack.c.b16 %v10068, %v10067
    %v10268 = vpack.c.b16 %v10070, %v10069
    %v10269 = vpack.c.b16 %v10072, %v10071
    %v10270 = vpack.c.b16 %v10074, %v10073
    %v10271 = vpack.c.b16 %v10076, %v10075
    %v10272 = vpack.c.b16 %v10078, %v10077
    %v10273 = vpack.c.b16 %v10080, %v10079
    %v10274 = vpack.c.b16 %v10082, %v10081
    %v10275 = vpack.c.b16 %v10084, %v10083
    %v10276 = vpack.c.b16 %v10086, %v10085
    %v10277 = vpack.c.b16 %v10088, %v10087
    %v10278 = vpack.c.b16 %v10090, %v10089
    %v10279 = vpack.c.b16 %v10092, %v10091
    %v10280 = vpack.c.b16 %v10094, %v10093
    %v10281 = vpack.c.b16 %v10096, %v10095
    %v10282 = vpack.c.b16 %v10098, %v10097
    %v10283 = vpack.c.b16 %v10100, %v10099
    %v10284 = vpack.c.b16 %v10102, %v10101
    %v10285 = vpack.c.b16 %v10104, %v10103
    %v10286 = vpack.c.b16 %v10106, %v10105
    %v10287 = vpack.c.b16 %v10108, %v10107
    %v10288 = vpack.c.b16 %v10110, %v10109
    %v10289 = vpack.c.b16 %v10112, %v10111
    %v10290 = vpack.c.b16 %v10114, %v10113
    %v10291 = vpack.c.b16 %v10116, %v10115
    %v10292 = vpack.c.b16 %v10118, %v10117
    %v10293 = vpack.c.b16 %v10120, %v10119
    %v10294 = vpack.c.b16 %v10122, %v10121
    %v10295 = vpack.c.b16 %v10124, %v10123
    %v10296 = vpack.c.b16 %v10126, %v10125
    %v10297 = vpack.c.b16 %v10128, %v10127
    %v10298 = vpack.c.b16 %v10130, %v10129
    %v10299 = vpack.c.b16 %v10132, %v10131
    %v10300 = vpack.c.b16 %v10134, %v10133
    %v10301 = vpack.c.b16 %v10136, %v10135
    %v10302 = vpack.c.b16 %v10138, %v10137
    %v10303 = vpack.c.b16 %v10140, %v10139
    %v10304 = vpack.c.b16 %v10142, %v10141
    %v10305 = vpack.c.b16 %v10144, %v10143
    %v10306 = vpack.c.b16 %v10146, %v10145
    %v10307 = vpack.c.b16 %v10148, %v10147
    %v10308 = vpack.c.b16 %v10150, %v10149
    %v10309 = vpack.c.b16 %v10152, %v10151
    %v10310 = vpack.c.b16 %v10154, %v10153
    %v10311 = vpack.c.b16 %v10156, %v10155
    %v10312 = vpack.c.b16 %v10158, %v10157
    %v10313 = vpack.c.b16 %v10160, %v10159
    %v10314 = vpack.c.b16 %v10162, %v10161
    %v10315 = vpack.c.b16 %v10164, %v10163
    %v10316 = vpack.c.b16 %v10166, %v10165
    %v10317 = vpack.c.b16 %v10168, %v10167
    %v10318 = vpack.c.b16 %v10170, %v10169
    %v10319 = vpack.c.b16 %v10172, %v10171
    %v10320 = vpack.c.b16 %v10174, %v10173
    %v10321 = vpack.c.b16 %v10176, %v10175
    %v10322 = vpack.c.b16 %v10178, %v10177
    %v10323 = vpack.c.b16 %v10180, %v10179
    %v10324 = vpack.c.b16 %v10182, %v10181
    %v10325 = vpack.c.b16 %v10184, %v10183
    %v10326 = vpack.c.b16 %v10186, %v10185
    %v10327 = vpack.c.b16 %v10188, %v10187
    %v10328 = vpack.c.b16 %v10190, %v10189
    %v10329 = vpack.c.b16 %v10192, %v10191
    %v10330 = vpack.c.b16 %v10194, %v10193
    %v10331 = vpack.c.b16 %v10196, %v10195
    %v10332 = vpack.c.b16 %v10198, %v10197
    %v10333 = vpack.c.b16 %v10200, %v10199
    %v10334 = vpack.c.b16 %v10202, %v10201
    %v10335 = vpack.c.b16 %v10204, %v10203
    %v10336 = vpack.c.b16 %v10206, %v10205
    %v10337 = vpack.c.b16 %v10208, %v10207
    %v10338 = vpack.c.b16 %v10210, %v10209
    %10467 = vmatpush.bf16.msra.mxu0 %v10218
    %10468 = vmatpush.bf16.msra.mxu0 %v10217
    %10469 = vmatpush.bf16.msra.mxu0 %v10216
    %10470 = vmatpush.bf16.msra.mxu0 %v10215
    %10471 = vmatpush.bf16.msra.mxu0 %v10214
    %10472 = vmatpush.bf16.msra.mxu0 %v10213
    %10473 = vmatpush.bf16.msra.mxu0 %v10212
    %10474 = vmatpush.bf16.msra.mxu0 %v10211
    %10475 = vmatmul.bf16.gmra.mxu0 %v9665
    %v10476 = vpop.f32.mrf.mxu0
    %v10477 = vadd.f32 %v9661, %v10476
    %v10478 = vpop.f32.mrf.mxu0
    %10479 = vdwg.mxu0
    %10480 = vmatpush.bf16.msra.mxu0 %v10226
    %10481 = vmatpush.bf16.msra.mxu0 %v10225
    %10482 = vmatpush.bf16.msra.mxu0 %v10224
    %10483 = vmatpush.bf16.msra.mxu0 %v10223
    %10484 = vmatpush.bf16.msra.mxu0 %v10222
    %10485 = vmatpush.bf16.msra.mxu0 %v10221
    %10486 = vmatpush.bf16.msra.mxu0 %v10220
    %10487 = vmatpush.bf16.msra.mxu0 %v10219
    %10488 = vmatmul.bf16.gmra.mxu0 %v9666
    %v10489 = vpop.f32.mrf.mxu0
    %v10490 = vadd.f32 %v10477, %v10489
    %v10491 = vpop.f32.mrf.mxu0
    %10492 = vdwg.mxu0
    %10493 = vmatpush.bf16.msra.mxu0 %v10234
    %10494 = vmatpush.bf16.msra.mxu0 %v10233
    %10495 = vmatpush.bf16.msra.mxu0 %v10232
    %10496 = vmatpush.bf16.msra.mxu0 %v10231
    %10497 = vmatpush.bf16.msra.mxu0 %v10230
    %10498 = vmatpush.bf16.msra.mxu0 %v10229
    %10499 = vmatpush.bf16.msra.mxu0 %v10228
    %10500 = vmatpush.bf16.msra.mxu0 %v10227
    %10501 = vmatmul.bf16.gmra.mxu0 %v9667
    %v10502 = vpop.f32.mrf.mxu0
    %v10503 = vadd.f32 %v10490, %v10502
    %v10504 = vpop.f32.mrf.mxu0
    %10505 = vdwg.mxu0
    %10506 = vmatpush.bf16.msra.mxu0 %v10242
    %10507 = vmatpush.bf16.msra.mxu0 %v10241
    %10508 = vmatpush.bf16.msra.mxu0 %v10240
    %10509 = vmatpush.bf16.msra.mxu0 %v10239
    %10510 = vmatpush.bf16.msra.mxu0 %v10238
    %10511 = vmatpush.bf16.msra.mxu0 %v10237
    %10512 = vmatpush.bf16.msra.mxu0 %v10236
    %10513 = vmatpush.bf16.msra.mxu0 %v10235
    %10514 = vmatmul.bf16.gmra.mxu0 %v9668
    %v10515 = vpop.f32.mrf.mxu0
    %v10516 = vadd.f32 %v10503, %v10515
    %v10517 = vpop.f32.mrf.mxu0
    %10518 = vdwg.mxu0
    %10519 = vmatpush.bf16.msra.mxu0 %v10250
    %10520 = vmatpush.bf16.msra.mxu0 %v10249
    %10521 = vmatpush.bf16.msra.mxu0 %v10248
    %10522 = vmatpush.bf16.msra.mxu0 %v10247
    %10523 = vmatpush.bf16.msra.mxu0 %v10246
    %10524 = vmatpush.bf16.msra.mxu0 %v10245
    %10525 = vmatpush.bf16.msra.mxu0 %v10244
    %10526 = vmatpush.bf16.msra.mxu0 %v10243
    %10527 = vmatmul.bf16.gmra.mxu0 %v9669
    %v10528 = vpop.f32.mrf.mxu0
    %v10529 = vadd.f32 %v10516, %v10528
    %v10530 = vpop.f32.mrf.mxu0
    %10531 = vdwg.mxu0
    %10532 = vmatpush.bf16.msra.mxu0 %v10258
    %10533 = vmatpush.bf16.msra.mxu0 %v10257
    %10534 = vmatpush.bf16.msra.mxu0 %v10256
    %10535 = vmatpush.bf16.msra.mxu0 %v10255
    %10536 = vmatpush.bf16.msra.mxu0 %v10254
    %10537 = vmatpush.bf16.msra.mxu0 %v10253
    %10538 = vmatpush.bf16.msra.mxu0 %v10252
    %10539 = vmatpush.bf16.msra.mxu0 %v10251
    %10540 = vmatmul.bf16.gmra.mxu0 %v9670
    %v10541 = vpop.f32.mrf.mxu0
    %v10542 = vadd.f32 %v10529, %v10541
    %v10543 = vpop.f32.mrf.mxu0
    %10544 = vdwg.mxu0
    %10545 = vmatpush.bf16.msra.mxu0 %v10266
    %10546 = vmatpush.bf16.msra.mxu0 %v10265
    %10547 = vmatpush.bf16.msra.mxu0 %v10264
    %10548 = vmatpush.bf16.msra.mxu0 %v10263
    %10549 = vmatpush.bf16.msra.mxu0 %v10262
    %10550 = vmatpush.bf16.msra.mxu0 %v10261
    %10551 = vmatpush.bf16.msra.mxu0 %v10260
    %10552 = vmatpush.bf16.msra.mxu0 %v10259
    %10553 = vmatmul.bf16.gmra.mxu0 %v9671
    %v10554 = vpop.f32.mrf.mxu0
    %v10555 = vadd.f32 %v10542, %v10554
    %v10556 = vpop.f32.mrf.mxu0
    %10557 = vdwg.mxu0
    %10558 = vmatpush.bf16.msra.mxu0 %v10274
    %10559 = vmatpush.bf16.msra.mxu0 %v10273
    %10560 = vmatpush.bf16.msra.mxu0 %v10272
    %10561 = vmatpush.bf16.msra.mxu0 %v10271
    %10562 = vmatpush.bf16.msra.mxu0 %v10270
    %10563 = vmatpush.bf16.msra.mxu0 %v10269
    %10564 = vmatpush.bf16.msra.mxu0 %v10268
    %10565 = vmatpush.bf16.msra.mxu0 %v10267
    %10566 = vmatmul.bf16.gmra.mxu0 %v9672
    %v10567 = vpop.f32.mrf.mxu0
    %v10568 = vadd.f32 %v10555, %v10567
    %v10569 = vpop.f32.mrf.mxu0
    %10570 = vdwg.mxu0
    %10571 = vmatpush.bf16.msra.mxu0 %v10282
    %10572 = vmatpush.bf16.msra.mxu0 %v10281
    %10573 = vmatpush.bf16.msra.mxu0 %v10280
    %10574 = vmatpush.bf16.msra.mxu0 %v10279
    %10575 = vmatpush.bf16.msra.mxu0 %v10278
    %10576 = vmatpush.bf16.msra.mxu0 %v10277
    %10577 = vmatpush.bf16.msra.mxu0 %v10276
    %10578 = vmatpush.bf16.msra.mxu0 %v10275
    %10579 = vmatmul.bf16.gmra.mxu0 %v9675
    %v10580 = vpop.f32.mrf.mxu0
    %v10581 = vadd.f32 %v10568, %v10580
    %v10582 = vpop.f32.mrf.mxu0
    %10583 = vdwg.mxu0
    %10584 = vmatpush.bf16.msra.mxu0 %v10290
    %10585 = vmatpush.bf16.msra.mxu0 %v10289
    %10586 = vmatpush.bf16.msra.mxu0 %v10288
    %10587 = vmatpush.bf16.msra.mxu0 %v10287
    %10588 = vmatpush.bf16.msra.mxu0 %v10286
    %10589 = vmatpush.bf16.msra.mxu0 %v10285
    %10590 = vmatpush.bf16.msra.mxu0 %v10284
    %10591 = vmatpush.bf16.msra.mxu0 %v10283
    %10592 = vmatmul.bf16.gmra.mxu0 %v9676
    %v10593 = vpop.f32.mrf.mxu0
    %v10594 = vadd.f32 %v10581, %v10593
    %v10595 = vpop.f32.mrf.mxu0
    %10596 = vdwg.mxu0
    %10597 = vmatpush.bf16.msra.mxu0 %v10298
    %10598 = vmatpush.bf16.msra.mxu0 %v10297
    %10599 = vmatpush.bf16.msra.mxu0 %v10296
    %10600 = vmatpush.bf16.msra.mxu0 %v10295
    %10601 = vmatpush.bf16.msra.mxu0 %v10294
    %10602 = vmatpush.bf16.msra.mxu0 %v10293
    %10603 = vmatpush.bf16.msra.mxu0 %v10292
    %10604 = vmatpush.bf16.msra.mxu0 %v10291
    %10605 = vmatmul.bf16.gmra.mxu0 %v9677
    %v10606 = vpop.f32.mrf.mxu0
    %v10607 = vadd.f32 %v10594, %v10606
    %v10608 = vpop.f32.mrf.mxu0
    %10609 = vdwg.mxu0
    %10610 = vmatpush.bf16.msra.mxu0 %v10306
    %10611 = vmatpush.bf16.msra.mxu0 %v10305
    %10612 = vmatpush.bf16.msra.mxu0 %v10304
    %10613 = vmatpush.bf16.msra.mxu0 %v10303
    %10614 = vmatpush.bf16.msra.mxu0 %v10302
    %10615 = vmatpush.bf16.msra.mxu0 %v10301
    %10616 = vmatpush.bf16.msra.mxu0 %v10300
    %10617 = vmatpush.bf16.msra.mxu0 %v10299
    %10618 = vmatmul.bf16.gmra.mxu0 %v9678
    %v10619 = vpop.f32.mrf.mxu0
    %v10620 = vadd.f32 %v10607, %v10619
    %v10621 = vpop.f32.mrf.mxu0
    %10622 = vdwg.mxu0
    %10623 = vmatpush.bf16.msra.mxu0 %v10314
    %10624 = vmatpush.bf16.msra.mxu0 %v10313
    %10625 = vmatpush.bf16.msra.mxu0 %v10312
    %10626 = vmatpush.bf16.msra.mxu0 %v10311
    %10627 = vmatpush.bf16.msra.mxu0 %v10310
    %10628 = vmatpush.bf16.msra.mxu0 %v10309
    %10629 = vmatpush.bf16.msra.mxu0 %v10308
    %10630 = vmatpush.bf16.msra.mxu0 %v10307
    %10631 = vmatmul.bf16.gmra.mxu0 %v9679
    %v10632 = vpop.f32.mrf.mxu0
    %v10633 = vadd.f32 %v10620, %v10632
    %v10634 = vpop.f32.mrf.mxu0
    %10635 = vdwg.mxu0
    %10636 = vmatpush.bf16.msra.mxu0 %v10322
    %10637 = vmatpush.bf16.msra.mxu0 %v10321
    %10638 = vmatpush.bf16.msra.mxu0 %v10320
    %10639 = vmatpush.bf16.msra.mxu0 %v10319
    %10640 = vmatpush.bf16.msra.mxu0 %v10318
    %10641 = vmatpush.bf16.msra.mxu0 %v10317
    %10642 = vmatpush.bf16.msra.mxu0 %v10316
    %10643 = vmatpush.bf16.msra.mxu0 %v10315
    %10644 = vmatmul.bf16.gmra.mxu0 %v9680
    %v10645 = vpop.f32.mrf.mxu0
    %v10646 = vadd.f32 %v10633, %v10645
    %v10647 = vpop.f32.mrf.mxu0
    %10648 = vdwg.mxu0
    %10649 = vmatpush.bf16.msra.mxu0 %v10330
    %10650 = vmatpush.bf16.msra.mxu0 %v10329
    %10651 = vmatpush.bf16.msra.mxu0 %v10328
    %10652 = vmatpush.bf16.msra.mxu0 %v10327
    %10653 = vmatpush.bf16.msra.mxu0 %v10326
    %10654 = vmatpush.bf16.msra.mxu0 %v10325
    %10655 = vmatpush.bf16.msra.mxu0 %v10324
    %10656 = vmatpush.bf16.msra.mxu0 %v10323
    %10657 = vmatmul.bf16.gmra.mxu0 %v9681
    %v10658 = vpop.f32.mrf.mxu0
    %v10659 = vadd.f32 %v10646, %v10658
    %v10660 = vpop.f32.mrf.mxu0
    %10661 = vdwg.mxu0
    %10662 = vmatpush.bf16.msra.mxu0 %v10338
    %10663 = vmatpush.bf16.msra.mxu0 %v10337
    %10664 = vmatpush.bf16.msra.mxu0 %v10336
    %10665 = vmatpush.bf16.msra.mxu0 %v10335
    %10666 = vmatpush.bf16.msra.mxu0 %v10334
    %10667 = vmatpush.bf16.msra.mxu0 %v10333
    %10668 = vmatpush.bf16.msra.mxu0 %v10332
    %10669 = vmatpush.bf16.msra.mxu0 %v10331
    %10670 = vmatmul.bf16.gmra.mxu0 %v9682
    %v10671 = vpop.f32.mrf.mxu0
    %v10672 = vadd.f32 %v10659, %v10671
    %v10673 = vpop.f32.mrf.mxu0
    %10674 = vdwg.mxu0
    %10675 = vst [vmem:[#allocation6] sm:$0x3] %v10672
    // Predicated region
    $region46: #{encoder_forward.1} parent=1 // pred_check
      _
    $region47: #{encoder_forward.1} parent=1 // pred_check_branch
      %10677 = sbr.rel (0) target = $region49
    $region48: #{encoder_forward.1} parent=1 // pred_region
      %10679 = vsyncadd [#allocation7], 0
      %s10681 = sshll.u32 [#allocation6], 4
      %s10682 = int_to_ptr.vmem [resolvable:$true] %s10681
      %s10683 = sshll.u32 %s11, 4
      %s10684 = int_to_ptr.hbm [resolvable:$true] %s10683
      %10686 = dma.vmem_to_hbm [thread:$0]  %s10682, 32, %s10684, [#allocation7]
    $region49: #{encoder_forward.1} parent=1 // pred_fallthru
      _
    // Predicated region
    $region50: #{encoder_forward.1} parent=1 // pred_check
      _
    $region51: #{encoder_forward.1} parent=1 // pred_check_branch
      %10688 = sbr.rel (0) target = $region53
    $region52: #{encoder_forward.1} parent=1 // pred_region
      %10690 = dma.done [#allocation7], 32
    $region53: #{encoder_forward.1} parent=1 // pred_fallthru
      _
    %10691 = vsyncpa [#allocation7], 1

</llo_original>
